<compile_context>
chip_gen: v5e
topology: v5e:2x2
jax: 0.10.0
libtpu: 0.0.40
codegen_flags: <defaults>
</compile_context>

<pallas_src>
import functools

import jax
import jax.numpy as jnp
from jax import lax
from jax.experimental import pallas as pl
from jax.experimental.pallas import tpu as pltpu


def _conv_bn_lrelu_kernel(x_ref, w_ref, t_ref, o_ref, xp_ref, *,
                          H, W, Cin, Cout, negative_slope):
    # x_ref : (H, W, Cin)      one image, channels-last
    # w_ref : (9, Cin, Cout)   BN-scale-folded conv weights, tap-major
    # t_ref : (1, Cout)        folded conv-bias + BN shift
    # o_ref : (H, W, Cout)
    # xp_ref: (H+2, W+2, Cin)  VMEM scratch used to build the zero halo in-kernel

    # Build the padded tile in VMEM (no extra HBM pad pass).
    xp_ref[...] = jnp.zeros_like(xp_ref)
    xp_ref[1:H + 1, 1:W + 1, :] = x_ref[...]
    xp = xp_ref[...]
    w = w_ref[...]                                   # (9, Cin, Cout)

    # 3x3 dense conv as 9 shifted-slice matmuls on the MXU (cross-correlation,
    # matching PyTorch Conv2d).
    acc = jnp.zeros((H * W, Cout), jnp.float32)
    for dh in range(3):
        for dw in range(3):
            patch = xp[dh:dh + H, dw:dw + W, :].reshape(H * W, Cin)
            acc = acc + jnp.dot(
                patch, w[dh * 3 + dw],
                preferred_element_type=jnp.float32,
                precision=lax.Precision.HIGHEST)

    # Fused (conv bias + BatchNorm) shift, then LeakyReLU(0.2).
    y = acc + t_ref[...]
    y = jnp.maximum(y, negative_slope * y)           # slope in (0, 1)
    o_ref[...] = y.reshape(H, W, Cout).astype(o_ref.dtype)


def conv_bn_leaky_relu(x, w, b, gamma, beta, running_mean, running_var,
                       *, eps=1e-5, negative_slope=0.2):
    """Forward of ConvBnLeakyRelu2d (eval-mode BN).

    x: (N, Cin, H, W) f32, w: (Cout, Cin, 3, 3) (PyTorch OIHW), b/gamma/beta/
    running_mean/running_var: (Cout,).  Returns (N, Cout, H, W) f32.
    """
    N, Cin, H, W = x.shape
    Cout = w.shape[0]

    # --- host-side parameter folding (O(params), not activation traffic) ---
    scale = gamma * lax.rsqrt(running_var + eps)                 # (Cout,)
    shift = (b - running_mean) * scale + beta                    # (Cout,)
    w_hwio = jnp.transpose(w, (2, 3, 1, 0))                      # (3,3,Cin,Cout)
    w_folded = (w_hwio * scale[None, None, None, :]).reshape(9, Cin, Cout)
    shift2d = shift.reshape(1, Cout).astype(jnp.float32)

    # Channels-last for lane-dense, MXU-friendly in-kernel layout.
    x_nhwc = jnp.transpose(x, (0, 2, 3, 1))                      # (N, H, W, Cin)

    kernel = functools.partial(
        _conv_bn_lrelu_kernel, H=H, W=W, Cin=Cin, Cout=Cout,
        negative_slope=negative_slope)

    out_nhwc = pl.pallas_call(
        kernel,
        out_shape=jax.ShapeDtypeStruct((N, H, W, Cout), x.dtype),
        grid=(N,),
        in_specs=[
            pl.BlockSpec((None, H, W, Cin), lambda n: (n, 0, 0, 0)),
            pl.BlockSpec((9, Cin, Cout), lambda n: (0, 0, 0)),
            pl.BlockSpec((1, Cout), lambda n: (0, 0)),
        ],
        out_specs=pl.BlockSpec((None, H, W, Cout), lambda n: (n, 0, 0, 0)),
        scratch_shapes=[pltpu.VMEM((H + 2, W + 2, Cin), jnp.float32)],
        compiler_params=pltpu.CompilerParams(
            dimension_semantics=("parallel",)),
    )(x_nhwc, w_folded, shift2d)

    return jnp.transpose(out_nhwc, (0, 3, 1, 2))                 # back to NCHW


def _conv_bn_leaky_relu_ref(x, w, b, gamma, beta, running_mean, running_var,
                            *, eps=1e-5, negative_slope=0.2):
    """Pure-JAX reference matching PyTorch Conv2d + BatchNorm2d(eval) + LeakyReLU."""
    dn = lax.conv_dimension_numbers(x.shape, w.shape, ("NCHW", "OIHW", "NCHW"))
    y = lax.conv_general_dilated(
        x, w, window_strides=(1, 1), padding=((1, 1), (1, 1)),
        dimension_numbers=dn, precision=lax.Precision.HIGHEST)
    y = y + b[None, :, None, None]
    inv = (gamma * lax.rsqrt(running_var + eps))[None, :, None, None]
    y = (y - running_mean[None, :, None, None]) * inv + beta[None, :, None, None]
    return jnp.where(y >= 0, y, negative_slope * y)


if __name__ == "__main__":
    key = jax.random.PRNGKey(0)
    k1, k2, k3, k4, k5, k6, k7 = jax.random.split(key, 7)

    N, Cin, Cout, H, W = 2, 4, 8, 16, 16
    x = jax.random.normal(k1, (N, Cin, H, W), dtype=jnp.float32)
    w = jax.random.normal(k2, (Cout, Cin, 3, 3), jnp.float32) * (1.0 / (Cin * 9) ** 0.5)
    b = jax.random.normal(k3, (Cout,), jnp.float32) * 0.1
    gamma = 1.0 + 0.1 * jax.random.normal(k4, (Cout,), jnp.float32)
    beta = 0.1 * jax.random.normal(k5, (Cout,), jnp.float32)
    running_mean = 0.1 * jax.random.normal(k6, (Cout,), jnp.float32)
    running_var = jax.random.uniform(k7, (Cout,), jnp.float32, minval=0.5, maxval=1.5)

    out = jax.block_until_ready(
        conv_bn_leaky_relu(x, w, b, gamma, beta, running_mean, running_var))
    ref = jax.block_until_ready(
        _conv_bn_leaky_relu_ref(x, w, b, gamma, beta, running_mean, running_var))

    assert out.shape == (N, Cout, H, W)
    assert jnp.allclose(out, ref, atol=2e-4, rtol=2e-4), "mismatch vs reference"
    print("KERNEL_OK")
</pallas_src>

<mosaic_0001>
module attributes {stable_mosaic.version = 11 : i64} {
  func.func @_conv_bn_lrelu_kernel(%arg0: i32, %arg1: memref<1x16x16x4xf32, #tpu.memory_space<vmem>>, %arg2: memref<9x4x8xf32, #tpu.memory_space<vmem>>, %arg3: memref<1x8xf32, #tpu.memory_space<vmem>>, %arg4: memref<1x16x16x8xf32, #tpu.memory_space<vmem>>, %arg5: memref<18x18x4xf32, #tpu.memory_space<vmem>>) attributes {dimension_semantics = [#tpu.dimension_semantics<parallel>], iteration_bounds = array<i64: 2>, scalar_prefetch = 0 : i64, scratch_operands = 1 : i64, tpu.core_type = #tpu.core_type<tc>, window_params = [{transform_indices = @transform_0, window_bounds = array<i64: 1, 16, 16, 4>}, {pipeline_mode = #tpu.pipeline_mode<synchronous>, transform_indices = @transform_1, window_bounds = array<i64: 9, 4, 8>}, {pipeline_mode = #tpu.pipeline_mode<synchronous>, transform_indices = @transform_2, window_bounds = array<i64: 1, 8>}, {transform_indices = @transform_3, window_bounds = array<i64: 1, 16, 16, 8>}]} {
    %cst = arith.constant 0.000000e+00 : f32
    %0 = vector.broadcast %cst : f32 to vector<18x18x4xf32>
    %c0 = arith.constant 0 : index
    %c0_0 = arith.constant 0 : index
    %c0_1 = arith.constant 0 : index
    %1 = vector.load %arg5[%c0, %c0_0, %c0_1] : memref<18x18x4xf32, #tpu.memory_space<vmem>>, vector<18x18x4xf32>
    tpu.vector_store %arg5[%c0, %c0_0, %c0_1], %0 {strides = array<i32>} : memref<18x18x4xf32, #tpu.memory_space<vmem>>, vector<18x18x4xf32>,
    %c0_2 = arith.constant 0 : index
    %c0_3 = arith.constant 0 : index
    %c0_4 = arith.constant 0 : index
    %c0_5 = arith.constant 0 : index
    %2 = vector.load %arg1[%c0_2, %c0_3, %c0_4, %c0_5] : memref<1x16x16x4xf32, #tpu.memory_space<vmem>>, vector<1x16x16x4xf32>
    %3 = vector.shape_cast %2 : vector<1x16x16x4xf32> to vector<16x16x4xf32>
    %c1 = arith.constant 1 : index
    %c1_6 = arith.constant 1 : index
    %c0_7 = arith.constant 0 : index
    %4 = vector.load %arg5[%c1, %c1_6, %c0_7] : memref<18x18x4xf32, #tpu.memory_space<vmem>>, vector<16x16x4xf32>
    tpu.vector_store %arg5[%c1, %c1_6, %c0_7], %3 {strides = array<i32>} : memref<18x18x4xf32, #tpu.memory_space<vmem>>, vector<16x16x4xf32>,
    %c0_8 = arith.constant 0 : index
    %c0_9 = arith.constant 0 : index
    %c0_10 = arith.constant 0 : index
    %5 = vector.load %arg5[%c0_8, %c0_9, %c0_10] : memref<18x18x4xf32, #tpu.memory_space<vmem>>, vector<18x18x4xf32>
    %c0_11 = arith.constant 0 : index
    %c0_12 = arith.constant 0 : index
    %c0_13 = arith.constant 0 : index
    %6 = vector.load %arg2[%c0_11, %c0_12, %c0_13] : memref<9x4x8xf32, #tpu.memory_space<vmem>>, vector<9x4x8xf32>
    %cst_14 = arith.constant 0.000000e+00 : f32
    %7 = vector.broadcast %cst_14 : f32 to vector<256x8xf32>
    %8 = vector.extract_strided_slice %5 {offsets = [0, 0, 0], sizes = [16, 16, 4], strides = [1, 1, 1]} : vector<18x18x4xf32> to vector<16x16x4xf32>
    %9 = vector.shape_cast %8 : vector<16x16x4xf32> to vector<256x4xf32>
    %10 = vector.extract_strided_slice %6 {offsets = [0, 0, 0], sizes = [1, 4, 8], strides = [1, 1, 1]} : vector<9x4x8xf32> to vector<1x4x8xf32>
    %11 = vector.shape_cast %10 : vector<1x4x8xf32> to vector<4x8xf32>
    %cst_15 = arith.constant dense<0.000000e+00> : vector<256x8xf32>
    %12 = tpu.matmul %9, %11, %cst_15 {dimension_numbers = #tpu.dot_dimension_numbers<[1], [0], [0], [1], [0, 0, 1, 1], [], []>, precision = #tpu.contract_precision<fp32>} : vector<256x4xf32>, vector<4x8xf32>, vector<256x8xf32> -> vector<256x8xf32>
    %13 = arith.addf %7, %12 : vector<256x8xf32>
    %14 = vector.extract_strided_slice %5 {offsets = [0, 1, 0], sizes = [16, 16, 4], strides = [1, 1, 1]} : vector<18x18x4xf32> to vector<16x16x4xf32>
    %15 = vector.shape_cast %14 : vector<16x16x4xf32> to vector<256x4xf32>
    %16 = vector.extract_strided_slice %6 {offsets = [1, 0, 0], sizes = [1, 4, 8], strides = [1, 1, 1]} : vector<9x4x8xf32> to vector<1x4x8xf32>
    %17 = vector.shape_cast %16 : vector<1x4x8xf32> to vector<4x8xf32>
    %cst_16 = arith.constant dense<0.000000e+00> : vector<256x8xf32>
    %18 = tpu.matmul %15, %17, %cst_16 {dimension_numbers = #tpu.dot_dimension_numbers<[1], [0], [0], [1], [0, 0, 1, 1], [], []>, precision = #tpu.contract_precision<fp32>} : vector<256x4xf32>, vector<4x8xf32>, vector<256x8xf32> -> vector<256x8xf32>
    %19 = arith.addf %13, %18 : vector<256x8xf32>
    %20 = vector.extract_strided_slice %5 {offsets = [0, 2, 0], sizes = [16, 16, 4], strides = [1, 1, 1]} : vector<18x18x4xf32> to vector<16x16x4xf32>
    %21 = vector.shape_cast %20 : vector<16x16x4xf32> to vector<256x4xf32>
    %22 = vector.extract_strided_slice %6 {offsets = [2, 0, 0], sizes = [1, 4, 8], strides = [1, 1, 1]} : vector<9x4x8xf32> to vector<1x4x8xf32>
    %23 = vector.shape_cast %22 : vector<1x4x8xf32> to vector<4x8xf32>
    %cst_17 = arith.constant dense<0.000000e+00> : vector<256x8xf32>
    %24 = tpu.matmul %21, %23, %cst_17 {dimension_numbers = #tpu.dot_dimension_numbers<[1], [0], [0], [1], [0, 0, 1, 1], [], []>, precision = #tpu.contract_precision<fp32>} : vector<256x4xf32>, vector<4x8xf32>, vector<256x8xf32> -> vector<256x8xf32>
    %25 = arith.addf %19, %24 : vector<256x8xf32>
    %26 = vector.extract_strided_slice %5 {offsets = [1, 0, 0], sizes = [16, 16, 4], strides = [1, 1, 1]} : vector<18x18x4xf32> to vector<16x16x4xf32>
    %27 = vector.shape_cast %26 : vector<16x16x4xf32> to vector<256x4xf32>
    %28 = vector.extract_strided_slice %6 {offsets = [3, 0, 0], sizes = [1, 4, 8], strides = [1, 1, 1]} : vector<9x4x8xf32> to vector<1x4x8xf32>
    %29 = vector.shape_cast %28 : vector<1x4x8xf32> to vector<4x8xf32>
    %cst_18 = arith.constant dense<0.000000e+00> : vector<256x8xf32>
    %30 = tpu.matmul %27, %29, %cst_18 {dimension_numbers = #tpu.dot_dimension_numbers<[1], [0], [0], [1], [0, 0, 1, 1], [], []>, precision = #tpu.contract_precision<fp32>} : vector<256x4xf32>, vector<4x8xf32>, vector<256x8xf32> -> vector<256x8xf32>
    %31 = arith.addf %25, %30 : vector<256x8xf32>
    %32 = vector.extract_strided_slice %5 {offsets = [1, 1, 0], sizes = [16, 16, 4], strides = [1, 1, 1]} : vector<18x18x4xf32> to vector<16x16x4xf32>
    %33 = vector.shape_cast %32 : vector<16x16x4xf32> to vector<256x4xf32>
    %34 = vector.extract_strided_slice %6 {offsets = [4, 0, 0], sizes = [1, 4, 8], strides = [1, 1, 1]} : vector<9x4x8xf32> to vector<1x4x8xf32>
    %35 = vector.shape_cast %34 : vector<1x4x8xf32> to vector<4x8xf32>
    %cst_19 = arith.constant dense<0.000000e+00> : vector<256x8xf32>
    %36 = tpu.matmul %33, %35, %cst_19 {dimension_numbers = #tpu.dot_dimension_numbers<[1], [0], [0], [1], [0, 0, 1, 1], [], []>, precision = #tpu.contract_precision<fp32>} : vector<256x4xf32>, vector<4x8xf32>, vector<256x8xf32> -> vector<256x8xf32>
    %37 = arith.addf %31, %36 : vector<256x8xf32>
    %38 = vector.extract_strided_slice %5 {offsets = [1, 2, 0], sizes = [16, 16, 4], strides = [1, 1, 1]} : vector<18x18x4xf32> to vector<16x16x4xf32>
    %39 = vector.shape_cast %38 : vector<16x16x4xf32> to vector<256x4xf32>
    %40 = vector.extract_strided_slice %6 {offsets = [5, 0, 0], sizes = [1, 4, 8], strides = [1, 1, 1]} : vector<9x4x8xf32> to vector<1x4x8xf32>
    %41 = vector.shape_cast %40 : vector<1x4x8xf32> to vector<4x8xf32>
    %cst_20 = arith.constant dense<0.000000e+00> : vector<256x8xf32>
    %42 = tpu.matmul %39, %41, %cst_20 {dimension_numbers = #tpu.dot_dimension_numbers<[1], [0], [0], [1], [0, 0, 1, 1], [], []>, precision = #tpu.contract_precision<fp32>} : vector<256x4xf32>, vector<4x8xf32>, vector<256x8xf32> -> vector<256x8xf32>
    %43 = arith.addf %37, %42 : vector<256x8xf32>
    %44 = vector.extract_strided_slice %5 {offsets = [2, 0, 0], sizes = [16, 16, 4], strides = [1, 1, 1]} : vector<18x18x4xf32> to vector<16x16x4xf32>
    %45 = vector.shape_cast %44 : vector<16x16x4xf32> to vector<256x4xf32>
    %46 = vector.extract_strided_slice %6 {offsets = [6, 0, 0], sizes = [1, 4, 8], strides = [1, 1, 1]} : vector<9x4x8xf32> to vector<1x4x8xf32>
    %47 = vector.shape_cast %46 : vector<1x4x8xf32> to vector<4x8xf32>
    %cst_21 = arith.constant dense<0.000000e+00> : vector<256x8xf32>
    %48 = tpu.matmul %45, %47, %cst_21 {dimension_numbers = #tpu.dot_dimension_numbers<[1], [0], [0], [1], [0, 0, 1, 1], [], []>, precision = #tpu.contract_precision<fp32>} : vector<256x4xf32>, vector<4x8xf32>, vector<256x8xf32> -> vector<256x8xf32>
    %49 = arith.addf %43, %48 : vector<256x8xf32>
    %50 = vector.extract_strided_slice %5 {offsets = [2, 1, 0], sizes = [16, 16, 4], strides = [1, 1, 1]} : vector<18x18x4xf32> to vector<16x16x4xf32>
    %51 = vector.shape_cast %50 : vector<16x16x4xf32> to vector<256x4xf32>
    %52 = vector.extract_strided_slice %6 {offsets = [7, 0, 0], sizes = [1, 4, 8], strides = [1, 1, 1]} : vector<9x4x8xf32> to vector<1x4x8xf32>
    %53 = vector.shape_cast %52 : vector<1x4x8xf32> to vector<4x8xf32>
    %cst_22 = arith.constant dense<0.000000e+00> : vector<256x8xf32>
    %54 = tpu.matmul %51, %53, %cst_22 {dimension_numbers = #tpu.dot_dimension_numbers<[1], [0], [0], [1], [0, 0, 1, 1], [], []>, precision = #tpu.contract_precision<fp32>} : vector<256x4xf32>, vector<4x8xf32>, vector<256x8xf32> -> vector<256x8xf32>
    %55 = arith.addf %49, %54 : vector<256x8xf32>
    %56 = vector.extract_strided_slice %5 {offsets = [2, 2, 0], sizes = [16, 16, 4], strides = [1, 1, 1]} : vector<18x18x4xf32> to vector<16x16x4xf32>
    %57 = vector.shape_cast %56 : vector<16x16x4xf32> to vector<256x4xf32>
    %58 = vector.extract_strided_slice %6 {offsets = [8, 0, 0], sizes = [1, 4, 8], strides = [1, 1, 1]} : vector<9x4x8xf32> to vector<1x4x8xf32>
    %59 = vector.shape_cast %58 : vector<1x4x8xf32> to vector<4x8xf32>
    %cst_23 = arith.constant dense<0.000000e+00> : vector<256x8xf32>
    %60 = tpu.matmul %57, %59, %cst_23 {dimension_numbers = #tpu.dot_dimension_numbers<[1], [0], [0], [1], [0, 0, 1, 1], [], []>, precision = #tpu.contract_precision<fp32>} : vector<256x4xf32>, vector<4x8xf32>, vector<256x8xf32> -> vector<256x8xf32>
    %61 = arith.addf %55, %60 : vector<256x8xf32>
    %c0_24 = arith.constant 0 : index
    %c0_25 = arith.constant 0 : index
    %62 = vector.load %arg3[%c0_24, %c0_25] : memref<1x8xf32, #tpu.memory_space<vmem>>, vector<1x8xf32>
    %63 = vector.broadcast %62 : vector<1x8xf32> to vector<256x8xf32>
    %64 = arith.addf %61, %63 : vector<256x8xf32>
    %cst_26 = arith.constant 2.000000e-01 : f32
    %65 = vector.broadcast %cst_26 : f32 to vector<256x8xf32>
    %66 = arith.mulf %65, %64 : vector<256x8xf32>
    %67 = arith.maximumf %64, %66 : vector<256x8xf32>
    %68 = vector.shape_cast %67 : vector<256x8xf32> to vector<16x16x8xf32>
    %c0_27 = arith.constant 0 : index
    %c0_28 = arith.constant 0 : index
    %c0_29 = arith.constant 0 : index
    %c0_30 = arith.constant 0 : index
    %69 = vector.load %arg4[%c0_27, %c0_28, %c0_29, %c0_30] : memref<1x16x16x8xf32, #tpu.memory_space<vmem>>, vector<1x16x16x8xf32>
    %70 = vector.shape_cast %69 : vector<1x16x16x8xf32> to vector<16x16x8xf32>
    %71 = vector.shape_cast %68 : vector<16x16x8xf32> to vector<1x16x16x8xf32>
    tpu.vector_store %arg4[%c0_27, %c0_28, %c0_29, %c0_30], %71 {strides = array<i32>} : memref<1x16x16x8xf32, #tpu.memory_space<vmem>>, vector<1x16x16x8xf32>,
    return
  }
  func.func @transform_0(%arg0: i32) -> (i32, i32, i32, i32) {
    %c0_i32 = arith.constant 0 : i32
    %c0_i32_0 = arith.constant 0 : i32
    %c0_i32_1 = arith.constant 0 : i32
    %c0_i32_2 = arith.constant 0 : i32
    return %arg0, %c0_i32, %c0_i32_0, %c0_i32_1 : i32, i32, i32, i32
  }
  func.func @transform_1(%arg0: i32) -> (i32, i32, i32) {
    %c0_i32 = arith.constant 0 : i32
    %c0_i32_0 = arith.constant 0 : i32
    %c0_i32_1 = arith.constant 0 : i32
    %c0_i32_2 = arith.constant 0 : i32
    return %c0_i32, %c0_i32_0, %c0_i32_1 : i32, i32, i32
  }
  func.func @transform_2(%arg0: i32) -> (i32, i32) {
    %c0_i32 = arith.constant 0 : i32
    %c0_i32_0 = arith.constant 0 : i32
    %c0_i32_1 = arith.constant 0 : i32
    return %c0_i32, %c0_i32_0 : i32, i32
  }
  func.func @transform_3(%arg0: i32) -> (i32, i32, i32, i32) {
    %c0_i32 = arith.constant 0 : i32
    %c0_i32_0 = arith.constant 0 : i32
    %c0_i32_1 = arith.constant 0 : i32
    %c0_i32_2 = arith.constant 0 : i32
    return %arg0, %c0_i32, %c0_i32_0, %c0_i32_1 : i32, i32, i32, i32
  }
}

</mosaic_0001>

<llo_original>
// kernel: tpu_custom_call.1
$region0: #{tpu_custom_call.1}
  #allocation0 [shape = 'u32[]', space=smem, size = 0x4, offset = 0x4, fixed_abs, tag = 'smem constant byte address 0x4 - core index']
  #allocation1 [shape = 'u32[72,128]{1,0:T(1,128)}', space=vmem, size = 0x9000, scoped, tag = 'internal scratch']
  #allocation2 [shape = 'f32[18,18,4]{2,1,0:T(8,128)}', space=vmem, size = 0x36000, scoped, tag = 'scratch operand']
  %s0 = inlined_call_operand.vmem [shape: f32[2,16,16,4], index: 0, kind: input, shape index: {}]
  %s1 = inlined_call_operand.vmem [shape: f32[9,4,8], index: 1, kind: input, shape index: {}]
  %s2 = inlined_call_operand.vmem [shape: f32[1,8], index: 2, kind: input, shape index: {}]
  %s3 = inlined_call_operand.vmem [shape: f32[2,16,16,8], index: 3, kind: output, shape index: {}]
  %s4 = sld [smem:[#allocation0]]
  $region45: #{tpu_custom_call.1} parent=0
    _
  %s6 = ssub.s32 1, %s4
  %s7 = scalar_select 0, %s6, %s4
  loop: start=0, step=1, limit=4
  $region2: #{tpu_custom_call.1} parent=0 // loop_pre_header
    _
  $region3: #{tpu_custom_call.1} parent=0 // loop_header
    %s9 = sphi 0, %s13
    %p10 = scmp.ge.s32.totalorder %s9, 4
    %s19 = sphi 0, %s21
    %s22 = sphi 0, %s19
    %s23 = sphi 0, %s22
    %s39 = sphi 0, %s23
    %s43 = sphi 0, %s43
    %s45 = sphi 0, %s43
    %s46 = sphi 0, %s45
    %s60 = sphi 0, %s46
    %s64 = sphi 0, %s64
    %s66 = sphi 0, %s64
    %s67 = sphi 0, %s66
    %s81 = sphi 0, %s67
    %s87 = sphi 0, %s89
    %s90 = sphi 0, %s87
    %s91 = sphi 0, %s90
    %s107 = sphi 0, %s91
  $region4: #{tpu_custom_call.1} parent=0 // loop_header_branch
    %12 = sbr.rel (%p10) target = $region8
  $region5: #{tpu_custom_call.1} parent=0 // loop_body
    %s14 = ssub.s32 %s9, 1
    %s15 = ssub.s32 %s9, 2
    %s16 = sadd.s32 %s9, 1
    %s17 = ssub.s32 %s9, %s16
    %p18 = scmp.eq.s32.totalorder %s17, 0
    %s20 = sadd.s32 %s19, 1
    %s21 = scalar_select %p18, %s19, %s20
    %p24 = pneg %p18
    %p25 = scmp.eq.s32.totalorder %s9, 1
    %p26 = por %p24, %p25
    %p27 = scmp.ne.s32.totalorder %s19, %s22
    %p28 = scmp.eq.s32.totalorder %s9, 0
    %p29 = por %p27, %p28
    %p30 = scmp.ne.s32.totalorder %s19, %s22
    %p31 = scmp.eq.s32.totalorder %s14, 1
    %p32 = por %p30, %p31
    %p33 = scmp.ne.s32.totalorder %s22, %s23
    %p34 = scmp.eq.s32.totalorder %s14, 0
    %p35 = por %p33, %p34
    %p36 = scmp.ne.s32.totalorder %s22, %s23
    %p37 = scmp.eq.s32.totalorder %s15, 1
    %p38 = por %p36, %p37
    %p40 = scmp.ne.s32.totalorder %s23, %s39
    %p41 = scmp.eq.s32.totalorder %s15, 0
    %p42 = por %p40, %p41
    %s44 = sadd.s32 %s43, 1
    %p47 = scmp.eq.s32.totalorder %s9, 1
    %p48 = scmp.ne.s32.totalorder %s43, %s45
    %p49 = scmp.eq.s32.totalorder %s9, 0
    %p50 = por %p48, %p49
    %p51 = scmp.ne.s32.totalorder %s43, %s45
    %p52 = scmp.eq.s32.totalorder %s14, 1
    %p53 = por %p51, %p52
    %p54 = scmp.ne.s32.totalorder %s45, %s46
    %p55 = scmp.eq.s32.totalorder %s14, 0
    %p56 = por %p54, %p55
    %p57 = scmp.ne.s32.totalorder %s45, %s46
    %p58 = scmp.eq.s32.totalorder %s15, 1
    %p59 = por %p57, %p58
    %p61 = scmp.ne.s32.totalorder %s46, %s60
    %p62 = scmp.eq.s32.totalorder %s15, 0
    %p63 = por %p61, %p62
    %s65 = sadd.s32 %s64, 1
    %p68 = scmp.eq.s32.totalorder %s9, 1
    %p69 = scmp.ne.s32.totalorder %s64, %s66
    %p70 = scmp.eq.s32.totalorder %s9, 0
    %p71 = por %p69, %p70
    %p72 = scmp.ne.s32.totalorder %s64, %s66
    %p73 = scmp.eq.s32.totalorder %s14, 1
    %p74 = por %p72, %p73
    %p75 = scmp.ne.s32.totalorder %s66, %s67
    %p76 = scmp.eq.s32.totalorder %s14, 0
    %p77 = por %p75, %p76
    %p78 = scmp.ne.s32.totalorder %s66, %s67
    %p79 = scmp.eq.s32.totalorder %s15, 1
    %p80 = por %p78, %p79
    %p82 = scmp.ne.s32.totalorder %s67, %s81
    %p83 = scmp.eq.s32.totalorder %s15, 0
    %p84 = por %p82, %p83
    %s85 = ssub.s32 %s9, %s16
    %p86 = scmp.eq.s32.totalorder %s85, 0
    %s88 = sadd.s32 %s87, 1
    %s89 = scalar_select %p86, %s87, %s88
    %p92 = pneg %p86
    %p93 = scmp.eq.s32.totalorder %s9, 1
    %p94 = por %p92, %p93
    %p95 = scmp.ne.s32.totalorder %s87, %s90
    %p96 = scmp.eq.s32.totalorder %s9, 0
    %p97 = por %p95, %p96
    %p98 = scmp.ne.s32.totalorder %s87, %s90
    %p99 = scmp.eq.s32.totalorder %s14, 1
    %p100 = por %p98, %p99
    %p101 = scmp.ne.s32.totalorder %s90, %s91
    %p102 = scmp.eq.s32.totalorder %s14, 0
    %p103 = por %p101, %p102
    %p104 = scmp.ne.s32.totalorder %s90, %s91
    %p105 = scmp.eq.s32.totalorder %s15, 1
    %p106 = por %p104, %p105
    %p108 = scmp.ne.s32.totalorder %s91, %s107
    %p109 = scmp.eq.s32.totalorder %s15, 0
    %p110 = por %p108, %p109
    %p111 = scmp.le.s32.totalorder 1, %s9
    %p112 = scmp.lt.s32.totalorder %s9, 3
    %p113 = pnand %p111, %p112
    %p114 = pneg %p113
    // Predicated region
    $region9: #{tpu_custom_call.1} parent=5 // pred_check
      _
    $region10: #{tpu_custom_call.1} parent=5 // pred_check_branch
      %116 = sbr.rel (%p113) target = $region12
    $region11: #{tpu_custom_call.1} parent=5 // pred_region
      %s117 = ssub.s32 %s9, 1
      // Predicated region
      $region13: #{tpu_custom_call.1} parent=11 // pred_check
        %p118 = pneg %p56
      $region14: #{tpu_custom_call.1} parent=11 // pred_check_branch
        %120 = sbr.rel (%p118) target = $region16
      $region15: #{tpu_custom_call.1} parent=11 // pred_region
        _
      $region16: #{tpu_custom_call.1} parent=11 // pred_fallthru
        _
      // Predicated region
      $region17: #{tpu_custom_call.1} parent=11 // pred_check
        %p121 = pneg %p77
      $region18: #{tpu_custom_call.1} parent=11 // pred_check_branch
        %123 = sbr.rel (%p121) target = $region20
      $region19: #{tpu_custom_call.1} parent=11 // pred_region
        _
      $region20: #{tpu_custom_call.1} parent=11 // pred_fallthru
        _
    $region12: #{tpu_custom_call.1} parent=5 // pred_fallthru
      _
    %p124 = scmp.lt.s32.totalorder %s9, 2
    // Predicated region
    $region21: #{tpu_custom_call.1} parent=5 // pred_check
      %p125 = pneg %p124
    $region22: #{tpu_custom_call.1} parent=5 // pred_check_branch
      %127 = sbr.rel (%p125) target = $region24
    $region23: #{tpu_custom_call.1} parent=5 // pred_region
      // Predicated region
      $region25: #{tpu_custom_call.1} parent=23 // pred_check
        %p128 = pneg %p29
      $region26: #{tpu_custom_call.1} parent=23 // pred_check_branch
        %130 = sbr.rel (%p128) target = $region28
      $region27: #{tpu_custom_call.1} parent=23 // pred_region
        %p131 = scmp.lt.s32.totalorder %s9, 1
        %s132 = scalar_select %p131, %s9, 1
        %s133 = smul.addr %s132, 32
        %s134 = smul.addr %s133, 8
        %s135 = scalar_lea.vmem %s0, %s134
      $region28: #{tpu_custom_call.1} parent=23 // pred_fallthru
        _
    $region24: #{tpu_custom_call.1} parent=5 // pred_fallthru
      _
    %p136 = scmp.le.s32.totalorder 1, %s9
    %p137 = scmp.lt.s32.totalorder %s9, 3
    %p138 = pnand %p136, %p137
    %p139 = pneg %p138
    // Predicated region
    $region29: #{tpu_custom_call.1} parent=5 // pred_check
      _
    $region30: #{tpu_custom_call.1} parent=5 // pred_check_branch
      %141 = sbr.rel (%p138) target = $region32
    $region31: #{tpu_custom_call.1} parent=5 // pred_region
      %s142 = ssub.s32 %s9, 1
      %p143 = scmp.lt.s32.totalorder %s14, 1
      %s144 = scalar_select %p143, %s14, 1
      %s145 = smul.addr %s144, 32
      %s146 = smul.addr %s145, 8
      %s147 = scalar_lea.vmem %s0, %s146
      %p148 = pneg %p35
      %p149 = pneg %p32
      %p150 = pneg %p56
      %p151 = pneg %p53
      %p152 = pneg %p77
      %p153 = pneg %p74
      %p154 = pneg %p103
      %p155 = pneg %p100
      %p156 = scmp.lt.s32.totalorder %s14, 1
      %s157 = scalar_select %p156, %s14, 1
      %s158 = smul.addr %s157, 32
      %s159 = smul.addr %s158, 8
      %s160 = scalar_lea.vmem %s3, %s159
      %p161 = scmp.lt.s32.totalorder %s14, 1
      %s162 = scalar_select %p161, %s14, 1
      %s163 = smul.addr %s162, 32
      %s164 = smul.addr %s163, 8
      %s165 = scalar_lea.vmem %s0, %s164
      %p166 = scmp.lt.s32.totalorder %s14, 1
      %s167 = scalar_select %p166, %s14, 1
      %s168 = smul.addr %s167, 32
      %s169 = smul.addr %s168, 8
      %s170 = scalar_lea.vmem %s3, %s169
      %vm171 = vcmask 31744
      %172 = vst.msk [vmem:[#allocation2] sm:$0xff] %vm171, 0.0
      %173 = vst.msk [vmem:[#allocation2 + $0x8] sm:$0xff] %vm171, 0.0
      %vm174 = vcmask 25600
      %175 = vst.msk [vmem:[#allocation2 + $0x10] sm:$0x3] %vm174, 0.0
      %176 = vst.msk [vmem:[#allocation2 + $0x18] sm:$0xff] %vm171, 0.0
      %177 = vst.msk [vmem:[#allocation2 + $0x20] sm:$0xff] %vm171, 0.0
      %178 = vst.msk [vmem:[#allocation2 + $0x28] sm:$0x3] %vm174, 0.0
      %179 = vst.msk [vmem:[#allocation2 + $0x30] sm:$0xff] %vm171, 0.0
      %180 = vst.msk [vmem:[#allocation2 + $0x38] sm:$0xff] %vm171, 0.0
      %181 = vst.msk [vmem:[#allocation2 + $0x40] sm:$0x3] %vm174, 0.0
      %182 = vst.msk [vmem:[#allocation2 + $0x48] sm:$0xff] %vm171, 0.0
      %183 = vst.msk [vmem:[#allocation2 + $0x50] sm:$0xff] %vm171, 0.0
      %184 = vst.msk [vmem:[#allocation2 + $0x58] sm:$0x3] %vm174, 0.0
      %185 = vst.msk [vmem:[#allocation2 + $0x60] sm:$0xff] %vm171, 0.0
      %186 = vst.msk [vmem:[#allocation2 + $0x68] sm:$0xff] %vm171, 0.0
      %187 = vst.msk [vmem:[#allocation2 + $0x70] sm:$0x3] %vm174, 0.0
      %188 = vst.msk [vmem:[#allocation2 + $0x78] sm:$0xff] %vm171, 0.0
      %189 = vst.msk [vmem:[#allocation2 + $0x80] sm:$0xff] %vm171, 0.0
      %190 = vst.msk [vmem:[#allocation2 + $0x88] sm:$0x3] %vm174, 0.0
      %191 = vst.msk [vmem:[#allocation2 + $0x90] sm:$0xff] %vm171, 0.0
      %192 = vst.msk [vmem:[#allocation2 + $0x98] sm:$0xff] %vm171, 0.0
      %193 = vst.msk [vmem:[#allocation2 + $0xa0] sm:$0x3] %vm174, 0.0
      %194 = vst.msk [vmem:[#allocation2 + $0xa8] sm:$0xff] %vm171, 0.0
      %195 = vst.msk [vmem:[#allocation2 + $0xb0] sm:$0xff] %vm171, 0.0
      %196 = vst.msk [vmem:[#allocation2 + $0xb8] sm:$0x3] %vm174, 0.0
      %197 = vst.msk [vmem:[#allocation2 + $0xc0] sm:$0xff] %vm171, 0.0
      %198 = vst.msk [vmem:[#allocation2 + $0xc8] sm:$0xff] %vm171, 0.0
      %199 = vst.msk [vmem:[#allocation2 + $0xd0] sm:$0x3] %vm174, 0.0
      %200 = vst.msk [vmem:[#allocation2 + $0xd8] sm:$0xff] %vm171, 0.0
      %201 = vst.msk [vmem:[#allocation2 + $0xe0] sm:$0xff] %vm171, 0.0
      %202 = vst.msk [vmem:[#allocation2 + $0xe8] sm:$0x3] %vm174, 0.0
      %203 = vst.msk [vmem:[#allocation2 + $0xf0] sm:$0xff] %vm171, 0.0
      %204 = vst.msk [vmem:[#allocation2 + $0xf8] sm:$0xff] %vm171, 0.0
      %205 = vst.msk [vmem:[#allocation2 + $0x100] sm:$0x3] %vm174, 0.0
      %206 = vst.msk [vmem:[#allocation2 + $0x108] sm:$0xff] %vm171, 0.0
      %207 = vst.msk [vmem:[#allocation2 + $0x110] sm:$0xff] %vm171, 0.0
      %208 = vst.msk [vmem:[#allocation2 + $0x118] sm:$0x3] %vm174, 0.0
      %209 = vst.msk [vmem:[#allocation2 + $0x120] sm:$0xff] %vm171, 0.0
      %210 = vst.msk [vmem:[#allocation2 + $0x128] sm:$0xff] %vm171, 0.0
      %211 = vst.msk [vmem:[#allocation2 + $0x130] sm:$0x3] %vm174, 0.0
      %212 = vst.msk [vmem:[#allocation2 + $0x138] sm:$0xff] %vm171, 0.0
      %213 = vst.msk [vmem:[#allocation2 + $0x140] sm:$0xff] %vm171, 0.0
      %214 = vst.msk [vmem:[#allocation2 + $0x148] sm:$0x3] %vm174, 0.0
      %215 = vst.msk [vmem:[#allocation2 + $0x150] sm:$0xff] %vm171, 0.0
      %216 = vst.msk [vmem:[#allocation2 + $0x158] sm:$0xff] %vm171, 0.0
      %217 = vst.msk [vmem:[#allocation2 + $0x160] sm:$0x3] %vm174, 0.0
      %218 = vst.msk [vmem:[#allocation2 + $0x168] sm:$0xff] %vm171, 0.0
      %219 = vst.msk [vmem:[#allocation2 + $0x170] sm:$0xff] %vm171, 0.0
      %220 = vst.msk [vmem:[#allocation2 + $0x178] sm:$0x3] %vm174, 0.0
      %221 = vst.msk [vmem:[#allocation2 + $0x180] sm:$0xff] %vm171, 0.0
      %222 = vst.msk [vmem:[#allocation2 + $0x188] sm:$0xff] %vm171, 0.0
      %223 = vst.msk [vmem:[#allocation2 + $0x190] sm:$0x3] %vm174, 0.0
      %224 = vst.msk [vmem:[#allocation2 + $0x198] sm:$0xff] %vm171, 0.0
      %225 = vst.msk [vmem:[#allocation2 + $0x1a0] sm:$0xff] %vm171, 0.0
      %226 = vst.msk [vmem:[#allocation2 + $0x1a8] sm:$0x3] %vm174, 0.0
      %v227 = vld [vmem:[%s165] sm:$0xff]
      %v228 = vld [vmem:[%s165 + $0x8] sm:$0xff]
      %v229 = vld [vmem:[%s165 + $0x10] sm:$0xff]
      %v230 = vld [vmem:[%s165 + $0x18] sm:$0xff]
      %v231 = vld [vmem:[%s165 + $0x20] sm:$0xff]
      %v232 = vld [vmem:[%s165 + $0x28] sm:$0xff]
      %v233 = vld [vmem:[%s165 + $0x30] sm:$0xff]
      %v234 = vld [vmem:[%s165 + $0x38] sm:$0xff]
      %v235 = vld [vmem:[%s165 + $0x40] sm:$0xff]
      %v236 = vld [vmem:[%s165 + $0x48] sm:$0xff]
      %v237 = vld [vmem:[%s165 + $0x50] sm:$0xff]
      %v238 = vld [vmem:[%s165 + $0x58] sm:$0xff]
      %v239 = vld [vmem:[%s165 + $0x60] sm:$0xff]
      %v240 = vld [vmem:[%s165 + $0x68] sm:$0xff]
      %v241 = vld [vmem:[%s165 + $0x70] sm:$0xff]
      %v242 = vld [vmem:[%s165 + $0x78] sm:$0xff]
      %v243 = vld [vmem:[%s165 + $0x80] sm:$0xff]
      %v244 = vld [vmem:[%s165 + $0x88] sm:$0xff]
      %v245 = vld [vmem:[%s165 + $0x90] sm:$0xff]
      %v246 = vld [vmem:[%s165 + $0x98] sm:$0xff]
      %v247 = vld [vmem:[%s165 + $0xa0] sm:$0xff]
      %v248 = vld [vmem:[%s165 + $0xa8] sm:$0xff]
      %v249 = vld [vmem:[%s165 + $0xb0] sm:$0xff]
      %v250 = vld [vmem:[%s165 + $0xb8] sm:$0xff]
      %v251 = vld [vmem:[%s165 + $0xc0] sm:$0xff]
      %v252 = vld [vmem:[%s165 + $0xc8] sm:$0xff]
      %v253 = vld [vmem:[%s165 + $0xd0] sm:$0xff]
      %v254 = vld [vmem:[%s165 + $0xd8] sm:$0xff]
      %v255 = vld [vmem:[%s165 + $0xe0] sm:$0xff]
      %v256 = vld [vmem:[%s165 + $0xe8] sm:$0xff]
      %v257 = vld [vmem:[%s165 + $0xf0] sm:$0xff]
      %v258 = vld [vmem:[%s165 + $0xf8] sm:$0xff]
      %s259 = scalar_lea.vmem [#allocation2], 24
      %260 = vst.msk [vmem:[%s259 + $0x1] sm:$0xff] %vm171, %v227
      %261 = vst.msk [vmem:[%s259 + $0x9] sm:$0xff] %vm171, %v228
      %262 = vst.msk [vmem:[%s259 + $0x19] sm:$0xff] %vm171, %v229
      %263 = vst.msk [vmem:[%s259 + $0x21] sm:$0xff] %vm171, %v230
      %264 = vst.msk [vmem:[%s259 + $0x31] sm:$0xff] %vm171, %v231
      %265 = vst.msk [vmem:[%s259 + $0x39] sm:$0xff] %vm171, %v232
      %266 = vst.msk [vmem:[%s259 + $0x49] sm:$0xff] %vm171, %v233
      %267 = vst.msk [vmem:[%s259 + $0x51] sm:$0xff] %vm171, %v234
      %268 = vst.msk [vmem:[%s259 + $0x61] sm:$0xff] %vm171, %v235
      %269 = vst.msk [vmem:[%s259 + $0x69] sm:$0xff] %vm171, %v236
      %270 = vst.msk [vmem:[%s259 + $0x79] sm:$0xff] %vm171, %v237
      %271 = vst.msk [vmem:[%s259 + $0x81] sm:$0xff] %vm171, %v238
      %272 = vst.msk [vmem:[%s259 + $0x91] sm:$0xff] %vm171, %v239
      %273 = vst.msk [vmem:[%s259 + $0x99] sm:$0xff] %vm171, %v240
      %274 = vst.msk [vmem:[%s259 + $0xa9] sm:$0xff] %vm171, %v241
      %275 = vst.msk [vmem:[%s259 + $0xb1] sm:$0xff] %vm171, %v242
      %276 = vst.msk [vmem:[%s259 + $0xc1] sm:$0xff] %vm171, %v243
      %277 = vst.msk [vmem:[%s259 + $0xc9] sm:$0xff] %vm171, %v244
      %278 = vst.msk [vmem:[%s259 + $0xd9] sm:$0xff] %vm171, %v245
      %279 = vst.msk [vmem:[%s259 + $0xe1] sm:$0xff] %vm171, %v246
      %280 = vst.msk [vmem:[%s259 + $0xf1] sm:$0xff] %vm171, %v247
      %281 = vst.msk [vmem:[%s259 + $0xf9] sm:$0xff] %vm171, %v248
      %282 = vst.msk [vmem:[%s259 + $0x109] sm:$0xff] %vm171, %v249
      %283 = vst.msk [vmem:[%s259 + $0x111] sm:$0xff] %vm171, %v250
      %284 = vst.msk [vmem:[%s259 + $0x121] sm:$0xff] %vm171, %v251
      %285 = vst.msk [vmem:[%s259 + $0x129] sm:$0xff] %vm171, %v252
      %286 = vst.msk [vmem:[%s259 + $0x139] sm:$0xff] %vm171, %v253
      %287 = vst.msk [vmem:[%s259 + $0x141] sm:$0xff] %vm171, %v254
      %288 = vst.msk [vmem:[%s259 + $0x151] sm:$0xff] %vm171, %v255
      %289 = vst.msk [vmem:[%s259 + $0x159] sm:$0xff] %vm171, %v256
      %290 = vst.msk [vmem:[%s259 + $0x169] sm:$0xff] %vm171, %v257
      %291 = vst.msk [vmem:[%s259 + $0x171] sm:$0xff] %vm171, %v258
      %v292 = vld [vmem:[#allocation2] sm:$0xff]
      %v293 = vld [vmem:[#allocation2 + $0x8] sm:$0xff]
      %v294 = vld [vmem:[#allocation2 + $0x10] sm:$0x3]
      %v295 = vld [vmem:[#allocation2 + $0x18] sm:$0xff]
      %v296 = vld [vmem:[#allocation2 + $0x20] sm:$0xff]
      %v297 = vld [vmem:[#allocation2 + $0x28] sm:$0x3]
      %v298 = vld [vmem:[#allocation2 + $0x30] sm:$0xff]
      %v299 = vld [vmem:[#allocation2 + $0x38] sm:$0xff]
      %v300 = vld [vmem:[#allocation2 + $0x40] sm:$0x3]
      %v301 = vld [vmem:[#allocation2 + $0x48] sm:$0xff]
      %v302 = vld [vmem:[#allocation2 + $0x50] sm:$0xff]
      %v303 = vld [vmem:[#allocation2 + $0x58] sm:$0x3]
      %v304 = vld [vmem:[#allocation2 + $0x60] sm:$0xff]
      %v305 = vld [vmem:[#allocation2 + $0x68] sm:$0xff]
      %v306 = vld [vmem:[#allocation2 + $0x70] sm:$0x3]
      %v307 = vld [vmem:[#allocation2 + $0x78] sm:$0xff]
      %v308 = vld [vmem:[#allocation2 + $0x80] sm:$0xff]
      %v309 = vld [vmem:[#allocation2 + $0x88] sm:$0x3]
      %v310 = vld [vmem:[#allocation2 + $0x90] sm:$0xff]
      %v311 = vld [vmem:[#allocation2 + $0x98] sm:$0xff]
      %v312 = vld [vmem:[#allocation2 + $0xa0] sm:$0x3]
      %v313 = vld [vmem:[#allocation2 + $0xa8] sm:$0xff]
      %v314 = vld [vmem:[#allocation2 + $0xb0] sm:$0xff]
      %v315 = vld [vmem:[#allocation2 + $0xb8] sm:$0x3]
      %v316 = vld [vmem:[#allocation2 + $0xc0] sm:$0xff]
      %v317 = vld [vmem:[#allocation2 + $0xc8] sm:$0xff]
      %v318 = vld [vmem:[#allocation2 + $0xd0] sm:$0x3]
      %v319 = vld [vmem:[#allocation2 + $0xd8] sm:$0xff]
      %v320 = vld [vmem:[#allocation2 + $0xe0] sm:$0xff]
      %v321 = vld [vmem:[#allocation2 + $0xe8] sm:$0x3]
      %v322 = vld [vmem:[#allocation2 + $0xf0] sm:$0xff]
      %v323 = vld [vmem:[#allocation2 + $0xf8] sm:$0xff]
      %v324 = vld [vmem:[#allocation2 + $0x100] sm:$0x3]
      %v325 = vld [vmem:[#allocation2 + $0x108] sm:$0xff]
      %v326 = vld [vmem:[#allocation2 + $0x110] sm:$0xff]
      %v327 = vld [vmem:[#allocation2 + $0x118] sm:$0x3]
      %v328 = vld [vmem:[#allocation2 + $0x120] sm:$0xff]
      %v329 = vld [vmem:[#allocation2 + $0x128] sm:$0xff]
      %v330 = vld [vmem:[#allocation2 + $0x130] sm:$0x3]
      %v331 = vld [vmem:[#allocation2 + $0x138] sm:$0xff]
      %v332 = vld [vmem:[#allocation2 + $0x140] sm:$0xff]
      %v333 = vld [vmem:[#allocation2 + $0x148] sm:$0x3]
      %v334 = vld [vmem:[#allocation2 + $0x150] sm:$0xff]
      %v335 = vld [vmem:[#allocation2 + $0x158] sm:$0xff]
      %v336 = vld [vmem:[#allocation2 + $0x160] sm:$0x3]
      %v337 = vld [vmem:[#allocation2 + $0x168] sm:$0xff]
      %v338 = vld [vmem:[#allocation2 + $0x170] sm:$0xff]
      %v339 = vld [vmem:[#allocation2 + $0x178] sm:$0x3]
      %v340 = vld [vmem:[#allocation2 + $0x180] sm:$0xff]
      %v341 = vld [vmem:[#allocation2 + $0x188] sm:$0xff]
      %v342 = vld [vmem:[#allocation2 + $0x190] sm:$0x3]
      %v343 = vld [vmem:[#allocation2 + $0x198] sm:$0xff]
      %v344 = vld [vmem:[#allocation2 + $0x1a0] sm:$0xff]
      %v345 = vld [vmem:[#allocation2 + $0x1a8] sm:$0x3]
      %v346 = vld [vmem:[%s1] sm:$0xf]
      %v347 = vld [vmem:[%s1 + $0x4] sm:$0xf]
      %v348 = vld [vmem:[%s1 + $0x8] sm:$0xf]
      %v349 = vld [vmem:[%s1 + $0xc] sm:$0xf]
      %v350 = vld [vmem:[%s1 + $0x10] sm:$0xf]
      %v351 = vld [vmem:[%s1 + $0x14] sm:$0xf]
      %v352 = vld [vmem:[%s1 + $0x18] sm:$0xf]
      %v353 = vld [vmem:[%s1 + $0x1c] sm:$0xf]
      %v354 = vld [vmem:[%s1 + $0x20] sm:$0xf]
      %vm403 = vcmask 1046528
      %v404 = vrot.slane %v292, 1
      %v405 = vrot.slane %v293, 1
      %v406 = vsel %vm403, %v404, %v405
      %v407 = vrot.slane %v294, 1
      %v408 = vsel %vm403, %v405, %v407
      %v409 = vrot.slane %v295, 1
      %v410 = vrot.slane %v296, 1
      %v411 = vsel %vm403, %v409, %v410
      %v412 = vrot.slane %v297, 1
      %v413 = vsel %vm403, %v410, %v412
      %v414 = vrot.slane %v298, 1
      %v415 = vrot.slane %v299, 1
      %v416 = vsel %vm403, %v414, %v415
      %v417 = vrot.slane %v300, 1
      %v418 = vsel %vm403, %v415, %v417
      %v419 = vrot.slane %v301, 1
      %v420 = vrot.slane %v302, 1
      %v421 = vsel %vm403, %v419, %v420
      %v422 = vrot.slane %v303, 1
      %v423 = vsel %vm403, %v420, %v422
      %v424 = vrot.slane %v304, 1
      %v425 = vrot.slane %v305, 1
      %v426 = vsel %vm403, %v424, %v425
      %v427 = vrot.slane %v306, 1
      %v428 = vsel %vm403, %v425, %v427
      %v429 = vrot.slane %v307, 1
      %v430 = vrot.slane %v308, 1
      %v431 = vsel %vm403, %v429, %v430
      %v432 = vrot.slane %v309, 1
      %v433 = vsel %vm403, %v430, %v432
      %v434 = vrot.slane %v310, 1
      %v435 = vrot.slane %v311, 1
      %v436 = vsel %vm403, %v434, %v435
      %v437 = vrot.slane %v312, 1
      %v438 = vsel %vm403, %v435, %v437
      %v439 = vrot.slane %v313, 1
      %v440 = vrot.slane %v314, 1
      %v441 = vsel %vm403, %v439, %v440
      %v442 = vrot.slane %v315, 1
      %v443 = vsel %vm403, %v440, %v442
      %v444 = vrot.slane %v316, 1
      %v445 = vrot.slane %v317, 1
      %v446 = vsel %vm403, %v444, %v445
      %v447 = vrot.slane %v318, 1
      %v448 = vsel %vm403, %v445, %v447
      %v449 = vrot.slane %v319, 1
      %v450 = vrot.slane %v320, 1
      %v451 = vsel %vm403, %v449, %v450
      %v452 = vrot.slane %v321, 1
      %v453 = vsel %vm403, %v450, %v452
      %v454 = vrot.slane %v322, 1
      %v455 = vrot.slane %v323, 1
      %v456 = vsel %vm403, %v454, %v455
      %v457 = vrot.slane %v324, 1
      %v458 = vsel %vm403, %v455, %v457
      %v459 = vrot.slane %v325, 1
      %v460 = vrot.slane %v326, 1
      %v461 = vsel %vm403, %v459, %v460
      %v462 = vrot.slane %v327, 1
      %v463 = vsel %vm403, %v460, %v462
      %v464 = vrot.slane %v328, 1
      %v465 = vrot.slane %v329, 1
      %v466 = vsel %vm403, %v464, %v465
      %v467 = vrot.slane %v330, 1
      %v468 = vsel %vm403, %v465, %v467
      %v469 = vrot.slane %v331, 1
      %v470 = vrot.slane %v332, 1
      %v471 = vsel %vm403, %v469, %v470
      %v472 = vrot.slane %v333, 1
      %v473 = vsel %vm403, %v470, %v472
      %v474 = vrot.slane %v334, 1
      %v475 = vrot.slane %v335, 1
      %v476 = vsel %vm403, %v474, %v475
      %v477 = vrot.slane %v336, 1
      %v478 = vsel %vm403, %v475, %v477
      %v479 = vrot.slane %v337, 1
      %v480 = vrot.slane %v338, 1
      %v481 = vsel %vm403, %v479, %v480
      %v482 = vrot.slane %v339, 1
      %v483 = vsel %vm403, %v480, %v482
      %v484 = vsel %vm171, %v406, 0
      %v486 = vsel %vm171, %v408, 0
      %v488 = vsel %vm171, %v411, 0
      %v490 = vsel %vm171, %v413, 0
      %v492 = vsel %vm171, %v416, 0
      %v494 = vsel %vm171, %v418, 0
      %v496 = vsel %vm171, %v421, 0
      %v498 = vsel %vm171, %v423, 0
      %v500 = vsel %vm171, %v426, 0
      %v502 = vsel %vm171, %v428, 0
      %v504 = vsel %vm171, %v431, 0
      %v506 = vsel %vm171, %v433, 0
      %v508 = vsel %vm171, %v436, 0
      %v510 = vsel %vm171, %v438, 0
      %v512 = vsel %vm171, %v441, 0
      %v514 = vsel %vm171, %v443, 0
      %v516 = vsel %vm171, %v446, 0
      %v518 = vsel %vm171, %v448, 0
      %v520 = vsel %vm171, %v451, 0
      %v522 = vsel %vm171, %v453, 0
      %v524 = vsel %vm171, %v456, 0
      %v526 = vsel %vm171, %v458, 0
      %v528 = vsel %vm171, %v461, 0
      %v530 = vsel %vm171, %v463, 0
      %v532 = vsel %vm171, %v466, 0
      %v534 = vsel %vm171, %v468, 0
      %v536 = vsel %vm171, %v471, 0
      %v538 = vsel %vm171, %v473, 0
      %v540 = vsel %vm171, %v476, 0
      %v542 = vsel %vm171, %v478, 0
      %v544 = vsel %vm171, %v481, 0
      %v546 = vsel %vm171, %v483, 0
      %vm548 = vcmask 1043456
      %v550 = vsel %vm548, %v347, 0
      %552 = vmatpush.msra.mxu0 0.0
      %553 = vmatpush.msra.mxu0 0.0
      %554 = vmatpush.msra.mxu0 0.0
      %555 = vmatpush.msra.mxu0 0.0
      %556 = vmatpush.msra.mxu0 0.0
      %557 = vmatpush.msra.mxu0 0.0
      %558 = vmatpush.msra.mxu0 0.0
      %559 = vmatpush.msra.mxu0 0.0
      %560 = vmatpush.msra.mxu0 0.0
      %561 = vmatpush.msra.mxu0 0.0
      %562 = vmatpush.msra.mxu0 0.0
      %563 = vmatpush.msra.mxu0 0.0
      %564 = vmatpush.msra.mxu0 0.0
      %565 = vmatpush.msra.mxu0 0.0
      %566 = vmatpush.msra.mxu0 0.0
      %v567 = vand.u32 %v550, 4294901760
      %568 = vmatpush.msra.mxu0 %v567
      %v569 = vand.u32 %v484, 4294901760
      %v570 = vsub.f32 %v484, %v569
      %v571 = vand.u32 %v570, 4294901760
      %v572 = vsub.f32 %v570, %v571
      %v573 = vand.u32 %v572, 4294901760
      %574 = vmatmul.f32.gmra.mxu0 %v573
      %v575 = vpop.f32.mrf.mxu0
      %v576 = vadd.f32 0.0, %v575
      %v577 = vand.u32 %v486, 4294901760
      %v578 = vsub.f32 %v486, %v577
      %v579 = vand.u32 %v578, 4294901760
      %v580 = vsub.f32 %v578, %v579
      %v581 = vand.u32 %v580, 4294901760
      %582 = vmatmul.f32.gmra.mxu0 %v581
      %v583 = vpop.f32.mrf.mxu0
      %v584 = vadd.f32 0.0, %v583
      %v585 = vand.u32 %v488, 4294901760
      %v586 = vsub.f32 %v488, %v585
      %v587 = vand.u32 %v586, 4294901760
      %v588 = vsub.f32 %v586, %v587
      %v589 = vand.u32 %v588, 4294901760
      %590 = vmatmul.f32.gmra.mxu0 %v589
      %v591 = vpop.f32.mrf.mxu0
      %v592 = vadd.f32 0.0, %v591
      %v593 = vand.u32 %v490, 4294901760
      %v594 = vsub.f32 %v490, %v593
      %v595 = vand.u32 %v594, 4294901760
      %v596 = vsub.f32 %v594, %v595
      %v597 = vand.u32 %v596, 4294901760
      %598 = vmatmul.f32.gmra.mxu0 %v597
      %v599 = vpop.f32.mrf.mxu0
      %v600 = vadd.f32 0.0, %v599
      %v601 = vand.u32 %v492, 4294901760
      %v602 = vsub.f32 %v492, %v601
      %v603 = vand.u32 %v602, 4294901760
      %v604 = vsub.f32 %v602, %v603
      %v605 = vand.u32 %v604, 4294901760
      %606 = vmatmul.f32.gmra.mxu0 %v605
      %v607 = vpop.f32.mrf.mxu0
      %v608 = vadd.f32 0.0, %v607
      %v609 = vand.u32 %v494, 4294901760
      %v610 = vsub.f32 %v494, %v609
      %v611 = vand.u32 %v610, 4294901760
      %v612 = vsub.f32 %v610, %v611
      %v613 = vand.u32 %v612, 4294901760
      %614 = vmatmul.f32.gmra.mxu0 %v613
      %v615 = vpop.f32.mrf.mxu0
      %v616 = vadd.f32 0.0, %v615
      %v617 = vand.u32 %v496, 4294901760
      %v618 = vsub.f32 %v496, %v617
      %v619 = vand.u32 %v618, 4294901760
      %v620 = vsub.f32 %v618, %v619
      %v621 = vand.u32 %v620, 4294901760
      %622 = vmatmul.f32.gmra.mxu0 %v621
      %v623 = vpop.f32.mrf.mxu0
      %v624 = vadd.f32 0.0, %v623
      %v625 = vand.u32 %v498, 4294901760
      %v626 = vsub.f32 %v498, %v625
      %v627 = vand.u32 %v626, 4294901760
      %v628 = vsub.f32 %v626, %v627
      %v629 = vand.u32 %v628, 4294901760
      %630 = vmatmul.f32.gmra.mxu0 %v629
      %v631 = vpop.f32.mrf.mxu0
      %v632 = vadd.f32 0.0, %v631
      %v633 = vand.u32 %v500, 4294901760
      %v634 = vsub.f32 %v500, %v633
      %v635 = vand.u32 %v634, 4294901760
      %v636 = vsub.f32 %v634, %v635
      %v637 = vand.u32 %v636, 4294901760
      %638 = vmatmul.f32.gmra.mxu0 %v637
      %v639 = vpop.f32.mrf.mxu0
      %v640 = vadd.f32 0.0, %v639
      %v641 = vand.u32 %v502, 4294901760
      %v642 = vsub.f32 %v502, %v641
      %v643 = vand.u32 %v642, 4294901760
      %v644 = vsub.f32 %v642, %v643
      %v645 = vand.u32 %v644, 4294901760
      %646 = vmatmul.f32.gmra.mxu0 %v645
      %v647 = vpop.f32.mrf.mxu0
      %v648 = vadd.f32 0.0, %v647
      %v649 = vand.u32 %v504, 4294901760
      %v650 = vsub.f32 %v504, %v649
      %v651 = vand.u32 %v650, 4294901760
      %v652 = vsub.f32 %v650, %v651
      %v653 = vand.u32 %v652, 4294901760
      %654 = vmatmul.f32.gmra.mxu0 %v653
      %v655 = vpop.f32.mrf.mxu0
      %v656 = vadd.f32 0.0, %v655
      %v657 = vand.u32 %v506, 4294901760
      %v658 = vsub.f32 %v506, %v657
      %v659 = vand.u32 %v658, 4294901760
      %v660 = vsub.f32 %v658, %v659
      %v661 = vand.u32 %v660, 4294901760
      %662 = vmatmul.f32.gmra.mxu0 %v661
      %v663 = vpop.f32.mrf.mxu0
      %v664 = vadd.f32 0.0, %v663
      %v665 = vand.u32 %v508, 4294901760
      %v666 = vsub.f32 %v508, %v665
      %v667 = vand.u32 %v666, 4294901760
      %v668 = vsub.f32 %v666, %v667
      %v669 = vand.u32 %v668, 4294901760
      %670 = vmatmul.f32.gmra.mxu0 %v669
      %v671 = vpop.f32.mrf.mxu0
      %v672 = vadd.f32 0.0, %v671
      %v673 = vand.u32 %v510, 4294901760
      %v674 = vsub.f32 %v510, %v673
      %v675 = vand.u32 %v674, 4294901760
      %v676 = vsub.f32 %v674, %v675
      %v677 = vand.u32 %v676, 4294901760
      %678 = vmatmul.f32.gmra.mxu0 %v677
      %v679 = vpop.f32.mrf.mxu0
      %v680 = vadd.f32 0.0, %v679
      %v681 = vand.u32 %v512, 4294901760
      %v682 = vsub.f32 %v512, %v681
      %v683 = vand.u32 %v682, 4294901760
      %v684 = vsub.f32 %v682, %v683
      %v685 = vand.u32 %v684, 4294901760
      %686 = vmatmul.f32.gmra.mxu0 %v685
      %v687 = vpop.f32.mrf.mxu0
      %v688 = vadd.f32 0.0, %v687
      %v689 = vand.u32 %v514, 4294901760
      %v690 = vsub.f32 %v514, %v689
      %v691 = vand.u32 %v690, 4294901760
      %v692 = vsub.f32 %v690, %v691
      %v693 = vand.u32 %v692, 4294901760
      %694 = vmatmul.f32.gmra.mxu0 %v693
      %v695 = vpop.f32.mrf.mxu0
      %v696 = vadd.f32 0.0, %v695
      %v697 = vand.u32 %v516, 4294901760
      %v698 = vsub.f32 %v516, %v697
      %v699 = vand.u32 %v698, 4294901760
      %v700 = vsub.f32 %v698, %v699
      %v701 = vand.u32 %v700, 4294901760
      %702 = vmatmul.f32.gmra.mxu0 %v701
      %v703 = vpop.f32.mrf.mxu0
      %v704 = vadd.f32 0.0, %v703
      %v705 = vand.u32 %v518, 4294901760
      %v706 = vsub.f32 %v518, %v705
      %v707 = vand.u32 %v706, 4294901760
      %v708 = vsub.f32 %v706, %v707
      %v709 = vand.u32 %v708, 4294901760
      %710 = vmatmul.f32.gmra.mxu0 %v709
      %v711 = vpop.f32.mrf.mxu0
      %v712 = vadd.f32 0.0, %v711
      %v713 = vand.u32 %v520, 4294901760
      %v714 = vsub.f32 %v520, %v713
      %v715 = vand.u32 %v714, 4294901760
      %v716 = vsub.f32 %v714, %v715
      %v717 = vand.u32 %v716, 4294901760
      %718 = vmatmul.f32.gmra.mxu0 %v717
      %v719 = vpop.f32.mrf.mxu0
      %v720 = vadd.f32 0.0, %v719
      %v721 = vand.u32 %v522, 4294901760
      %v722 = vsub.f32 %v522, %v721
      %v723 = vand.u32 %v722, 4294901760
      %v724 = vsub.f32 %v722, %v723
      %v725 = vand.u32 %v724, 4294901760
      %726 = vmatmul.f32.gmra.mxu0 %v725
      %v727 = vpop.f32.mrf.mxu0
      %v728 = vadd.f32 0.0, %v727
      %v729 = vand.u32 %v524, 4294901760
      %v730 = vsub.f32 %v524, %v729
      %v731 = vand.u32 %v730, 4294901760
      %v732 = vsub.f32 %v730, %v731
      %v733 = vand.u32 %v732, 4294901760
      %734 = vmatmul.f32.gmra.mxu0 %v733
      %v735 = vpop.f32.mrf.mxu0
      %v736 = vadd.f32 0.0, %v735
      %v737 = vand.u32 %v526, 4294901760
      %v738 = vsub.f32 %v526, %v737
      %v739 = vand.u32 %v738, 4294901760
      %v740 = vsub.f32 %v738, %v739
      %v741 = vand.u32 %v740, 4294901760
      %742 = vmatmul.f32.gmra.mxu0 %v741
      %v743 = vpop.f32.mrf.mxu0
      %v744 = vadd.f32 0.0, %v743
      %v745 = vand.u32 %v528, 4294901760
      %v746 = vsub.f32 %v528, %v745
      %v747 = vand.u32 %v746, 4294901760
      %v748 = vsub.f32 %v746, %v747
      %v749 = vand.u32 %v748, 4294901760
      %750 = vmatmul.f32.gmra.mxu0 %v749
      %v751 = vpop.f32.mrf.mxu0
      %v752 = vadd.f32 0.0, %v751
      %v753 = vand.u32 %v530, 4294901760
      %v754 = vsub.f32 %v530, %v753
      %v755 = vand.u32 %v754, 4294901760
      %v756 = vsub.f32 %v754, %v755
      %v757 = vand.u32 %v756, 4294901760
      %758 = vmatmul.f32.gmra.mxu0 %v757
      %v759 = vpop.f32.mrf.mxu0
      %v760 = vadd.f32 0.0, %v759
      %v761 = vand.u32 %v532, 4294901760
      %v762 = vsub.f32 %v532, %v761
      %v763 = vand.u32 %v762, 4294901760
      %v764 = vsub.f32 %v762, %v763
      %v765 = vand.u32 %v764, 4294901760
      %766 = vmatmul.f32.gmra.mxu0 %v765
      %v767 = vpop.f32.mrf.mxu0
      %v768 = vadd.f32 0.0, %v767
      %v769 = vand.u32 %v534, 4294901760
      %v770 = vsub.f32 %v534, %v769
      %v771 = vand.u32 %v770, 4294901760
      %v772 = vsub.f32 %v770, %v771
      %v773 = vand.u32 %v772, 4294901760
      %774 = vmatmul.f32.gmra.mxu0 %v773
      %v775 = vpop.f32.mrf.mxu0
      %v776 = vadd.f32 0.0, %v775
      %v777 = vand.u32 %v536, 4294901760
      %v778 = vsub.f32 %v536, %v777
      %v779 = vand.u32 %v778, 4294901760
      %v780 = vsub.f32 %v778, %v779
      %v781 = vand.u32 %v780, 4294901760
      %782 = vmatmul.f32.gmra.mxu0 %v781
      %v783 = vpop.f32.mrf.mxu0
      %v784 = vadd.f32 0.0, %v783
      %v785 = vand.u32 %v538, 4294901760
      %v786 = vsub.f32 %v538, %v785
      %v787 = vand.u32 %v786, 4294901760
      %v788 = vsub.f32 %v786, %v787
      %v789 = vand.u32 %v788, 4294901760
      %790 = vmatmul.f32.gmra.mxu0 %v789
      %v791 = vpop.f32.mrf.mxu0
      %v792 = vadd.f32 0.0, %v791
      %v793 = vand.u32 %v540, 4294901760
      %v794 = vsub.f32 %v540, %v793
      %v795 = vand.u32 %v794, 4294901760
      %v796 = vsub.f32 %v794, %v795
      %v797 = vand.u32 %v796, 4294901760
      %798 = vmatmul.f32.gmra.mxu0 %v797
      %v799 = vpop.f32.mrf.mxu0
      %v800 = vadd.f32 0.0, %v799
      %v801 = vand.u32 %v542, 4294901760
      %v802 = vsub.f32 %v542, %v801
      %v803 = vand.u32 %v802, 4294901760
      %v804 = vsub.f32 %v802, %v803
      %v805 = vand.u32 %v804, 4294901760
      %806 = vmatmul.f32.gmra.mxu0 %v805
      %v807 = vpop.f32.mrf.mxu0
      %v808 = vadd.f32 0.0, %v807
      %v809 = vand.u32 %v544, 4294901760
      %v810 = vsub.f32 %v544, %v809
      %v811 = vand.u32 %v810, 4294901760
      %v812 = vsub.f32 %v810, %v811
      %v813 = vand.u32 %v812, 4294901760
      %814 = vmatmul.f32.gmra.mxu0 %v813
      %v815 = vpop.f32.mrf.mxu0
      %v816 = vadd.f32 0.0, %v815
      %v817 = vand.u32 %v546, 4294901760
      %v818 = vsub.f32 %v546, %v817
      %v819 = vand.u32 %v818, 4294901760
      %v820 = vsub.f32 %v818, %v819
      %v821 = vand.u32 %v820, 4294901760
      %822 = vmatmul.f32.gmra.mxu0 %v821
      %v823 = vpop.f32.mrf.mxu0
      %v824 = vadd.f32 0.0, %v823
      %825 = vdwg.mxu0
      %826 = vmatpush.msra.mxu0 0.0
      %827 = vmatpush.msra.mxu0 0.0
      %828 = vmatpush.msra.mxu0 0.0
      %829 = vmatpush.msra.mxu0 0.0
      %830 = vmatpush.msra.mxu0 0.0
      %831 = vmatpush.msra.mxu0 0.0
      %832 = vmatpush.msra.mxu0 0.0
      %833 = vmatpush.msra.mxu0 0.0
      %834 = vmatpush.msra.mxu0 0.0
      %835 = vmatpush.msra.mxu0 0.0
      %836 = vmatpush.msra.mxu0 0.0
      %837 = vmatpush.msra.mxu0 0.0
      %838 = vmatpush.msra.mxu0 0.0
      %839 = vmatpush.msra.mxu0 0.0
      %840 = vmatpush.msra.mxu0 0.0
      %v841 = vand.u32 %v550, 4294901760
      %v842 = vsub.f32 %v550, %v841
      %v843 = vand.u32 %v842, 4294901760
      %v844 = vsub.f32 %v842, %v843
      %v845 = vand.u32 %v844, 4294901760
      %846 = vmatpush.msra.mxu0 %v845
      %v847 = vand.u32 %v484, 4294901760
      %848 = vmatmul.f32.gmra.mxu0 %v847
      %v849 = vpop.f32.mrf.mxu0
      %v850 = vadd.f32 %v576, %v849
      %v851 = vand.u32 %v486, 4294901760
      %852 = vmatmul.f32.gmra.mxu0 %v851
      %v853 = vpop.f32.mrf.mxu0
      %v854 = vadd.f32 %v584, %v853
      %v855 = vand.u32 %v488, 4294901760
      %856 = vmatmul.f32.gmra.mxu0 %v855
      %v857 = vpop.f32.mrf.mxu0
      %v858 = vadd.f32 %v592, %v857
      %v859 = vand.u32 %v490, 4294901760
      %860 = vmatmul.f32.gmra.mxu0 %v859
      %v861 = vpop.f32.mrf.mxu0
      %v862 = vadd.f32 %v600, %v861
      %v863 = vand.u32 %v492, 4294901760
      %864 = vmatmul.f32.gmra.mxu0 %v863
      %v865 = vpop.f32.mrf.mxu0
      %v866 = vadd.f32 %v608, %v865
      %v867 = vand.u32 %v494, 4294901760
      %868 = vmatmul.f32.gmra.mxu0 %v867
      %v869 = vpop.f32.mrf.mxu0
      %v870 = vadd.f32 %v616, %v869
      %v871 = vand.u32 %v496, 4294901760
      %872 = vmatmul.f32.gmra.mxu0 %v871
      %v873 = vpop.f32.mrf.mxu0
      %v874 = vadd.f32 %v624, %v873
      %v875 = vand.u32 %v498, 4294901760
      %876 = vmatmul.f32.gmra.mxu0 %v875
      %v877 = vpop.f32.mrf.mxu0
      %v878 = vadd.f32 %v632, %v877
      %v879 = vand.u32 %v500, 4294901760
      %880 = vmatmul.f32.gmra.mxu0 %v879
      %v881 = vpop.f32.mrf.mxu0
      %v882 = vadd.f32 %v640, %v881
      %v883 = vand.u32 %v502, 4294901760
      %884 = vmatmul.f32.gmra.mxu0 %v883
      %v885 = vpop.f32.mrf.mxu0
      %v886 = vadd.f32 %v648, %v885
      %v887 = vand.u32 %v504, 4294901760
      %888 = vmatmul.f32.gmra.mxu0 %v887
      %v889 = vpop.f32.mrf.mxu0
      %v890 = vadd.f32 %v656, %v889
      %v891 = vand.u32 %v506, 4294901760
      %892 = vmatmul.f32.gmra.mxu0 %v891
      %v893 = vpop.f32.mrf.mxu0
      %v894 = vadd.f32 %v664, %v893
      %v895 = vand.u32 %v508, 4294901760
      %896 = vmatmul.f32.gmra.mxu0 %v895
      %v897 = vpop.f32.mrf.mxu0
      %v898 = vadd.f32 %v672, %v897
      %v899 = vand.u32 %v510, 4294901760
      %900 = vmatmul.f32.gmra.mxu0 %v899
      %v901 = vpop.f32.mrf.mxu0
      %v902 = vadd.f32 %v680, %v901
      %v903 = vand.u32 %v512, 4294901760
      %904 = vmatmul.f32.gmra.mxu0 %v903
      %v905 = vpop.f32.mrf.mxu0
      %v906 = vadd.f32 %v688, %v905
      %v907 = vand.u32 %v514, 4294901760
      %908 = vmatmul.f32.gmra.mxu0 %v907
      %v909 = vpop.f32.mrf.mxu0
      %v910 = vadd.f32 %v696, %v909
      %v911 = vand.u32 %v516, 4294901760
      %912 = vmatmul.f32.gmra.mxu0 %v911
      %v913 = vpop.f32.mrf.mxu0
      %v914 = vadd.f32 %v704, %v913
      %v915 = vand.u32 %v518, 4294901760
      %916 = vmatmul.f32.gmra.mxu0 %v915
      %v917 = vpop.f32.mrf.mxu0
      %v918 = vadd.f32 %v712, %v917
      %v919 = vand.u32 %v520, 4294901760
      %920 = vmatmul.f32.gmra.mxu0 %v919
      %v921 = vpop.f32.mrf.mxu0
      %v922 = vadd.f32 %v720, %v921
      %v923 = vand.u32 %v522, 4294901760
      %924 = vmatmul.f32.gmra.mxu0 %v923
      %v925 = vpop.f32.mrf.mxu0
      %v926 = vadd.f32 %v728, %v925
      %v927 = vand.u32 %v524, 4294901760
      %928 = vmatmul.f32.gmra.mxu0 %v927
      %v929 = vpop.f32.mrf.mxu0
      %v930 = vadd.f32 %v736, %v929
      %v931 = vand.u32 %v526, 4294901760
      %932 = vmatmul.f32.gmra.mxu0 %v931
      %v933 = vpop.f32.mrf.mxu0
      %v934 = vadd.f32 %v744, %v933
      %v935 = vand.u32 %v528, 4294901760
      %936 = vmatmul.f32.gmra.mxu0 %v935
      %v937 = vpop.f32.mrf.mxu0
      %v938 = vadd.f32 %v752, %v937
      %v939 = vand.u32 %v530, 4294901760
      %940 = vmatmul.f32.gmra.mxu0 %v939
      %v941 = vpop.f32.mrf.mxu0
      %v942 = vadd.f32 %v760, %v941
      %v943 = vand.u32 %v532, 4294901760
      %944 = vmatmul.f32.gmra.mxu0 %v943
      %v945 = vpop.f32.mrf.mxu0
      %v946 = vadd.f32 %v768, %v945
      %v947 = vand.u32 %v534, 4294901760
      %948 = vmatmul.f32.gmra.mxu0 %v947
      %v949 = vpop.f32.mrf.mxu0
      %v950 = vadd.f32 %v776, %v949
      %v951 = vand.u32 %v536, 4294901760
      %952 = vmatmul.f32.gmra.mxu0 %v951
      %v953 = vpop.f32.mrf.mxu0
      %v954 = vadd.f32 %v784, %v953
      %v955 = vand.u32 %v538, 4294901760
      %956 = vmatmul.f32.gmra.mxu0 %v955
      %v957 = vpop.f32.mrf.mxu0
      %v958 = vadd.f32 %v792, %v957
      %v959 = vand.u32 %v540, 4294901760
      %960 = vmatmul.f32.gmra.mxu0 %v959
      %v961 = vpop.f32.mrf.mxu0
      %v962 = vadd.f32 %v800, %v961
      %v963 = vand.u32 %v542, 4294901760
      %964 = vmatmul.f32.gmra.mxu0 %v963
      %v965 = vpop.f32.mrf.mxu0
      %v966 = vadd.f32 %v808, %v965
      %v967 = vand.u32 %v544, 4294901760
      %968 = vmatmul.f32.gmra.mxu0 %v967
      %v969 = vpop.f32.mrf.mxu0
      %v970 = vadd.f32 %v816, %v969
      %v971 = vand.u32 %v546, 4294901760
      %972 = vmatmul.f32.gmra.mxu0 %v971
      %v973 = vpop.f32.mrf.mxu0
      %v974 = vadd.f32 %v824, %v973
      %975 = vdwg.mxu0
      %976 = vmatpush.msra.mxu0 0.0
      %977 = vmatpush.msra.mxu0 0.0
      %978 = vmatpush.msra.mxu0 0.0
      %979 = vmatpush.msra.mxu0 0.0
      %980 = vmatpush.msra.mxu0 0.0
      %981 = vmatpush.msra.mxu0 0.0
      %982 = vmatpush.msra.mxu0 0.0
      %983 = vmatpush.msra.mxu0 0.0
      %984 = vmatpush.msra.mxu0 0.0
      %985 = vmatpush.msra.mxu0 0.0
      %986 = vmatpush.msra.mxu0 0.0
      %987 = vmatpush.msra.mxu0 0.0
      %988 = vmatpush.msra.mxu0 0.0
      %989 = vmatpush.msra.mxu0 0.0
      %990 = vmatpush.msra.mxu0 0.0
      %v991 = vand.u32 %v550, 4294901760
      %v992 = vsub.f32 %v550, %v991
      %993 = vmatpush.msra.mxu0 %v992
      %v994 = vand.u32 %v484, 4294901760
      %v995 = vsub.f32 %v484, %v994
      %996 = vmatmul.f32.gmra.mxu0 %v995
      %v997 = vpop.f32.mrf.mxu0
      %v998 = vadd.f32 %v850, %v997
      %v999 = vand.u32 %v486, 4294901760
      %v1000 = vsub.f32 %v486, %v999
      %1001 = vmatmul.f32.gmra.mxu0 %v1000
      %v1002 = vpop.f32.mrf.mxu0
      %v1003 = vadd.f32 %v854, %v1002
      %v1004 = vand.u32 %v488, 4294901760
      %v1005 = vsub.f32 %v488, %v1004
      %1006 = vmatmul.f32.gmra.mxu0 %v1005
      %v1007 = vpop.f32.mrf.mxu0
      %v1008 = vadd.f32 %v858, %v1007
      %v1009 = vand.u32 %v490, 4294901760
      %v1010 = vsub.f32 %v490, %v1009
      %1011 = vmatmul.f32.gmra.mxu0 %v1010
      %v1012 = vpop.f32.mrf.mxu0
      %v1013 = vadd.f32 %v862, %v1012
      %v1014 = vand.u32 %v492, 4294901760
      %v1015 = vsub.f32 %v492, %v1014
      %1016 = vmatmul.f32.gmra.mxu0 %v1015
      %v1017 = vpop.f32.mrf.mxu0
      %v1018 = vadd.f32 %v866, %v1017
      %v1019 = vand.u32 %v494, 4294901760
      %v1020 = vsub.f32 %v494, %v1019
      %1021 = vmatmul.f32.gmra.mxu0 %v1020
      %v1022 = vpop.f32.mrf.mxu0
      %v1023 = vadd.f32 %v870, %v1022
      %v1024 = vand.u32 %v496, 4294901760
      %v1025 = vsub.f32 %v496, %v1024
      %1026 = vmatmul.f32.gmra.mxu0 %v1025
      %v1027 = vpop.f32.mrf.mxu0
      %v1028 = vadd.f32 %v874, %v1027
      %v1029 = vand.u32 %v498, 4294901760
      %v1030 = vsub.f32 %v498, %v1029
      %1031 = vmatmul.f32.gmra.mxu0 %v1030
      %v1032 = vpop.f32.mrf.mxu0
      %v1033 = vadd.f32 %v878, %v1032
      %v1034 = vand.u32 %v500, 4294901760
      %v1035 = vsub.f32 %v500, %v1034
      %1036 = vmatmul.f32.gmra.mxu0 %v1035
      %v1037 = vpop.f32.mrf.mxu0
      %v1038 = vadd.f32 %v882, %v1037
      %v1039 = vand.u32 %v502, 4294901760
      %v1040 = vsub.f32 %v502, %v1039
      %1041 = vmatmul.f32.gmra.mxu0 %v1040
      %v1042 = vpop.f32.mrf.mxu0
      %v1043 = vadd.f32 %v886, %v1042
      %v1044 = vand.u32 %v504, 4294901760
      %v1045 = vsub.f32 %v504, %v1044
      %1046 = vmatmul.f32.gmra.mxu0 %v1045
      %v1047 = vpop.f32.mrf.mxu0
      %v1048 = vadd.f32 %v890, %v1047
      %v1049 = vand.u32 %v506, 4294901760
      %v1050 = vsub.f32 %v506, %v1049
      %1051 = vmatmul.f32.gmra.mxu0 %v1050
      %v1052 = vpop.f32.mrf.mxu0
      %v1053 = vadd.f32 %v894, %v1052
      %v1054 = vand.u32 %v508, 4294901760
      %v1055 = vsub.f32 %v508, %v1054
      %1056 = vmatmul.f32.gmra.mxu0 %v1055
      %v1057 = vpop.f32.mrf.mxu0
      %v1058 = vadd.f32 %v898, %v1057
      %v1059 = vand.u32 %v510, 4294901760
      %v1060 = vsub.f32 %v510, %v1059
      %1061 = vmatmul.f32.gmra.mxu0 %v1060
      %v1062 = vpop.f32.mrf.mxu0
      %v1063 = vadd.f32 %v902, %v1062
      %v1064 = vand.u32 %v512, 4294901760
      %v1065 = vsub.f32 %v512, %v1064
      %1066 = vmatmul.f32.gmra.mxu0 %v1065
      %v1067 = vpop.f32.mrf.mxu0
      %v1068 = vadd.f32 %v906, %v1067
      %v1069 = vand.u32 %v514, 4294901760
      %v1070 = vsub.f32 %v514, %v1069
      %1071 = vmatmul.f32.gmra.mxu0 %v1070
      %v1072 = vpop.f32.mrf.mxu0
      %v1073 = vadd.f32 %v910, %v1072
      %v1074 = vand.u32 %v516, 4294901760
      %v1075 = vsub.f32 %v516, %v1074
      %1076 = vmatmul.f32.gmra.mxu0 %v1075
      %v1077 = vpop.f32.mrf.mxu0
      %v1078 = vadd.f32 %v914, %v1077
      %v1079 = vand.u32 %v518, 4294901760
      %v1080 = vsub.f32 %v518, %v1079
      %1081 = vmatmul.f32.gmra.mxu0 %v1080
      %v1082 = vpop.f32.mrf.mxu0
      %v1083 = vadd.f32 %v918, %v1082
      %v1084 = vand.u32 %v520, 4294901760
      %v1085 = vsub.f32 %v520, %v1084
      %1086 = vmatmul.f32.gmra.mxu0 %v1085
      %v1087 = vpop.f32.mrf.mxu0
      %v1088 = vadd.f32 %v922, %v1087
      %v1089 = vand.u32 %v522, 4294901760
      %v1090 = vsub.f32 %v522, %v1089
      %1091 = vmatmul.f32.gmra.mxu0 %v1090
      %v1092 = vpop.f32.mrf.mxu0
      %v1093 = vadd.f32 %v926, %v1092
      %v1094 = vand.u32 %v524, 4294901760
      %v1095 = vsub.f32 %v524, %v1094
      %1096 = vmatmul.f32.gmra.mxu0 %v1095
      %v1097 = vpop.f32.mrf.mxu0
      %v1098 = vadd.f32 %v930, %v1097
      %v1099 = vand.u32 %v526, 4294901760
      %v1100 = vsub.f32 %v526, %v1099
      %1101 = vmatmul.f32.gmra.mxu0 %v1100
      %v1102 = vpop.f32.mrf.mxu0
      %v1103 = vadd.f32 %v934, %v1102
      %v1104 = vand.u32 %v528, 4294901760
      %v1105 = vsub.f32 %v528, %v1104
      %1106 = vmatmul.f32.gmra.mxu0 %v1105
      %v1107 = vpop.f32.mrf.mxu0
      %v1108 = vadd.f32 %v938, %v1107
      %v1109 = vand.u32 %v530, 4294901760
      %v1110 = vsub.f32 %v530, %v1109
      %1111 = vmatmul.f32.gmra.mxu0 %v1110
      %v1112 = vpop.f32.mrf.mxu0
      %v1113 = vadd.f32 %v942, %v1112
      %v1114 = vand.u32 %v532, 4294901760
      %v1115 = vsub.f32 %v532, %v1114
      %1116 = vmatmul.f32.gmra.mxu0 %v1115
      %v1117 = vpop.f32.mrf.mxu0
      %v1118 = vadd.f32 %v946, %v1117
      %v1119 = vand.u32 %v534, 4294901760
      %v1120 = vsub.f32 %v534, %v1119
      %1121 = vmatmul.f32.gmra.mxu0 %v1120
      %v1122 = vpop.f32.mrf.mxu0
      %v1123 = vadd.f32 %v950, %v1122
      %v1124 = vand.u32 %v536, 4294901760
      %v1125 = vsub.f32 %v536, %v1124
      %1126 = vmatmul.f32.gmra.mxu0 %v1125
      %v1127 = vpop.f32.mrf.mxu0
      %v1128 = vadd.f32 %v954, %v1127
      %v1129 = vand.u32 %v538, 4294901760
      %v1130 = vsub.f32 %v538, %v1129
      %1131 = vmatmul.f32.gmra.mxu0 %v1130
      %v1132 = vpop.f32.mrf.mxu0
      %v1133 = vadd.f32 %v958, %v1132
      %v1134 = vand.u32 %v540, 4294901760
      %v1135 = vsub.f32 %v540, %v1134
      %1136 = vmatmul.f32.gmra.mxu0 %v1135
      %v1137 = vpop.f32.mrf.mxu0
      %v1138 = vadd.f32 %v962, %v1137
      %v1139 = vand.u32 %v542, 4294901760
      %v1140 = vsub.f32 %v542, %v1139
      %1141 = vmatmul.f32.gmra.mxu0 %v1140
      %v1142 = vpop.f32.mrf.mxu0
      %v1143 = vadd.f32 %v966, %v1142
      %v1144 = vand.u32 %v544, 4294901760
      %v1145 = vsub.f32 %v544, %v1144
      %1146 = vmatmul.f32.gmra.mxu0 %v1145
      %v1147 = vpop.f32.mrf.mxu0
      %v1148 = vadd.f32 %v970, %v1147
      %v1149 = vand.u32 %v546, 4294901760
      %v1150 = vsub.f32 %v546, %v1149
      %1151 = vmatmul.f32.gmra.mxu0 %v1150
      %v1152 = vpop.f32.mrf.mxu0
      %v1153 = vadd.f32 %v974, %v1152
      %1154 = vdwg.mxu0
      %1155 = vmatpush.msra.mxu0 0.0
      %1156 = vmatpush.msra.mxu0 0.0
      %1157 = vmatpush.msra.mxu0 0.0
      %1158 = vmatpush.msra.mxu0 0.0
      %1159 = vmatpush.msra.mxu0 0.0
      %1160 = vmatpush.msra.mxu0 0.0
      %1161 = vmatpush.msra.mxu0 0.0
      %1162 = vmatpush.msra.mxu0 0.0
      %1163 = vmatpush.msra.mxu0 0.0
      %1164 = vmatpush.msra.mxu0 0.0
      %1165 = vmatpush.msra.mxu0 0.0
      %1166 = vmatpush.msra.mxu0 0.0
      %1167 = vmatpush.msra.mxu0 0.0
      %1168 = vmatpush.msra.mxu0 0.0
      %1169 = vmatpush.msra.mxu0 0.0
      %v1170 = vand.u32 %v550, 4294901760
      %1171 = vmatpush.msra.mxu0 %v1170
      %v1172 = vand.u32 %v484, 4294901760
      %v1173 = vsub.f32 %v484, %v1172
      %v1174 = vand.u32 %v1173, 4294901760
      %1175 = vmatmul.f32.gmra.mxu0 %v1174
      %v1176 = vpop.f32.mrf.mxu0
      %v1177 = vadd.f32 %v998, %v1176
      %v1178 = vand.u32 %v486, 4294901760
      %v1179 = vsub.f32 %v486, %v1178
      %v1180 = vand.u32 %v1179, 4294901760
      %1181 = vmatmul.f32.gmra.mxu0 %v1180
      %v1182 = vpop.f32.mrf.mxu0
      %v1183 = vadd.f32 %v1003, %v1182
      %v1184 = vand.u32 %v488, 4294901760
      %v1185 = vsub.f32 %v488, %v1184
      %v1186 = vand.u32 %v1185, 4294901760
      %1187 = vmatmul.f32.gmra.mxu0 %v1186
      %v1188 = vpop.f32.mrf.mxu0
      %v1189 = vadd.f32 %v1008, %v1188
      %v1190 = vand.u32 %v490, 4294901760
      %v1191 = vsub.f32 %v490, %v1190
      %v1192 = vand.u32 %v1191, 4294901760
      %1193 = vmatmul.f32.gmra.mxu0 %v1192
      %v1194 = vpop.f32.mrf.mxu0
      %v1195 = vadd.f32 %v1013, %v1194
      %v1196 = vand.u32 %v492, 4294901760
      %v1197 = vsub.f32 %v492, %v1196
      %v1198 = vand.u32 %v1197, 4294901760
      %1199 = vmatmul.f32.gmra.mxu0 %v1198
      %v1200 = vpop.f32.mrf.mxu0
      %v1201 = vadd.f32 %v1018, %v1200
      %v1202 = vand.u32 %v494, 4294901760
      %v1203 = vsub.f32 %v494, %v1202
      %v1204 = vand.u32 %v1203, 4294901760
      %1205 = vmatmul.f32.gmra.mxu0 %v1204
      %v1206 = vpop.f32.mrf.mxu0
      %v1207 = vadd.f32 %v1023, %v1206
      %v1208 = vand.u32 %v496, 4294901760
      %v1209 = vsub.f32 %v496, %v1208
      %v1210 = vand.u32 %v1209, 4294901760
      %1211 = vmatmul.f32.gmra.mxu0 %v1210
      %v1212 = vpop.f32.mrf.mxu0
      %v1213 = vadd.f32 %v1028, %v1212
      %v1214 = vand.u32 %v498, 4294901760
      %v1215 = vsub.f32 %v498, %v1214
      %v1216 = vand.u32 %v1215, 4294901760
      %1217 = vmatmul.f32.gmra.mxu0 %v1216
      %v1218 = vpop.f32.mrf.mxu0
      %v1219 = vadd.f32 %v1033, %v1218
      %v1220 = vand.u32 %v500, 4294901760
      %v1221 = vsub.f32 %v500, %v1220
      %v1222 = vand.u32 %v1221, 4294901760
      %1223 = vmatmul.f32.gmra.mxu0 %v1222
      %v1224 = vpop.f32.mrf.mxu0
      %v1225 = vadd.f32 %v1038, %v1224
      %v1226 = vand.u32 %v502, 4294901760
      %v1227 = vsub.f32 %v502, %v1226
      %v1228 = vand.u32 %v1227, 4294901760
      %1229 = vmatmul.f32.gmra.mxu0 %v1228
      %v1230 = vpop.f32.mrf.mxu0
      %v1231 = vadd.f32 %v1043, %v1230
      %v1232 = vand.u32 %v504, 4294901760
      %v1233 = vsub.f32 %v504, %v1232
      %v1234 = vand.u32 %v1233, 4294901760
      %1235 = vmatmul.f32.gmra.mxu0 %v1234
      %v1236 = vpop.f32.mrf.mxu0
      %v1237 = vadd.f32 %v1048, %v1236
      %v1238 = vand.u32 %v506, 4294901760
      %v1239 = vsub.f32 %v506, %v1238
      %v1240 = vand.u32 %v1239, 4294901760
      %1241 = vmatmul.f32.gmra.mxu0 %v1240
      %v1242 = vpop.f32.mrf.mxu0
      %v1243 = vadd.f32 %v1053, %v1242
      %v1244 = vand.u32 %v508, 4294901760
      %v1245 = vsub.f32 %v508, %v1244
      %v1246 = vand.u32 %v1245, 4294901760
      %1247 = vmatmul.f32.gmra.mxu0 %v1246
      %v1248 = vpop.f32.mrf.mxu0
      %v1249 = vadd.f32 %v1058, %v1248
      %v1250 = vand.u32 %v510, 4294901760
      %v1251 = vsub.f32 %v510, %v1250
      %v1252 = vand.u32 %v1251, 4294901760
      %1253 = vmatmul.f32.gmra.mxu0 %v1252
      %v1254 = vpop.f32.mrf.mxu0
      %v1255 = vadd.f32 %v1063, %v1254
      %v1256 = vand.u32 %v512, 4294901760
      %v1257 = vsub.f32 %v512, %v1256
      %v1258 = vand.u32 %v1257, 4294901760
      %1259 = vmatmul.f32.gmra.mxu0 %v1258
      %v1260 = vpop.f32.mrf.mxu0
      %v1261 = vadd.f32 %v1068, %v1260
      %v1262 = vand.u32 %v514, 4294901760
      %v1263 = vsub.f32 %v514, %v1262
      %v1264 = vand.u32 %v1263, 4294901760
      %1265 = vmatmul.f32.gmra.mxu0 %v1264
      %v1266 = vpop.f32.mrf.mxu0
      %v1267 = vadd.f32 %v1073, %v1266
      %v1268 = vand.u32 %v516, 4294901760
      %v1269 = vsub.f32 %v516, %v1268
      %v1270 = vand.u32 %v1269, 4294901760
      %1271 = vmatmul.f32.gmra.mxu0 %v1270
      %v1272 = vpop.f32.mrf.mxu0
      %v1273 = vadd.f32 %v1078, %v1272
      %v1274 = vand.u32 %v518, 4294901760
      %v1275 = vsub.f32 %v518, %v1274
      %v1276 = vand.u32 %v1275, 4294901760
      %1277 = vmatmul.f32.gmra.mxu0 %v1276
      %v1278 = vpop.f32.mrf.mxu0
      %v1279 = vadd.f32 %v1083, %v1278
      %v1280 = vand.u32 %v520, 4294901760
      %v1281 = vsub.f32 %v520, %v1280
      %v1282 = vand.u32 %v1281, 4294901760
      %1283 = vmatmul.f32.gmra.mxu0 %v1282
      %v1284 = vpop.f32.mrf.mxu0
      %v1285 = vadd.f32 %v1088, %v1284
      %v1286 = vand.u32 %v522, 4294901760
      %v1287 = vsub.f32 %v522, %v1286
      %v1288 = vand.u32 %v1287, 4294901760
      %1289 = vmatmul.f32.gmra.mxu0 %v1288
      %v1290 = vpop.f32.mrf.mxu0
      %v1291 = vadd.f32 %v1093, %v1290
      %v1292 = vand.u32 %v524, 4294901760
      %v1293 = vsub.f32 %v524, %v1292
      %v1294 = vand.u32 %v1293, 4294901760
      %1295 = vmatmul.f32.gmra.mxu0 %v1294
      %v1296 = vpop.f32.mrf.mxu0
      %v1297 = vadd.f32 %v1098, %v1296
      %v1298 = vand.u32 %v526, 4294901760
      %v1299 = vsub.f32 %v526, %v1298
      %v1300 = vand.u32 %v1299, 4294901760
      %1301 = vmatmul.f32.gmra.mxu0 %v1300
      %v1302 = vpop.f32.mrf.mxu0
      %v1303 = vadd.f32 %v1103, %v1302
      %v1304 = vand.u32 %v528, 4294901760
      %v1305 = vsub.f32 %v528, %v1304
      %v1306 = vand.u32 %v1305, 4294901760
      %1307 = vmatmul.f32.gmra.mxu0 %v1306
      %v1308 = vpop.f32.mrf.mxu0
      %v1309 = vadd.f32 %v1108, %v1308
      %v1310 = vand.u32 %v530, 4294901760
      %v1311 = vsub.f32 %v530, %v1310
      %v1312 = vand.u32 %v1311, 4294901760
      %1313 = vmatmul.f32.gmra.mxu0 %v1312
      %v1314 = vpop.f32.mrf.mxu0
      %v1315 = vadd.f32 %v1113, %v1314
      %v1316 = vand.u32 %v532, 4294901760
      %v1317 = vsub.f32 %v532, %v1316
      %v1318 = vand.u32 %v1317, 4294901760
      %1319 = vmatmul.f32.gmra.mxu0 %v1318
      %v1320 = vpop.f32.mrf.mxu0
      %v1321 = vadd.f32 %v1118, %v1320
      %v1322 = vand.u32 %v534, 4294901760
      %v1323 = vsub.f32 %v534, %v1322
      %v1324 = vand.u32 %v1323, 4294901760
      %1325 = vmatmul.f32.gmra.mxu0 %v1324
      %v1326 = vpop.f32.mrf.mxu0
      %v1327 = vadd.f32 %v1123, %v1326
      %v1328 = vand.u32 %v536, 4294901760
      %v1329 = vsub.f32 %v536, %v1328
      %v1330 = vand.u32 %v1329, 4294901760
      %1331 = vmatmul.f32.gmra.mxu0 %v1330
      %v1332 = vpop.f32.mrf.mxu0
      %v1333 = vadd.f32 %v1128, %v1332
      %v1334 = vand.u32 %v538, 4294901760
      %v1335 = vsub.f32 %v538, %v1334
      %v1336 = vand.u32 %v1335, 4294901760
      %1337 = vmatmul.f32.gmra.mxu0 %v1336
      %v1338 = vpop.f32.mrf.mxu0
      %v1339 = vadd.f32 %v1133, %v1338
      %v1340 = vand.u32 %v540, 4294901760
      %v1341 = vsub.f32 %v540, %v1340
      %v1342 = vand.u32 %v1341, 4294901760
      %1343 = vmatmul.f32.gmra.mxu0 %v1342
      %v1344 = vpop.f32.mrf.mxu0
      %v1345 = vadd.f32 %v1138, %v1344
      %v1346 = vand.u32 %v542, 4294901760
      %v1347 = vsub.f32 %v542, %v1346
      %v1348 = vand.u32 %v1347, 4294901760
      %1349 = vmatmul.f32.gmra.mxu0 %v1348
      %v1350 = vpop.f32.mrf.mxu0
      %v1351 = vadd.f32 %v1143, %v1350
      %v1352 = vand.u32 %v544, 4294901760
      %v1353 = vsub.f32 %v544, %v1352
      %v1354 = vand.u32 %v1353, 4294901760
      %1355 = vmatmul.f32.gmra.mxu0 %v1354
      %v1356 = vpop.f32.mrf.mxu0
      %v1357 = vadd.f32 %v1148, %v1356
      %v1358 = vand.u32 %v546, 4294901760
      %v1359 = vsub.f32 %v546, %v1358
      %v1360 = vand.u32 %v1359, 4294901760
      %1361 = vmatmul.f32.gmra.mxu0 %v1360
      %v1362 = vpop.f32.mrf.mxu0
      %v1363 = vadd.f32 %v1153, %v1362
      %1364 = vdwg.mxu0
      %1365 = vmatpush.msra.mxu0 0.0
      %1366 = vmatpush.msra.mxu0 0.0
      %1367 = vmatpush.msra.mxu0 0.0
      %1368 = vmatpush.msra.mxu0 0.0
      %1369 = vmatpush.msra.mxu0 0.0
      %1370 = vmatpush.msra.mxu0 0.0
      %1371 = vmatpush.msra.mxu0 0.0
      %1372 = vmatpush.msra.mxu0 0.0
      %1373 = vmatpush.msra.mxu0 0.0
      %1374 = vmatpush.msra.mxu0 0.0
      %1375 = vmatpush.msra.mxu0 0.0
      %1376 = vmatpush.msra.mxu0 0.0
      %1377 = vmatpush.msra.mxu0 0.0
      %1378 = vmatpush.msra.mxu0 0.0
      %1379 = vmatpush.msra.mxu0 0.0
      %v1380 = vand.u32 %v550, 4294901760
      %v1381 = vsub.f32 %v550, %v1380
      %v1382 = vand.u32 %v1381, 4294901760
      %1383 = vmatpush.msra.mxu0 %v1382
      %v1384 = vand.u32 %v484, 4294901760
      %1385 = vmatmul.f32.gmra.mxu0 %v1384
      %v1386 = vpop.f32.mrf.mxu0
      %v1387 = vadd.f32 %v1177, %v1386
      %v1388 = vand.u32 %v486, 4294901760
      %1389 = vmatmul.f32.gmra.mxu0 %v1388
      %v1390 = vpop.f32.mrf.mxu0
      %v1391 = vadd.f32 %v1183, %v1390
      %v1392 = vand.u32 %v488, 4294901760
      %1393 = vmatmul.f32.gmra.mxu0 %v1392
      %v1394 = vpop.f32.mrf.mxu0
      %v1395 = vadd.f32 %v1189, %v1394
      %v1396 = vand.u32 %v490, 4294901760
      %1397 = vmatmul.f32.gmra.mxu0 %v1396
      %v1398 = vpop.f32.mrf.mxu0
      %v1399 = vadd.f32 %v1195, %v1398
      %v1400 = vand.u32 %v492, 4294901760
      %1401 = vmatmul.f32.gmra.mxu0 %v1400
      %v1402 = vpop.f32.mrf.mxu0
      %v1403 = vadd.f32 %v1201, %v1402
      %v1404 = vand.u32 %v494, 4294901760
      %1405 = vmatmul.f32.gmra.mxu0 %v1404
      %v1406 = vpop.f32.mrf.mxu0
      %v1407 = vadd.f32 %v1207, %v1406
      %v1408 = vand.u32 %v496, 4294901760
      %1409 = vmatmul.f32.gmra.mxu0 %v1408
      %v1410 = vpop.f32.mrf.mxu0
      %v1411 = vadd.f32 %v1213, %v1410
      %v1412 = vand.u32 %v498, 4294901760
      %1413 = vmatmul.f32.gmra.mxu0 %v1412
      %v1414 = vpop.f32.mrf.mxu0
      %v1415 = vadd.f32 %v1219, %v1414
      %v1416 = vand.u32 %v500, 4294901760
      %1417 = vmatmul.f32.gmra.mxu0 %v1416
      %v1418 = vpop.f32.mrf.mxu0
      %v1419 = vadd.f32 %v1225, %v1418
      %v1420 = vand.u32 %v502, 4294901760
      %1421 = vmatmul.f32.gmra.mxu0 %v1420
      %v1422 = vpop.f32.mrf.mxu0
      %v1423 = vadd.f32 %v1231, %v1422
      %v1424 = vand.u32 %v504, 4294901760
      %1425 = vmatmul.f32.gmra.mxu0 %v1424
      %v1426 = vpop.f32.mrf.mxu0
      %v1427 = vadd.f32 %v1237, %v1426
      %v1428 = vand.u32 %v506, 4294901760
      %1429 = vmatmul.f32.gmra.mxu0 %v1428
      %v1430 = vpop.f32.mrf.mxu0
      %v1431 = vadd.f32 %v1243, %v1430
      %v1432 = vand.u32 %v508, 4294901760
      %1433 = vmatmul.f32.gmra.mxu0 %v1432
      %v1434 = vpop.f32.mrf.mxu0
      %v1435 = vadd.f32 %v1249, %v1434
      %v1436 = vand.u32 %v510, 4294901760
      %1437 = vmatmul.f32.gmra.mxu0 %v1436
      %v1438 = vpop.f32.mrf.mxu0
      %v1439 = vadd.f32 %v1255, %v1438
      %v1440 = vand.u32 %v512, 4294901760
      %1441 = vmatmul.f32.gmra.mxu0 %v1440
      %v1442 = vpop.f32.mrf.mxu0
      %v1443 = vadd.f32 %v1261, %v1442
      %v1444 = vand.u32 %v514, 4294901760
      %1445 = vmatmul.f32.gmra.mxu0 %v1444
      %v1446 = vpop.f32.mrf.mxu0
      %v1447 = vadd.f32 %v1267, %v1446
      %v1448 = vand.u32 %v516, 4294901760
      %1449 = vmatmul.f32.gmra.mxu0 %v1448
      %v1450 = vpop.f32.mrf.mxu0
      %v1451 = vadd.f32 %v1273, %v1450
      %v1452 = vand.u32 %v518, 4294901760
      %1453 = vmatmul.f32.gmra.mxu0 %v1452
      %v1454 = vpop.f32.mrf.mxu0
      %v1455 = vadd.f32 %v1279, %v1454
      %v1456 = vand.u32 %v520, 4294901760
      %1457 = vmatmul.f32.gmra.mxu0 %v1456
      %v1458 = vpop.f32.mrf.mxu0
      %v1459 = vadd.f32 %v1285, %v1458
      %v1460 = vand.u32 %v522, 4294901760
      %1461 = vmatmul.f32.gmra.mxu0 %v1460
      %v1462 = vpop.f32.mrf.mxu0
      %v1463 = vadd.f32 %v1291, %v1462
      %v1464 = vand.u32 %v524, 4294901760
      %1465 = vmatmul.f32.gmra.mxu0 %v1464
      %v1466 = vpop.f32.mrf.mxu0
      %v1467 = vadd.f32 %v1297, %v1466
      %v1468 = vand.u32 %v526, 4294901760
      %1469 = vmatmul.f32.gmra.mxu0 %v1468
      %v1470 = vpop.f32.mrf.mxu0
      %v1471 = vadd.f32 %v1303, %v1470
      %v1472 = vand.u32 %v528, 4294901760
      %1473 = vmatmul.f32.gmra.mxu0 %v1472
      %v1474 = vpop.f32.mrf.mxu0
      %v1475 = vadd.f32 %v1309, %v1474
      %v1476 = vand.u32 %v530, 4294901760
      %1477 = vmatmul.f32.gmra.mxu0 %v1476
      %v1478 = vpop.f32.mrf.mxu0
      %v1479 = vadd.f32 %v1315, %v1478
      %v1480 = vand.u32 %v532, 4294901760
      %1481 = vmatmul.f32.gmra.mxu0 %v1480
      %v1482 = vpop.f32.mrf.mxu0
      %v1483 = vadd.f32 %v1321, %v1482
      %v1484 = vand.u32 %v534, 4294901760
      %1485 = vmatmul.f32.gmra.mxu0 %v1484
      %v1486 = vpop.f32.mrf.mxu0
      %v1487 = vadd.f32 %v1327, %v1486
      %v1488 = vand.u32 %v536, 4294901760
      %1489 = vmatmul.f32.gmra.mxu0 %v1488
      %v1490 = vpop.f32.mrf.mxu0
      %v1491 = vadd.f32 %v1333, %v1490
      %v1492 = vand.u32 %v538, 4294901760
      %1493 = vmatmul.f32.gmra.mxu0 %v1492
      %v1494 = vpop.f32.mrf.mxu0
      %v1495 = vadd.f32 %v1339, %v1494
      %v1496 = vand.u32 %v540, 4294901760
      %1497 = vmatmul.f32.gmra.mxu0 %v1496
      %v1498 = vpop.f32.mrf.mxu0
      %v1499 = vadd.f32 %v1345, %v1498
      %v1500 = vand.u32 %v542, 4294901760
      %1501 = vmatmul.f32.gmra.mxu0 %v1500
      %v1502 = vpop.f32.mrf.mxu0
      %v1503 = vadd.f32 %v1351, %v1502
      %v1504 = vand.u32 %v544, 4294901760
      %1505 = vmatmul.f32.gmra.mxu0 %v1504
      %v1506 = vpop.f32.mrf.mxu0
      %v1507 = vadd.f32 %v1357, %v1506
      %v1508 = vand.u32 %v546, 4294901760
      %1509 = vmatmul.f32.gmra.mxu0 %v1508
      %v1510 = vpop.f32.mrf.mxu0
      %v1511 = vadd.f32 %v1363, %v1510
      %1512 = vdwg.mxu0
      %1513 = vmatpush.msra.mxu0 0.0
      %1514 = vmatpush.msra.mxu0 0.0
      %1515 = vmatpush.msra.mxu0 0.0
      %1516 = vmatpush.msra.mxu0 0.0
      %1517 = vmatpush.msra.mxu0 0.0
      %1518 = vmatpush.msra.mxu0 0.0
      %1519 = vmatpush.msra.mxu0 0.0
      %1520 = vmatpush.msra.mxu0 0.0
      %1521 = vmatpush.msra.mxu0 0.0
      %1522 = vmatpush.msra.mxu0 0.0
      %1523 = vmatpush.msra.mxu0 0.0
      %1524 = vmatpush.msra.mxu0 0.0
      %1525 = vmatpush.msra.mxu0 0.0
      %1526 = vmatpush.msra.mxu0 0.0
      %1527 = vmatpush.msra.mxu0 0.0
      %v1528 = vand.u32 %v550, 4294901760
      %1529 = vmatpush.msra.mxu0 %v1528
      %v1530 = vand.u32 %v484, 4294901760
      %1531 = vmatmul.f32.gmra.mxu0 %v1530
      %v1532 = vpop.f32.mrf.mxu0
      %v1533 = vadd.f32 %v1387, %v1532
      %v1534 = vand.u32 %v486, 4294901760
      %1535 = vmatmul.f32.gmra.mxu0 %v1534
      %v1536 = vpop.f32.mrf.mxu0
      %v1537 = vadd.f32 %v1391, %v1536
      %v1538 = vand.u32 %v488, 4294901760
      %1539 = vmatmul.f32.gmra.mxu0 %v1538
      %v1540 = vpop.f32.mrf.mxu0
      %v1541 = vadd.f32 %v1395, %v1540
      %v1542 = vand.u32 %v490, 4294901760
      %1543 = vmatmul.f32.gmra.mxu0 %v1542
      %v1544 = vpop.f32.mrf.mxu0
      %v1545 = vadd.f32 %v1399, %v1544
      %v1546 = vand.u32 %v492, 4294901760
      %1547 = vmatmul.f32.gmra.mxu0 %v1546
      %v1548 = vpop.f32.mrf.mxu0
      %v1549 = vadd.f32 %v1403, %v1548
      %v1550 = vand.u32 %v494, 4294901760
      %1551 = vmatmul.f32.gmra.mxu0 %v1550
      %v1552 = vpop.f32.mrf.mxu0
      %v1553 = vadd.f32 %v1407, %v1552
      %v1554 = vand.u32 %v496, 4294901760
      %1555 = vmatmul.f32.gmra.mxu0 %v1554
      %v1556 = vpop.f32.mrf.mxu0
      %v1557 = vadd.f32 %v1411, %v1556
      %v1558 = vand.u32 %v498, 4294901760
      %1559 = vmatmul.f32.gmra.mxu0 %v1558
      %v1560 = vpop.f32.mrf.mxu0
      %v1561 = vadd.f32 %v1415, %v1560
      %v1562 = vand.u32 %v500, 4294901760
      %1563 = vmatmul.f32.gmra.mxu0 %v1562
      %v1564 = vpop.f32.mrf.mxu0
      %v1565 = vadd.f32 %v1419, %v1564
      %v1566 = vand.u32 %v502, 4294901760
      %1567 = vmatmul.f32.gmra.mxu0 %v1566
      %v1568 = vpop.f32.mrf.mxu0
      %v1569 = vadd.f32 %v1423, %v1568
      %v1570 = vand.u32 %v504, 4294901760
      %1571 = vmatmul.f32.gmra.mxu0 %v1570
      %v1572 = vpop.f32.mrf.mxu0
      %v1573 = vadd.f32 %v1427, %v1572
      %v1574 = vand.u32 %v506, 4294901760
      %1575 = vmatmul.f32.gmra.mxu0 %v1574
      %v1576 = vpop.f32.mrf.mxu0
      %v1577 = vadd.f32 %v1431, %v1576
      %v1578 = vand.u32 %v508, 4294901760
      %1579 = vmatmul.f32.gmra.mxu0 %v1578
      %v1580 = vpop.f32.mrf.mxu0
      %v1581 = vadd.f32 %v1435, %v1580
      %v1582 = vand.u32 %v510, 4294901760
      %1583 = vmatmul.f32.gmra.mxu0 %v1582
      %v1584 = vpop.f32.mrf.mxu0
      %v1585 = vadd.f32 %v1439, %v1584
      %v1586 = vand.u32 %v512, 4294901760
      %1587 = vmatmul.f32.gmra.mxu0 %v1586
      %v1588 = vpop.f32.mrf.mxu0
      %v1589 = vadd.f32 %v1443, %v1588
      %v1590 = vand.u32 %v514, 4294901760
      %1591 = vmatmul.f32.gmra.mxu0 %v1590
      %v1592 = vpop.f32.mrf.mxu0
      %v1593 = vadd.f32 %v1447, %v1592
      %v1594 = vand.u32 %v516, 4294901760
      %1595 = vmatmul.f32.gmra.mxu0 %v1594
      %v1596 = vpop.f32.mrf.mxu0
      %v1597 = vadd.f32 %v1451, %v1596
      %v1598 = vand.u32 %v518, 4294901760
      %1599 = vmatmul.f32.gmra.mxu0 %v1598
      %v1600 = vpop.f32.mrf.mxu0
      %v1601 = vadd.f32 %v1455, %v1600
      %v1602 = vand.u32 %v520, 4294901760
      %1603 = vmatmul.f32.gmra.mxu0 %v1602
      %v1604 = vpop.f32.mrf.mxu0
      %v1605 = vadd.f32 %v1459, %v1604
      %v1606 = vand.u32 %v522, 4294901760
      %1607 = vmatmul.f32.gmra.mxu0 %v1606
      %v1608 = vpop.f32.mrf.mxu0
      %v1609 = vadd.f32 %v1463, %v1608
      %v1610 = vand.u32 %v524, 4294901760
      %1611 = vmatmul.f32.gmra.mxu0 %v1610
      %v1612 = vpop.f32.mrf.mxu0
      %v1613 = vadd.f32 %v1467, %v1612
      %v1614 = vand.u32 %v526, 4294901760
      %1615 = vmatmul.f32.gmra.mxu0 %v1614
      %v1616 = vpop.f32.mrf.mxu0
      %v1617 = vadd.f32 %v1471, %v1616
      %v1618 = vand.u32 %v528, 4294901760
      %1619 = vmatmul.f32.gmra.mxu0 %v1618
      %v1620 = vpop.f32.mrf.mxu0
      %v1621 = vadd.f32 %v1475, %v1620
      %v1622 = vand.u32 %v530, 4294901760
      %1623 = vmatmul.f32.gmra.mxu0 %v1622
      %v1624 = vpop.f32.mrf.mxu0
      %v1625 = vadd.f32 %v1479, %v1624
      %v1626 = vand.u32 %v532, 4294901760
      %1627 = vmatmul.f32.gmra.mxu0 %v1626
      %v1628 = vpop.f32.mrf.mxu0
      %v1629 = vadd.f32 %v1483, %v1628
      %v1630 = vand.u32 %v534, 4294901760
      %1631 = vmatmul.f32.gmra.mxu0 %v1630
      %v1632 = vpop.f32.mrf.mxu0
      %v1633 = vadd.f32 %v1487, %v1632
      %v1634 = vand.u32 %v536, 4294901760
      %1635 = vmatmul.f32.gmra.mxu0 %v1634
      %v1636 = vpop.f32.mrf.mxu0
      %v1637 = vadd.f32 %v1491, %v1636
      %v1638 = vand.u32 %v538, 4294901760
      %1639 = vmatmul.f32.gmra.mxu0 %v1638
      %v1640 = vpop.f32.mrf.mxu0
      %v1641 = vadd.f32 %v1495, %v1640
      %v1642 = vand.u32 %v540, 4294901760
      %1643 = vmatmul.f32.gmra.mxu0 %v1642
      %v1644 = vpop.f32.mrf.mxu0
      %v1645 = vadd.f32 %v1499, %v1644
      %v1646 = vand.u32 %v542, 4294901760
      %1647 = vmatmul.f32.gmra.mxu0 %v1646
      %v1648 = vpop.f32.mrf.mxu0
      %v1649 = vadd.f32 %v1503, %v1648
      %v1650 = vand.u32 %v544, 4294901760
      %1651 = vmatmul.f32.gmra.mxu0 %v1650
      %v1652 = vpop.f32.mrf.mxu0
      %v1653 = vadd.f32 %v1507, %v1652
      %v1654 = vand.u32 %v546, 4294901760
      %1655 = vmatmul.f32.gmra.mxu0 %v1654
      %v1656 = vpop.f32.mrf.mxu0
      %v1657 = vadd.f32 %v1511, %v1656
      %1658 = vdwg.mxu0
      %v1659 = vsel %vm171, %v292, 0
      %v1661 = vsel %vm171, %v293, 0
      %v1663 = vsel %vm171, %v295, 0
      %v1665 = vsel %vm171, %v296, 0
      %v1667 = vsel %vm171, %v298, 0
      %v1669 = vsel %vm171, %v299, 0
      %v1671 = vsel %vm171, %v301, 0
      %v1673 = vsel %vm171, %v302, 0
      %v1675 = vsel %vm171, %v304, 0
      %v1677 = vsel %vm171, %v305, 0
      %v1679 = vsel %vm171, %v307, 0
      %v1681 = vsel %vm171, %v308, 0
      %v1683 = vsel %vm171, %v310, 0
      %v1685 = vsel %vm171, %v311, 0
      %v1687 = vsel %vm171, %v313, 0
      %v1689 = vsel %vm171, %v314, 0
      %v1691 = vsel %vm171, %v316, 0
      %v1693 = vsel %vm171, %v317, 0
      %v1695 = vsel %vm171, %v319, 0
      %v1697 = vsel %vm171, %v320, 0
      %v1699 = vsel %vm171, %v322, 0
      %v1701 = vsel %vm171, %v323, 0
      %v1703 = vsel %vm171, %v325, 0
      %v1705 = vsel %vm171, %v326, 0
      %v1707 = vsel %vm171, %v328, 0
      %v1709 = vsel %vm171, %v329, 0
      %v1711 = vsel %vm171, %v331, 0
      %v1713 = vsel %vm171, %v332, 0
      %v1715 = vsel %vm171, %v334, 0
      %v1717 = vsel %vm171, %v335, 0
      %v1719 = vsel %vm171, %v337, 0
      %v1721 = vsel %vm171, %v338, 0
      %v1724 = vsel %vm548, %v346, 0
      %1726 = vmatpush.msra.mxu0 0.0
      %1727 = vmatpush.msra.mxu0 0.0
      %1728 = vmatpush.msra.mxu0 0.0
      %1729 = vmatpush.msra.mxu0 0.0
      %1730 = vmatpush.msra.mxu0 0.0
      %1731 = vmatpush.msra.mxu0 0.0
      %1732 = vmatpush.msra.mxu0 0.0
      %1733 = vmatpush.msra.mxu0 0.0
      %1734 = vmatpush.msra.mxu0 0.0
      %1735 = vmatpush.msra.mxu0 0.0
      %1736 = vmatpush.msra.mxu0 0.0
      %1737 = vmatpush.msra.mxu0 0.0
      %1738 = vmatpush.msra.mxu0 0.0
      %1739 = vmatpush.msra.mxu0 0.0
      %1740 = vmatpush.msra.mxu0 0.0
      %v1741 = vand.u32 %v1724, 4294901760
      %1742 = vmatpush.msra.mxu0 %v1741
      %v1743 = vand.u32 %v1659, 4294901760
      %v1744 = vsub.f32 %v1659, %v1743
      %v1745 = vand.u32 %v1744, 4294901760
      %v1746 = vsub.f32 %v1744, %v1745
      %v1747 = vand.u32 %v1746, 4294901760
      %1748 = vmatmul.f32.gmra.mxu0 %v1747
      %v1749 = vpop.f32.mrf.mxu0
      %v1750 = vadd.f32 %v1533, %v1749
      %v1751 = vand.u32 %v1661, 4294901760
      %v1752 = vsub.f32 %v1661, %v1751
      %v1753 = vand.u32 %v1752, 4294901760
      %v1754 = vsub.f32 %v1752, %v1753
      %v1755 = vand.u32 %v1754, 4294901760
      %1756 = vmatmul.f32.gmra.mxu0 %v1755
      %v1757 = vpop.f32.mrf.mxu0
      %v1758 = vadd.f32 %v1537, %v1757
      %v1759 = vand.u32 %v1663, 4294901760
      %v1760 = vsub.f32 %v1663, %v1759
      %v1761 = vand.u32 %v1760, 4294901760
      %v1762 = vsub.f32 %v1760, %v1761
      %v1763 = vand.u32 %v1762, 4294901760
      %1764 = vmatmul.f32.gmra.mxu0 %v1763
      %v1765 = vpop.f32.mrf.mxu0
      %v1766 = vadd.f32 %v1541, %v1765
      %v1767 = vand.u32 %v1665, 4294901760
      %v1768 = vsub.f32 %v1665, %v1767
      %v1769 = vand.u32 %v1768, 4294901760
      %v1770 = vsub.f32 %v1768, %v1769
      %v1771 = vand.u32 %v1770, 4294901760
      %1772 = vmatmul.f32.gmra.mxu0 %v1771
      %v1773 = vpop.f32.mrf.mxu0
      %v1774 = vadd.f32 %v1545, %v1773
      %v1775 = vand.u32 %v1667, 4294901760
      %v1776 = vsub.f32 %v1667, %v1775
      %v1777 = vand.u32 %v1776, 4294901760
      %v1778 = vsub.f32 %v1776, %v1777
      %v1779 = vand.u32 %v1778, 4294901760
      %1780 = vmatmul.f32.gmra.mxu0 %v1779
      %v1781 = vpop.f32.mrf.mxu0
      %v1782 = vadd.f32 %v1549, %v1781
      %v1783 = vand.u32 %v1669, 4294901760
      %v1784 = vsub.f32 %v1669, %v1783
      %v1785 = vand.u32 %v1784, 4294901760
      %v1786 = vsub.f32 %v1784, %v1785
      %v1787 = vand.u32 %v1786, 4294901760
      %1788 = vmatmul.f32.gmra.mxu0 %v1787
      %v1789 = vpop.f32.mrf.mxu0
      %v1790 = vadd.f32 %v1553, %v1789
      %v1791 = vand.u32 %v1671, 4294901760
      %v1792 = vsub.f32 %v1671, %v1791
      %v1793 = vand.u32 %v1792, 4294901760
      %v1794 = vsub.f32 %v1792, %v1793
      %v1795 = vand.u32 %v1794, 4294901760
      %1796 = vmatmul.f32.gmra.mxu0 %v1795
      %v1797 = vpop.f32.mrf.mxu0
      %v1798 = vadd.f32 %v1557, %v1797
      %v1799 = vand.u32 %v1673, 4294901760
      %v1800 = vsub.f32 %v1673, %v1799
      %v1801 = vand.u32 %v1800, 4294901760
      %v1802 = vsub.f32 %v1800, %v1801
      %v1803 = vand.u32 %v1802, 4294901760
      %1804 = vmatmul.f32.gmra.mxu0 %v1803
      %v1805 = vpop.f32.mrf.mxu0
      %v1806 = vadd.f32 %v1561, %v1805
      %v1807 = vand.u32 %v1675, 4294901760
      %v1808 = vsub.f32 %v1675, %v1807
      %v1809 = vand.u32 %v1808, 4294901760
      %v1810 = vsub.f32 %v1808, %v1809
      %v1811 = vand.u32 %v1810, 4294901760
      %1812 = vmatmul.f32.gmra.mxu0 %v1811
      %v1813 = vpop.f32.mrf.mxu0
      %v1814 = vadd.f32 %v1565, %v1813
      %v1815 = vand.u32 %v1677, 4294901760
      %v1816 = vsub.f32 %v1677, %v1815
      %v1817 = vand.u32 %v1816, 4294901760
      %v1818 = vsub.f32 %v1816, %v1817
      %v1819 = vand.u32 %v1818, 4294901760
      %1820 = vmatmul.f32.gmra.mxu0 %v1819
      %v1821 = vpop.f32.mrf.mxu0
      %v1822 = vadd.f32 %v1569, %v1821
      %v1823 = vand.u32 %v1679, 4294901760
      %v1824 = vsub.f32 %v1679, %v1823
      %v1825 = vand.u32 %v1824, 4294901760
      %v1826 = vsub.f32 %v1824, %v1825
      %v1827 = vand.u32 %v1826, 4294901760
      %1828 = vmatmul.f32.gmra.mxu0 %v1827
      %v1829 = vpop.f32.mrf.mxu0
      %v1830 = vadd.f32 %v1573, %v1829
      %v1831 = vand.u32 %v1681, 4294901760
      %v1832 = vsub.f32 %v1681, %v1831
      %v1833 = vand.u32 %v1832, 4294901760
      %v1834 = vsub.f32 %v1832, %v1833
      %v1835 = vand.u32 %v1834, 4294901760
      %1836 = vmatmul.f32.gmra.mxu0 %v1835
      %v1837 = vpop.f32.mrf.mxu0
      %v1838 = vadd.f32 %v1577, %v1837
      %v1839 = vand.u32 %v1683, 4294901760
      %v1840 = vsub.f32 %v1683, %v1839
      %v1841 = vand.u32 %v1840, 4294901760
      %v1842 = vsub.f32 %v1840, %v1841
      %v1843 = vand.u32 %v1842, 4294901760
      %1844 = vmatmul.f32.gmra.mxu0 %v1843
      %v1845 = vpop.f32.mrf.mxu0
      %v1846 = vadd.f32 %v1581, %v1845
      %v1847 = vand.u32 %v1685, 4294901760
      %v1848 = vsub.f32 %v1685, %v1847
      %v1849 = vand.u32 %v1848, 4294901760
      %v1850 = vsub.f32 %v1848, %v1849
      %v1851 = vand.u32 %v1850, 4294901760
      %1852 = vmatmul.f32.gmra.mxu0 %v1851
      %v1853 = vpop.f32.mrf.mxu0
      %v1854 = vadd.f32 %v1585, %v1853
      %v1855 = vand.u32 %v1687, 4294901760
      %v1856 = vsub.f32 %v1687, %v1855
      %v1857 = vand.u32 %v1856, 4294901760
      %v1858 = vsub.f32 %v1856, %v1857
      %v1859 = vand.u32 %v1858, 4294901760
      %1860 = vmatmul.f32.gmra.mxu0 %v1859
      %v1861 = vpop.f32.mrf.mxu0
      %v1862 = vadd.f32 %v1589, %v1861
      %v1863 = vand.u32 %v1689, 4294901760
      %v1864 = vsub.f32 %v1689, %v1863
      %v1865 = vand.u32 %v1864, 4294901760
      %v1866 = vsub.f32 %v1864, %v1865
      %v1867 = vand.u32 %v1866, 4294901760
      %1868 = vmatmul.f32.gmra.mxu0 %v1867
      %v1869 = vpop.f32.mrf.mxu0
      %v1870 = vadd.f32 %v1593, %v1869
      %v1871 = vand.u32 %v1691, 4294901760
      %v1872 = vsub.f32 %v1691, %v1871
      %v1873 = vand.u32 %v1872, 4294901760
      %v1874 = vsub.f32 %v1872, %v1873
      %v1875 = vand.u32 %v1874, 4294901760
      %1876 = vmatmul.f32.gmra.mxu0 %v1875
      %v1877 = vpop.f32.mrf.mxu0
      %v1878 = vadd.f32 %v1597, %v1877
      %v1879 = vand.u32 %v1693, 4294901760
      %v1880 = vsub.f32 %v1693, %v1879
      %v1881 = vand.u32 %v1880, 4294901760
      %v1882 = vsub.f32 %v1880, %v1881
      %v1883 = vand.u32 %v1882, 4294901760
      %1884 = vmatmul.f32.gmra.mxu0 %v1883
      %v1885 = vpop.f32.mrf.mxu0
      %v1886 = vadd.f32 %v1601, %v1885
      %v1887 = vand.u32 %v1695, 4294901760
      %v1888 = vsub.f32 %v1695, %v1887
      %v1889 = vand.u32 %v1888, 4294901760
      %v1890 = vsub.f32 %v1888, %v1889
      %v1891 = vand.u32 %v1890, 4294901760
      %1892 = vmatmul.f32.gmra.mxu0 %v1891
      %v1893 = vpop.f32.mrf.mxu0
      %v1894 = vadd.f32 %v1605, %v1893
      %v1895 = vand.u32 %v1697, 4294901760
      %v1896 = vsub.f32 %v1697, %v1895
      %v1897 = vand.u32 %v1896, 4294901760
      %v1898 = vsub.f32 %v1896, %v1897
      %v1899 = vand.u32 %v1898, 4294901760
      %1900 = vmatmul.f32.gmra.mxu0 %v1899
      %v1901 = vpop.f32.mrf.mxu0
      %v1902 = vadd.f32 %v1609, %v1901
      %v1903 = vand.u32 %v1699, 4294901760
      %v1904 = vsub.f32 %v1699, %v1903
      %v1905 = vand.u32 %v1904, 4294901760
      %v1906 = vsub.f32 %v1904, %v1905
      %v1907 = vand.u32 %v1906, 4294901760
      %1908 = vmatmul.f32.gmra.mxu0 %v1907
      %v1909 = vpop.f32.mrf.mxu0
      %v1910 = vadd.f32 %v1613, %v1909
      %v1911 = vand.u32 %v1701, 4294901760
      %v1912 = vsub.f32 %v1701, %v1911
      %v1913 = vand.u32 %v1912, 4294901760
      %v1914 = vsub.f32 %v1912, %v1913
      %v1915 = vand.u32 %v1914, 4294901760
      %1916 = vmatmul.f32.gmra.mxu0 %v1915
      %v1917 = vpop.f32.mrf.mxu0
      %v1918 = vadd.f32 %v1617, %v1917
      %v1919 = vand.u32 %v1703, 4294901760
      %v1920 = vsub.f32 %v1703, %v1919
      %v1921 = vand.u32 %v1920, 4294901760
      %v1922 = vsub.f32 %v1920, %v1921
      %v1923 = vand.u32 %v1922, 4294901760
      %1924 = vmatmul.f32.gmra.mxu0 %v1923
      %v1925 = vpop.f32.mrf.mxu0
      %v1926 = vadd.f32 %v1621, %v1925
      %v1927 = vand.u32 %v1705, 4294901760
      %v1928 = vsub.f32 %v1705, %v1927
      %v1929 = vand.u32 %v1928, 4294901760
      %v1930 = vsub.f32 %v1928, %v1929
      %v1931 = vand.u32 %v1930, 4294901760
      %1932 = vmatmul.f32.gmra.mxu0 %v1931
      %v1933 = vpop.f32.mrf.mxu0
      %v1934 = vadd.f32 %v1625, %v1933
      %v1935 = vand.u32 %v1707, 4294901760
      %v1936 = vsub.f32 %v1707, %v1935
      %v1937 = vand.u32 %v1936, 4294901760
      %v1938 = vsub.f32 %v1936, %v1937
      %v1939 = vand.u32 %v1938, 4294901760
      %1940 = vmatmul.f32.gmra.mxu0 %v1939
      %v1941 = vpop.f32.mrf.mxu0
      %v1942 = vadd.f32 %v1629, %v1941
      %v1943 = vand.u32 %v1709, 4294901760
      %v1944 = vsub.f32 %v1709, %v1943
      %v1945 = vand.u32 %v1944, 4294901760
      %v1946 = vsub.f32 %v1944, %v1945
      %v1947 = vand.u32 %v1946, 4294901760
      %1948 = vmatmul.f32.gmra.mxu0 %v1947
      %v1949 = vpop.f32.mrf.mxu0
      %v1950 = vadd.f32 %v1633, %v1949
      %v1951 = vand.u32 %v1711, 4294901760
      %v1952 = vsub.f32 %v1711, %v1951
      %v1953 = vand.u32 %v1952, 4294901760
      %v1954 = vsub.f32 %v1952, %v1953
      %v1955 = vand.u32 %v1954, 4294901760
      %1956 = vmatmul.f32.gmra.mxu0 %v1955
      %v1957 = vpop.f32.mrf.mxu0
      %v1958 = vadd.f32 %v1637, %v1957
      %v1959 = vand.u32 %v1713, 4294901760
      %v1960 = vsub.f32 %v1713, %v1959
      %v1961 = vand.u32 %v1960, 4294901760
      %v1962 = vsub.f32 %v1960, %v1961
      %v1963 = vand.u32 %v1962, 4294901760
      %1964 = vmatmul.f32.gmra.mxu0 %v1963
      %v1965 = vpop.f32.mrf.mxu0
      %v1966 = vadd.f32 %v1641, %v1965
      %v1967 = vand.u32 %v1715, 4294901760
      %v1968 = vsub.f32 %v1715, %v1967
      %v1969 = vand.u32 %v1968, 4294901760
      %v1970 = vsub.f32 %v1968, %v1969
      %v1971 = vand.u32 %v1970, 4294901760
      %1972 = vmatmul.f32.gmra.mxu0 %v1971
      %v1973 = vpop.f32.mrf.mxu0
      %v1974 = vadd.f32 %v1645, %v1973
      %v1975 = vand.u32 %v1717, 4294901760
      %v1976 = vsub.f32 %v1717, %v1975
      %v1977 = vand.u32 %v1976, 4294901760
      %v1978 = vsub.f32 %v1976, %v1977
      %v1979 = vand.u32 %v1978, 4294901760
      %1980 = vmatmul.f32.gmra.mxu0 %v1979
      %v1981 = vpop.f32.mrf.mxu0
      %v1982 = vadd.f32 %v1649, %v1981
      %v1983 = vand.u32 %v1719, 4294901760
      %v1984 = vsub.f32 %v1719, %v1983
      %v1985 = vand.u32 %v1984, 4294901760
      %v1986 = vsub.f32 %v1984, %v1985
      %v1987 = vand.u32 %v1986, 4294901760
      %1988 = vmatmul.f32.gmra.mxu0 %v1987
      %v1989 = vpop.f32.mrf.mxu0
      %v1990 = vadd.f32 %v1653, %v1989
      %v1991 = vand.u32 %v1721, 4294901760
      %v1992 = vsub.f32 %v1721, %v1991
      %v1993 = vand.u32 %v1992, 4294901760
      %v1994 = vsub.f32 %v1992, %v1993
      %v1995 = vand.u32 %v1994, 4294901760
      %1996 = vmatmul.f32.gmra.mxu0 %v1995
      %v1997 = vpop.f32.mrf.mxu0
      %v1998 = vadd.f32 %v1657, %v1997
      %1999 = vdwg.mxu0
      %2000 = vmatpush.msra.mxu0 0.0
      %2001 = vmatpush.msra.mxu0 0.0
      %2002 = vmatpush.msra.mxu0 0.0
      %2003 = vmatpush.msra.mxu0 0.0
      %2004 = vmatpush.msra.mxu0 0.0
      %2005 = vmatpush.msra.mxu0 0.0
      %2006 = vmatpush.msra.mxu0 0.0
      %2007 = vmatpush.msra.mxu0 0.0
      %2008 = vmatpush.msra.mxu0 0.0
      %2009 = vmatpush.msra.mxu0 0.0
      %2010 = vmatpush.msra.mxu0 0.0
      %2011 = vmatpush.msra.mxu0 0.0
      %2012 = vmatpush.msra.mxu0 0.0
      %2013 = vmatpush.msra.mxu0 0.0
      %2014 = vmatpush.msra.mxu0 0.0
      %v2015 = vand.u32 %v1724, 4294901760
      %v2016 = vsub.f32 %v1724, %v2015
      %v2017 = vand.u32 %v2016, 4294901760
      %v2018 = vsub.f32 %v2016, %v2017
      %v2019 = vand.u32 %v2018, 4294901760
      %2020 = vmatpush.msra.mxu0 %v2019
      %v2021 = vand.u32 %v1659, 4294901760
      %2022 = vmatmul.f32.gmra.mxu0 %v2021
      %v2023 = vpop.f32.mrf.mxu0
      %v2024 = vadd.f32 %v1750, %v2023
      %v2025 = vand.u32 %v1661, 4294901760
      %2026 = vmatmul.f32.gmra.mxu0 %v2025
      %v2027 = vpop.f32.mrf.mxu0
      %v2028 = vadd.f32 %v1758, %v2027
      %v2029 = vand.u32 %v1663, 4294901760
      %2030 = vmatmul.f32.gmra.mxu0 %v2029
      %v2031 = vpop.f32.mrf.mxu0
      %v2032 = vadd.f32 %v1766, %v2031
      %v2033 = vand.u32 %v1665, 4294901760
      %2034 = vmatmul.f32.gmra.mxu0 %v2033
      %v2035 = vpop.f32.mrf.mxu0
      %v2036 = vadd.f32 %v1774, %v2035
      %v2037 = vand.u32 %v1667, 4294901760
      %2038 = vmatmul.f32.gmra.mxu0 %v2037
      %v2039 = vpop.f32.mrf.mxu0
      %v2040 = vadd.f32 %v1782, %v2039
      %v2041 = vand.u32 %v1669, 4294901760
      %2042 = vmatmul.f32.gmra.mxu0 %v2041
      %v2043 = vpop.f32.mrf.mxu0
      %v2044 = vadd.f32 %v1790, %v2043
      %v2045 = vand.u32 %v1671, 4294901760
      %2046 = vmatmul.f32.gmra.mxu0 %v2045
      %v2047 = vpop.f32.mrf.mxu0
      %v2048 = vadd.f32 %v1798, %v2047
      %v2049 = vand.u32 %v1673, 4294901760
      %2050 = vmatmul.f32.gmra.mxu0 %v2049
      %v2051 = vpop.f32.mrf.mxu0
      %v2052 = vadd.f32 %v1806, %v2051
      %v2053 = vand.u32 %v1675, 4294901760
      %2054 = vmatmul.f32.gmra.mxu0 %v2053
      %v2055 = vpop.f32.mrf.mxu0
      %v2056 = vadd.f32 %v1814, %v2055
      %v2057 = vand.u32 %v1677, 4294901760
      %2058 = vmatmul.f32.gmra.mxu0 %v2057
      %v2059 = vpop.f32.mrf.mxu0
      %v2060 = vadd.f32 %v1822, %v2059
      %v2061 = vand.u32 %v1679, 4294901760
      %2062 = vmatmul.f32.gmra.mxu0 %v2061
      %v2063 = vpop.f32.mrf.mxu0
      %v2064 = vadd.f32 %v1830, %v2063
      %v2065 = vand.u32 %v1681, 4294901760
      %2066 = vmatmul.f32.gmra.mxu0 %v2065
      %v2067 = vpop.f32.mrf.mxu0
      %v2068 = vadd.f32 %v1838, %v2067
      %v2069 = vand.u32 %v1683, 4294901760
      %2070 = vmatmul.f32.gmra.mxu0 %v2069
      %v2071 = vpop.f32.mrf.mxu0
      %v2072 = vadd.f32 %v1846, %v2071
      %v2073 = vand.u32 %v1685, 4294901760
      %2074 = vmatmul.f32.gmra.mxu0 %v2073
      %v2075 = vpop.f32.mrf.mxu0
      %v2076 = vadd.f32 %v1854, %v2075
      %v2077 = vand.u32 %v1687, 4294901760
      %2078 = vmatmul.f32.gmra.mxu0 %v2077
      %v2079 = vpop.f32.mrf.mxu0
      %v2080 = vadd.f32 %v1862, %v2079
      %v2081 = vand.u32 %v1689, 4294901760
      %2082 = vmatmul.f32.gmra.mxu0 %v2081
      %v2083 = vpop.f32.mrf.mxu0
      %v2084 = vadd.f32 %v1870, %v2083
      %v2085 = vand.u32 %v1691, 4294901760
      %2086 = vmatmul.f32.gmra.mxu0 %v2085
      %v2087 = vpop.f32.mrf.mxu0
      %v2088 = vadd.f32 %v1878, %v2087
      %v2089 = vand.u32 %v1693, 4294901760
      %2090 = vmatmul.f32.gmra.mxu0 %v2089
      %v2091 = vpop.f32.mrf.mxu0
      %v2092 = vadd.f32 %v1886, %v2091
      %v2093 = vand.u32 %v1695, 4294901760
      %2094 = vmatmul.f32.gmra.mxu0 %v2093
      %v2095 = vpop.f32.mrf.mxu0
      %v2096 = vadd.f32 %v1894, %v2095
      %v2097 = vand.u32 %v1697, 4294901760
      %2098 = vmatmul.f32.gmra.mxu0 %v2097
      %v2099 = vpop.f32.mrf.mxu0
      %v2100 = vadd.f32 %v1902, %v2099
      %v2101 = vand.u32 %v1699, 4294901760
      %2102 = vmatmul.f32.gmra.mxu0 %v2101
      %v2103 = vpop.f32.mrf.mxu0
      %v2104 = vadd.f32 %v1910, %v2103
      %v2105 = vand.u32 %v1701, 4294901760
      %2106 = vmatmul.f32.gmra.mxu0 %v2105
      %v2107 = vpop.f32.mrf.mxu0
      %v2108 = vadd.f32 %v1918, %v2107
      %v2109 = vand.u32 %v1703, 4294901760
      %2110 = vmatmul.f32.gmra.mxu0 %v2109
      %v2111 = vpop.f32.mrf.mxu0
      %v2112 = vadd.f32 %v1926, %v2111
      %v2113 = vand.u32 %v1705, 4294901760
      %2114 = vmatmul.f32.gmra.mxu0 %v2113
      %v2115 = vpop.f32.mrf.mxu0
      %v2116 = vadd.f32 %v1934, %v2115
      %v2117 = vand.u32 %v1707, 4294901760
      %2118 = vmatmul.f32.gmra.mxu0 %v2117
      %v2119 = vpop.f32.mrf.mxu0
      %v2120 = vadd.f32 %v1942, %v2119
      %v2121 = vand.u32 %v1709, 4294901760
      %2122 = vmatmul.f32.gmra.mxu0 %v2121
      %v2123 = vpop.f32.mrf.mxu0
      %v2124 = vadd.f32 %v1950, %v2123
      %v2125 = vand.u32 %v1711, 4294901760
      %2126 = vmatmul.f32.gmra.mxu0 %v2125
      %v2127 = vpop.f32.mrf.mxu0
      %v2128 = vadd.f32 %v1958, %v2127
      %v2129 = vand.u32 %v1713, 4294901760
      %2130 = vmatmul.f32.gmra.mxu0 %v2129
      %v2131 = vpop.f32.mrf.mxu0
      %v2132 = vadd.f32 %v1966, %v2131
      %v2133 = vand.u32 %v1715, 4294901760
      %2134 = vmatmul.f32.gmra.mxu0 %v2133
      %v2135 = vpop.f32.mrf.mxu0
      %v2136 = vadd.f32 %v1974, %v2135
      %v2137 = vand.u32 %v1717, 4294901760
      %2138 = vmatmul.f32.gmra.mxu0 %v2137
      %v2139 = vpop.f32.mrf.mxu0
      %v2140 = vadd.f32 %v1982, %v2139
      %v2141 = vand.u32 %v1719, 4294901760
      %2142 = vmatmul.f32.gmra.mxu0 %v2141
      %v2143 = vpop.f32.mrf.mxu0
      %v2144 = vadd.f32 %v1990, %v2143
      %v2145 = vand.u32 %v1721, 4294901760
      %2146 = vmatmul.f32.gmra.mxu0 %v2145
      %v2147 = vpop.f32.mrf.mxu0
      %v2148 = vadd.f32 %v1998, %v2147
      %2149 = vdwg.mxu0
      %2150 = vmatpush.msra.mxu0 0.0
      %2151 = vmatpush.msra.mxu0 0.0
      %2152 = vmatpush.msra.mxu0 0.0
      %2153 = vmatpush.msra.mxu0 0.0
      %2154 = vmatpush.msra.mxu0 0.0
      %2155 = vmatpush.msra.mxu0 0.0
      %2156 = vmatpush.msra.mxu0 0.0
      %2157 = vmatpush.msra.mxu0 0.0
      %2158 = vmatpush.msra.mxu0 0.0
      %2159 = vmatpush.msra.mxu0 0.0
      %2160 = vmatpush.msra.mxu0 0.0
      %2161 = vmatpush.msra.mxu0 0.0
      %2162 = vmatpush.msra.mxu0 0.0
      %2163 = vmatpush.msra.mxu0 0.0
      %2164 = vmatpush.msra.mxu0 0.0
      %v2165 = vand.u32 %v1724, 4294901760
      %v2166 = vsub.f32 %v1724, %v2165
      %2167 = vmatpush.msra.mxu0 %v2166
      %v2168 = vand.u32 %v1659, 4294901760
      %v2169 = vsub.f32 %v1659, %v2168
      %2170 = vmatmul.f32.gmra.mxu0 %v2169
      %v2171 = vpop.f32.mrf.mxu0
      %v2172 = vadd.f32 %v2024, %v2171
      %v2173 = vand.u32 %v1661, 4294901760
      %v2174 = vsub.f32 %v1661, %v2173
      %2175 = vmatmul.f32.gmra.mxu0 %v2174
      %v2176 = vpop.f32.mrf.mxu0
      %v2177 = vadd.f32 %v2028, %v2176
      %v2178 = vand.u32 %v1663, 4294901760
      %v2179 = vsub.f32 %v1663, %v2178
      %2180 = vmatmul.f32.gmra.mxu0 %v2179
      %v2181 = vpop.f32.mrf.mxu0
      %v2182 = vadd.f32 %v2032, %v2181
      %v2183 = vand.u32 %v1665, 4294901760
      %v2184 = vsub.f32 %v1665, %v2183
      %2185 = vmatmul.f32.gmra.mxu0 %v2184
      %v2186 = vpop.f32.mrf.mxu0
      %v2187 = vadd.f32 %v2036, %v2186
      %v2188 = vand.u32 %v1667, 4294901760
      %v2189 = vsub.f32 %v1667, %v2188
      %2190 = vmatmul.f32.gmra.mxu0 %v2189
      %v2191 = vpop.f32.mrf.mxu0
      %v2192 = vadd.f32 %v2040, %v2191
      %v2193 = vand.u32 %v1669, 4294901760
      %v2194 = vsub.f32 %v1669, %v2193
      %2195 = vmatmul.f32.gmra.mxu0 %v2194
      %v2196 = vpop.f32.mrf.mxu0
      %v2197 = vadd.f32 %v2044, %v2196
      %v2198 = vand.u32 %v1671, 4294901760
      %v2199 = vsub.f32 %v1671, %v2198
      %2200 = vmatmul.f32.gmra.mxu0 %v2199
      %v2201 = vpop.f32.mrf.mxu0
      %v2202 = vadd.f32 %v2048, %v2201
      %v2203 = vand.u32 %v1673, 4294901760
      %v2204 = vsub.f32 %v1673, %v2203
      %2205 = vmatmul.f32.gmra.mxu0 %v2204
      %v2206 = vpop.f32.mrf.mxu0
      %v2207 = vadd.f32 %v2052, %v2206
      %v2208 = vand.u32 %v1675, 4294901760
      %v2209 = vsub.f32 %v1675, %v2208
      %2210 = vmatmul.f32.gmra.mxu0 %v2209
      %v2211 = vpop.f32.mrf.mxu0
      %v2212 = vadd.f32 %v2056, %v2211
      %v2213 = vand.u32 %v1677, 4294901760
      %v2214 = vsub.f32 %v1677, %v2213
      %2215 = vmatmul.f32.gmra.mxu0 %v2214
      %v2216 = vpop.f32.mrf.mxu0
      %v2217 = vadd.f32 %v2060, %v2216
      %v2218 = vand.u32 %v1679, 4294901760
      %v2219 = vsub.f32 %v1679, %v2218
      %2220 = vmatmul.f32.gmra.mxu0 %v2219
      %v2221 = vpop.f32.mrf.mxu0
      %v2222 = vadd.f32 %v2064, %v2221
      %v2223 = vand.u32 %v1681, 4294901760
      %v2224 = vsub.f32 %v1681, %v2223
      %2225 = vmatmul.f32.gmra.mxu0 %v2224
      %v2226 = vpop.f32.mrf.mxu0
      %v2227 = vadd.f32 %v2068, %v2226
      %v2228 = vand.u32 %v1683, 4294901760
      %v2229 = vsub.f32 %v1683, %v2228
      %2230 = vmatmul.f32.gmra.mxu0 %v2229
      %v2231 = vpop.f32.mrf.mxu0
      %v2232 = vadd.f32 %v2072, %v2231
      %v2233 = vand.u32 %v1685, 4294901760
      %v2234 = vsub.f32 %v1685, %v2233
      %2235 = vmatmul.f32.gmra.mxu0 %v2234
      %v2236 = vpop.f32.mrf.mxu0
      %v2237 = vadd.f32 %v2076, %v2236
      %v2238 = vand.u32 %v1687, 4294901760
      %v2239 = vsub.f32 %v1687, %v2238
      %2240 = vmatmul.f32.gmra.mxu0 %v2239
      %v2241 = vpop.f32.mrf.mxu0
      %v2242 = vadd.f32 %v2080, %v2241
      %v2243 = vand.u32 %v1689, 4294901760
      %v2244 = vsub.f32 %v1689, %v2243
      %2245 = vmatmul.f32.gmra.mxu0 %v2244
      %v2246 = vpop.f32.mrf.mxu0
      %v2247 = vadd.f32 %v2084, %v2246
      %v2248 = vand.u32 %v1691, 4294901760
      %v2249 = vsub.f32 %v1691, %v2248
      %2250 = vmatmul.f32.gmra.mxu0 %v2249
      %v2251 = vpop.f32.mrf.mxu0
      %v2252 = vadd.f32 %v2088, %v2251
      %v2253 = vand.u32 %v1693, 4294901760
      %v2254 = vsub.f32 %v1693, %v2253
      %2255 = vmatmul.f32.gmra.mxu0 %v2254
      %v2256 = vpop.f32.mrf.mxu0
      %v2257 = vadd.f32 %v2092, %v2256
      %v2258 = vand.u32 %v1695, 4294901760
      %v2259 = vsub.f32 %v1695, %v2258
      %2260 = vmatmul.f32.gmra.mxu0 %v2259
      %v2261 = vpop.f32.mrf.mxu0
      %v2262 = vadd.f32 %v2096, %v2261
      %v2263 = vand.u32 %v1697, 4294901760
      %v2264 = vsub.f32 %v1697, %v2263
      %2265 = vmatmul.f32.gmra.mxu0 %v2264
      %v2266 = vpop.f32.mrf.mxu0
      %v2267 = vadd.f32 %v2100, %v2266
      %v2268 = vand.u32 %v1699, 4294901760
      %v2269 = vsub.f32 %v1699, %v2268
      %2270 = vmatmul.f32.gmra.mxu0 %v2269
      %v2271 = vpop.f32.mrf.mxu0
      %v2272 = vadd.f32 %v2104, %v2271
      %v2273 = vand.u32 %v1701, 4294901760
      %v2274 = vsub.f32 %v1701, %v2273
      %2275 = vmatmul.f32.gmra.mxu0 %v2274
      %v2276 = vpop.f32.mrf.mxu0
      %v2277 = vadd.f32 %v2108, %v2276
      %v2278 = vand.u32 %v1703, 4294901760
      %v2279 = vsub.f32 %v1703, %v2278
      %2280 = vmatmul.f32.gmra.mxu0 %v2279
      %v2281 = vpop.f32.mrf.mxu0
      %v2282 = vadd.f32 %v2112, %v2281
      %v2283 = vand.u32 %v1705, 4294901760
      %v2284 = vsub.f32 %v1705, %v2283
      %2285 = vmatmul.f32.gmra.mxu0 %v2284
      %v2286 = vpop.f32.mrf.mxu0
      %v2287 = vadd.f32 %v2116, %v2286
      %v2288 = vand.u32 %v1707, 4294901760
      %v2289 = vsub.f32 %v1707, %v2288
      %2290 = vmatmul.f32.gmra.mxu0 %v2289
      %v2291 = vpop.f32.mrf.mxu0
      %v2292 = vadd.f32 %v2120, %v2291
      %v2293 = vand.u32 %v1709, 4294901760
      %v2294 = vsub.f32 %v1709, %v2293
      %2295 = vmatmul.f32.gmra.mxu0 %v2294
      %v2296 = vpop.f32.mrf.mxu0
      %v2297 = vadd.f32 %v2124, %v2296
      %v2298 = vand.u32 %v1711, 4294901760
      %v2299 = vsub.f32 %v1711, %v2298
      %2300 = vmatmul.f32.gmra.mxu0 %v2299
      %v2301 = vpop.f32.mrf.mxu0
      %v2302 = vadd.f32 %v2128, %v2301
      %v2303 = vand.u32 %v1713, 4294901760
      %v2304 = vsub.f32 %v1713, %v2303
      %2305 = vmatmul.f32.gmra.mxu0 %v2304
      %v2306 = vpop.f32.mrf.mxu0
      %v2307 = vadd.f32 %v2132, %v2306
      %v2308 = vand.u32 %v1715, 4294901760
      %v2309 = vsub.f32 %v1715, %v2308
      %2310 = vmatmul.f32.gmra.mxu0 %v2309
      %v2311 = vpop.f32.mrf.mxu0
      %v2312 = vadd.f32 %v2136, %v2311
      %v2313 = vand.u32 %v1717, 4294901760
      %v2314 = vsub.f32 %v1717, %v2313
      %2315 = vmatmul.f32.gmra.mxu0 %v2314
      %v2316 = vpop.f32.mrf.mxu0
      %v2317 = vadd.f32 %v2140, %v2316
      %v2318 = vand.u32 %v1719, 4294901760
      %v2319 = vsub.f32 %v1719, %v2318
      %2320 = vmatmul.f32.gmra.mxu0 %v2319
      %v2321 = vpop.f32.mrf.mxu0
      %v2322 = vadd.f32 %v2144, %v2321
      %v2323 = vand.u32 %v1721, 4294901760
      %v2324 = vsub.f32 %v1721, %v2323
      %2325 = vmatmul.f32.gmra.mxu0 %v2324
      %v2326 = vpop.f32.mrf.mxu0
      %v2327 = vadd.f32 %v2148, %v2326
      %2328 = vdwg.mxu0
      %2329 = vmatpush.msra.mxu0 0.0
      %2330 = vmatpush.msra.mxu0 0.0
      %2331 = vmatpush.msra.mxu0 0.0
      %2332 = vmatpush.msra.mxu0 0.0
      %2333 = vmatpush.msra.mxu0 0.0
      %2334 = vmatpush.msra.mxu0 0.0
      %2335 = vmatpush.msra.mxu0 0.0
      %2336 = vmatpush.msra.mxu0 0.0
      %2337 = vmatpush.msra.mxu0 0.0
      %2338 = vmatpush.msra.mxu0 0.0
      %2339 = vmatpush.msra.mxu0 0.0
      %2340 = vmatpush.msra.mxu0 0.0
      %2341 = vmatpush.msra.mxu0 0.0
      %2342 = vmatpush.msra.mxu0 0.0
      %2343 = vmatpush.msra.mxu0 0.0
      %v2344 = vand.u32 %v1724, 4294901760
      %2345 = vmatpush.msra.mxu0 %v2344
      %v2346 = vand.u32 %v1659, 4294901760
      %v2347 = vsub.f32 %v1659, %v2346
      %v2348 = vand.u32 %v2347, 4294901760
      %2349 = vmatmul.f32.gmra.mxu0 %v2348
      %v2350 = vpop.f32.mrf.mxu0
      %v2351 = vadd.f32 %v2172, %v2350
      %v2352 = vand.u32 %v1661, 4294901760
      %v2353 = vsub.f32 %v1661, %v2352
      %v2354 = vand.u32 %v2353, 4294901760
      %2355 = vmatmul.f32.gmra.mxu0 %v2354
      %v2356 = vpop.f32.mrf.mxu0
      %v2357 = vadd.f32 %v2177, %v2356
      %v2358 = vand.u32 %v1663, 4294901760
      %v2359 = vsub.f32 %v1663, %v2358
      %v2360 = vand.u32 %v2359, 4294901760
      %2361 = vmatmul.f32.gmra.mxu0 %v2360
      %v2362 = vpop.f32.mrf.mxu0
      %v2363 = vadd.f32 %v2182, %v2362
      %v2364 = vand.u32 %v1665, 4294901760
      %v2365 = vsub.f32 %v1665, %v2364
      %v2366 = vand.u32 %v2365, 4294901760
      %2367 = vmatmul.f32.gmra.mxu0 %v2366
      %v2368 = vpop.f32.mrf.mxu0
      %v2369 = vadd.f32 %v2187, %v2368
      %v2370 = vand.u32 %v1667, 4294901760
      %v2371 = vsub.f32 %v1667, %v2370
      %v2372 = vand.u32 %v2371, 4294901760
      %2373 = vmatmul.f32.gmra.mxu0 %v2372
      %v2374 = vpop.f32.mrf.mxu0
      %v2375 = vadd.f32 %v2192, %v2374
      %v2376 = vand.u32 %v1669, 4294901760
      %v2377 = vsub.f32 %v1669, %v2376
      %v2378 = vand.u32 %v2377, 4294901760
      %2379 = vmatmul.f32.gmra.mxu0 %v2378
      %v2380 = vpop.f32.mrf.mxu0
      %v2381 = vadd.f32 %v2197, %v2380
      %v2382 = vand.u32 %v1671, 4294901760
      %v2383 = vsub.f32 %v1671, %v2382
      %v2384 = vand.u32 %v2383, 4294901760
      %2385 = vmatmul.f32.gmra.mxu0 %v2384
      %v2386 = vpop.f32.mrf.mxu0
      %v2387 = vadd.f32 %v2202, %v2386
      %v2388 = vand.u32 %v1673, 4294901760
      %v2389 = vsub.f32 %v1673, %v2388
      %v2390 = vand.u32 %v2389, 4294901760
      %2391 = vmatmul.f32.gmra.mxu0 %v2390
      %v2392 = vpop.f32.mrf.mxu0
      %v2393 = vadd.f32 %v2207, %v2392
      %v2394 = vand.u32 %v1675, 4294901760
      %v2395 = vsub.f32 %v1675, %v2394
      %v2396 = vand.u32 %v2395, 4294901760
      %2397 = vmatmul.f32.gmra.mxu0 %v2396
      %v2398 = vpop.f32.mrf.mxu0
      %v2399 = vadd.f32 %v2212, %v2398
      %v2400 = vand.u32 %v1677, 4294901760
      %v2401 = vsub.f32 %v1677, %v2400
      %v2402 = vand.u32 %v2401, 4294901760
      %2403 = vmatmul.f32.gmra.mxu0 %v2402
      %v2404 = vpop.f32.mrf.mxu0
      %v2405 = vadd.f32 %v2217, %v2404
      %v2406 = vand.u32 %v1679, 4294901760
      %v2407 = vsub.f32 %v1679, %v2406
      %v2408 = vand.u32 %v2407, 4294901760
      %2409 = vmatmul.f32.gmra.mxu0 %v2408
      %v2410 = vpop.f32.mrf.mxu0
      %v2411 = vadd.f32 %v2222, %v2410
      %v2412 = vand.u32 %v1681, 4294901760
      %v2413 = vsub.f32 %v1681, %v2412
      %v2414 = vand.u32 %v2413, 4294901760
      %2415 = vmatmul.f32.gmra.mxu0 %v2414
      %v2416 = vpop.f32.mrf.mxu0
      %v2417 = vadd.f32 %v2227, %v2416
      %v2418 = vand.u32 %v1683, 4294901760
      %v2419 = vsub.f32 %v1683, %v2418
      %v2420 = vand.u32 %v2419, 4294901760
      %2421 = vmatmul.f32.gmra.mxu0 %v2420
      %v2422 = vpop.f32.mrf.mxu0
      %v2423 = vadd.f32 %v2232, %v2422
      %v2424 = vand.u32 %v1685, 4294901760
      %v2425 = vsub.f32 %v1685, %v2424
      %v2426 = vand.u32 %v2425, 4294901760
      %2427 = vmatmul.f32.gmra.mxu0 %v2426
      %v2428 = vpop.f32.mrf.mxu0
      %v2429 = vadd.f32 %v2237, %v2428
      %v2430 = vand.u32 %v1687, 4294901760
      %v2431 = vsub.f32 %v1687, %v2430
      %v2432 = vand.u32 %v2431, 4294901760
      %2433 = vmatmul.f32.gmra.mxu0 %v2432
      %v2434 = vpop.f32.mrf.mxu0
      %v2435 = vadd.f32 %v2242, %v2434
      %v2436 = vand.u32 %v1689, 4294901760
      %v2437 = vsub.f32 %v1689, %v2436
      %v2438 = vand.u32 %v2437, 4294901760
      %2439 = vmatmul.f32.gmra.mxu0 %v2438
      %v2440 = vpop.f32.mrf.mxu0
      %v2441 = vadd.f32 %v2247, %v2440
      %v2442 = vand.u32 %v1691, 4294901760
      %v2443 = vsub.f32 %v1691, %v2442
      %v2444 = vand.u32 %v2443, 4294901760
      %2445 = vmatmul.f32.gmra.mxu0 %v2444
      %v2446 = vpop.f32.mrf.mxu0
      %v2447 = vadd.f32 %v2252, %v2446
      %v2448 = vand.u32 %v1693, 4294901760
      %v2449 = vsub.f32 %v1693, %v2448
      %v2450 = vand.u32 %v2449, 4294901760
      %2451 = vmatmul.f32.gmra.mxu0 %v2450
      %v2452 = vpop.f32.mrf.mxu0
      %v2453 = vadd.f32 %v2257, %v2452
      %v2454 = vand.u32 %v1695, 4294901760
      %v2455 = vsub.f32 %v1695, %v2454
      %v2456 = vand.u32 %v2455, 4294901760
      %2457 = vmatmul.f32.gmra.mxu0 %v2456
      %v2458 = vpop.f32.mrf.mxu0
      %v2459 = vadd.f32 %v2262, %v2458
      %v2460 = vand.u32 %v1697, 4294901760
      %v2461 = vsub.f32 %v1697, %v2460
      %v2462 = vand.u32 %v2461, 4294901760
      %2463 = vmatmul.f32.gmra.mxu0 %v2462
      %v2464 = vpop.f32.mrf.mxu0
      %v2465 = vadd.f32 %v2267, %v2464
      %v2466 = vand.u32 %v1699, 4294901760
      %v2467 = vsub.f32 %v1699, %v2466
      %v2468 = vand.u32 %v2467, 4294901760
      %2469 = vmatmul.f32.gmra.mxu0 %v2468
      %v2470 = vpop.f32.mrf.mxu0
      %v2471 = vadd.f32 %v2272, %v2470
      %v2472 = vand.u32 %v1701, 4294901760
      %v2473 = vsub.f32 %v1701, %v2472
      %v2474 = vand.u32 %v2473, 4294901760
      %2475 = vmatmul.f32.gmra.mxu0 %v2474
      %v2476 = vpop.f32.mrf.mxu0
      %v2477 = vadd.f32 %v2277, %v2476
      %v2478 = vand.u32 %v1703, 4294901760
      %v2479 = vsub.f32 %v1703, %v2478
      %v2480 = vand.u32 %v2479, 4294901760
      %2481 = vmatmul.f32.gmra.mxu0 %v2480
      %v2482 = vpop.f32.mrf.mxu0
      %v2483 = vadd.f32 %v2282, %v2482
      %v2484 = vand.u32 %v1705, 4294901760
      %v2485 = vsub.f32 %v1705, %v2484
      %v2486 = vand.u32 %v2485, 4294901760
      %2487 = vmatmul.f32.gmra.mxu0 %v2486
      %v2488 = vpop.f32.mrf.mxu0
      %v2489 = vadd.f32 %v2287, %v2488
      %v2490 = vand.u32 %v1707, 4294901760
      %v2491 = vsub.f32 %v1707, %v2490
      %v2492 = vand.u32 %v2491, 4294901760
      %2493 = vmatmul.f32.gmra.mxu0 %v2492
      %v2494 = vpop.f32.mrf.mxu0
      %v2495 = vadd.f32 %v2292, %v2494
      %v2496 = vand.u32 %v1709, 4294901760
      %v2497 = vsub.f32 %v1709, %v2496
      %v2498 = vand.u32 %v2497, 4294901760
      %2499 = vmatmul.f32.gmra.mxu0 %v2498
      %v2500 = vpop.f32.mrf.mxu0
      %v2501 = vadd.f32 %v2297, %v2500
      %v2502 = vand.u32 %v1711, 4294901760
      %v2503 = vsub.f32 %v1711, %v2502
      %v2504 = vand.u32 %v2503, 4294901760
      %2505 = vmatmul.f32.gmra.mxu0 %v2504
      %v2506 = vpop.f32.mrf.mxu0
      %v2507 = vadd.f32 %v2302, %v2506
      %v2508 = vand.u32 %v1713, 4294901760
      %v2509 = vsub.f32 %v1713, %v2508
      %v2510 = vand.u32 %v2509, 4294901760
      %2511 = vmatmul.f32.gmra.mxu0 %v2510
      %v2512 = vpop.f32.mrf.mxu0
      %v2513 = vadd.f32 %v2307, %v2512
      %v2514 = vand.u32 %v1715, 4294901760
      %v2515 = vsub.f32 %v1715, %v2514
      %v2516 = vand.u32 %v2515, 4294901760
      %2517 = vmatmul.f32.gmra.mxu0 %v2516
      %v2518 = vpop.f32.mrf.mxu0
      %v2519 = vadd.f32 %v2312, %v2518
      %v2520 = vand.u32 %v1717, 4294901760
      %v2521 = vsub.f32 %v1717, %v2520
      %v2522 = vand.u32 %v2521, 4294901760
      %2523 = vmatmul.f32.gmra.mxu0 %v2522
      %v2524 = vpop.f32.mrf.mxu0
      %v2525 = vadd.f32 %v2317, %v2524
      %v2526 = vand.u32 %v1719, 4294901760
      %v2527 = vsub.f32 %v1719, %v2526
      %v2528 = vand.u32 %v2527, 4294901760
      %2529 = vmatmul.f32.gmra.mxu0 %v2528
      %v2530 = vpop.f32.mrf.mxu0
      %v2531 = vadd.f32 %v2322, %v2530
      %v2532 = vand.u32 %v1721, 4294901760
      %v2533 = vsub.f32 %v1721, %v2532
      %v2534 = vand.u32 %v2533, 4294901760
      %2535 = vmatmul.f32.gmra.mxu0 %v2534
      %v2536 = vpop.f32.mrf.mxu0
      %v2537 = vadd.f32 %v2327, %v2536
      %2538 = vdwg.mxu0
      %2539 = vmatpush.msra.mxu0 0.0
      %2540 = vmatpush.msra.mxu0 0.0
      %2541 = vmatpush.msra.mxu0 0.0
      %2542 = vmatpush.msra.mxu0 0.0
      %2543 = vmatpush.msra.mxu0 0.0
      %2544 = vmatpush.msra.mxu0 0.0
      %2545 = vmatpush.msra.mxu0 0.0
      %2546 = vmatpush.msra.mxu0 0.0
      %2547 = vmatpush.msra.mxu0 0.0
      %2548 = vmatpush.msra.mxu0 0.0
      %2549 = vmatpush.msra.mxu0 0.0
      %2550 = vmatpush.msra.mxu0 0.0
      %2551 = vmatpush.msra.mxu0 0.0
      %2552 = vmatpush.msra.mxu0 0.0
      %2553 = vmatpush.msra.mxu0 0.0
      %v2554 = vand.u32 %v1724, 4294901760
      %v2555 = vsub.f32 %v1724, %v2554
      %v2556 = vand.u32 %v2555, 4294901760
      %2557 = vmatpush.msra.mxu0 %v2556
      %v2558 = vand.u32 %v1659, 4294901760
      %2559 = vmatmul.f32.gmra.mxu0 %v2558
      %v2560 = vpop.f32.mrf.mxu0
      %v2561 = vadd.f32 %v2351, %v2560
      %v2562 = vand.u32 %v1661, 4294901760
      %2563 = vmatmul.f32.gmra.mxu0 %v2562
      %v2564 = vpop.f32.mrf.mxu0
      %v2565 = vadd.f32 %v2357, %v2564
      %v2566 = vand.u32 %v1663, 4294901760
      %2567 = vmatmul.f32.gmra.mxu0 %v2566
      %v2568 = vpop.f32.mrf.mxu0
      %v2569 = vadd.f32 %v2363, %v2568
      %v2570 = vand.u32 %v1665, 4294901760
      %2571 = vmatmul.f32.gmra.mxu0 %v2570
      %v2572 = vpop.f32.mrf.mxu0
      %v2573 = vadd.f32 %v2369, %v2572
      %v2574 = vand.u32 %v1667, 4294901760
      %2575 = vmatmul.f32.gmra.mxu0 %v2574
      %v2576 = vpop.f32.mrf.mxu0
      %v2577 = vadd.f32 %v2375, %v2576
      %v2578 = vand.u32 %v1669, 4294901760
      %2579 = vmatmul.f32.gmra.mxu0 %v2578
      %v2580 = vpop.f32.mrf.mxu0
      %v2581 = vadd.f32 %v2381, %v2580
      %v2582 = vand.u32 %v1671, 4294901760
      %2583 = vmatmul.f32.gmra.mxu0 %v2582
      %v2584 = vpop.f32.mrf.mxu0
      %v2585 = vadd.f32 %v2387, %v2584
      %v2586 = vand.u32 %v1673, 4294901760
      %2587 = vmatmul.f32.gmra.mxu0 %v2586
      %v2588 = vpop.f32.mrf.mxu0
      %v2589 = vadd.f32 %v2393, %v2588
      %v2590 = vand.u32 %v1675, 4294901760
      %2591 = vmatmul.f32.gmra.mxu0 %v2590
      %v2592 = vpop.f32.mrf.mxu0
      %v2593 = vadd.f32 %v2399, %v2592
      %v2594 = vand.u32 %v1677, 4294901760
      %2595 = vmatmul.f32.gmra.mxu0 %v2594
      %v2596 = vpop.f32.mrf.mxu0
      %v2597 = vadd.f32 %v2405, %v2596
      %v2598 = vand.u32 %v1679, 4294901760
      %2599 = vmatmul.f32.gmra.mxu0 %v2598
      %v2600 = vpop.f32.mrf.mxu0
      %v2601 = vadd.f32 %v2411, %v2600
      %v2602 = vand.u32 %v1681, 4294901760
      %2603 = vmatmul.f32.gmra.mxu0 %v2602
      %v2604 = vpop.f32.mrf.mxu0
      %v2605 = vadd.f32 %v2417, %v2604
      %v2606 = vand.u32 %v1683, 4294901760
      %2607 = vmatmul.f32.gmra.mxu0 %v2606
      %v2608 = vpop.f32.mrf.mxu0
      %v2609 = vadd.f32 %v2423, %v2608
      %v2610 = vand.u32 %v1685, 4294901760
      %2611 = vmatmul.f32.gmra.mxu0 %v2610
      %v2612 = vpop.f32.mrf.mxu0
      %v2613 = vadd.f32 %v2429, %v2612
      %v2614 = vand.u32 %v1687, 4294901760
      %2615 = vmatmul.f32.gmra.mxu0 %v2614
      %v2616 = vpop.f32.mrf.mxu0
      %v2617 = vadd.f32 %v2435, %v2616
      %v2618 = vand.u32 %v1689, 4294901760
      %2619 = vmatmul.f32.gmra.mxu0 %v2618
      %v2620 = vpop.f32.mrf.mxu0
      %v2621 = vadd.f32 %v2441, %v2620
      %v2622 = vand.u32 %v1691, 4294901760
      %2623 = vmatmul.f32.gmra.mxu0 %v2622
      %v2624 = vpop.f32.mrf.mxu0
      %v2625 = vadd.f32 %v2447, %v2624
      %v2626 = vand.u32 %v1693, 4294901760
      %2627 = vmatmul.f32.gmra.mxu0 %v2626
      %v2628 = vpop.f32.mrf.mxu0
      %v2629 = vadd.f32 %v2453, %v2628
      %v2630 = vand.u32 %v1695, 4294901760
      %2631 = vmatmul.f32.gmra.mxu0 %v2630
      %v2632 = vpop.f32.mrf.mxu0
      %v2633 = vadd.f32 %v2459, %v2632
      %v2634 = vand.u32 %v1697, 4294901760
      %2635 = vmatmul.f32.gmra.mxu0 %v2634
      %v2636 = vpop.f32.mrf.mxu0
      %v2637 = vadd.f32 %v2465, %v2636
      %v2638 = vand.u32 %v1699, 4294901760
      %2639 = vmatmul.f32.gmra.mxu0 %v2638
      %v2640 = vpop.f32.mrf.mxu0
      %v2641 = vadd.f32 %v2471, %v2640
      %v2642 = vand.u32 %v1701, 4294901760
      %2643 = vmatmul.f32.gmra.mxu0 %v2642
      %v2644 = vpop.f32.mrf.mxu0
      %v2645 = vadd.f32 %v2477, %v2644
      %v2646 = vand.u32 %v1703, 4294901760
      %2647 = vmatmul.f32.gmra.mxu0 %v2646
      %v2648 = vpop.f32.mrf.mxu0
      %v2649 = vadd.f32 %v2483, %v2648
      %v2650 = vand.u32 %v1705, 4294901760
      %2651 = vmatmul.f32.gmra.mxu0 %v2650
      %v2652 = vpop.f32.mrf.mxu0
      %v2653 = vadd.f32 %v2489, %v2652
      %v2654 = vand.u32 %v1707, 4294901760
      %2655 = vmatmul.f32.gmra.mxu0 %v2654
      %v2656 = vpop.f32.mrf.mxu0
      %v2657 = vadd.f32 %v2495, %v2656
      %v2658 = vand.u32 %v1709, 4294901760
      %2659 = vmatmul.f32.gmra.mxu0 %v2658
      %v2660 = vpop.f32.mrf.mxu0
      %v2661 = vadd.f32 %v2501, %v2660
      %v2662 = vand.u32 %v1711, 4294901760
      %2663 = vmatmul.f32.gmra.mxu0 %v2662
      %v2664 = vpop.f32.mrf.mxu0
      %v2665 = vadd.f32 %v2507, %v2664
      %v2666 = vand.u32 %v1713, 4294901760
      %2667 = vmatmul.f32.gmra.mxu0 %v2666
      %v2668 = vpop.f32.mrf.mxu0
      %v2669 = vadd.f32 %v2513, %v2668
      %v2670 = vand.u32 %v1715, 4294901760
      %2671 = vmatmul.f32.gmra.mxu0 %v2670
      %v2672 = vpop.f32.mrf.mxu0
      %v2673 = vadd.f32 %v2519, %v2672
      %v2674 = vand.u32 %v1717, 4294901760
      %2675 = vmatmul.f32.gmra.mxu0 %v2674
      %v2676 = vpop.f32.mrf.mxu0
      %v2677 = vadd.f32 %v2525, %v2676
      %v2678 = vand.u32 %v1719, 4294901760
      %2679 = vmatmul.f32.gmra.mxu0 %v2678
      %v2680 = vpop.f32.mrf.mxu0
      %v2681 = vadd.f32 %v2531, %v2680
      %v2682 = vand.u32 %v1721, 4294901760
      %2683 = vmatmul.f32.gmra.mxu0 %v2682
      %v2684 = vpop.f32.mrf.mxu0
      %v2685 = vadd.f32 %v2537, %v2684
      %2686 = vdwg.mxu0
      %2687 = vmatpush.msra.mxu0 0.0
      %2688 = vmatpush.msra.mxu0 0.0
      %2689 = vmatpush.msra.mxu0 0.0
      %2690 = vmatpush.msra.mxu0 0.0
      %2691 = vmatpush.msra.mxu0 0.0
      %2692 = vmatpush.msra.mxu0 0.0
      %2693 = vmatpush.msra.mxu0 0.0
      %2694 = vmatpush.msra.mxu0 0.0
      %2695 = vmatpush.msra.mxu0 0.0
      %2696 = vmatpush.msra.mxu0 0.0
      %2697 = vmatpush.msra.mxu0 0.0
      %2698 = vmatpush.msra.mxu0 0.0
      %2699 = vmatpush.msra.mxu0 0.0
      %2700 = vmatpush.msra.mxu0 0.0
      %2701 = vmatpush.msra.mxu0 0.0
      %v2702 = vand.u32 %v1724, 4294901760
      %2703 = vmatpush.msra.mxu0 %v2702
      %v2704 = vand.u32 %v1659, 4294901760
      %2705 = vmatmul.f32.gmra.mxu0 %v2704
      %v2706 = vpop.f32.mrf.mxu0
      %v2707 = vadd.f32 %v2561, %v2706
      %v2708 = vand.u32 %v1661, 4294901760
      %2709 = vmatmul.f32.gmra.mxu0 %v2708
      %v2710 = vpop.f32.mrf.mxu0
      %v2711 = vadd.f32 %v2565, %v2710
      %v2712 = vand.u32 %v1663, 4294901760
      %2713 = vmatmul.f32.gmra.mxu0 %v2712
      %v2714 = vpop.f32.mrf.mxu0
      %v2715 = vadd.f32 %v2569, %v2714
      %v2716 = vand.u32 %v1665, 4294901760
      %2717 = vmatmul.f32.gmra.mxu0 %v2716
      %v2718 = vpop.f32.mrf.mxu0
      %v2719 = vadd.f32 %v2573, %v2718
      %v2720 = vand.u32 %v1667, 4294901760
      %2721 = vmatmul.f32.gmra.mxu0 %v2720
      %v2722 = vpop.f32.mrf.mxu0
      %v2723 = vadd.f32 %v2577, %v2722
      %v2724 = vand.u32 %v1669, 4294901760
      %2725 = vmatmul.f32.gmra.mxu0 %v2724
      %v2726 = vpop.f32.mrf.mxu0
      %v2727 = vadd.f32 %v2581, %v2726
      %v2728 = vand.u32 %v1671, 4294901760
      %2729 = vmatmul.f32.gmra.mxu0 %v2728
      %v2730 = vpop.f32.mrf.mxu0
      %v2731 = vadd.f32 %v2585, %v2730
      %v2732 = vand.u32 %v1673, 4294901760
      %2733 = vmatmul.f32.gmra.mxu0 %v2732
      %v2734 = vpop.f32.mrf.mxu0
      %v2735 = vadd.f32 %v2589, %v2734
      %v2736 = vand.u32 %v1675, 4294901760
      %2737 = vmatmul.f32.gmra.mxu0 %v2736
      %v2738 = vpop.f32.mrf.mxu0
      %v2739 = vadd.f32 %v2593, %v2738
      %v2740 = vand.u32 %v1677, 4294901760
      %2741 = vmatmul.f32.gmra.mxu0 %v2740
      %v2742 = vpop.f32.mrf.mxu0
      %v2743 = vadd.f32 %v2597, %v2742
      %v2744 = vand.u32 %v1679, 4294901760
      %2745 = vmatmul.f32.gmra.mxu0 %v2744
      %v2746 = vpop.f32.mrf.mxu0
      %v2747 = vadd.f32 %v2601, %v2746
      %v2748 = vand.u32 %v1681, 4294901760
      %2749 = vmatmul.f32.gmra.mxu0 %v2748
      %v2750 = vpop.f32.mrf.mxu0
      %v2751 = vadd.f32 %v2605, %v2750
      %v2752 = vand.u32 %v1683, 4294901760
      %2753 = vmatmul.f32.gmra.mxu0 %v2752
      %v2754 = vpop.f32.mrf.mxu0
      %v2755 = vadd.f32 %v2609, %v2754
      %v2756 = vand.u32 %v1685, 4294901760
      %2757 = vmatmul.f32.gmra.mxu0 %v2756
      %v2758 = vpop.f32.mrf.mxu0
      %v2759 = vadd.f32 %v2613, %v2758
      %v2760 = vand.u32 %v1687, 4294901760
      %2761 = vmatmul.f32.gmra.mxu0 %v2760
      %v2762 = vpop.f32.mrf.mxu0
      %v2763 = vadd.f32 %v2617, %v2762
      %v2764 = vand.u32 %v1689, 4294901760
      %2765 = vmatmul.f32.gmra.mxu0 %v2764
      %v2766 = vpop.f32.mrf.mxu0
      %v2767 = vadd.f32 %v2621, %v2766
      %v2768 = vand.u32 %v1691, 4294901760
      %2769 = vmatmul.f32.gmra.mxu0 %v2768
      %v2770 = vpop.f32.mrf.mxu0
      %v2771 = vadd.f32 %v2625, %v2770
      %v2772 = vand.u32 %v1693, 4294901760
      %2773 = vmatmul.f32.gmra.mxu0 %v2772
      %v2774 = vpop.f32.mrf.mxu0
      %v2775 = vadd.f32 %v2629, %v2774
      %v2776 = vand.u32 %v1695, 4294901760
      %2777 = vmatmul.f32.gmra.mxu0 %v2776
      %v2778 = vpop.f32.mrf.mxu0
      %v2779 = vadd.f32 %v2633, %v2778
      %v2780 = vand.u32 %v1697, 4294901760
      %2781 = vmatmul.f32.gmra.mxu0 %v2780
      %v2782 = vpop.f32.mrf.mxu0
      %v2783 = vadd.f32 %v2637, %v2782
      %v2784 = vand.u32 %v1699, 4294901760
      %2785 = vmatmul.f32.gmra.mxu0 %v2784
      %v2786 = vpop.f32.mrf.mxu0
      %v2787 = vadd.f32 %v2641, %v2786
      %v2788 = vand.u32 %v1701, 4294901760
      %2789 = vmatmul.f32.gmra.mxu0 %v2788
      %v2790 = vpop.f32.mrf.mxu0
      %v2791 = vadd.f32 %v2645, %v2790
      %v2792 = vand.u32 %v1703, 4294901760
      %2793 = vmatmul.f32.gmra.mxu0 %v2792
      %v2794 = vpop.f32.mrf.mxu0
      %v2795 = vadd.f32 %v2649, %v2794
      %v2796 = vand.u32 %v1705, 4294901760
      %2797 = vmatmul.f32.gmra.mxu0 %v2796
      %v2798 = vpop.f32.mrf.mxu0
      %v2799 = vadd.f32 %v2653, %v2798
      %v2800 = vand.u32 %v1707, 4294901760
      %2801 = vmatmul.f32.gmra.mxu0 %v2800
      %v2802 = vpop.f32.mrf.mxu0
      %v2803 = vadd.f32 %v2657, %v2802
      %v2804 = vand.u32 %v1709, 4294901760
      %2805 = vmatmul.f32.gmra.mxu0 %v2804
      %v2806 = vpop.f32.mrf.mxu0
      %v2807 = vadd.f32 %v2661, %v2806
      %v2808 = vand.u32 %v1711, 4294901760
      %2809 = vmatmul.f32.gmra.mxu0 %v2808
      %v2810 = vpop.f32.mrf.mxu0
      %v2811 = vadd.f32 %v2665, %v2810
      %v2812 = vand.u32 %v1713, 4294901760
      %2813 = vmatmul.f32.gmra.mxu0 %v2812
      %v2814 = vpop.f32.mrf.mxu0
      %v2815 = vadd.f32 %v2669, %v2814
      %v2816 = vand.u32 %v1715, 4294901760
      %2817 = vmatmul.f32.gmra.mxu0 %v2816
      %v2818 = vpop.f32.mrf.mxu0
      %v2819 = vadd.f32 %v2673, %v2818
      %v2820 = vand.u32 %v1717, 4294901760
      %2821 = vmatmul.f32.gmra.mxu0 %v2820
      %v2822 = vpop.f32.mrf.mxu0
      %v2823 = vadd.f32 %v2677, %v2822
      %v2824 = vand.u32 %v1719, 4294901760
      %2825 = vmatmul.f32.gmra.mxu0 %v2824
      %v2826 = vpop.f32.mrf.mxu0
      %v2827 = vadd.f32 %v2681, %v2826
      %v2828 = vand.u32 %v1721, 4294901760
      %2829 = vmatmul.f32.gmra.mxu0 %v2828
      %v2830 = vpop.f32.mrf.mxu0
      %v2831 = vadd.f32 %v2685, %v2830
      %2832 = vdwg.mxu0
      %vm2833 = vcmask 1045504
      %v2834 = vrot.slane %v292, 2
      %v2835 = vrot.slane %v293, 2
      %v2836 = vsel %vm2833, %v2834, %v2835
      %v2837 = vrot.slane %v294, 2
      %v2838 = vsel %vm2833, %v2835, %v2837
      %v2839 = vrot.slane %v295, 2
      %v2840 = vrot.slane %v296, 2
      %v2841 = vsel %vm2833, %v2839, %v2840
      %v2842 = vrot.slane %v297, 2
      %v2843 = vsel %vm2833, %v2840, %v2842
      %v2844 = vrot.slane %v298, 2
      %v2845 = vrot.slane %v299, 2
      %v2846 = vsel %vm2833, %v2844, %v2845
      %v2847 = vrot.slane %v300, 2
      %v2848 = vsel %vm2833, %v2845, %v2847
      %v2849 = vrot.slane %v301, 2
      %v2850 = vrot.slane %v302, 2
      %v2851 = vsel %vm2833, %v2849, %v2850
      %v2852 = vrot.slane %v303, 2
      %v2853 = vsel %vm2833, %v2850, %v2852
      %v2854 = vrot.slane %v304, 2
      %v2855 = vrot.slane %v305, 2
      %v2856 = vsel %vm2833, %v2854, %v2855
      %v2857 = vrot.slane %v306, 2
      %v2858 = vsel %vm2833, %v2855, %v2857
      %v2859 = vrot.slane %v307, 2
      %v2860 = vrot.slane %v308, 2
      %v2861 = vsel %vm2833, %v2859, %v2860
      %v2862 = vrot.slane %v309, 2
      %v2863 = vsel %vm2833, %v2860, %v2862
      %v2864 = vrot.slane %v310, 2
      %v2865 = vrot.slane %v311, 2
      %v2866 = vsel %vm2833, %v2864, %v2865
      %v2867 = vrot.slane %v312, 2
      %v2868 = vsel %vm2833, %v2865, %v2867
      %v2869 = vrot.slane %v313, 2
      %v2870 = vrot.slane %v314, 2
      %v2871 = vsel %vm2833, %v2869, %v2870
      %v2872 = vrot.slane %v315, 2
      %v2873 = vsel %vm2833, %v2870, %v2872
      %v2874 = vrot.slane %v316, 2
      %v2875 = vrot.slane %v317, 2
      %v2876 = vsel %vm2833, %v2874, %v2875
      %v2877 = vrot.slane %v318, 2
      %v2878 = vsel %vm2833, %v2875, %v2877
      %v2879 = vrot.slane %v319, 2
      %v2880 = vrot.slane %v320, 2
      %v2881 = vsel %vm2833, %v2879, %v2880
      %v2882 = vrot.slane %v321, 2
      %v2883 = vsel %vm2833, %v2880, %v2882
      %v2884 = vrot.slane %v322, 2
      %v2885 = vrot.slane %v323, 2
      %v2886 = vsel %vm2833, %v2884, %v2885
      %v2887 = vrot.slane %v324, 2
      %v2888 = vsel %vm2833, %v2885, %v2887
      %v2889 = vrot.slane %v325, 2
      %v2890 = vrot.slane %v326, 2
      %v2891 = vsel %vm2833, %v2889, %v2890
      %v2892 = vrot.slane %v327, 2
      %v2893 = vsel %vm2833, %v2890, %v2892
      %v2894 = vrot.slane %v328, 2
      %v2895 = vrot.slane %v329, 2
      %v2896 = vsel %vm2833, %v2894, %v2895
      %v2897 = vrot.slane %v330, 2
      %v2898 = vsel %vm2833, %v2895, %v2897
      %v2899 = vrot.slane %v331, 2
      %v2900 = vrot.slane %v332, 2
      %v2901 = vsel %vm2833, %v2899, %v2900
      %v2902 = vrot.slane %v333, 2
      %v2903 = vsel %vm2833, %v2900, %v2902
      %v2904 = vrot.slane %v334, 2
      %v2905 = vrot.slane %v335, 2
      %v2906 = vsel %vm2833, %v2904, %v2905
      %v2907 = vrot.slane %v336, 2
      %v2908 = vsel %vm2833, %v2905, %v2907
      %v2909 = vrot.slane %v337, 2
      %v2910 = vrot.slane %v338, 2
      %v2911 = vsel %vm2833, %v2909, %v2910
      %v2912 = vrot.slane %v339, 2
      %v2913 = vsel %vm2833, %v2910, %v2912
      %v2914 = vsel %vm171, %v2836, 0
      %v2916 = vsel %vm171, %v2838, 0
      %v2918 = vsel %vm171, %v2841, 0
      %v2920 = vsel %vm171, %v2843, 0
      %v2922 = vsel %vm171, %v2846, 0
      %v2924 = vsel %vm171, %v2848, 0
      %v2926 = vsel %vm171, %v2851, 0
      %v2928 = vsel %vm171, %v2853, 0
      %v2930 = vsel %vm171, %v2856, 0
      %v2932 = vsel %vm171, %v2858, 0
      %v2934 = vsel %vm171, %v2861, 0
      %v2936 = vsel %vm171, %v2863, 0
      %v2938 = vsel %vm171, %v2866, 0
      %v2940 = vsel %vm171, %v2868, 0
      %v2942 = vsel %vm171, %v2871, 0
      %v2944 = vsel %vm171, %v2873, 0
      %v2946 = vsel %vm171, %v2876, 0
      %v2948 = vsel %vm171, %v2878, 0
      %v2950 = vsel %vm171, %v2881, 0
      %v2952 = vsel %vm171, %v2883, 0
      %v2954 = vsel %vm171, %v2886, 0
      %v2956 = vsel %vm171, %v2888, 0
      %v2958 = vsel %vm171, %v2891, 0
      %v2960 = vsel %vm171, %v2893, 0
      %v2962 = vsel %vm171, %v2896, 0
      %v2964 = vsel %vm171, %v2898, 0
      %v2966 = vsel %vm171, %v2901, 0
      %v2968 = vsel %vm171, %v2903, 0
      %v2970 = vsel %vm171, %v2906, 0
      %v2972 = vsel %vm171, %v2908, 0
      %v2974 = vsel %vm171, %v2911, 0
      %v2976 = vsel %vm171, %v2913, 0
      %v2979 = vsel %vm548, %v348, 0
      %2981 = vmatpush.msra.mxu0 0.0
      %2982 = vmatpush.msra.mxu0 0.0
      %2983 = vmatpush.msra.mxu0 0.0
      %2984 = vmatpush.msra.mxu0 0.0
      %2985 = vmatpush.msra.mxu0 0.0
      %2986 = vmatpush.msra.mxu0 0.0
      %2987 = vmatpush.msra.mxu0 0.0
      %2988 = vmatpush.msra.mxu0 0.0
      %2989 = vmatpush.msra.mxu0 0.0
      %2990 = vmatpush.msra.mxu0 0.0
      %2991 = vmatpush.msra.mxu0 0.0
      %2992 = vmatpush.msra.mxu0 0.0
      %2993 = vmatpush.msra.mxu0 0.0
      %2994 = vmatpush.msra.mxu0 0.0
      %2995 = vmatpush.msra.mxu0 0.0
      %v2996 = vand.u32 %v2979, 4294901760
      %2997 = vmatpush.msra.mxu0 %v2996
      %v2998 = vand.u32 %v2914, 4294901760
      %v2999 = vsub.f32 %v2914, %v2998
      %v3000 = vand.u32 %v2999, 4294901760
      %v3001 = vsub.f32 %v2999, %v3000
      %v3002 = vand.u32 %v3001, 4294901760
      %3003 = vmatmul.f32.gmra.mxu0 %v3002
      %v3004 = vpop.f32.mrf.mxu0
      %v3005 = vadd.f32 0.0, %v3004
      %v3006 = vand.u32 %v2916, 4294901760
      %v3007 = vsub.f32 %v2916, %v3006
      %v3008 = vand.u32 %v3007, 4294901760
      %v3009 = vsub.f32 %v3007, %v3008
      %v3010 = vand.u32 %v3009, 4294901760
      %3011 = vmatmul.f32.gmra.mxu0 %v3010
      %v3012 = vpop.f32.mrf.mxu0
      %v3013 = vadd.f32 0.0, %v3012
      %v3014 = vand.u32 %v2918, 4294901760
      %v3015 = vsub.f32 %v2918, %v3014
      %v3016 = vand.u32 %v3015, 4294901760
      %v3017 = vsub.f32 %v3015, %v3016
      %v3018 = vand.u32 %v3017, 4294901760
      %3019 = vmatmul.f32.gmra.mxu0 %v3018
      %v3020 = vpop.f32.mrf.mxu0
      %v3021 = vadd.f32 0.0, %v3020
      %v3022 = vand.u32 %v2920, 4294901760
      %v3023 = vsub.f32 %v2920, %v3022
      %v3024 = vand.u32 %v3023, 4294901760
      %v3025 = vsub.f32 %v3023, %v3024
      %v3026 = vand.u32 %v3025, 4294901760
      %3027 = vmatmul.f32.gmra.mxu0 %v3026
      %v3028 = vpop.f32.mrf.mxu0
      %v3029 = vadd.f32 0.0, %v3028
      %v3030 = vand.u32 %v2922, 4294901760
      %v3031 = vsub.f32 %v2922, %v3030
      %v3032 = vand.u32 %v3031, 4294901760
      %v3033 = vsub.f32 %v3031, %v3032
      %v3034 = vand.u32 %v3033, 4294901760
      %3035 = vmatmul.f32.gmra.mxu0 %v3034
      %v3036 = vpop.f32.mrf.mxu0
      %v3037 = vadd.f32 0.0, %v3036
      %v3038 = vand.u32 %v2924, 4294901760
      %v3039 = vsub.f32 %v2924, %v3038
      %v3040 = vand.u32 %v3039, 4294901760
      %v3041 = vsub.f32 %v3039, %v3040
      %v3042 = vand.u32 %v3041, 4294901760
      %3043 = vmatmul.f32.gmra.mxu0 %v3042
      %v3044 = vpop.f32.mrf.mxu0
      %v3045 = vadd.f32 0.0, %v3044
      %v3046 = vand.u32 %v2926, 4294901760
      %v3047 = vsub.f32 %v2926, %v3046
      %v3048 = vand.u32 %v3047, 4294901760
      %v3049 = vsub.f32 %v3047, %v3048
      %v3050 = vand.u32 %v3049, 4294901760
      %3051 = vmatmul.f32.gmra.mxu0 %v3050
      %v3052 = vpop.f32.mrf.mxu0
      %v3053 = vadd.f32 0.0, %v3052
      %v3054 = vand.u32 %v2928, 4294901760
      %v3055 = vsub.f32 %v2928, %v3054
      %v3056 = vand.u32 %v3055, 4294901760
      %v3057 = vsub.f32 %v3055, %v3056
      %v3058 = vand.u32 %v3057, 4294901760
      %3059 = vmatmul.f32.gmra.mxu0 %v3058
      %v3060 = vpop.f32.mrf.mxu0
      %v3061 = vadd.f32 0.0, %v3060
      %v3062 = vand.u32 %v2930, 4294901760
      %v3063 = vsub.f32 %v2930, %v3062
      %v3064 = vand.u32 %v3063, 4294901760
      %v3065 = vsub.f32 %v3063, %v3064
      %v3066 = vand.u32 %v3065, 4294901760
      %3067 = vmatmul.f32.gmra.mxu0 %v3066
      %v3068 = vpop.f32.mrf.mxu0
      %v3069 = vadd.f32 0.0, %v3068
      %v3070 = vand.u32 %v2932, 4294901760
      %v3071 = vsub.f32 %v2932, %v3070
      %v3072 = vand.u32 %v3071, 4294901760
      %v3073 = vsub.f32 %v3071, %v3072
      %v3074 = vand.u32 %v3073, 4294901760
      %3075 = vmatmul.f32.gmra.mxu0 %v3074
      %v3076 = vpop.f32.mrf.mxu0
      %v3077 = vadd.f32 0.0, %v3076
      %v3078 = vand.u32 %v2934, 4294901760
      %v3079 = vsub.f32 %v2934, %v3078
      %v3080 = vand.u32 %v3079, 4294901760
      %v3081 = vsub.f32 %v3079, %v3080
      %v3082 = vand.u32 %v3081, 4294901760
      %3083 = vmatmul.f32.gmra.mxu0 %v3082
      %v3084 = vpop.f32.mrf.mxu0
      %v3085 = vadd.f32 0.0, %v3084
      %v3086 = vand.u32 %v2936, 4294901760
      %v3087 = vsub.f32 %v2936, %v3086
      %v3088 = vand.u32 %v3087, 4294901760
      %v3089 = vsub.f32 %v3087, %v3088
      %v3090 = vand.u32 %v3089, 4294901760
      %3091 = vmatmul.f32.gmra.mxu0 %v3090
      %v3092 = vpop.f32.mrf.mxu0
      %v3093 = vadd.f32 0.0, %v3092
      %v3094 = vand.u32 %v2938, 4294901760
      %v3095 = vsub.f32 %v2938, %v3094
      %v3096 = vand.u32 %v3095, 4294901760
      %v3097 = vsub.f32 %v3095, %v3096
      %v3098 = vand.u32 %v3097, 4294901760
      %3099 = vmatmul.f32.gmra.mxu0 %v3098
      %v3100 = vpop.f32.mrf.mxu0
      %v3101 = vadd.f32 0.0, %v3100
      %v3102 = vand.u32 %v2940, 4294901760
      %v3103 = vsub.f32 %v2940, %v3102
      %v3104 = vand.u32 %v3103, 4294901760
      %v3105 = vsub.f32 %v3103, %v3104
      %v3106 = vand.u32 %v3105, 4294901760
      %3107 = vmatmul.f32.gmra.mxu0 %v3106
      %v3108 = vpop.f32.mrf.mxu0
      %v3109 = vadd.f32 0.0, %v3108
      %v3110 = vand.u32 %v2942, 4294901760
      %v3111 = vsub.f32 %v2942, %v3110
      %v3112 = vand.u32 %v3111, 4294901760
      %v3113 = vsub.f32 %v3111, %v3112
      %v3114 = vand.u32 %v3113, 4294901760
      %3115 = vmatmul.f32.gmra.mxu0 %v3114
      %v3116 = vpop.f32.mrf.mxu0
      %v3117 = vadd.f32 0.0, %v3116
      %v3118 = vand.u32 %v2944, 4294901760
      %v3119 = vsub.f32 %v2944, %v3118
      %v3120 = vand.u32 %v3119, 4294901760
      %v3121 = vsub.f32 %v3119, %v3120
      %v3122 = vand.u32 %v3121, 4294901760
      %3123 = vmatmul.f32.gmra.mxu0 %v3122
      %v3124 = vpop.f32.mrf.mxu0
      %v3125 = vadd.f32 0.0, %v3124
      %v3126 = vand.u32 %v2946, 4294901760
      %v3127 = vsub.f32 %v2946, %v3126
      %v3128 = vand.u32 %v3127, 4294901760
      %v3129 = vsub.f32 %v3127, %v3128
      %v3130 = vand.u32 %v3129, 4294901760
      %3131 = vmatmul.f32.gmra.mxu0 %v3130
      %v3132 = vpop.f32.mrf.mxu0
      %v3133 = vadd.f32 0.0, %v3132
      %v3134 = vand.u32 %v2948, 4294901760
      %v3135 = vsub.f32 %v2948, %v3134
      %v3136 = vand.u32 %v3135, 4294901760
      %v3137 = vsub.f32 %v3135, %v3136
      %v3138 = vand.u32 %v3137, 4294901760
      %3139 = vmatmul.f32.gmra.mxu0 %v3138
      %v3140 = vpop.f32.mrf.mxu0
      %v3141 = vadd.f32 0.0, %v3140
      %v3142 = vand.u32 %v2950, 4294901760
      %v3143 = vsub.f32 %v2950, %v3142
      %v3144 = vand.u32 %v3143, 4294901760
      %v3145 = vsub.f32 %v3143, %v3144
      %v3146 = vand.u32 %v3145, 4294901760
      %3147 = vmatmul.f32.gmra.mxu0 %v3146
      %v3148 = vpop.f32.mrf.mxu0
      %v3149 = vadd.f32 0.0, %v3148
      %v3150 = vand.u32 %v2952, 4294901760
      %v3151 = vsub.f32 %v2952, %v3150
      %v3152 = vand.u32 %v3151, 4294901760
      %v3153 = vsub.f32 %v3151, %v3152
      %v3154 = vand.u32 %v3153, 4294901760
      %3155 = vmatmul.f32.gmra.mxu0 %v3154
      %v3156 = vpop.f32.mrf.mxu0
      %v3157 = vadd.f32 0.0, %v3156
      %v3158 = vand.u32 %v2954, 4294901760
      %v3159 = vsub.f32 %v2954, %v3158
      %v3160 = vand.u32 %v3159, 4294901760
      %v3161 = vsub.f32 %v3159, %v3160
      %v3162 = vand.u32 %v3161, 4294901760
      %3163 = vmatmul.f32.gmra.mxu0 %v3162
      %v3164 = vpop.f32.mrf.mxu0
      %v3165 = vadd.f32 0.0, %v3164
      %v3166 = vand.u32 %v2956, 4294901760
      %v3167 = vsub.f32 %v2956, %v3166
      %v3168 = vand.u32 %v3167, 4294901760
      %v3169 = vsub.f32 %v3167, %v3168
      %v3170 = vand.u32 %v3169, 4294901760
      %3171 = vmatmul.f32.gmra.mxu0 %v3170
      %v3172 = vpop.f32.mrf.mxu0
      %v3173 = vadd.f32 0.0, %v3172
      %v3174 = vand.u32 %v2958, 4294901760
      %v3175 = vsub.f32 %v2958, %v3174
      %v3176 = vand.u32 %v3175, 4294901760
      %v3177 = vsub.f32 %v3175, %v3176
      %v3178 = vand.u32 %v3177, 4294901760
      %3179 = vmatmul.f32.gmra.mxu0 %v3178
      %v3180 = vpop.f32.mrf.mxu0
      %v3181 = vadd.f32 0.0, %v3180
      %v3182 = vand.u32 %v2960, 4294901760
      %v3183 = vsub.f32 %v2960, %v3182
      %v3184 = vand.u32 %v3183, 4294901760
      %v3185 = vsub.f32 %v3183, %v3184
      %v3186 = vand.u32 %v3185, 4294901760
      %3187 = vmatmul.f32.gmra.mxu0 %v3186
      %v3188 = vpop.f32.mrf.mxu0
      %v3189 = vadd.f32 0.0, %v3188
      %v3190 = vand.u32 %v2962, 4294901760
      %v3191 = vsub.f32 %v2962, %v3190
      %v3192 = vand.u32 %v3191, 4294901760
      %v3193 = vsub.f32 %v3191, %v3192
      %v3194 = vand.u32 %v3193, 4294901760
      %3195 = vmatmul.f32.gmra.mxu0 %v3194
      %v3196 = vpop.f32.mrf.mxu0
      %v3197 = vadd.f32 0.0, %v3196
      %v3198 = vand.u32 %v2964, 4294901760
      %v3199 = vsub.f32 %v2964, %v3198
      %v3200 = vand.u32 %v3199, 4294901760
      %v3201 = vsub.f32 %v3199, %v3200
      %v3202 = vand.u32 %v3201, 4294901760
      %3203 = vmatmul.f32.gmra.mxu0 %v3202
      %v3204 = vpop.f32.mrf.mxu0
      %v3205 = vadd.f32 0.0, %v3204
      %v3206 = vand.u32 %v2966, 4294901760
      %v3207 = vsub.f32 %v2966, %v3206
      %v3208 = vand.u32 %v3207, 4294901760
      %v3209 = vsub.f32 %v3207, %v3208
      %v3210 = vand.u32 %v3209, 4294901760
      %3211 = vmatmul.f32.gmra.mxu0 %v3210
      %v3212 = vpop.f32.mrf.mxu0
      %v3213 = vadd.f32 0.0, %v3212
      %v3214 = vand.u32 %v2968, 4294901760
      %v3215 = vsub.f32 %v2968, %v3214
      %v3216 = vand.u32 %v3215, 4294901760
      %v3217 = vsub.f32 %v3215, %v3216
      %v3218 = vand.u32 %v3217, 4294901760
      %3219 = vmatmul.f32.gmra.mxu0 %v3218
      %v3220 = vpop.f32.mrf.mxu0
      %v3221 = vadd.f32 0.0, %v3220
      %v3222 = vand.u32 %v2970, 4294901760
      %v3223 = vsub.f32 %v2970, %v3222
      %v3224 = vand.u32 %v3223, 4294901760
      %v3225 = vsub.f32 %v3223, %v3224
      %v3226 = vand.u32 %v3225, 4294901760
      %3227 = vmatmul.f32.gmra.mxu0 %v3226
      %v3228 = vpop.f32.mrf.mxu0
      %v3229 = vadd.f32 0.0, %v3228
      %v3230 = vand.u32 %v2972, 4294901760
      %v3231 = vsub.f32 %v2972, %v3230
      %v3232 = vand.u32 %v3231, 4294901760
      %v3233 = vsub.f32 %v3231, %v3232
      %v3234 = vand.u32 %v3233, 4294901760
      %3235 = vmatmul.f32.gmra.mxu0 %v3234
      %v3236 = vpop.f32.mrf.mxu0
      %v3237 = vadd.f32 0.0, %v3236
      %v3238 = vand.u32 %v2974, 4294901760
      %v3239 = vsub.f32 %v2974, %v3238
      %v3240 = vand.u32 %v3239, 4294901760
      %v3241 = vsub.f32 %v3239, %v3240
      %v3242 = vand.u32 %v3241, 4294901760
      %3243 = vmatmul.f32.gmra.mxu0 %v3242
      %v3244 = vpop.f32.mrf.mxu0
      %v3245 = vadd.f32 0.0, %v3244
      %v3246 = vand.u32 %v2976, 4294901760
      %v3247 = vsub.f32 %v2976, %v3246
      %v3248 = vand.u32 %v3247, 4294901760
      %v3249 = vsub.f32 %v3247, %v3248
      %v3250 = vand.u32 %v3249, 4294901760
      %3251 = vmatmul.f32.gmra.mxu0 %v3250
      %v3252 = vpop.f32.mrf.mxu0
      %v3253 = vadd.f32 0.0, %v3252
      %3254 = vdwg.mxu0
      %3255 = vmatpush.msra.mxu0 0.0
      %3256 = vmatpush.msra.mxu0 0.0
      %3257 = vmatpush.msra.mxu0 0.0
      %3258 = vmatpush.msra.mxu0 0.0
      %3259 = vmatpush.msra.mxu0 0.0
      %3260 = vmatpush.msra.mxu0 0.0
      %3261 = vmatpush.msra.mxu0 0.0
      %3262 = vmatpush.msra.mxu0 0.0
      %3263 = vmatpush.msra.mxu0 0.0
      %3264 = vmatpush.msra.mxu0 0.0
      %3265 = vmatpush.msra.mxu0 0.0
      %3266 = vmatpush.msra.mxu0 0.0
      %3267 = vmatpush.msra.mxu0 0.0
      %3268 = vmatpush.msra.mxu0 0.0
      %3269 = vmatpush.msra.mxu0 0.0
      %v3270 = vand.u32 %v2979, 4294901760
      %v3271 = vsub.f32 %v2979, %v3270
      %v3272 = vand.u32 %v3271, 4294901760
      %v3273 = vsub.f32 %v3271, %v3272
      %v3274 = vand.u32 %v3273, 4294901760
      %3275 = vmatpush.msra.mxu0 %v3274
      %v3276 = vand.u32 %v2914, 4294901760
      %3277 = vmatmul.f32.gmra.mxu0 %v3276
      %v3278 = vpop.f32.mrf.mxu0
      %v3279 = vadd.f32 %v3005, %v3278
      %v3280 = vand.u32 %v2916, 4294901760
      %3281 = vmatmul.f32.gmra.mxu0 %v3280
      %v3282 = vpop.f32.mrf.mxu0
      %v3283 = vadd.f32 %v3013, %v3282
      %v3284 = vand.u32 %v2918, 4294901760
      %3285 = vmatmul.f32.gmra.mxu0 %v3284
      %v3286 = vpop.f32.mrf.mxu0
      %v3287 = vadd.f32 %v3021, %v3286
      %v3288 = vand.u32 %v2920, 4294901760
      %3289 = vmatmul.f32.gmra.mxu0 %v3288
      %v3290 = vpop.f32.mrf.mxu0
      %v3291 = vadd.f32 %v3029, %v3290
      %v3292 = vand.u32 %v2922, 4294901760
      %3293 = vmatmul.f32.gmra.mxu0 %v3292
      %v3294 = vpop.f32.mrf.mxu0
      %v3295 = vadd.f32 %v3037, %v3294
      %v3296 = vand.u32 %v2924, 4294901760
      %3297 = vmatmul.f32.gmra.mxu0 %v3296
      %v3298 = vpop.f32.mrf.mxu0
      %v3299 = vadd.f32 %v3045, %v3298
      %v3300 = vand.u32 %v2926, 4294901760
      %3301 = vmatmul.f32.gmra.mxu0 %v3300
      %v3302 = vpop.f32.mrf.mxu0
      %v3303 = vadd.f32 %v3053, %v3302
      %v3304 = vand.u32 %v2928, 4294901760
      %3305 = vmatmul.f32.gmra.mxu0 %v3304
      %v3306 = vpop.f32.mrf.mxu0
      %v3307 = vadd.f32 %v3061, %v3306
      %v3308 = vand.u32 %v2930, 4294901760
      %3309 = vmatmul.f32.gmra.mxu0 %v3308
      %v3310 = vpop.f32.mrf.mxu0
      %v3311 = vadd.f32 %v3069, %v3310
      %v3312 = vand.u32 %v2932, 4294901760
      %3313 = vmatmul.f32.gmra.mxu0 %v3312
      %v3314 = vpop.f32.mrf.mxu0
      %v3315 = vadd.f32 %v3077, %v3314
      %v3316 = vand.u32 %v2934, 4294901760
      %3317 = vmatmul.f32.gmra.mxu0 %v3316
      %v3318 = vpop.f32.mrf.mxu0
      %v3319 = vadd.f32 %v3085, %v3318
      %v3320 = vand.u32 %v2936, 4294901760
      %3321 = vmatmul.f32.gmra.mxu0 %v3320
      %v3322 = vpop.f32.mrf.mxu0
      %v3323 = vadd.f32 %v3093, %v3322
      %v3324 = vand.u32 %v2938, 4294901760
      %3325 = vmatmul.f32.gmra.mxu0 %v3324
      %v3326 = vpop.f32.mrf.mxu0
      %v3327 = vadd.f32 %v3101, %v3326
      %v3328 = vand.u32 %v2940, 4294901760
      %3329 = vmatmul.f32.gmra.mxu0 %v3328
      %v3330 = vpop.f32.mrf.mxu0
      %v3331 = vadd.f32 %v3109, %v3330
      %v3332 = vand.u32 %v2942, 4294901760
      %3333 = vmatmul.f32.gmra.mxu0 %v3332
      %v3334 = vpop.f32.mrf.mxu0
      %v3335 = vadd.f32 %v3117, %v3334
      %v3336 = vand.u32 %v2944, 4294901760
      %3337 = vmatmul.f32.gmra.mxu0 %v3336
      %v3338 = vpop.f32.mrf.mxu0
      %v3339 = vadd.f32 %v3125, %v3338
      %v3340 = vand.u32 %v2946, 4294901760
      %3341 = vmatmul.f32.gmra.mxu0 %v3340
      %v3342 = vpop.f32.mrf.mxu0
      %v3343 = vadd.f32 %v3133, %v3342
      %v3344 = vand.u32 %v2948, 4294901760
      %3345 = vmatmul.f32.gmra.mxu0 %v3344
      %v3346 = vpop.f32.mrf.mxu0
      %v3347 = vadd.f32 %v3141, %v3346
      %v3348 = vand.u32 %v2950, 4294901760
      %3349 = vmatmul.f32.gmra.mxu0 %v3348
      %v3350 = vpop.f32.mrf.mxu0
      %v3351 = vadd.f32 %v3149, %v3350
      %v3352 = vand.u32 %v2952, 4294901760
      %3353 = vmatmul.f32.gmra.mxu0 %v3352
      %v3354 = vpop.f32.mrf.mxu0
      %v3355 = vadd.f32 %v3157, %v3354
      %v3356 = vand.u32 %v2954, 4294901760
      %3357 = vmatmul.f32.gmra.mxu0 %v3356
      %v3358 = vpop.f32.mrf.mxu0
      %v3359 = vadd.f32 %v3165, %v3358
      %v3360 = vand.u32 %v2956, 4294901760
      %3361 = vmatmul.f32.gmra.mxu0 %v3360
      %v3362 = vpop.f32.mrf.mxu0
      %v3363 = vadd.f32 %v3173, %v3362
      %v3364 = vand.u32 %v2958, 4294901760
      %3365 = vmatmul.f32.gmra.mxu0 %v3364
      %v3366 = vpop.f32.mrf.mxu0
      %v3367 = vadd.f32 %v3181, %v3366
      %v3368 = vand.u32 %v2960, 4294901760
      %3369 = vmatmul.f32.gmra.mxu0 %v3368
      %v3370 = vpop.f32.mrf.mxu0
      %v3371 = vadd.f32 %v3189, %v3370
      %v3372 = vand.u32 %v2962, 4294901760
      %3373 = vmatmul.f32.gmra.mxu0 %v3372
      %v3374 = vpop.f32.mrf.mxu0
      %v3375 = vadd.f32 %v3197, %v3374
      %v3376 = vand.u32 %v2964, 4294901760
      %3377 = vmatmul.f32.gmra.mxu0 %v3376
      %v3378 = vpop.f32.mrf.mxu0
      %v3379 = vadd.f32 %v3205, %v3378
      %v3380 = vand.u32 %v2966, 4294901760
      %3381 = vmatmul.f32.gmra.mxu0 %v3380
      %v3382 = vpop.f32.mrf.mxu0
      %v3383 = vadd.f32 %v3213, %v3382
      %v3384 = vand.u32 %v2968, 4294901760
      %3385 = vmatmul.f32.gmra.mxu0 %v3384
      %v3386 = vpop.f32.mrf.mxu0
      %v3387 = vadd.f32 %v3221, %v3386
      %v3388 = vand.u32 %v2970, 4294901760
      %3389 = vmatmul.f32.gmra.mxu0 %v3388
      %v3390 = vpop.f32.mrf.mxu0
      %v3391 = vadd.f32 %v3229, %v3390
      %v3392 = vand.u32 %v2972, 4294901760
      %3393 = vmatmul.f32.gmra.mxu0 %v3392
      %v3394 = vpop.f32.mrf.mxu0
      %v3395 = vadd.f32 %v3237, %v3394
      %v3396 = vand.u32 %v2974, 4294901760
      %3397 = vmatmul.f32.gmra.mxu0 %v3396
      %v3398 = vpop.f32.mrf.mxu0
      %v3399 = vadd.f32 %v3245, %v3398
      %v3400 = vand.u32 %v2976, 4294901760
      %3401 = vmatmul.f32.gmra.mxu0 %v3400
      %v3402 = vpop.f32.mrf.mxu0
      %v3403 = vadd.f32 %v3253, %v3402
      %3404 = vdwg.mxu0
      %3405 = vmatpush.msra.mxu0 0.0
      %3406 = vmatpush.msra.mxu0 0.0
      %3407 = vmatpush.msra.mxu0 0.0
      %3408 = vmatpush.msra.mxu0 0.0
      %3409 = vmatpush.msra.mxu0 0.0
      %3410 = vmatpush.msra.mxu0 0.0
      %3411 = vmatpush.msra.mxu0 0.0
      %3412 = vmatpush.msra.mxu0 0.0
      %3413 = vmatpush.msra.mxu0 0.0
      %3414 = vmatpush.msra.mxu0 0.0
      %3415 = vmatpush.msra.mxu0 0.0
      %3416 = vmatpush.msra.mxu0 0.0
      %3417 = vmatpush.msra.mxu0 0.0
      %3418 = vmatpush.msra.mxu0 0.0
      %3419 = vmatpush.msra.mxu0 0.0
      %v3420 = vand.u32 %v2979, 4294901760
      %v3421 = vsub.f32 %v2979, %v3420
      %3422 = vmatpush.msra.mxu0 %v3421
      %v3423 = vand.u32 %v2914, 4294901760
      %v3424 = vsub.f32 %v2914, %v3423
      %3425 = vmatmul.f32.gmra.mxu0 %v3424
      %v3426 = vpop.f32.mrf.mxu0
      %v3427 = vadd.f32 %v3279, %v3426
      %v3428 = vand.u32 %v2916, 4294901760
      %v3429 = vsub.f32 %v2916, %v3428
      %3430 = vmatmul.f32.gmra.mxu0 %v3429
      %v3431 = vpop.f32.mrf.mxu0
      %v3432 = vadd.f32 %v3283, %v3431
      %v3433 = vand.u32 %v2918, 4294901760
      %v3434 = vsub.f32 %v2918, %v3433
      %3435 = vmatmul.f32.gmra.mxu0 %v3434
      %v3436 = vpop.f32.mrf.mxu0
      %v3437 = vadd.f32 %v3287, %v3436
      %v3438 = vand.u32 %v2920, 4294901760
      %v3439 = vsub.f32 %v2920, %v3438
      %3440 = vmatmul.f32.gmra.mxu0 %v3439
      %v3441 = vpop.f32.mrf.mxu0
      %v3442 = vadd.f32 %v3291, %v3441
      %v3443 = vand.u32 %v2922, 4294901760
      %v3444 = vsub.f32 %v2922, %v3443
      %3445 = vmatmul.f32.gmra.mxu0 %v3444
      %v3446 = vpop.f32.mrf.mxu0
      %v3447 = vadd.f32 %v3295, %v3446
      %v3448 = vand.u32 %v2924, 4294901760
      %v3449 = vsub.f32 %v2924, %v3448
      %3450 = vmatmul.f32.gmra.mxu0 %v3449
      %v3451 = vpop.f32.mrf.mxu0
      %v3452 = vadd.f32 %v3299, %v3451
      %v3453 = vand.u32 %v2926, 4294901760
      %v3454 = vsub.f32 %v2926, %v3453
      %3455 = vmatmul.f32.gmra.mxu0 %v3454
      %v3456 = vpop.f32.mrf.mxu0
      %v3457 = vadd.f32 %v3303, %v3456
      %v3458 = vand.u32 %v2928, 4294901760
      %v3459 = vsub.f32 %v2928, %v3458
      %3460 = vmatmul.f32.gmra.mxu0 %v3459
      %v3461 = vpop.f32.mrf.mxu0
      %v3462 = vadd.f32 %v3307, %v3461
      %v3463 = vand.u32 %v2930, 4294901760
      %v3464 = vsub.f32 %v2930, %v3463
      %3465 = vmatmul.f32.gmra.mxu0 %v3464
      %v3466 = vpop.f32.mrf.mxu0
      %v3467 = vadd.f32 %v3311, %v3466
      %v3468 = vand.u32 %v2932, 4294901760
      %v3469 = vsub.f32 %v2932, %v3468
      %3470 = vmatmul.f32.gmra.mxu0 %v3469
      %v3471 = vpop.f32.mrf.mxu0
      %v3472 = vadd.f32 %v3315, %v3471
      %v3473 = vand.u32 %v2934, 4294901760
      %v3474 = vsub.f32 %v2934, %v3473
      %3475 = vmatmul.f32.gmra.mxu0 %v3474
      %v3476 = vpop.f32.mrf.mxu0
      %v3477 = vadd.f32 %v3319, %v3476
      %v3478 = vand.u32 %v2936, 4294901760
      %v3479 = vsub.f32 %v2936, %v3478
      %3480 = vmatmul.f32.gmra.mxu0 %v3479
      %v3481 = vpop.f32.mrf.mxu0
      %v3482 = vadd.f32 %v3323, %v3481
      %v3483 = vand.u32 %v2938, 4294901760
      %v3484 = vsub.f32 %v2938, %v3483
      %3485 = vmatmul.f32.gmra.mxu0 %v3484
      %v3486 = vpop.f32.mrf.mxu0
      %v3487 = vadd.f32 %v3327, %v3486
      %v3488 = vand.u32 %v2940, 4294901760
      %v3489 = vsub.f32 %v2940, %v3488
      %3490 = vmatmul.f32.gmra.mxu0 %v3489
      %v3491 = vpop.f32.mrf.mxu0
      %v3492 = vadd.f32 %v3331, %v3491
      %v3493 = vand.u32 %v2942, 4294901760
      %v3494 = vsub.f32 %v2942, %v3493
      %3495 = vmatmul.f32.gmra.mxu0 %v3494
      %v3496 = vpop.f32.mrf.mxu0
      %v3497 = vadd.f32 %v3335, %v3496
      %v3498 = vand.u32 %v2944, 4294901760
      %v3499 = vsub.f32 %v2944, %v3498
      %3500 = vmatmul.f32.gmra.mxu0 %v3499
      %v3501 = vpop.f32.mrf.mxu0
      %v3502 = vadd.f32 %v3339, %v3501
      %v3503 = vand.u32 %v2946, 4294901760
      %v3504 = vsub.f32 %v2946, %v3503
      %3505 = vmatmul.f32.gmra.mxu0 %v3504
      %v3506 = vpop.f32.mrf.mxu0
      %v3507 = vadd.f32 %v3343, %v3506
      %v3508 = vand.u32 %v2948, 4294901760
      %v3509 = vsub.f32 %v2948, %v3508
      %3510 = vmatmul.f32.gmra.mxu0 %v3509
      %v3511 = vpop.f32.mrf.mxu0
      %v3512 = vadd.f32 %v3347, %v3511
      %v3513 = vand.u32 %v2950, 4294901760
      %v3514 = vsub.f32 %v2950, %v3513
      %3515 = vmatmul.f32.gmra.mxu0 %v3514
      %v3516 = vpop.f32.mrf.mxu0
      %v3517 = vadd.f32 %v3351, %v3516
      %v3518 = vand.u32 %v2952, 4294901760
      %v3519 = vsub.f32 %v2952, %v3518
      %3520 = vmatmul.f32.gmra.mxu0 %v3519
      %v3521 = vpop.f32.mrf.mxu0
      %v3522 = vadd.f32 %v3355, %v3521
      %v3523 = vand.u32 %v2954, 4294901760
      %v3524 = vsub.f32 %v2954, %v3523
      %3525 = vmatmul.f32.gmra.mxu0 %v3524
      %v3526 = vpop.f32.mrf.mxu0
      %v3527 = vadd.f32 %v3359, %v3526
      %v3528 = vand.u32 %v2956, 4294901760
      %v3529 = vsub.f32 %v2956, %v3528
      %3530 = vmatmul.f32.gmra.mxu0 %v3529
      %v3531 = vpop.f32.mrf.mxu0
      %v3532 = vadd.f32 %v3363, %v3531
      %v3533 = vand.u32 %v2958, 4294901760
      %v3534 = vsub.f32 %v2958, %v3533
      %3535 = vmatmul.f32.gmra.mxu0 %v3534
      %v3536 = vpop.f32.mrf.mxu0
      %v3537 = vadd.f32 %v3367, %v3536
      %v3538 = vand.u32 %v2960, 4294901760
      %v3539 = vsub.f32 %v2960, %v3538
      %3540 = vmatmul.f32.gmra.mxu0 %v3539
      %v3541 = vpop.f32.mrf.mxu0
      %v3542 = vadd.f32 %v3371, %v3541
      %v3543 = vand.u32 %v2962, 4294901760
      %v3544 = vsub.f32 %v2962, %v3543
      %3545 = vmatmul.f32.gmra.mxu0 %v3544
      %v3546 = vpop.f32.mrf.mxu0
      %v3547 = vadd.f32 %v3375, %v3546
      %v3548 = vand.u32 %v2964, 4294901760
      %v3549 = vsub.f32 %v2964, %v3548
      %3550 = vmatmul.f32.gmra.mxu0 %v3549
      %v3551 = vpop.f32.mrf.mxu0
      %v3552 = vadd.f32 %v3379, %v3551
      %v3553 = vand.u32 %v2966, 4294901760
      %v3554 = vsub.f32 %v2966, %v3553
      %3555 = vmatmul.f32.gmra.mxu0 %v3554
      %v3556 = vpop.f32.mrf.mxu0
      %v3557 = vadd.f32 %v3383, %v3556
      %v3558 = vand.u32 %v2968, 4294901760
      %v3559 = vsub.f32 %v2968, %v3558
      %3560 = vmatmul.f32.gmra.mxu0 %v3559
      %v3561 = vpop.f32.mrf.mxu0
      %v3562 = vadd.f32 %v3387, %v3561
      %v3563 = vand.u32 %v2970, 4294901760
      %v3564 = vsub.f32 %v2970, %v3563
      %3565 = vmatmul.f32.gmra.mxu0 %v3564
      %v3566 = vpop.f32.mrf.mxu0
      %v3567 = vadd.f32 %v3391, %v3566
      %v3568 = vand.u32 %v2972, 4294901760
      %v3569 = vsub.f32 %v2972, %v3568
      %3570 = vmatmul.f32.gmra.mxu0 %v3569
      %v3571 = vpop.f32.mrf.mxu0
      %v3572 = vadd.f32 %v3395, %v3571
      %v3573 = vand.u32 %v2974, 4294901760
      %v3574 = vsub.f32 %v2974, %v3573
      %3575 = vmatmul.f32.gmra.mxu0 %v3574
      %v3576 = vpop.f32.mrf.mxu0
      %v3577 = vadd.f32 %v3399, %v3576
      %v3578 = vand.u32 %v2976, 4294901760
      %v3579 = vsub.f32 %v2976, %v3578
      %3580 = vmatmul.f32.gmra.mxu0 %v3579
      %v3581 = vpop.f32.mrf.mxu0
      %v3582 = vadd.f32 %v3403, %v3581
      %3583 = vdwg.mxu0
      %3584 = vmatpush.msra.mxu0 0.0
      %3585 = vmatpush.msra.mxu0 0.0
      %3586 = vmatpush.msra.mxu0 0.0
      %3587 = vmatpush.msra.mxu0 0.0
      %3588 = vmatpush.msra.mxu0 0.0
      %3589 = vmatpush.msra.mxu0 0.0
      %3590 = vmatpush.msra.mxu0 0.0
      %3591 = vmatpush.msra.mxu0 0.0
      %3592 = vmatpush.msra.mxu0 0.0
      %3593 = vmatpush.msra.mxu0 0.0
      %3594 = vmatpush.msra.mxu0 0.0
      %3595 = vmatpush.msra.mxu0 0.0
      %3596 = vmatpush.msra.mxu0 0.0
      %3597 = vmatpush.msra.mxu0 0.0
      %3598 = vmatpush.msra.mxu0 0.0
      %v3599 = vand.u32 %v2979, 4294901760
      %3600 = vmatpush.msra.mxu0 %v3599
      %v3601 = vand.u32 %v2914, 4294901760
      %v3602 = vsub.f32 %v2914, %v3601
      %v3603 = vand.u32 %v3602, 4294901760
      %3604 = vmatmul.f32.gmra.mxu0 %v3603
      %v3605 = vpop.f32.mrf.mxu0
      %v3606 = vadd.f32 %v3427, %v3605
      %v3607 = vand.u32 %v2916, 4294901760
      %v3608 = vsub.f32 %v2916, %v3607
      %v3609 = vand.u32 %v3608, 4294901760
      %3610 = vmatmul.f32.gmra.mxu0 %v3609
      %v3611 = vpop.f32.mrf.mxu0
      %v3612 = vadd.f32 %v3432, %v3611
      %v3613 = vand.u32 %v2918, 4294901760
      %v3614 = vsub.f32 %v2918, %v3613
      %v3615 = vand.u32 %v3614, 4294901760
      %3616 = vmatmul.f32.gmra.mxu0 %v3615
      %v3617 = vpop.f32.mrf.mxu0
      %v3618 = vadd.f32 %v3437, %v3617
      %v3619 = vand.u32 %v2920, 4294901760
      %v3620 = vsub.f32 %v2920, %v3619
      %v3621 = vand.u32 %v3620, 4294901760
      %3622 = vmatmul.f32.gmra.mxu0 %v3621
      %v3623 = vpop.f32.mrf.mxu0
      %v3624 = vadd.f32 %v3442, %v3623
      %v3625 = vand.u32 %v2922, 4294901760
      %v3626 = vsub.f32 %v2922, %v3625
      %v3627 = vand.u32 %v3626, 4294901760
      %3628 = vmatmul.f32.gmra.mxu0 %v3627
      %v3629 = vpop.f32.mrf.mxu0
      %v3630 = vadd.f32 %v3447, %v3629
      %v3631 = vand.u32 %v2924, 4294901760
      %v3632 = vsub.f32 %v2924, %v3631
      %v3633 = vand.u32 %v3632, 4294901760
      %3634 = vmatmul.f32.gmra.mxu0 %v3633
      %v3635 = vpop.f32.mrf.mxu0
      %v3636 = vadd.f32 %v3452, %v3635
      %v3637 = vand.u32 %v2926, 4294901760
      %v3638 = vsub.f32 %v2926, %v3637
      %v3639 = vand.u32 %v3638, 4294901760
      %3640 = vmatmul.f32.gmra.mxu0 %v3639
      %v3641 = vpop.f32.mrf.mxu0
      %v3642 = vadd.f32 %v3457, %v3641
      %v3643 = vand.u32 %v2928, 4294901760
      %v3644 = vsub.f32 %v2928, %v3643
      %v3645 = vand.u32 %v3644, 4294901760
      %3646 = vmatmul.f32.gmra.mxu0 %v3645
      %v3647 = vpop.f32.mrf.mxu0
      %v3648 = vadd.f32 %v3462, %v3647
      %v3649 = vand.u32 %v2930, 4294901760
      %v3650 = vsub.f32 %v2930, %v3649
      %v3651 = vand.u32 %v3650, 4294901760
      %3652 = vmatmul.f32.gmra.mxu0 %v3651
      %v3653 = vpop.f32.mrf.mxu0
      %v3654 = vadd.f32 %v3467, %v3653
      %v3655 = vand.u32 %v2932, 4294901760
      %v3656 = vsub.f32 %v2932, %v3655
      %v3657 = vand.u32 %v3656, 4294901760
      %3658 = vmatmul.f32.gmra.mxu0 %v3657
      %v3659 = vpop.f32.mrf.mxu0
      %v3660 = vadd.f32 %v3472, %v3659
      %v3661 = vand.u32 %v2934, 4294901760
      %v3662 = vsub.f32 %v2934, %v3661
      %v3663 = vand.u32 %v3662, 4294901760
      %3664 = vmatmul.f32.gmra.mxu0 %v3663
      %v3665 = vpop.f32.mrf.mxu0
      %v3666 = vadd.f32 %v3477, %v3665
      %v3667 = vand.u32 %v2936, 4294901760
      %v3668 = vsub.f32 %v2936, %v3667
      %v3669 = vand.u32 %v3668, 4294901760
      %3670 = vmatmul.f32.gmra.mxu0 %v3669
      %v3671 = vpop.f32.mrf.mxu0
      %v3672 = vadd.f32 %v3482, %v3671
      %v3673 = vand.u32 %v2938, 4294901760
      %v3674 = vsub.f32 %v2938, %v3673
      %v3675 = vand.u32 %v3674, 4294901760
      %3676 = vmatmul.f32.gmra.mxu0 %v3675
      %v3677 = vpop.f32.mrf.mxu0
      %v3678 = vadd.f32 %v3487, %v3677
      %v3679 = vand.u32 %v2940, 4294901760
      %v3680 = vsub.f32 %v2940, %v3679
      %v3681 = vand.u32 %v3680, 4294901760
      %3682 = vmatmul.f32.gmra.mxu0 %v3681
      %v3683 = vpop.f32.mrf.mxu0
      %v3684 = vadd.f32 %v3492, %v3683
      %v3685 = vand.u32 %v2942, 4294901760
      %v3686 = vsub.f32 %v2942, %v3685
      %v3687 = vand.u32 %v3686, 4294901760
      %3688 = vmatmul.f32.gmra.mxu0 %v3687
      %v3689 = vpop.f32.mrf.mxu0
      %v3690 = vadd.f32 %v3497, %v3689
      %v3691 = vand.u32 %v2944, 4294901760
      %v3692 = vsub.f32 %v2944, %v3691
      %v3693 = vand.u32 %v3692, 4294901760
      %3694 = vmatmul.f32.gmra.mxu0 %v3693
      %v3695 = vpop.f32.mrf.mxu0
      %v3696 = vadd.f32 %v3502, %v3695
      %v3697 = vand.u32 %v2946, 4294901760
      %v3698 = vsub.f32 %v2946, %v3697
      %v3699 = vand.u32 %v3698, 4294901760
      %3700 = vmatmul.f32.gmra.mxu0 %v3699
      %v3701 = vpop.f32.mrf.mxu0
      %v3702 = vadd.f32 %v3507, %v3701
      %v3703 = vand.u32 %v2948, 4294901760
      %v3704 = vsub.f32 %v2948, %v3703
      %v3705 = vand.u32 %v3704, 4294901760
      %3706 = vmatmul.f32.gmra.mxu0 %v3705
      %v3707 = vpop.f32.mrf.mxu0
      %v3708 = vadd.f32 %v3512, %v3707
      %v3709 = vand.u32 %v2950, 4294901760
      %v3710 = vsub.f32 %v2950, %v3709
      %v3711 = vand.u32 %v3710, 4294901760
      %3712 = vmatmul.f32.gmra.mxu0 %v3711
      %v3713 = vpop.f32.mrf.mxu0
      %v3714 = vadd.f32 %v3517, %v3713
      %v3715 = vand.u32 %v2952, 4294901760
      %v3716 = vsub.f32 %v2952, %v3715
      %v3717 = vand.u32 %v3716, 4294901760
      %3718 = vmatmul.f32.gmra.mxu0 %v3717
      %v3719 = vpop.f32.mrf.mxu0
      %v3720 = vadd.f32 %v3522, %v3719
      %v3721 = vand.u32 %v2954, 4294901760
      %v3722 = vsub.f32 %v2954, %v3721
      %v3723 = vand.u32 %v3722, 4294901760
      %3724 = vmatmul.f32.gmra.mxu0 %v3723
      %v3725 = vpop.f32.mrf.mxu0
      %v3726 = vadd.f32 %v3527, %v3725
      %v3727 = vand.u32 %v2956, 4294901760
      %v3728 = vsub.f32 %v2956, %v3727
      %v3729 = vand.u32 %v3728, 4294901760
      %3730 = vmatmul.f32.gmra.mxu0 %v3729
      %v3731 = vpop.f32.mrf.mxu0
      %v3732 = vadd.f32 %v3532, %v3731
      %v3733 = vand.u32 %v2958, 4294901760
      %v3734 = vsub.f32 %v2958, %v3733
      %v3735 = vand.u32 %v3734, 4294901760
      %3736 = vmatmul.f32.gmra.mxu0 %v3735
      %v3737 = vpop.f32.mrf.mxu0
      %v3738 = vadd.f32 %v3537, %v3737
      %v3739 = vand.u32 %v2960, 4294901760
      %v3740 = vsub.f32 %v2960, %v3739
      %v3741 = vand.u32 %v3740, 4294901760
      %3742 = vmatmul.f32.gmra.mxu0 %v3741
      %v3743 = vpop.f32.mrf.mxu0
      %v3744 = vadd.f32 %v3542, %v3743
      %v3745 = vand.u32 %v2962, 4294901760
      %v3746 = vsub.f32 %v2962, %v3745
      %v3747 = vand.u32 %v3746, 4294901760
      %3748 = vmatmul.f32.gmra.mxu0 %v3747
      %v3749 = vpop.f32.mrf.mxu0
      %v3750 = vadd.f32 %v3547, %v3749
      %v3751 = vand.u32 %v2964, 4294901760
      %v3752 = vsub.f32 %v2964, %v3751
      %v3753 = vand.u32 %v3752, 4294901760
      %3754 = vmatmul.f32.gmra.mxu0 %v3753
      %v3755 = vpop.f32.mrf.mxu0
      %v3756 = vadd.f32 %v3552, %v3755
      %v3757 = vand.u32 %v2966, 4294901760
      %v3758 = vsub.f32 %v2966, %v3757
      %v3759 = vand.u32 %v3758, 4294901760
      %3760 = vmatmul.f32.gmra.mxu0 %v3759
      %v3761 = vpop.f32.mrf.mxu0
      %v3762 = vadd.f32 %v3557, %v3761
      %v3763 = vand.u32 %v2968, 4294901760
      %v3764 = vsub.f32 %v2968, %v3763
      %v3765 = vand.u32 %v3764, 4294901760
      %3766 = vmatmul.f32.gmra.mxu0 %v3765
      %v3767 = vpop.f32.mrf.mxu0
      %v3768 = vadd.f32 %v3562, %v3767
      %v3769 = vand.u32 %v2970, 4294901760
      %v3770 = vsub.f32 %v2970, %v3769
      %v3771 = vand.u32 %v3770, 4294901760
      %3772 = vmatmul.f32.gmra.mxu0 %v3771
      %v3773 = vpop.f32.mrf.mxu0
      %v3774 = vadd.f32 %v3567, %v3773
      %v3775 = vand.u32 %v2972, 4294901760
      %v3776 = vsub.f32 %v2972, %v3775
      %v3777 = vand.u32 %v3776, 4294901760
      %3778 = vmatmul.f32.gmra.mxu0 %v3777
      %v3779 = vpop.f32.mrf.mxu0
      %v3780 = vadd.f32 %v3572, %v3779
      %v3781 = vand.u32 %v2974, 4294901760
      %v3782 = vsub.f32 %v2974, %v3781
      %v3783 = vand.u32 %v3782, 4294901760
      %3784 = vmatmul.f32.gmra.mxu0 %v3783
      %v3785 = vpop.f32.mrf.mxu0
      %v3786 = vadd.f32 %v3577, %v3785
      %v3787 = vand.u32 %v2976, 4294901760
      %v3788 = vsub.f32 %v2976, %v3787
      %v3789 = vand.u32 %v3788, 4294901760
      %3790 = vmatmul.f32.gmra.mxu0 %v3789
      %v3791 = vpop.f32.mrf.mxu0
      %v3792 = vadd.f32 %v3582, %v3791
      %3793 = vdwg.mxu0
      %3794 = vmatpush.msra.mxu0 0.0
      %3795 = vmatpush.msra.mxu0 0.0
      %3796 = vmatpush.msra.mxu0 0.0
      %3797 = vmatpush.msra.mxu0 0.0
      %3798 = vmatpush.msra.mxu0 0.0
      %3799 = vmatpush.msra.mxu0 0.0
      %3800 = vmatpush.msra.mxu0 0.0
      %3801 = vmatpush.msra.mxu0 0.0
      %3802 = vmatpush.msra.mxu0 0.0
      %3803 = vmatpush.msra.mxu0 0.0
      %3804 = vmatpush.msra.mxu0 0.0
      %3805 = vmatpush.msra.mxu0 0.0
      %3806 = vmatpush.msra.mxu0 0.0
      %3807 = vmatpush.msra.mxu0 0.0
      %3808 = vmatpush.msra.mxu0 0.0
      %v3809 = vand.u32 %v2979, 4294901760
      %v3810 = vsub.f32 %v2979, %v3809
      %v3811 = vand.u32 %v3810, 4294901760
      %3812 = vmatpush.msra.mxu0 %v3811
      %v3813 = vand.u32 %v2914, 4294901760
      %3814 = vmatmul.f32.gmra.mxu0 %v3813
      %v3815 = vpop.f32.mrf.mxu0
      %v3816 = vadd.f32 %v3606, %v3815
      %v3817 = vand.u32 %v2916, 4294901760
      %3818 = vmatmul.f32.gmra.mxu0 %v3817
      %v3819 = vpop.f32.mrf.mxu0
      %v3820 = vadd.f32 %v3612, %v3819
      %v3821 = vand.u32 %v2918, 4294901760
      %3822 = vmatmul.f32.gmra.mxu0 %v3821
      %v3823 = vpop.f32.mrf.mxu0
      %v3824 = vadd.f32 %v3618, %v3823
      %v3825 = vand.u32 %v2920, 4294901760
      %3826 = vmatmul.f32.gmra.mxu0 %v3825
      %v3827 = vpop.f32.mrf.mxu0
      %v3828 = vadd.f32 %v3624, %v3827
      %v3829 = vand.u32 %v2922, 4294901760
      %3830 = vmatmul.f32.gmra.mxu0 %v3829
      %v3831 = vpop.f32.mrf.mxu0
      %v3832 = vadd.f32 %v3630, %v3831
      %v3833 = vand.u32 %v2924, 4294901760
      %3834 = vmatmul.f32.gmra.mxu0 %v3833
      %v3835 = vpop.f32.mrf.mxu0
      %v3836 = vadd.f32 %v3636, %v3835
      %v3837 = vand.u32 %v2926, 4294901760
      %3838 = vmatmul.f32.gmra.mxu0 %v3837
      %v3839 = vpop.f32.mrf.mxu0
      %v3840 = vadd.f32 %v3642, %v3839
      %v3841 = vand.u32 %v2928, 4294901760
      %3842 = vmatmul.f32.gmra.mxu0 %v3841
      %v3843 = vpop.f32.mrf.mxu0
      %v3844 = vadd.f32 %v3648, %v3843
      %v3845 = vand.u32 %v2930, 4294901760
      %3846 = vmatmul.f32.gmra.mxu0 %v3845
      %v3847 = vpop.f32.mrf.mxu0
      %v3848 = vadd.f32 %v3654, %v3847
      %v3849 = vand.u32 %v2932, 4294901760
      %3850 = vmatmul.f32.gmra.mxu0 %v3849
      %v3851 = vpop.f32.mrf.mxu0
      %v3852 = vadd.f32 %v3660, %v3851
      %v3853 = vand.u32 %v2934, 4294901760
      %3854 = vmatmul.f32.gmra.mxu0 %v3853
      %v3855 = vpop.f32.mrf.mxu0
      %v3856 = vadd.f32 %v3666, %v3855
      %v3857 = vand.u32 %v2936, 4294901760
      %3858 = vmatmul.f32.gmra.mxu0 %v3857
      %v3859 = vpop.f32.mrf.mxu0
      %v3860 = vadd.f32 %v3672, %v3859
      %v3861 = vand.u32 %v2938, 4294901760
      %3862 = vmatmul.f32.gmra.mxu0 %v3861
      %v3863 = vpop.f32.mrf.mxu0
      %v3864 = vadd.f32 %v3678, %v3863
      %v3865 = vand.u32 %v2940, 4294901760
      %3866 = vmatmul.f32.gmra.mxu0 %v3865
      %v3867 = vpop.f32.mrf.mxu0
      %v3868 = vadd.f32 %v3684, %v3867
      %v3869 = vand.u32 %v2942, 4294901760
      %3870 = vmatmul.f32.gmra.mxu0 %v3869
      %v3871 = vpop.f32.mrf.mxu0
      %v3872 = vadd.f32 %v3690, %v3871
      %v3873 = vand.u32 %v2944, 4294901760
      %3874 = vmatmul.f32.gmra.mxu0 %v3873
      %v3875 = vpop.f32.mrf.mxu0
      %v3876 = vadd.f32 %v3696, %v3875
      %v3877 = vand.u32 %v2946, 4294901760
      %3878 = vmatmul.f32.gmra.mxu0 %v3877
      %v3879 = vpop.f32.mrf.mxu0
      %v3880 = vadd.f32 %v3702, %v3879
      %v3881 = vand.u32 %v2948, 4294901760
      %3882 = vmatmul.f32.gmra.mxu0 %v3881
      %v3883 = vpop.f32.mrf.mxu0
      %v3884 = vadd.f32 %v3708, %v3883
      %v3885 = vand.u32 %v2950, 4294901760
      %3886 = vmatmul.f32.gmra.mxu0 %v3885
      %v3887 = vpop.f32.mrf.mxu0
      %v3888 = vadd.f32 %v3714, %v3887
      %v3889 = vand.u32 %v2952, 4294901760
      %3890 = vmatmul.f32.gmra.mxu0 %v3889
      %v3891 = vpop.f32.mrf.mxu0
      %v3892 = vadd.f32 %v3720, %v3891
      %v3893 = vand.u32 %v2954, 4294901760
      %3894 = vmatmul.f32.gmra.mxu0 %v3893
      %v3895 = vpop.f32.mrf.mxu0
      %v3896 = vadd.f32 %v3726, %v3895
      %v3897 = vand.u32 %v2956, 4294901760
      %3898 = vmatmul.f32.gmra.mxu0 %v3897
      %v3899 = vpop.f32.mrf.mxu0
      %v3900 = vadd.f32 %v3732, %v3899
      %v3901 = vand.u32 %v2958, 4294901760
      %3902 = vmatmul.f32.gmra.mxu0 %v3901
      %v3903 = vpop.f32.mrf.mxu0
      %v3904 = vadd.f32 %v3738, %v3903
      %v3905 = vand.u32 %v2960, 4294901760
      %3906 = vmatmul.f32.gmra.mxu0 %v3905
      %v3907 = vpop.f32.mrf.mxu0
      %v3908 = vadd.f32 %v3744, %v3907
      %v3909 = vand.u32 %v2962, 4294901760
      %3910 = vmatmul.f32.gmra.mxu0 %v3909
      %v3911 = vpop.f32.mrf.mxu0
      %v3912 = vadd.f32 %v3750, %v3911
      %v3913 = vand.u32 %v2964, 4294901760
      %3914 = vmatmul.f32.gmra.mxu0 %v3913
      %v3915 = vpop.f32.mrf.mxu0
      %v3916 = vadd.f32 %v3756, %v3915
      %v3917 = vand.u32 %v2966, 4294901760
      %3918 = vmatmul.f32.gmra.mxu0 %v3917
      %v3919 = vpop.f32.mrf.mxu0
      %v3920 = vadd.f32 %v3762, %v3919
      %v3921 = vand.u32 %v2968, 4294901760
      %3922 = vmatmul.f32.gmra.mxu0 %v3921
      %v3923 = vpop.f32.mrf.mxu0
      %v3924 = vadd.f32 %v3768, %v3923
      %v3925 = vand.u32 %v2970, 4294901760
      %3926 = vmatmul.f32.gmra.mxu0 %v3925
      %v3927 = vpop.f32.mrf.mxu0
      %v3928 = vadd.f32 %v3774, %v3927
      %v3929 = vand.u32 %v2972, 4294901760
      %3930 = vmatmul.f32.gmra.mxu0 %v3929
      %v3931 = vpop.f32.mrf.mxu0
      %v3932 = vadd.f32 %v3780, %v3931
      %v3933 = vand.u32 %v2974, 4294901760
      %3934 = vmatmul.f32.gmra.mxu0 %v3933
      %v3935 = vpop.f32.mrf.mxu0
      %v3936 = vadd.f32 %v3786, %v3935
      %v3937 = vand.u32 %v2976, 4294901760
      %3938 = vmatmul.f32.gmra.mxu0 %v3937
      %v3939 = vpop.f32.mrf.mxu0
      %v3940 = vadd.f32 %v3792, %v3939
      %3941 = vdwg.mxu0
      %3942 = vmatpush.msra.mxu0 0.0
      %3943 = vmatpush.msra.mxu0 0.0
      %3944 = vmatpush.msra.mxu0 0.0
      %3945 = vmatpush.msra.mxu0 0.0
      %3946 = vmatpush.msra.mxu0 0.0
      %3947 = vmatpush.msra.mxu0 0.0
      %3948 = vmatpush.msra.mxu0 0.0
      %3949 = vmatpush.msra.mxu0 0.0
      %3950 = vmatpush.msra.mxu0 0.0
      %3951 = vmatpush.msra.mxu0 0.0
      %3952 = vmatpush.msra.mxu0 0.0
      %3953 = vmatpush.msra.mxu0 0.0
      %3954 = vmatpush.msra.mxu0 0.0
      %3955 = vmatpush.msra.mxu0 0.0
      %3956 = vmatpush.msra.mxu0 0.0
      %v3957 = vand.u32 %v2979, 4294901760
      %3958 = vmatpush.msra.mxu0 %v3957
      %v3959 = vand.u32 %v2914, 4294901760
      %3960 = vmatmul.f32.gmra.mxu0 %v3959
      %v3961 = vpop.f32.mrf.mxu0
      %v3962 = vadd.f32 %v3816, %v3961
      %v3963 = vand.u32 %v2916, 4294901760
      %3964 = vmatmul.f32.gmra.mxu0 %v3963
      %v3965 = vpop.f32.mrf.mxu0
      %v3966 = vadd.f32 %v3820, %v3965
      %v3967 = vand.u32 %v2918, 4294901760
      %3968 = vmatmul.f32.gmra.mxu0 %v3967
      %v3969 = vpop.f32.mrf.mxu0
      %v3970 = vadd.f32 %v3824, %v3969
      %v3971 = vand.u32 %v2920, 4294901760
      %3972 = vmatmul.f32.gmra.mxu0 %v3971
      %v3973 = vpop.f32.mrf.mxu0
      %v3974 = vadd.f32 %v3828, %v3973
      %v3975 = vand.u32 %v2922, 4294901760
      %3976 = vmatmul.f32.gmra.mxu0 %v3975
      %v3977 = vpop.f32.mrf.mxu0
      %v3978 = vadd.f32 %v3832, %v3977
      %v3979 = vand.u32 %v2924, 4294901760
      %3980 = vmatmul.f32.gmra.mxu0 %v3979
      %v3981 = vpop.f32.mrf.mxu0
      %v3982 = vadd.f32 %v3836, %v3981
      %v3983 = vand.u32 %v2926, 4294901760
      %3984 = vmatmul.f32.gmra.mxu0 %v3983
      %v3985 = vpop.f32.mrf.mxu0
      %v3986 = vadd.f32 %v3840, %v3985
      %v3987 = vand.u32 %v2928, 4294901760
      %3988 = vmatmul.f32.gmra.mxu0 %v3987
      %v3989 = vpop.f32.mrf.mxu0
      %v3990 = vadd.f32 %v3844, %v3989
      %v3991 = vand.u32 %v2930, 4294901760
      %3992 = vmatmul.f32.gmra.mxu0 %v3991
      %v3993 = vpop.f32.mrf.mxu0
      %v3994 = vadd.f32 %v3848, %v3993
      %v3995 = vand.u32 %v2932, 4294901760
      %3996 = vmatmul.f32.gmra.mxu0 %v3995
      %v3997 = vpop.f32.mrf.mxu0
      %v3998 = vadd.f32 %v3852, %v3997
      %v3999 = vand.u32 %v2934, 4294901760
      %4000 = vmatmul.f32.gmra.mxu0 %v3999
      %v4001 = vpop.f32.mrf.mxu0
      %v4002 = vadd.f32 %v3856, %v4001
      %v4003 = vand.u32 %v2936, 4294901760
      %4004 = vmatmul.f32.gmra.mxu0 %v4003
      %v4005 = vpop.f32.mrf.mxu0
      %v4006 = vadd.f32 %v3860, %v4005
      %v4007 = vand.u32 %v2938, 4294901760
      %4008 = vmatmul.f32.gmra.mxu0 %v4007
      %v4009 = vpop.f32.mrf.mxu0
      %v4010 = vadd.f32 %v3864, %v4009
      %v4011 = vand.u32 %v2940, 4294901760
      %4012 = vmatmul.f32.gmra.mxu0 %v4011
      %v4013 = vpop.f32.mrf.mxu0
      %v4014 = vadd.f32 %v3868, %v4013
      %v4015 = vand.u32 %v2942, 4294901760
      %4016 = vmatmul.f32.gmra.mxu0 %v4015
      %v4017 = vpop.f32.mrf.mxu0
      %v4018 = vadd.f32 %v3872, %v4017
      %v4019 = vand.u32 %v2944, 4294901760
      %4020 = vmatmul.f32.gmra.mxu0 %v4019
      %v4021 = vpop.f32.mrf.mxu0
      %v4022 = vadd.f32 %v3876, %v4021
      %v4023 = vand.u32 %v2946, 4294901760
      %4024 = vmatmul.f32.gmra.mxu0 %v4023
      %v4025 = vpop.f32.mrf.mxu0
      %v4026 = vadd.f32 %v3880, %v4025
      %v4027 = vand.u32 %v2948, 4294901760
      %4028 = vmatmul.f32.gmra.mxu0 %v4027
      %v4029 = vpop.f32.mrf.mxu0
      %v4030 = vadd.f32 %v3884, %v4029
      %v4031 = vand.u32 %v2950, 4294901760
      %4032 = vmatmul.f32.gmra.mxu0 %v4031
      %v4033 = vpop.f32.mrf.mxu0
      %v4034 = vadd.f32 %v3888, %v4033
      %v4035 = vand.u32 %v2952, 4294901760
      %4036 = vmatmul.f32.gmra.mxu0 %v4035
      %v4037 = vpop.f32.mrf.mxu0
      %v4038 = vadd.f32 %v3892, %v4037
      %v4039 = vand.u32 %v2954, 4294901760
      %4040 = vmatmul.f32.gmra.mxu0 %v4039
      %v4041 = vpop.f32.mrf.mxu0
      %v4042 = vadd.f32 %v3896, %v4041
      %v4043 = vand.u32 %v2956, 4294901760
      %4044 = vmatmul.f32.gmra.mxu0 %v4043
      %v4045 = vpop.f32.mrf.mxu0
      %v4046 = vadd.f32 %v3900, %v4045
      %v4047 = vand.u32 %v2958, 4294901760
      %4048 = vmatmul.f32.gmra.mxu0 %v4047
      %v4049 = vpop.f32.mrf.mxu0
      %v4050 = vadd.f32 %v3904, %v4049
      %v4051 = vand.u32 %v2960, 4294901760
      %4052 = vmatmul.f32.gmra.mxu0 %v4051
      %v4053 = vpop.f32.mrf.mxu0
      %v4054 = vadd.f32 %v3908, %v4053
      %v4055 = vand.u32 %v2962, 4294901760
      %4056 = vmatmul.f32.gmra.mxu0 %v4055
      %v4057 = vpop.f32.mrf.mxu0
      %v4058 = vadd.f32 %v3912, %v4057
      %v4059 = vand.u32 %v2964, 4294901760
      %4060 = vmatmul.f32.gmra.mxu0 %v4059
      %v4061 = vpop.f32.mrf.mxu0
      %v4062 = vadd.f32 %v3916, %v4061
      %v4063 = vand.u32 %v2966, 4294901760
      %4064 = vmatmul.f32.gmra.mxu0 %v4063
      %v4065 = vpop.f32.mrf.mxu0
      %v4066 = vadd.f32 %v3920, %v4065
      %v4067 = vand.u32 %v2968, 4294901760
      %4068 = vmatmul.f32.gmra.mxu0 %v4067
      %v4069 = vpop.f32.mrf.mxu0
      %v4070 = vadd.f32 %v3924, %v4069
      %v4071 = vand.u32 %v2970, 4294901760
      %4072 = vmatmul.f32.gmra.mxu0 %v4071
      %v4073 = vpop.f32.mrf.mxu0
      %v4074 = vadd.f32 %v3928, %v4073
      %v4075 = vand.u32 %v2972, 4294901760
      %4076 = vmatmul.f32.gmra.mxu0 %v4075
      %v4077 = vpop.f32.mrf.mxu0
      %v4078 = vadd.f32 %v3932, %v4077
      %v4079 = vand.u32 %v2974, 4294901760
      %4080 = vmatmul.f32.gmra.mxu0 %v4079
      %v4081 = vpop.f32.mrf.mxu0
      %v4082 = vadd.f32 %v3936, %v4081
      %v4083 = vand.u32 %v2976, 4294901760
      %4084 = vmatmul.f32.gmra.mxu0 %v4083
      %v4085 = vpop.f32.mrf.mxu0
      %v4086 = vadd.f32 %v3940, %v4085
      %4087 = vdwg.mxu0
      %v4088 = vadd.f32 %v2707, %v3962
      %v4089 = vadd.f32 %v2711, %v3966
      %v4090 = vadd.f32 %v2715, %v3970
      %v4091 = vadd.f32 %v2719, %v3974
      %v4092 = vadd.f32 %v2723, %v3978
      %v4093 = vadd.f32 %v2727, %v3982
      %v4094 = vadd.f32 %v2731, %v3986
      %v4095 = vadd.f32 %v2735, %v3990
      %v4096 = vadd.f32 %v2739, %v3994
      %v4097 = vadd.f32 %v2743, %v3998
      %v4098 = vadd.f32 %v2747, %v4002
      %v4099 = vadd.f32 %v2751, %v4006
      %v4100 = vadd.f32 %v2755, %v4010
      %v4101 = vadd.f32 %v2759, %v4014
      %v4102 = vadd.f32 %v2763, %v4018
      %v4103 = vadd.f32 %v2767, %v4022
      %v4104 = vadd.f32 %v2771, %v4026
      %v4105 = vadd.f32 %v2775, %v4030
      %v4106 = vadd.f32 %v2779, %v4034
      %v4107 = vadd.f32 %v2783, %v4038
      %v4108 = vadd.f32 %v2787, %v4042
      %v4109 = vadd.f32 %v2791, %v4046
      %v4110 = vadd.f32 %v2795, %v4050
      %v4111 = vadd.f32 %v2799, %v4054
      %v4112 = vadd.f32 %v2803, %v4058
      %v4113 = vadd.f32 %v2807, %v4062
      %v4114 = vadd.f32 %v2811, %v4066
      %v4115 = vadd.f32 %v2815, %v4070
      %v4116 = vadd.f32 %v2819, %v4074
      %v4117 = vadd.f32 %v2823, %v4078
      %v4118 = vadd.f32 %v2827, %v4082
      %v4119 = vadd.f32 %v2831, %v4086
      %v4121 = vsel %vm171, %v340, 0
      %v4124 = vsel %vm171, %v341, 0
      %v4127 = vsel %vm548, %v349, 0
      %4129 = vmatpush.msra.mxu0 0.0
      %4130 = vmatpush.msra.mxu0 0.0
      %4131 = vmatpush.msra.mxu0 0.0
      %4132 = vmatpush.msra.mxu0 0.0
      %4133 = vmatpush.msra.mxu0 0.0
      %4134 = vmatpush.msra.mxu0 0.0
      %4135 = vmatpush.msra.mxu0 0.0
      %4136 = vmatpush.msra.mxu0 0.0
      %4137 = vmatpush.msra.mxu0 0.0
      %4138 = vmatpush.msra.mxu0 0.0
      %4139 = vmatpush.msra.mxu0 0.0
      %4140 = vmatpush.msra.mxu0 0.0
      %4141 = vmatpush.msra.mxu0 0.0
      %4142 = vmatpush.msra.mxu0 0.0
      %4143 = vmatpush.msra.mxu0 0.0
      %v4144 = vand.u32 %v4127, 4294901760
      %4145 = vmatpush.msra.mxu0 %v4144
      %v4146 = vand.u32 %v1663, 4294901760
      %v4147 = vsub.f32 %v1663, %v4146
      %v4148 = vand.u32 %v4147, 4294901760
      %v4149 = vsub.f32 %v4147, %v4148
      %v4150 = vand.u32 %v4149, 4294901760
      %4151 = vmatmul.f32.gmra.mxu0 %v4150
      %v4152 = vpop.f32.mrf.mxu0
      %v4153 = vadd.f32 0.0, %v4152
      %v4154 = vand.u32 %v1665, 4294901760
      %v4155 = vsub.f32 %v1665, %v4154
      %v4156 = vand.u32 %v4155, 4294901760
      %v4157 = vsub.f32 %v4155, %v4156
      %v4158 = vand.u32 %v4157, 4294901760
      %4159 = vmatmul.f32.gmra.mxu0 %v4158
      %v4160 = vpop.f32.mrf.mxu0
      %v4161 = vadd.f32 0.0, %v4160
      %v4162 = vand.u32 %v1667, 4294901760
      %v4163 = vsub.f32 %v1667, %v4162
      %v4164 = vand.u32 %v4163, 4294901760
      %v4165 = vsub.f32 %v4163, %v4164
      %v4166 = vand.u32 %v4165, 4294901760
      %4167 = vmatmul.f32.gmra.mxu0 %v4166
      %v4168 = vpop.f32.mrf.mxu0
      %v4169 = vadd.f32 0.0, %v4168
      %v4170 = vand.u32 %v1669, 4294901760
      %v4171 = vsub.f32 %v1669, %v4170
      %v4172 = vand.u32 %v4171, 4294901760
      %v4173 = vsub.f32 %v4171, %v4172
      %v4174 = vand.u32 %v4173, 4294901760
      %4175 = vmatmul.f32.gmra.mxu0 %v4174
      %v4176 = vpop.f32.mrf.mxu0
      %v4177 = vadd.f32 0.0, %v4176
      %v4178 = vand.u32 %v1671, 4294901760
      %v4179 = vsub.f32 %v1671, %v4178
      %v4180 = vand.u32 %v4179, 4294901760
      %v4181 = vsub.f32 %v4179, %v4180
      %v4182 = vand.u32 %v4181, 4294901760
      %4183 = vmatmul.f32.gmra.mxu0 %v4182
      %v4184 = vpop.f32.mrf.mxu0
      %v4185 = vadd.f32 0.0, %v4184
      %v4186 = vand.u32 %v1673, 4294901760
      %v4187 = vsub.f32 %v1673, %v4186
      %v4188 = vand.u32 %v4187, 4294901760
      %v4189 = vsub.f32 %v4187, %v4188
      %v4190 = vand.u32 %v4189, 4294901760
      %4191 = vmatmul.f32.gmra.mxu0 %v4190
      %v4192 = vpop.f32.mrf.mxu0
      %v4193 = vadd.f32 0.0, %v4192
      %v4194 = vand.u32 %v1675, 4294901760
      %v4195 = vsub.f32 %v1675, %v4194
      %v4196 = vand.u32 %v4195, 4294901760
      %v4197 = vsub.f32 %v4195, %v4196
      %v4198 = vand.u32 %v4197, 4294901760
      %4199 = vmatmul.f32.gmra.mxu0 %v4198
      %v4200 = vpop.f32.mrf.mxu0
      %v4201 = vadd.f32 0.0, %v4200
      %v4202 = vand.u32 %v1677, 4294901760
      %v4203 = vsub.f32 %v1677, %v4202
      %v4204 = vand.u32 %v4203, 4294901760
      %v4205 = vsub.f32 %v4203, %v4204
      %v4206 = vand.u32 %v4205, 4294901760
      %4207 = vmatmul.f32.gmra.mxu0 %v4206
      %v4208 = vpop.f32.mrf.mxu0
      %v4209 = vadd.f32 0.0, %v4208
      %v4210 = vand.u32 %v1679, 4294901760
      %v4211 = vsub.f32 %v1679, %v4210
      %v4212 = vand.u32 %v4211, 4294901760
      %v4213 = vsub.f32 %v4211, %v4212
      %v4214 = vand.u32 %v4213, 4294901760
      %4215 = vmatmul.f32.gmra.mxu0 %v4214
      %v4216 = vpop.f32.mrf.mxu0
      %v4217 = vadd.f32 0.0, %v4216
      %v4218 = vand.u32 %v1681, 4294901760
      %v4219 = vsub.f32 %v1681, %v4218
      %v4220 = vand.u32 %v4219, 4294901760
      %v4221 = vsub.f32 %v4219, %v4220
      %v4222 = vand.u32 %v4221, 4294901760
      %4223 = vmatmul.f32.gmra.mxu0 %v4222
      %v4224 = vpop.f32.mrf.mxu0
      %v4225 = vadd.f32 0.0, %v4224
      %v4226 = vand.u32 %v1683, 4294901760
      %v4227 = vsub.f32 %v1683, %v4226
      %v4228 = vand.u32 %v4227, 4294901760
      %v4229 = vsub.f32 %v4227, %v4228
      %v4230 = vand.u32 %v4229, 4294901760
      %4231 = vmatmul.f32.gmra.mxu0 %v4230
      %v4232 = vpop.f32.mrf.mxu0
      %v4233 = vadd.f32 0.0, %v4232
      %v4234 = vand.u32 %v1685, 4294901760
      %v4235 = vsub.f32 %v1685, %v4234
      %v4236 = vand.u32 %v4235, 4294901760
      %v4237 = vsub.f32 %v4235, %v4236
      %v4238 = vand.u32 %v4237, 4294901760
      %4239 = vmatmul.f32.gmra.mxu0 %v4238
      %v4240 = vpop.f32.mrf.mxu0
      %v4241 = vadd.f32 0.0, %v4240
      %v4242 = vand.u32 %v1687, 4294901760
      %v4243 = vsub.f32 %v1687, %v4242
      %v4244 = vand.u32 %v4243, 4294901760
      %v4245 = vsub.f32 %v4243, %v4244
      %v4246 = vand.u32 %v4245, 4294901760
      %4247 = vmatmul.f32.gmra.mxu0 %v4246
      %v4248 = vpop.f32.mrf.mxu0
      %v4249 = vadd.f32 0.0, %v4248
      %v4250 = vand.u32 %v1689, 4294901760
      %v4251 = vsub.f32 %v1689, %v4250
      %v4252 = vand.u32 %v4251, 4294901760
      %v4253 = vsub.f32 %v4251, %v4252
      %v4254 = vand.u32 %v4253, 4294901760
      %4255 = vmatmul.f32.gmra.mxu0 %v4254
      %v4256 = vpop.f32.mrf.mxu0
      %v4257 = vadd.f32 0.0, %v4256
      %v4258 = vand.u32 %v1691, 4294901760
      %v4259 = vsub.f32 %v1691, %v4258
      %v4260 = vand.u32 %v4259, 4294901760
      %v4261 = vsub.f32 %v4259, %v4260
      %v4262 = vand.u32 %v4261, 4294901760
      %4263 = vmatmul.f32.gmra.mxu0 %v4262
      %v4264 = vpop.f32.mrf.mxu0
      %v4265 = vadd.f32 0.0, %v4264
      %v4266 = vand.u32 %v1693, 4294901760
      %v4267 = vsub.f32 %v1693, %v4266
      %v4268 = vand.u32 %v4267, 4294901760
      %v4269 = vsub.f32 %v4267, %v4268
      %v4270 = vand.u32 %v4269, 4294901760
      %4271 = vmatmul.f32.gmra.mxu0 %v4270
      %v4272 = vpop.f32.mrf.mxu0
      %v4273 = vadd.f32 0.0, %v4272
      %v4274 = vand.u32 %v1695, 4294901760
      %v4275 = vsub.f32 %v1695, %v4274
      %v4276 = vand.u32 %v4275, 4294901760
      %v4277 = vsub.f32 %v4275, %v4276
      %v4278 = vand.u32 %v4277, 4294901760
      %4279 = vmatmul.f32.gmra.mxu0 %v4278
      %v4280 = vpop.f32.mrf.mxu0
      %v4281 = vadd.f32 0.0, %v4280
      %v4282 = vand.u32 %v1697, 4294901760
      %v4283 = vsub.f32 %v1697, %v4282
      %v4284 = vand.u32 %v4283, 4294901760
      %v4285 = vsub.f32 %v4283, %v4284
      %v4286 = vand.u32 %v4285, 4294901760
      %4287 = vmatmul.f32.gmra.mxu0 %v4286
      %v4288 = vpop.f32.mrf.mxu0
      %v4289 = vadd.f32 0.0, %v4288
      %v4290 = vand.u32 %v1699, 4294901760
      %v4291 = vsub.f32 %v1699, %v4290
      %v4292 = vand.u32 %v4291, 4294901760
      %v4293 = vsub.f32 %v4291, %v4292
      %v4294 = vand.u32 %v4293, 4294901760
      %4295 = vmatmul.f32.gmra.mxu0 %v4294
      %v4296 = vpop.f32.mrf.mxu0
      %v4297 = vadd.f32 0.0, %v4296
      %v4298 = vand.u32 %v1701, 4294901760
      %v4299 = vsub.f32 %v1701, %v4298
      %v4300 = vand.u32 %v4299, 4294901760
      %v4301 = vsub.f32 %v4299, %v4300
      %v4302 = vand.u32 %v4301, 4294901760
      %4303 = vmatmul.f32.gmra.mxu0 %v4302
      %v4304 = vpop.f32.mrf.mxu0
      %v4305 = vadd.f32 0.0, %v4304
      %v4306 = vand.u32 %v1703, 4294901760
      %v4307 = vsub.f32 %v1703, %v4306
      %v4308 = vand.u32 %v4307, 4294901760
      %v4309 = vsub.f32 %v4307, %v4308
      %v4310 = vand.u32 %v4309, 4294901760
      %4311 = vmatmul.f32.gmra.mxu0 %v4310
      %v4312 = vpop.f32.mrf.mxu0
      %v4313 = vadd.f32 0.0, %v4312
      %v4314 = vand.u32 %v1705, 4294901760
      %v4315 = vsub.f32 %v1705, %v4314
      %v4316 = vand.u32 %v4315, 4294901760
      %v4317 = vsub.f32 %v4315, %v4316
      %v4318 = vand.u32 %v4317, 4294901760
      %4319 = vmatmul.f32.gmra.mxu0 %v4318
      %v4320 = vpop.f32.mrf.mxu0
      %v4321 = vadd.f32 0.0, %v4320
      %v4322 = vand.u32 %v1707, 4294901760
      %v4323 = vsub.f32 %v1707, %v4322
      %v4324 = vand.u32 %v4323, 4294901760
      %v4325 = vsub.f32 %v4323, %v4324
      %v4326 = vand.u32 %v4325, 4294901760
      %4327 = vmatmul.f32.gmra.mxu0 %v4326
      %v4328 = vpop.f32.mrf.mxu0
      %v4329 = vadd.f32 0.0, %v4328
      %v4330 = vand.u32 %v1709, 4294901760
      %v4331 = vsub.f32 %v1709, %v4330
      %v4332 = vand.u32 %v4331, 4294901760
      %v4333 = vsub.f32 %v4331, %v4332
      %v4334 = vand.u32 %v4333, 4294901760
      %4335 = vmatmul.f32.gmra.mxu0 %v4334
      %v4336 = vpop.f32.mrf.mxu0
      %v4337 = vadd.f32 0.0, %v4336
      %v4338 = vand.u32 %v1711, 4294901760
      %v4339 = vsub.f32 %v1711, %v4338
      %v4340 = vand.u32 %v4339, 4294901760
      %v4341 = vsub.f32 %v4339, %v4340
      %v4342 = vand.u32 %v4341, 4294901760
      %4343 = vmatmul.f32.gmra.mxu0 %v4342
      %v4344 = vpop.f32.mrf.mxu0
      %v4345 = vadd.f32 0.0, %v4344
      %v4346 = vand.u32 %v1713, 4294901760
      %v4347 = vsub.f32 %v1713, %v4346
      %v4348 = vand.u32 %v4347, 4294901760
      %v4349 = vsub.f32 %v4347, %v4348
      %v4350 = vand.u32 %v4349, 4294901760
      %4351 = vmatmul.f32.gmra.mxu0 %v4350
      %v4352 = vpop.f32.mrf.mxu0
      %v4353 = vadd.f32 0.0, %v4352
      %v4354 = vand.u32 %v1715, 4294901760
      %v4355 = vsub.f32 %v1715, %v4354
      %v4356 = vand.u32 %v4355, 4294901760
      %v4357 = vsub.f32 %v4355, %v4356
      %v4358 = vand.u32 %v4357, 4294901760
      %4359 = vmatmul.f32.gmra.mxu0 %v4358
      %v4360 = vpop.f32.mrf.mxu0
      %v4361 = vadd.f32 0.0, %v4360
      %v4362 = vand.u32 %v1717, 4294901760
      %v4363 = vsub.f32 %v1717, %v4362
      %v4364 = vand.u32 %v4363, 4294901760
      %v4365 = vsub.f32 %v4363, %v4364
      %v4366 = vand.u32 %v4365, 4294901760
      %4367 = vmatmul.f32.gmra.mxu0 %v4366
      %v4368 = vpop.f32.mrf.mxu0
      %v4369 = vadd.f32 0.0, %v4368
      %v4370 = vand.u32 %v1719, 4294901760
      %v4371 = vsub.f32 %v1719, %v4370
      %v4372 = vand.u32 %v4371, 4294901760
      %v4373 = vsub.f32 %v4371, %v4372
      %v4374 = vand.u32 %v4373, 4294901760
      %4375 = vmatmul.f32.gmra.mxu0 %v4374
      %v4376 = vpop.f32.mrf.mxu0
      %v4377 = vadd.f32 0.0, %v4376
      %v4378 = vand.u32 %v1721, 4294901760
      %v4379 = vsub.f32 %v1721, %v4378
      %v4380 = vand.u32 %v4379, 4294901760
      %v4381 = vsub.f32 %v4379, %v4380
      %v4382 = vand.u32 %v4381, 4294901760
      %4383 = vmatmul.f32.gmra.mxu0 %v4382
      %v4384 = vpop.f32.mrf.mxu0
      %v4385 = vadd.f32 0.0, %v4384
      %v4386 = vand.u32 %v4121, 4294901760
      %v4387 = vsub.f32 %v4121, %v4386
      %v4388 = vand.u32 %v4387, 4294901760
      %v4389 = vsub.f32 %v4387, %v4388
      %v4390 = vand.u32 %v4389, 4294901760
      %4391 = vmatmul.f32.gmra.mxu0 %v4390
      %v4392 = vpop.f32.mrf.mxu0
      %v4393 = vadd.f32 0.0, %v4392
      %v4394 = vand.u32 %v4124, 4294901760
      %v4395 = vsub.f32 %v4124, %v4394
      %v4396 = vand.u32 %v4395, 4294901760
      %v4397 = vsub.f32 %v4395, %v4396
      %v4398 = vand.u32 %v4397, 4294901760
      %4399 = vmatmul.f32.gmra.mxu0 %v4398
      %v4400 = vpop.f32.mrf.mxu0
      %v4401 = vadd.f32 0.0, %v4400
      %4402 = vdwg.mxu0
      %4403 = vmatpush.msra.mxu0 0.0
      %4404 = vmatpush.msra.mxu0 0.0
      %4405 = vmatpush.msra.mxu0 0.0
      %4406 = vmatpush.msra.mxu0 0.0
      %4407 = vmatpush.msra.mxu0 0.0
      %4408 = vmatpush.msra.mxu0 0.0
      %4409 = vmatpush.msra.mxu0 0.0
      %4410 = vmatpush.msra.mxu0 0.0
      %4411 = vmatpush.msra.mxu0 0.0
      %4412 = vmatpush.msra.mxu0 0.0
      %4413 = vmatpush.msra.mxu0 0.0
      %4414 = vmatpush.msra.mxu0 0.0
      %4415 = vmatpush.msra.mxu0 0.0
      %4416 = vmatpush.msra.mxu0 0.0
      %4417 = vmatpush.msra.mxu0 0.0
      %v4418 = vand.u32 %v4127, 4294901760
      %v4419 = vsub.f32 %v4127, %v4418
      %v4420 = vand.u32 %v4419, 4294901760
      %v4421 = vsub.f32 %v4419, %v4420
      %v4422 = vand.u32 %v4421, 4294901760
      %4423 = vmatpush.msra.mxu0 %v4422
      %v4424 = vand.u32 %v1663, 4294901760
      %4425 = vmatmul.f32.gmra.mxu0 %v4424
      %v4426 = vpop.f32.mrf.mxu0
      %v4427 = vadd.f32 %v4153, %v4426
      %v4428 = vand.u32 %v1665, 4294901760
      %4429 = vmatmul.f32.gmra.mxu0 %v4428
      %v4430 = vpop.f32.mrf.mxu0
      %v4431 = vadd.f32 %v4161, %v4430
      %v4432 = vand.u32 %v1667, 4294901760
      %4433 = vmatmul.f32.gmra.mxu0 %v4432
      %v4434 = vpop.f32.mrf.mxu0
      %v4435 = vadd.f32 %v4169, %v4434
      %v4436 = vand.u32 %v1669, 4294901760
      %4437 = vmatmul.f32.gmra.mxu0 %v4436
      %v4438 = vpop.f32.mrf.mxu0
      %v4439 = vadd.f32 %v4177, %v4438
      %v4440 = vand.u32 %v1671, 4294901760
      %4441 = vmatmul.f32.gmra.mxu0 %v4440
      %v4442 = vpop.f32.mrf.mxu0
      %v4443 = vadd.f32 %v4185, %v4442
      %v4444 = vand.u32 %v1673, 4294901760
      %4445 = vmatmul.f32.gmra.mxu0 %v4444
      %v4446 = vpop.f32.mrf.mxu0
      %v4447 = vadd.f32 %v4193, %v4446
      %v4448 = vand.u32 %v1675, 4294901760
      %4449 = vmatmul.f32.gmra.mxu0 %v4448
      %v4450 = vpop.f32.mrf.mxu0
      %v4451 = vadd.f32 %v4201, %v4450
      %v4452 = vand.u32 %v1677, 4294901760
      %4453 = vmatmul.f32.gmra.mxu0 %v4452
      %v4454 = vpop.f32.mrf.mxu0
      %v4455 = vadd.f32 %v4209, %v4454
      %v4456 = vand.u32 %v1679, 4294901760
      %4457 = vmatmul.f32.gmra.mxu0 %v4456
      %v4458 = vpop.f32.mrf.mxu0
      %v4459 = vadd.f32 %v4217, %v4458
      %v4460 = vand.u32 %v1681, 4294901760
      %4461 = vmatmul.f32.gmra.mxu0 %v4460
      %v4462 = vpop.f32.mrf.mxu0
      %v4463 = vadd.f32 %v4225, %v4462
      %v4464 = vand.u32 %v1683, 4294901760
      %4465 = vmatmul.f32.gmra.mxu0 %v4464
      %v4466 = vpop.f32.mrf.mxu0
      %v4467 = vadd.f32 %v4233, %v4466
      %v4468 = vand.u32 %v1685, 4294901760
      %4469 = vmatmul.f32.gmra.mxu0 %v4468
      %v4470 = vpop.f32.mrf.mxu0
      %v4471 = vadd.f32 %v4241, %v4470
      %v4472 = vand.u32 %v1687, 4294901760
      %4473 = vmatmul.f32.gmra.mxu0 %v4472
      %v4474 = vpop.f32.mrf.mxu0
      %v4475 = vadd.f32 %v4249, %v4474
      %v4476 = vand.u32 %v1689, 4294901760
      %4477 = vmatmul.f32.gmra.mxu0 %v4476
      %v4478 = vpop.f32.mrf.mxu0
      %v4479 = vadd.f32 %v4257, %v4478
      %v4480 = vand.u32 %v1691, 4294901760
      %4481 = vmatmul.f32.gmra.mxu0 %v4480
      %v4482 = vpop.f32.mrf.mxu0
      %v4483 = vadd.f32 %v4265, %v4482
      %v4484 = vand.u32 %v1693, 4294901760
      %4485 = vmatmul.f32.gmra.mxu0 %v4484
      %v4486 = vpop.f32.mrf.mxu0
      %v4487 = vadd.f32 %v4273, %v4486
      %v4488 = vand.u32 %v1695, 4294901760
      %4489 = vmatmul.f32.gmra.mxu0 %v4488
      %v4490 = vpop.f32.mrf.mxu0
      %v4491 = vadd.f32 %v4281, %v4490
      %v4492 = vand.u32 %v1697, 4294901760
      %4493 = vmatmul.f32.gmra.mxu0 %v4492
      %v4494 = vpop.f32.mrf.mxu0
      %v4495 = vadd.f32 %v4289, %v4494
      %v4496 = vand.u32 %v1699, 4294901760
      %4497 = vmatmul.f32.gmra.mxu0 %v4496
      %v4498 = vpop.f32.mrf.mxu0
      %v4499 = vadd.f32 %v4297, %v4498
      %v4500 = vand.u32 %v1701, 4294901760
      %4501 = vmatmul.f32.gmra.mxu0 %v4500
      %v4502 = vpop.f32.mrf.mxu0
      %v4503 = vadd.f32 %v4305, %v4502
      %v4504 = vand.u32 %v1703, 4294901760
      %4505 = vmatmul.f32.gmra.mxu0 %v4504
      %v4506 = vpop.f32.mrf.mxu0
      %v4507 = vadd.f32 %v4313, %v4506
      %v4508 = vand.u32 %v1705, 4294901760
      %4509 = vmatmul.f32.gmra.mxu0 %v4508
      %v4510 = vpop.f32.mrf.mxu0
      %v4511 = vadd.f32 %v4321, %v4510
      %v4512 = vand.u32 %v1707, 4294901760
      %4513 = vmatmul.f32.gmra.mxu0 %v4512
      %v4514 = vpop.f32.mrf.mxu0
      %v4515 = vadd.f32 %v4329, %v4514
      %v4516 = vand.u32 %v1709, 4294901760
      %4517 = vmatmul.f32.gmra.mxu0 %v4516
      %v4518 = vpop.f32.mrf.mxu0
      %v4519 = vadd.f32 %v4337, %v4518
      %v4520 = vand.u32 %v1711, 4294901760
      %4521 = vmatmul.f32.gmra.mxu0 %v4520
      %v4522 = vpop.f32.mrf.mxu0
      %v4523 = vadd.f32 %v4345, %v4522
      %v4524 = vand.u32 %v1713, 4294901760
      %4525 = vmatmul.f32.gmra.mxu0 %v4524
      %v4526 = vpop.f32.mrf.mxu0
      %v4527 = vadd.f32 %v4353, %v4526
      %v4528 = vand.u32 %v1715, 4294901760
      %4529 = vmatmul.f32.gmra.mxu0 %v4528
      %v4530 = vpop.f32.mrf.mxu0
      %v4531 = vadd.f32 %v4361, %v4530
      %v4532 = vand.u32 %v1717, 4294901760
      %4533 = vmatmul.f32.gmra.mxu0 %v4532
      %v4534 = vpop.f32.mrf.mxu0
      %v4535 = vadd.f32 %v4369, %v4534
      %v4536 = vand.u32 %v1719, 4294901760
      %4537 = vmatmul.f32.gmra.mxu0 %v4536
      %v4538 = vpop.f32.mrf.mxu0
      %v4539 = vadd.f32 %v4377, %v4538
      %v4540 = vand.u32 %v1721, 4294901760
      %4541 = vmatmul.f32.gmra.mxu0 %v4540
      %v4542 = vpop.f32.mrf.mxu0
      %v4543 = vadd.f32 %v4385, %v4542
      %v4544 = vand.u32 %v4121, 4294901760
      %4545 = vmatmul.f32.gmra.mxu0 %v4544
      %v4546 = vpop.f32.mrf.mxu0
      %v4547 = vadd.f32 %v4393, %v4546
      %v4548 = vand.u32 %v4124, 4294901760
      %4549 = vmatmul.f32.gmra.mxu0 %v4548
      %v4550 = vpop.f32.mrf.mxu0
      %v4551 = vadd.f32 %v4401, %v4550
      %4552 = vdwg.mxu0
      %4553 = vmatpush.msra.mxu0 0.0
      %4554 = vmatpush.msra.mxu0 0.0
      %4555 = vmatpush.msra.mxu0 0.0
      %4556 = vmatpush.msra.mxu0 0.0
      %4557 = vmatpush.msra.mxu0 0.0
      %4558 = vmatpush.msra.mxu0 0.0
      %4559 = vmatpush.msra.mxu0 0.0
      %4560 = vmatpush.msra.mxu0 0.0
      %4561 = vmatpush.msra.mxu0 0.0
      %4562 = vmatpush.msra.mxu0 0.0
      %4563 = vmatpush.msra.mxu0 0.0
      %4564 = vmatpush.msra.mxu0 0.0
      %4565 = vmatpush.msra.mxu0 0.0
      %4566 = vmatpush.msra.mxu0 0.0
      %4567 = vmatpush.msra.mxu0 0.0
      %v4568 = vand.u32 %v4127, 4294901760
      %v4569 = vsub.f32 %v4127, %v4568
      %4570 = vmatpush.msra.mxu0 %v4569
      %v4571 = vand.u32 %v1663, 4294901760
      %v4572 = vsub.f32 %v1663, %v4571
      %4573 = vmatmul.f32.gmra.mxu0 %v4572
      %v4574 = vpop.f32.mrf.mxu0
      %v4575 = vadd.f32 %v4427, %v4574
      %v4576 = vand.u32 %v1665, 4294901760
      %v4577 = vsub.f32 %v1665, %v4576
      %4578 = vmatmul.f32.gmra.mxu0 %v4577
      %v4579 = vpop.f32.mrf.mxu0
      %v4580 = vadd.f32 %v4431, %v4579
      %v4581 = vand.u32 %v1667, 4294901760
      %v4582 = vsub.f32 %v1667, %v4581
      %4583 = vmatmul.f32.gmra.mxu0 %v4582
      %v4584 = vpop.f32.mrf.mxu0
      %v4585 = vadd.f32 %v4435, %v4584
      %v4586 = vand.u32 %v1669, 4294901760
      %v4587 = vsub.f32 %v1669, %v4586
      %4588 = vmatmul.f32.gmra.mxu0 %v4587
      %v4589 = vpop.f32.mrf.mxu0
      %v4590 = vadd.f32 %v4439, %v4589
      %v4591 = vand.u32 %v1671, 4294901760
      %v4592 = vsub.f32 %v1671, %v4591
      %4593 = vmatmul.f32.gmra.mxu0 %v4592
      %v4594 = vpop.f32.mrf.mxu0
      %v4595 = vadd.f32 %v4443, %v4594
      %v4596 = vand.u32 %v1673, 4294901760
      %v4597 = vsub.f32 %v1673, %v4596
      %4598 = vmatmul.f32.gmra.mxu0 %v4597
      %v4599 = vpop.f32.mrf.mxu0
      %v4600 = vadd.f32 %v4447, %v4599
      %v4601 = vand.u32 %v1675, 4294901760
      %v4602 = vsub.f32 %v1675, %v4601
      %4603 = vmatmul.f32.gmra.mxu0 %v4602
      %v4604 = vpop.f32.mrf.mxu0
      %v4605 = vadd.f32 %v4451, %v4604
      %v4606 = vand.u32 %v1677, 4294901760
      %v4607 = vsub.f32 %v1677, %v4606
      %4608 = vmatmul.f32.gmra.mxu0 %v4607
      %v4609 = vpop.f32.mrf.mxu0
      %v4610 = vadd.f32 %v4455, %v4609
      %v4611 = vand.u32 %v1679, 4294901760
      %v4612 = vsub.f32 %v1679, %v4611
      %4613 = vmatmul.f32.gmra.mxu0 %v4612
      %v4614 = vpop.f32.mrf.mxu0
      %v4615 = vadd.f32 %v4459, %v4614
      %v4616 = vand.u32 %v1681, 4294901760
      %v4617 = vsub.f32 %v1681, %v4616
      %4618 = vmatmul.f32.gmra.mxu0 %v4617
      %v4619 = vpop.f32.mrf.mxu0
      %v4620 = vadd.f32 %v4463, %v4619
      %v4621 = vand.u32 %v1683, 4294901760
      %v4622 = vsub.f32 %v1683, %v4621
      %4623 = vmatmul.f32.gmra.mxu0 %v4622
      %v4624 = vpop.f32.mrf.mxu0
      %v4625 = vadd.f32 %v4467, %v4624
      %v4626 = vand.u32 %v1685, 4294901760
      %v4627 = vsub.f32 %v1685, %v4626
      %4628 = vmatmul.f32.gmra.mxu0 %v4627
      %v4629 = vpop.f32.mrf.mxu0
      %v4630 = vadd.f32 %v4471, %v4629
      %v4631 = vand.u32 %v1687, 4294901760
      %v4632 = vsub.f32 %v1687, %v4631
      %4633 = vmatmul.f32.gmra.mxu0 %v4632
      %v4634 = vpop.f32.mrf.mxu0
      %v4635 = vadd.f32 %v4475, %v4634
      %v4636 = vand.u32 %v1689, 4294901760
      %v4637 = vsub.f32 %v1689, %v4636
      %4638 = vmatmul.f32.gmra.mxu0 %v4637
      %v4639 = vpop.f32.mrf.mxu0
      %v4640 = vadd.f32 %v4479, %v4639
      %v4641 = vand.u32 %v1691, 4294901760
      %v4642 = vsub.f32 %v1691, %v4641
      %4643 = vmatmul.f32.gmra.mxu0 %v4642
      %v4644 = vpop.f32.mrf.mxu0
      %v4645 = vadd.f32 %v4483, %v4644
      %v4646 = vand.u32 %v1693, 4294901760
      %v4647 = vsub.f32 %v1693, %v4646
      %4648 = vmatmul.f32.gmra.mxu0 %v4647
      %v4649 = vpop.f32.mrf.mxu0
      %v4650 = vadd.f32 %v4487, %v4649
      %v4651 = vand.u32 %v1695, 4294901760
      %v4652 = vsub.f32 %v1695, %v4651
      %4653 = vmatmul.f32.gmra.mxu0 %v4652
      %v4654 = vpop.f32.mrf.mxu0
      %v4655 = vadd.f32 %v4491, %v4654
      %v4656 = vand.u32 %v1697, 4294901760
      %v4657 = vsub.f32 %v1697, %v4656
      %4658 = vmatmul.f32.gmra.mxu0 %v4657
      %v4659 = vpop.f32.mrf.mxu0
      %v4660 = vadd.f32 %v4495, %v4659
      %v4661 = vand.u32 %v1699, 4294901760
      %v4662 = vsub.f32 %v1699, %v4661
      %4663 = vmatmul.f32.gmra.mxu0 %v4662
      %v4664 = vpop.f32.mrf.mxu0
      %v4665 = vadd.f32 %v4499, %v4664
      %v4666 = vand.u32 %v1701, 4294901760
      %v4667 = vsub.f32 %v1701, %v4666
      %4668 = vmatmul.f32.gmra.mxu0 %v4667
      %v4669 = vpop.f32.mrf.mxu0
      %v4670 = vadd.f32 %v4503, %v4669
      %v4671 = vand.u32 %v1703, 4294901760
      %v4672 = vsub.f32 %v1703, %v4671
      %4673 = vmatmul.f32.gmra.mxu0 %v4672
      %v4674 = vpop.f32.mrf.mxu0
      %v4675 = vadd.f32 %v4507, %v4674
      %v4676 = vand.u32 %v1705, 4294901760
      %v4677 = vsub.f32 %v1705, %v4676
      %4678 = vmatmul.f32.gmra.mxu0 %v4677
      %v4679 = vpop.f32.mrf.mxu0
      %v4680 = vadd.f32 %v4511, %v4679
      %v4681 = vand.u32 %v1707, 4294901760
      %v4682 = vsub.f32 %v1707, %v4681
      %4683 = vmatmul.f32.gmra.mxu0 %v4682
      %v4684 = vpop.f32.mrf.mxu0
      %v4685 = vadd.f32 %v4515, %v4684
      %v4686 = vand.u32 %v1709, 4294901760
      %v4687 = vsub.f32 %v1709, %v4686
      %4688 = vmatmul.f32.gmra.mxu0 %v4687
      %v4689 = vpop.f32.mrf.mxu0
      %v4690 = vadd.f32 %v4519, %v4689
      %v4691 = vand.u32 %v1711, 4294901760
      %v4692 = vsub.f32 %v1711, %v4691
      %4693 = vmatmul.f32.gmra.mxu0 %v4692
      %v4694 = vpop.f32.mrf.mxu0
      %v4695 = vadd.f32 %v4523, %v4694
      %v4696 = vand.u32 %v1713, 4294901760
      %v4697 = vsub.f32 %v1713, %v4696
      %4698 = vmatmul.f32.gmra.mxu0 %v4697
      %v4699 = vpop.f32.mrf.mxu0
      %v4700 = vadd.f32 %v4527, %v4699
      %v4701 = vand.u32 %v1715, 4294901760
      %v4702 = vsub.f32 %v1715, %v4701
      %4703 = vmatmul.f32.gmra.mxu0 %v4702
      %v4704 = vpop.f32.mrf.mxu0
      %v4705 = vadd.f32 %v4531, %v4704
      %v4706 = vand.u32 %v1717, 4294901760
      %v4707 = vsub.f32 %v1717, %v4706
      %4708 = vmatmul.f32.gmra.mxu0 %v4707
      %v4709 = vpop.f32.mrf.mxu0
      %v4710 = vadd.f32 %v4535, %v4709
      %v4711 = vand.u32 %v1719, 4294901760
      %v4712 = vsub.f32 %v1719, %v4711
      %4713 = vmatmul.f32.gmra.mxu0 %v4712
      %v4714 = vpop.f32.mrf.mxu0
      %v4715 = vadd.f32 %v4539, %v4714
      %v4716 = vand.u32 %v1721, 4294901760
      %v4717 = vsub.f32 %v1721, %v4716
      %4718 = vmatmul.f32.gmra.mxu0 %v4717
      %v4719 = vpop.f32.mrf.mxu0
      %v4720 = vadd.f32 %v4543, %v4719
      %v4721 = vand.u32 %v4121, 4294901760
      %v4722 = vsub.f32 %v4121, %v4721
      %4723 = vmatmul.f32.gmra.mxu0 %v4722
      %v4724 = vpop.f32.mrf.mxu0
      %v4725 = vadd.f32 %v4547, %v4724
      %v4726 = vand.u32 %v4124, 4294901760
      %v4727 = vsub.f32 %v4124, %v4726
      %4728 = vmatmul.f32.gmra.mxu0 %v4727
      %v4729 = vpop.f32.mrf.mxu0
      %v4730 = vadd.f32 %v4551, %v4729
      %4731 = vdwg.mxu0
      %4732 = vmatpush.msra.mxu0 0.0
      %4733 = vmatpush.msra.mxu0 0.0
      %4734 = vmatpush.msra.mxu0 0.0
      %4735 = vmatpush.msra.mxu0 0.0
      %4736 = vmatpush.msra.mxu0 0.0
      %4737 = vmatpush.msra.mxu0 0.0
      %4738 = vmatpush.msra.mxu0 0.0
      %4739 = vmatpush.msra.mxu0 0.0
      %4740 = vmatpush.msra.mxu0 0.0
      %4741 = vmatpush.msra.mxu0 0.0
      %4742 = vmatpush.msra.mxu0 0.0
      %4743 = vmatpush.msra.mxu0 0.0
      %4744 = vmatpush.msra.mxu0 0.0
      %4745 = vmatpush.msra.mxu0 0.0
      %4746 = vmatpush.msra.mxu0 0.0
      %v4747 = vand.u32 %v4127, 4294901760
      %4748 = vmatpush.msra.mxu0 %v4747
      %v4749 = vand.u32 %v1663, 4294901760
      %v4750 = vsub.f32 %v1663, %v4749
      %v4751 = vand.u32 %v4750, 4294901760
      %4752 = vmatmul.f32.gmra.mxu0 %v4751
      %v4753 = vpop.f32.mrf.mxu0
      %v4754 = vadd.f32 %v4575, %v4753
      %v4755 = vand.u32 %v1665, 4294901760
      %v4756 = vsub.f32 %v1665, %v4755
      %v4757 = vand.u32 %v4756, 4294901760
      %4758 = vmatmul.f32.gmra.mxu0 %v4757
      %v4759 = vpop.f32.mrf.mxu0
      %v4760 = vadd.f32 %v4580, %v4759
      %v4761 = vand.u32 %v1667, 4294901760
      %v4762 = vsub.f32 %v1667, %v4761
      %v4763 = vand.u32 %v4762, 4294901760
      %4764 = vmatmul.f32.gmra.mxu0 %v4763
      %v4765 = vpop.f32.mrf.mxu0
      %v4766 = vadd.f32 %v4585, %v4765
      %v4767 = vand.u32 %v1669, 4294901760
      %v4768 = vsub.f32 %v1669, %v4767
      %v4769 = vand.u32 %v4768, 4294901760
      %4770 = vmatmul.f32.gmra.mxu0 %v4769
      %v4771 = vpop.f32.mrf.mxu0
      %v4772 = vadd.f32 %v4590, %v4771
      %v4773 = vand.u32 %v1671, 4294901760
      %v4774 = vsub.f32 %v1671, %v4773
      %v4775 = vand.u32 %v4774, 4294901760
      %4776 = vmatmul.f32.gmra.mxu0 %v4775
      %v4777 = vpop.f32.mrf.mxu0
      %v4778 = vadd.f32 %v4595, %v4777
      %v4779 = vand.u32 %v1673, 4294901760
      %v4780 = vsub.f32 %v1673, %v4779
      %v4781 = vand.u32 %v4780, 4294901760
      %4782 = vmatmul.f32.gmra.mxu0 %v4781
      %v4783 = vpop.f32.mrf.mxu0
      %v4784 = vadd.f32 %v4600, %v4783
      %v4785 = vand.u32 %v1675, 4294901760
      %v4786 = vsub.f32 %v1675, %v4785
      %v4787 = vand.u32 %v4786, 4294901760
      %4788 = vmatmul.f32.gmra.mxu0 %v4787
      %v4789 = vpop.f32.mrf.mxu0
      %v4790 = vadd.f32 %v4605, %v4789
      %v4791 = vand.u32 %v1677, 4294901760
      %v4792 = vsub.f32 %v1677, %v4791
      %v4793 = vand.u32 %v4792, 4294901760
      %4794 = vmatmul.f32.gmra.mxu0 %v4793
      %v4795 = vpop.f32.mrf.mxu0
      %v4796 = vadd.f32 %v4610, %v4795
      %v4797 = vand.u32 %v1679, 4294901760
      %v4798 = vsub.f32 %v1679, %v4797
      %v4799 = vand.u32 %v4798, 4294901760
      %4800 = vmatmul.f32.gmra.mxu0 %v4799
      %v4801 = vpop.f32.mrf.mxu0
      %v4802 = vadd.f32 %v4615, %v4801
      %v4803 = vand.u32 %v1681, 4294901760
      %v4804 = vsub.f32 %v1681, %v4803
      %v4805 = vand.u32 %v4804, 4294901760
      %4806 = vmatmul.f32.gmra.mxu0 %v4805
      %v4807 = vpop.f32.mrf.mxu0
      %v4808 = vadd.f32 %v4620, %v4807
      %v4809 = vand.u32 %v1683, 4294901760
      %v4810 = vsub.f32 %v1683, %v4809
      %v4811 = vand.u32 %v4810, 4294901760
      %4812 = vmatmul.f32.gmra.mxu0 %v4811
      %v4813 = vpop.f32.mrf.mxu0
      %v4814 = vadd.f32 %v4625, %v4813
      %v4815 = vand.u32 %v1685, 4294901760
      %v4816 = vsub.f32 %v1685, %v4815
      %v4817 = vand.u32 %v4816, 4294901760
      %4818 = vmatmul.f32.gmra.mxu0 %v4817
      %v4819 = vpop.f32.mrf.mxu0
      %v4820 = vadd.f32 %v4630, %v4819
      %v4821 = vand.u32 %v1687, 4294901760
      %v4822 = vsub.f32 %v1687, %v4821
      %v4823 = vand.u32 %v4822, 4294901760
      %4824 = vmatmul.f32.gmra.mxu0 %v4823
      %v4825 = vpop.f32.mrf.mxu0
      %v4826 = vadd.f32 %v4635, %v4825
      %v4827 = vand.u32 %v1689, 4294901760
      %v4828 = vsub.f32 %v1689, %v4827
      %v4829 = vand.u32 %v4828, 4294901760
      %4830 = vmatmul.f32.gmra.mxu0 %v4829
      %v4831 = vpop.f32.mrf.mxu0
      %v4832 = vadd.f32 %v4640, %v4831
      %v4833 = vand.u32 %v1691, 4294901760
      %v4834 = vsub.f32 %v1691, %v4833
      %v4835 = vand.u32 %v4834, 4294901760
      %4836 = vmatmul.f32.gmra.mxu0 %v4835
      %v4837 = vpop.f32.mrf.mxu0
      %v4838 = vadd.f32 %v4645, %v4837
      %v4839 = vand.u32 %v1693, 4294901760
      %v4840 = vsub.f32 %v1693, %v4839
      %v4841 = vand.u32 %v4840, 4294901760
      %4842 = vmatmul.f32.gmra.mxu0 %v4841
      %v4843 = vpop.f32.mrf.mxu0
      %v4844 = vadd.f32 %v4650, %v4843
      %v4845 = vand.u32 %v1695, 4294901760
      %v4846 = vsub.f32 %v1695, %v4845
      %v4847 = vand.u32 %v4846, 4294901760
      %4848 = vmatmul.f32.gmra.mxu0 %v4847
      %v4849 = vpop.f32.mrf.mxu0
      %v4850 = vadd.f32 %v4655, %v4849
      %v4851 = vand.u32 %v1697, 4294901760
      %v4852 = vsub.f32 %v1697, %v4851
      %v4853 = vand.u32 %v4852, 4294901760
      %4854 = vmatmul.f32.gmra.mxu0 %v4853
      %v4855 = vpop.f32.mrf.mxu0
      %v4856 = vadd.f32 %v4660, %v4855
      %v4857 = vand.u32 %v1699, 4294901760
      %v4858 = vsub.f32 %v1699, %v4857
      %v4859 = vand.u32 %v4858, 4294901760
      %4860 = vmatmul.f32.gmra.mxu0 %v4859
      %v4861 = vpop.f32.mrf.mxu0
      %v4862 = vadd.f32 %v4665, %v4861
      %v4863 = vand.u32 %v1701, 4294901760
      %v4864 = vsub.f32 %v1701, %v4863
      %v4865 = vand.u32 %v4864, 4294901760
      %4866 = vmatmul.f32.gmra.mxu0 %v4865
      %v4867 = vpop.f32.mrf.mxu0
      %v4868 = vadd.f32 %v4670, %v4867
      %v4869 = vand.u32 %v1703, 4294901760
      %v4870 = vsub.f32 %v1703, %v4869
      %v4871 = vand.u32 %v4870, 4294901760
      %4872 = vmatmul.f32.gmra.mxu0 %v4871
      %v4873 = vpop.f32.mrf.mxu0
      %v4874 = vadd.f32 %v4675, %v4873
      %v4875 = vand.u32 %v1705, 4294901760
      %v4876 = vsub.f32 %v1705, %v4875
      %v4877 = vand.u32 %v4876, 4294901760
      %4878 = vmatmul.f32.gmra.mxu0 %v4877
      %v4879 = vpop.f32.mrf.mxu0
      %v4880 = vadd.f32 %v4680, %v4879
      %v4881 = vand.u32 %v1707, 4294901760
      %v4882 = vsub.f32 %v1707, %v4881
      %v4883 = vand.u32 %v4882, 4294901760
      %4884 = vmatmul.f32.gmra.mxu0 %v4883
      %v4885 = vpop.f32.mrf.mxu0
      %v4886 = vadd.f32 %v4685, %v4885
      %v4887 = vand.u32 %v1709, 4294901760
      %v4888 = vsub.f32 %v1709, %v4887
      %v4889 = vand.u32 %v4888, 4294901760
      %4890 = vmatmul.f32.gmra.mxu0 %v4889
      %v4891 = vpop.f32.mrf.mxu0
      %v4892 = vadd.f32 %v4690, %v4891
      %v4893 = vand.u32 %v1711, 4294901760
      %v4894 = vsub.f32 %v1711, %v4893
      %v4895 = vand.u32 %v4894, 4294901760
      %4896 = vmatmul.f32.gmra.mxu0 %v4895
      %v4897 = vpop.f32.mrf.mxu0
      %v4898 = vadd.f32 %v4695, %v4897
      %v4899 = vand.u32 %v1713, 4294901760
      %v4900 = vsub.f32 %v1713, %v4899
      %v4901 = vand.u32 %v4900, 4294901760
      %4902 = vmatmul.f32.gmra.mxu0 %v4901
      %v4903 = vpop.f32.mrf.mxu0
      %v4904 = vadd.f32 %v4700, %v4903
      %v4905 = vand.u32 %v1715, 4294901760
      %v4906 = vsub.f32 %v1715, %v4905
      %v4907 = vand.u32 %v4906, 4294901760
      %4908 = vmatmul.f32.gmra.mxu0 %v4907
      %v4909 = vpop.f32.mrf.mxu0
      %v4910 = vadd.f32 %v4705, %v4909
      %v4911 = vand.u32 %v1717, 4294901760
      %v4912 = vsub.f32 %v1717, %v4911
      %v4913 = vand.u32 %v4912, 4294901760
      %4914 = vmatmul.f32.gmra.mxu0 %v4913
      %v4915 = vpop.f32.mrf.mxu0
      %v4916 = vadd.f32 %v4710, %v4915
      %v4917 = vand.u32 %v1719, 4294901760
      %v4918 = vsub.f32 %v1719, %v4917
      %v4919 = vand.u32 %v4918, 4294901760
      %4920 = vmatmul.f32.gmra.mxu0 %v4919
      %v4921 = vpop.f32.mrf.mxu0
      %v4922 = vadd.f32 %v4715, %v4921
      %v4923 = vand.u32 %v1721, 4294901760
      %v4924 = vsub.f32 %v1721, %v4923
      %v4925 = vand.u32 %v4924, 4294901760
      %4926 = vmatmul.f32.gmra.mxu0 %v4925
      %v4927 = vpop.f32.mrf.mxu0
      %v4928 = vadd.f32 %v4720, %v4927
      %v4929 = vand.u32 %v4121, 4294901760
      %v4930 = vsub.f32 %v4121, %v4929
      %v4931 = vand.u32 %v4930, 4294901760
      %4932 = vmatmul.f32.gmra.mxu0 %v4931
      %v4933 = vpop.f32.mrf.mxu0
      %v4934 = vadd.f32 %v4725, %v4933
      %v4935 = vand.u32 %v4124, 4294901760
      %v4936 = vsub.f32 %v4124, %v4935
      %v4937 = vand.u32 %v4936, 4294901760
      %4938 = vmatmul.f32.gmra.mxu0 %v4937
      %v4939 = vpop.f32.mrf.mxu0
      %v4940 = vadd.f32 %v4730, %v4939
      %4941 = vdwg.mxu0
      %4942 = vmatpush.msra.mxu0 0.0
      %4943 = vmatpush.msra.mxu0 0.0
      %4944 = vmatpush.msra.mxu0 0.0
      %4945 = vmatpush.msra.mxu0 0.0
      %4946 = vmatpush.msra.mxu0 0.0
      %4947 = vmatpush.msra.mxu0 0.0
      %4948 = vmatpush.msra.mxu0 0.0
      %4949 = vmatpush.msra.mxu0 0.0
      %4950 = vmatpush.msra.mxu0 0.0
      %4951 = vmatpush.msra.mxu0 0.0
      %4952 = vmatpush.msra.mxu0 0.0
      %4953 = vmatpush.msra.mxu0 0.0
      %4954 = vmatpush.msra.mxu0 0.0
      %4955 = vmatpush.msra.mxu0 0.0
      %4956 = vmatpush.msra.mxu0 0.0
      %v4957 = vand.u32 %v4127, 4294901760
      %v4958 = vsub.f32 %v4127, %v4957
      %v4959 = vand.u32 %v4958, 4294901760
      %4960 = vmatpush.msra.mxu0 %v4959
      %v4961 = vand.u32 %v1663, 4294901760
      %4962 = vmatmul.f32.gmra.mxu0 %v4961
      %v4963 = vpop.f32.mrf.mxu0
      %v4964 = vadd.f32 %v4754, %v4963
      %v4965 = vand.u32 %v1665, 4294901760
      %4966 = vmatmul.f32.gmra.mxu0 %v4965
      %v4967 = vpop.f32.mrf.mxu0
      %v4968 = vadd.f32 %v4760, %v4967
      %v4969 = vand.u32 %v1667, 4294901760
      %4970 = vmatmul.f32.gmra.mxu0 %v4969
      %v4971 = vpop.f32.mrf.mxu0
      %v4972 = vadd.f32 %v4766, %v4971
      %v4973 = vand.u32 %v1669, 4294901760
      %4974 = vmatmul.f32.gmra.mxu0 %v4973
      %v4975 = vpop.f32.mrf.mxu0
      %v4976 = vadd.f32 %v4772, %v4975
      %v4977 = vand.u32 %v1671, 4294901760
      %4978 = vmatmul.f32.gmra.mxu0 %v4977
      %v4979 = vpop.f32.mrf.mxu0
      %v4980 = vadd.f32 %v4778, %v4979
      %v4981 = vand.u32 %v1673, 4294901760
      %4982 = vmatmul.f32.gmra.mxu0 %v4981
      %v4983 = vpop.f32.mrf.mxu0
      %v4984 = vadd.f32 %v4784, %v4983
      %v4985 = vand.u32 %v1675, 4294901760
      %4986 = vmatmul.f32.gmra.mxu0 %v4985
      %v4987 = vpop.f32.mrf.mxu0
      %v4988 = vadd.f32 %v4790, %v4987
      %v4989 = vand.u32 %v1677, 4294901760
      %4990 = vmatmul.f32.gmra.mxu0 %v4989
      %v4991 = vpop.f32.mrf.mxu0
      %v4992 = vadd.f32 %v4796, %v4991
      %v4993 = vand.u32 %v1679, 4294901760
      %4994 = vmatmul.f32.gmra.mxu0 %v4993
      %v4995 = vpop.f32.mrf.mxu0
      %v4996 = vadd.f32 %v4802, %v4995
      %v4997 = vand.u32 %v1681, 4294901760
      %4998 = vmatmul.f32.gmra.mxu0 %v4997
      %v4999 = vpop.f32.mrf.mxu0
      %v5000 = vadd.f32 %v4808, %v4999
      %v5001 = vand.u32 %v1683, 4294901760
      %5002 = vmatmul.f32.gmra.mxu0 %v5001
      %v5003 = vpop.f32.mrf.mxu0
      %v5004 = vadd.f32 %v4814, %v5003
      %v5005 = vand.u32 %v1685, 4294901760
      %5006 = vmatmul.f32.gmra.mxu0 %v5005
      %v5007 = vpop.f32.mrf.mxu0
      %v5008 = vadd.f32 %v4820, %v5007
      %v5009 = vand.u32 %v1687, 4294901760
      %5010 = vmatmul.f32.gmra.mxu0 %v5009
      %v5011 = vpop.f32.mrf.mxu0
      %v5012 = vadd.f32 %v4826, %v5011
      %v5013 = vand.u32 %v1689, 4294901760
      %5014 = vmatmul.f32.gmra.mxu0 %v5013
      %v5015 = vpop.f32.mrf.mxu0
      %v5016 = vadd.f32 %v4832, %v5015
      %v5017 = vand.u32 %v1691, 4294901760
      %5018 = vmatmul.f32.gmra.mxu0 %v5017
      %v5019 = vpop.f32.mrf.mxu0
      %v5020 = vadd.f32 %v4838, %v5019
      %v5021 = vand.u32 %v1693, 4294901760
      %5022 = vmatmul.f32.gmra.mxu0 %v5021
      %v5023 = vpop.f32.mrf.mxu0
      %v5024 = vadd.f32 %v4844, %v5023
      %v5025 = vand.u32 %v1695, 4294901760
      %5026 = vmatmul.f32.gmra.mxu0 %v5025
      %v5027 = vpop.f32.mrf.mxu0
      %v5028 = vadd.f32 %v4850, %v5027
      %v5029 = vand.u32 %v1697, 4294901760
      %5030 = vmatmul.f32.gmra.mxu0 %v5029
      %v5031 = vpop.f32.mrf.mxu0
      %v5032 = vadd.f32 %v4856, %v5031
      %v5033 = vand.u32 %v1699, 4294901760
      %5034 = vmatmul.f32.gmra.mxu0 %v5033
      %v5035 = vpop.f32.mrf.mxu0
      %v5036 = vadd.f32 %v4862, %v5035
      %v5037 = vand.u32 %v1701, 4294901760
      %5038 = vmatmul.f32.gmra.mxu0 %v5037
      %v5039 = vpop.f32.mrf.mxu0
      %v5040 = vadd.f32 %v4868, %v5039
      %v5041 = vand.u32 %v1703, 4294901760
      %5042 = vmatmul.f32.gmra.mxu0 %v5041
      %v5043 = vpop.f32.mrf.mxu0
      %v5044 = vadd.f32 %v4874, %v5043
      %v5045 = vand.u32 %v1705, 4294901760
      %5046 = vmatmul.f32.gmra.mxu0 %v5045
      %v5047 = vpop.f32.mrf.mxu0
      %v5048 = vadd.f32 %v4880, %v5047
      %v5049 = vand.u32 %v1707, 4294901760
      %5050 = vmatmul.f32.gmra.mxu0 %v5049
      %v5051 = vpop.f32.mrf.mxu0
      %v5052 = vadd.f32 %v4886, %v5051
      %v5053 = vand.u32 %v1709, 4294901760
      %5054 = vmatmul.f32.gmra.mxu0 %v5053
      %v5055 = vpop.f32.mrf.mxu0
      %v5056 = vadd.f32 %v4892, %v5055
      %v5057 = vand.u32 %v1711, 4294901760
      %5058 = vmatmul.f32.gmra.mxu0 %v5057
      %v5059 = vpop.f32.mrf.mxu0
      %v5060 = vadd.f32 %v4898, %v5059
      %v5061 = vand.u32 %v1713, 4294901760
      %5062 = vmatmul.f32.gmra.mxu0 %v5061
      %v5063 = vpop.f32.mrf.mxu0
      %v5064 = vadd.f32 %v4904, %v5063
      %v5065 = vand.u32 %v1715, 4294901760
      %5066 = vmatmul.f32.gmra.mxu0 %v5065
      %v5067 = vpop.f32.mrf.mxu0
      %v5068 = vadd.f32 %v4910, %v5067
      %v5069 = vand.u32 %v1717, 4294901760
      %5070 = vmatmul.f32.gmra.mxu0 %v5069
      %v5071 = vpop.f32.mrf.mxu0
      %v5072 = vadd.f32 %v4916, %v5071
      %v5073 = vand.u32 %v1719, 4294901760
      %5074 = vmatmul.f32.gmra.mxu0 %v5073
      %v5075 = vpop.f32.mrf.mxu0
      %v5076 = vadd.f32 %v4922, %v5075
      %v5077 = vand.u32 %v1721, 4294901760
      %5078 = vmatmul.f32.gmra.mxu0 %v5077
      %v5079 = vpop.f32.mrf.mxu0
      %v5080 = vadd.f32 %v4928, %v5079
      %v5081 = vand.u32 %v4121, 4294901760
      %5082 = vmatmul.f32.gmra.mxu0 %v5081
      %v5083 = vpop.f32.mrf.mxu0
      %v5084 = vadd.f32 %v4934, %v5083
      %v5085 = vand.u32 %v4124, 4294901760
      %5086 = vmatmul.f32.gmra.mxu0 %v5085
      %v5087 = vpop.f32.mrf.mxu0
      %v5088 = vadd.f32 %v4940, %v5087
      %5089 = vdwg.mxu0
      %5090 = vmatpush.msra.mxu0 0.0
      %5091 = vmatpush.msra.mxu0 0.0
      %5092 = vmatpush.msra.mxu0 0.0
      %5093 = vmatpush.msra.mxu0 0.0
      %5094 = vmatpush.msra.mxu0 0.0
      %5095 = vmatpush.msra.mxu0 0.0
      %5096 = vmatpush.msra.mxu0 0.0
      %5097 = vmatpush.msra.mxu0 0.0
      %5098 = vmatpush.msra.mxu0 0.0
      %5099 = vmatpush.msra.mxu0 0.0
      %5100 = vmatpush.msra.mxu0 0.0
      %5101 = vmatpush.msra.mxu0 0.0
      %5102 = vmatpush.msra.mxu0 0.0
      %5103 = vmatpush.msra.mxu0 0.0
      %5104 = vmatpush.msra.mxu0 0.0
      %v5105 = vand.u32 %v4127, 4294901760
      %5106 = vmatpush.msra.mxu0 %v5105
      %v5107 = vand.u32 %v1663, 4294901760
      %5108 = vmatmul.f32.gmra.mxu0 %v5107
      %v5109 = vpop.f32.mrf.mxu0
      %v5110 = vadd.f32 %v4964, %v5109
      %v5111 = vand.u32 %v1665, 4294901760
      %5112 = vmatmul.f32.gmra.mxu0 %v5111
      %v5113 = vpop.f32.mrf.mxu0
      %v5114 = vadd.f32 %v4968, %v5113
      %v5115 = vand.u32 %v1667, 4294901760
      %5116 = vmatmul.f32.gmra.mxu0 %v5115
      %v5117 = vpop.f32.mrf.mxu0
      %v5118 = vadd.f32 %v4972, %v5117
      %v5119 = vand.u32 %v1669, 4294901760
      %5120 = vmatmul.f32.gmra.mxu0 %v5119
      %v5121 = vpop.f32.mrf.mxu0
      %v5122 = vadd.f32 %v4976, %v5121
      %v5123 = vand.u32 %v1671, 4294901760
      %5124 = vmatmul.f32.gmra.mxu0 %v5123
      %v5125 = vpop.f32.mrf.mxu0
      %v5126 = vadd.f32 %v4980, %v5125
      %v5127 = vand.u32 %v1673, 4294901760
      %5128 = vmatmul.f32.gmra.mxu0 %v5127
      %v5129 = vpop.f32.mrf.mxu0
      %v5130 = vadd.f32 %v4984, %v5129
      %v5131 = vand.u32 %v1675, 4294901760
      %5132 = vmatmul.f32.gmra.mxu0 %v5131
      %v5133 = vpop.f32.mrf.mxu0
      %v5134 = vadd.f32 %v4988, %v5133
      %v5135 = vand.u32 %v1677, 4294901760
      %5136 = vmatmul.f32.gmra.mxu0 %v5135
      %v5137 = vpop.f32.mrf.mxu0
      %v5138 = vadd.f32 %v4992, %v5137
      %v5139 = vand.u32 %v1679, 4294901760
      %5140 = vmatmul.f32.gmra.mxu0 %v5139
      %v5141 = vpop.f32.mrf.mxu0
      %v5142 = vadd.f32 %v4996, %v5141
      %v5143 = vand.u32 %v1681, 4294901760
      %5144 = vmatmul.f32.gmra.mxu0 %v5143
      %v5145 = vpop.f32.mrf.mxu0
      %v5146 = vadd.f32 %v5000, %v5145
      %v5147 = vand.u32 %v1683, 4294901760
      %5148 = vmatmul.f32.gmra.mxu0 %v5147
      %v5149 = vpop.f32.mrf.mxu0
      %v5150 = vadd.f32 %v5004, %v5149
      %v5151 = vand.u32 %v1685, 4294901760
      %5152 = vmatmul.f32.gmra.mxu0 %v5151
      %v5153 = vpop.f32.mrf.mxu0
      %v5154 = vadd.f32 %v5008, %v5153
      %v5155 = vand.u32 %v1687, 4294901760
      %5156 = vmatmul.f32.gmra.mxu0 %v5155
      %v5157 = vpop.f32.mrf.mxu0
      %v5158 = vadd.f32 %v5012, %v5157
      %v5159 = vand.u32 %v1689, 4294901760
      %5160 = vmatmul.f32.gmra.mxu0 %v5159
      %v5161 = vpop.f32.mrf.mxu0
      %v5162 = vadd.f32 %v5016, %v5161
      %v5163 = vand.u32 %v1691, 4294901760
      %5164 = vmatmul.f32.gmra.mxu0 %v5163
      %v5165 = vpop.f32.mrf.mxu0
      %v5166 = vadd.f32 %v5020, %v5165
      %v5167 = vand.u32 %v1693, 4294901760
      %5168 = vmatmul.f32.gmra.mxu0 %v5167
      %v5169 = vpop.f32.mrf.mxu0
      %v5170 = vadd.f32 %v5024, %v5169
      %v5171 = vand.u32 %v1695, 4294901760
      %5172 = vmatmul.f32.gmra.mxu0 %v5171
      %v5173 = vpop.f32.mrf.mxu0
      %v5174 = vadd.f32 %v5028, %v5173
      %v5175 = vand.u32 %v1697, 4294901760
      %5176 = vmatmul.f32.gmra.mxu0 %v5175
      %v5177 = vpop.f32.mrf.mxu0
      %v5178 = vadd.f32 %v5032, %v5177
      %v5179 = vand.u32 %v1699, 4294901760
      %5180 = vmatmul.f32.gmra.mxu0 %v5179
      %v5181 = vpop.f32.mrf.mxu0
      %v5182 = vadd.f32 %v5036, %v5181
      %v5183 = vand.u32 %v1701, 4294901760
      %5184 = vmatmul.f32.gmra.mxu0 %v5183
      %v5185 = vpop.f32.mrf.mxu0
      %v5186 = vadd.f32 %v5040, %v5185
      %v5187 = vand.u32 %v1703, 4294901760
      %5188 = vmatmul.f32.gmra.mxu0 %v5187
      %v5189 = vpop.f32.mrf.mxu0
      %v5190 = vadd.f32 %v5044, %v5189
      %v5191 = vand.u32 %v1705, 4294901760
      %5192 = vmatmul.f32.gmra.mxu0 %v5191
      %v5193 = vpop.f32.mrf.mxu0
      %v5194 = vadd.f32 %v5048, %v5193
      %v5195 = vand.u32 %v1707, 4294901760
      %5196 = vmatmul.f32.gmra.mxu0 %v5195
      %v5197 = vpop.f32.mrf.mxu0
      %v5198 = vadd.f32 %v5052, %v5197
      %v5199 = vand.u32 %v1709, 4294901760
      %5200 = vmatmul.f32.gmra.mxu0 %v5199
      %v5201 = vpop.f32.mrf.mxu0
      %v5202 = vadd.f32 %v5056, %v5201
      %v5203 = vand.u32 %v1711, 4294901760
      %5204 = vmatmul.f32.gmra.mxu0 %v5203
      %v5205 = vpop.f32.mrf.mxu0
      %v5206 = vadd.f32 %v5060, %v5205
      %v5207 = vand.u32 %v1713, 4294901760
      %5208 = vmatmul.f32.gmra.mxu0 %v5207
      %v5209 = vpop.f32.mrf.mxu0
      %v5210 = vadd.f32 %v5064, %v5209
      %v5211 = vand.u32 %v1715, 4294901760
      %5212 = vmatmul.f32.gmra.mxu0 %v5211
      %v5213 = vpop.f32.mrf.mxu0
      %v5214 = vadd.f32 %v5068, %v5213
      %v5215 = vand.u32 %v1717, 4294901760
      %5216 = vmatmul.f32.gmra.mxu0 %v5215
      %v5217 = vpop.f32.mrf.mxu0
      %v5218 = vadd.f32 %v5072, %v5217
      %v5219 = vand.u32 %v1719, 4294901760
      %5220 = vmatmul.f32.gmra.mxu0 %v5219
      %v5221 = vpop.f32.mrf.mxu0
      %v5222 = vadd.f32 %v5076, %v5221
      %v5223 = vand.u32 %v1721, 4294901760
      %5224 = vmatmul.f32.gmra.mxu0 %v5223
      %v5225 = vpop.f32.mrf.mxu0
      %v5226 = vadd.f32 %v5080, %v5225
      %v5227 = vand.u32 %v4121, 4294901760
      %5228 = vmatmul.f32.gmra.mxu0 %v5227
      %v5229 = vpop.f32.mrf.mxu0
      %v5230 = vadd.f32 %v5084, %v5229
      %v5231 = vand.u32 %v4124, 4294901760
      %5232 = vmatmul.f32.gmra.mxu0 %v5231
      %v5233 = vpop.f32.mrf.mxu0
      %v5234 = vadd.f32 %v5088, %v5233
      %5235 = vdwg.mxu0
      %v5236 = vadd.f32 %v4088, %v5110
      %v5237 = vadd.f32 %v4089, %v5114
      %v5238 = vadd.f32 %v4090, %v5118
      %v5239 = vadd.f32 %v4091, %v5122
      %v5240 = vadd.f32 %v4092, %v5126
      %v5241 = vadd.f32 %v4093, %v5130
      %v5242 = vadd.f32 %v4094, %v5134
      %v5243 = vadd.f32 %v4095, %v5138
      %v5244 = vadd.f32 %v4096, %v5142
      %v5245 = vadd.f32 %v4097, %v5146
      %v5246 = vadd.f32 %v4098, %v5150
      %v5247 = vadd.f32 %v4099, %v5154
      %v5248 = vadd.f32 %v4100, %v5158
      %v5249 = vadd.f32 %v4101, %v5162
      %v5250 = vadd.f32 %v4102, %v5166
      %v5251 = vadd.f32 %v4103, %v5170
      %v5252 = vadd.f32 %v4104, %v5174
      %v5253 = vadd.f32 %v4105, %v5178
      %v5254 = vadd.f32 %v4106, %v5182
      %v5255 = vadd.f32 %v4107, %v5186
      %v5256 = vadd.f32 %v4108, %v5190
      %v5257 = vadd.f32 %v4109, %v5194
      %v5258 = vadd.f32 %v4110, %v5198
      %v5259 = vadd.f32 %v4111, %v5202
      %v5260 = vadd.f32 %v4112, %v5206
      %v5261 = vadd.f32 %v4113, %v5210
      %v5262 = vadd.f32 %v4114, %v5214
      %v5263 = vadd.f32 %v4115, %v5218
      %v5264 = vadd.f32 %v4116, %v5222
      %v5265 = vadd.f32 %v4117, %v5226
      %v5266 = vadd.f32 %v4118, %v5230
      %v5267 = vadd.f32 %v4119, %v5234
      %v5269 = vrot.slane %v340, 1
      %v5270 = vrot.slane %v341, 1
      %v5271 = vsel %vm403, %v5269, %v5270
      %v5272 = vrot.slane %v342, 1
      %v5273 = vsel %vm403, %v5270, %v5272
      %v5274 = vsel %vm171, %v5271, 0
      %v5276 = vsel %vm171, %v5273, 0
      %v5279 = vsel %vm548, %v350, 0
      %5281 = vmatpush.msra.mxu0 0.0
      %5282 = vmatpush.msra.mxu0 0.0
      %5283 = vmatpush.msra.mxu0 0.0
      %5284 = vmatpush.msra.mxu0 0.0
      %5285 = vmatpush.msra.mxu0 0.0
      %5286 = vmatpush.msra.mxu0 0.0
      %5287 = vmatpush.msra.mxu0 0.0
      %5288 = vmatpush.msra.mxu0 0.0
      %5289 = vmatpush.msra.mxu0 0.0
      %5290 = vmatpush.msra.mxu0 0.0
      %5291 = vmatpush.msra.mxu0 0.0
      %5292 = vmatpush.msra.mxu0 0.0
      %5293 = vmatpush.msra.mxu0 0.0
      %5294 = vmatpush.msra.mxu0 0.0
      %5295 = vmatpush.msra.mxu0 0.0
      %v5296 = vand.u32 %v5279, 4294901760
      %5297 = vmatpush.msra.mxu0 %v5296
      %v5298 = vand.u32 %v488, 4294901760
      %v5299 = vsub.f32 %v488, %v5298
      %v5300 = vand.u32 %v5299, 4294901760
      %v5301 = vsub.f32 %v5299, %v5300
      %v5302 = vand.u32 %v5301, 4294901760
      %5303 = vmatmul.f32.gmra.mxu0 %v5302
      %v5304 = vpop.f32.mrf.mxu0
      %v5305 = vadd.f32 0.0, %v5304
      %v5306 = vand.u32 %v490, 4294901760
      %v5307 = vsub.f32 %v490, %v5306
      %v5308 = vand.u32 %v5307, 4294901760
      %v5309 = vsub.f32 %v5307, %v5308
      %v5310 = vand.u32 %v5309, 4294901760
      %5311 = vmatmul.f32.gmra.mxu0 %v5310
      %v5312 = vpop.f32.mrf.mxu0
      %v5313 = vadd.f32 0.0, %v5312
      %v5314 = vand.u32 %v492, 4294901760
      %v5315 = vsub.f32 %v492, %v5314
      %v5316 = vand.u32 %v5315, 4294901760
      %v5317 = vsub.f32 %v5315, %v5316
      %v5318 = vand.u32 %v5317, 4294901760
      %5319 = vmatmul.f32.gmra.mxu0 %v5318
      %v5320 = vpop.f32.mrf.mxu0
      %v5321 = vadd.f32 0.0, %v5320
      %v5322 = vand.u32 %v494, 4294901760
      %v5323 = vsub.f32 %v494, %v5322
      %v5324 = vand.u32 %v5323, 4294901760
      %v5325 = vsub.f32 %v5323, %v5324
      %v5326 = vand.u32 %v5325, 4294901760
      %5327 = vmatmul.f32.gmra.mxu0 %v5326
      %v5328 = vpop.f32.mrf.mxu0
      %v5329 = vadd.f32 0.0, %v5328
      %v5330 = vand.u32 %v496, 4294901760
      %v5331 = vsub.f32 %v496, %v5330
      %v5332 = vand.u32 %v5331, 4294901760
      %v5333 = vsub.f32 %v5331, %v5332
      %v5334 = vand.u32 %v5333, 4294901760
      %5335 = vmatmul.f32.gmra.mxu0 %v5334
      %v5336 = vpop.f32.mrf.mxu0
      %v5337 = vadd.f32 0.0, %v5336
      %v5338 = vand.u32 %v498, 4294901760
      %v5339 = vsub.f32 %v498, %v5338
      %v5340 = vand.u32 %v5339, 4294901760
      %v5341 = vsub.f32 %v5339, %v5340
      %v5342 = vand.u32 %v5341, 4294901760
      %5343 = vmatmul.f32.gmra.mxu0 %v5342
      %v5344 = vpop.f32.mrf.mxu0
      %v5345 = vadd.f32 0.0, %v5344
      %v5346 = vand.u32 %v500, 4294901760
      %v5347 = vsub.f32 %v500, %v5346
      %v5348 = vand.u32 %v5347, 4294901760
      %v5349 = vsub.f32 %v5347, %v5348
      %v5350 = vand.u32 %v5349, 4294901760
      %5351 = vmatmul.f32.gmra.mxu0 %v5350
      %v5352 = vpop.f32.mrf.mxu0
      %v5353 = vadd.f32 0.0, %v5352
      %v5354 = vand.u32 %v502, 4294901760
      %v5355 = vsub.f32 %v502, %v5354
      %v5356 = vand.u32 %v5355, 4294901760
      %v5357 = vsub.f32 %v5355, %v5356
      %v5358 = vand.u32 %v5357, 4294901760
      %5359 = vmatmul.f32.gmra.mxu0 %v5358
      %v5360 = vpop.f32.mrf.mxu0
      %v5361 = vadd.f32 0.0, %v5360
      %v5362 = vand.u32 %v504, 4294901760
      %v5363 = vsub.f32 %v504, %v5362
      %v5364 = vand.u32 %v5363, 4294901760
      %v5365 = vsub.f32 %v5363, %v5364
      %v5366 = vand.u32 %v5365, 4294901760
      %5367 = vmatmul.f32.gmra.mxu0 %v5366
      %v5368 = vpop.f32.mrf.mxu0
      %v5369 = vadd.f32 0.0, %v5368
      %v5370 = vand.u32 %v506, 4294901760
      %v5371 = vsub.f32 %v506, %v5370
      %v5372 = vand.u32 %v5371, 4294901760
      %v5373 = vsub.f32 %v5371, %v5372
      %v5374 = vand.u32 %v5373, 4294901760
      %5375 = vmatmul.f32.gmra.mxu0 %v5374
      %v5376 = vpop.f32.mrf.mxu0
      %v5377 = vadd.f32 0.0, %v5376
      %v5378 = vand.u32 %v508, 4294901760
      %v5379 = vsub.f32 %v508, %v5378
      %v5380 = vand.u32 %v5379, 4294901760
      %v5381 = vsub.f32 %v5379, %v5380
      %v5382 = vand.u32 %v5381, 4294901760
      %5383 = vmatmul.f32.gmra.mxu0 %v5382
      %v5384 = vpop.f32.mrf.mxu0
      %v5385 = vadd.f32 0.0, %v5384
      %v5386 = vand.u32 %v510, 4294901760
      %v5387 = vsub.f32 %v510, %v5386
      %v5388 = vand.u32 %v5387, 4294901760
      %v5389 = vsub.f32 %v5387, %v5388
      %v5390 = vand.u32 %v5389, 4294901760
      %5391 = vmatmul.f32.gmra.mxu0 %v5390
      %v5392 = vpop.f32.mrf.mxu0
      %v5393 = vadd.f32 0.0, %v5392
      %v5394 = vand.u32 %v512, 4294901760
      %v5395 = vsub.f32 %v512, %v5394
      %v5396 = vand.u32 %v5395, 4294901760
      %v5397 = vsub.f32 %v5395, %v5396
      %v5398 = vand.u32 %v5397, 4294901760
      %5399 = vmatmul.f32.gmra.mxu0 %v5398
      %v5400 = vpop.f32.mrf.mxu0
      %v5401 = vadd.f32 0.0, %v5400
      %v5402 = vand.u32 %v514, 4294901760
      %v5403 = vsub.f32 %v514, %v5402
      %v5404 = vand.u32 %v5403, 4294901760
      %v5405 = vsub.f32 %v5403, %v5404
      %v5406 = vand.u32 %v5405, 4294901760
      %5407 = vmatmul.f32.gmra.mxu0 %v5406
      %v5408 = vpop.f32.mrf.mxu0
      %v5409 = vadd.f32 0.0, %v5408
      %v5410 = vand.u32 %v516, 4294901760
      %v5411 = vsub.f32 %v516, %v5410
      %v5412 = vand.u32 %v5411, 4294901760
      %v5413 = vsub.f32 %v5411, %v5412
      %v5414 = vand.u32 %v5413, 4294901760
      %5415 = vmatmul.f32.gmra.mxu0 %v5414
      %v5416 = vpop.f32.mrf.mxu0
      %v5417 = vadd.f32 0.0, %v5416
      %v5418 = vand.u32 %v518, 4294901760
      %v5419 = vsub.f32 %v518, %v5418
      %v5420 = vand.u32 %v5419, 4294901760
      %v5421 = vsub.f32 %v5419, %v5420
      %v5422 = vand.u32 %v5421, 4294901760
      %5423 = vmatmul.f32.gmra.mxu0 %v5422
      %v5424 = vpop.f32.mrf.mxu0
      %v5425 = vadd.f32 0.0, %v5424
      %v5426 = vand.u32 %v520, 4294901760
      %v5427 = vsub.f32 %v520, %v5426
      %v5428 = vand.u32 %v5427, 4294901760
      %v5429 = vsub.f32 %v5427, %v5428
      %v5430 = vand.u32 %v5429, 4294901760
      %5431 = vmatmul.f32.gmra.mxu0 %v5430
      %v5432 = vpop.f32.mrf.mxu0
      %v5433 = vadd.f32 0.0, %v5432
      %v5434 = vand.u32 %v522, 4294901760
      %v5435 = vsub.f32 %v522, %v5434
      %v5436 = vand.u32 %v5435, 4294901760
      %v5437 = vsub.f32 %v5435, %v5436
      %v5438 = vand.u32 %v5437, 4294901760
      %5439 = vmatmul.f32.gmra.mxu0 %v5438
      %v5440 = vpop.f32.mrf.mxu0
      %v5441 = vadd.f32 0.0, %v5440
      %v5442 = vand.u32 %v524, 4294901760
      %v5443 = vsub.f32 %v524, %v5442
      %v5444 = vand.u32 %v5443, 4294901760
      %v5445 = vsub.f32 %v5443, %v5444
      %v5446 = vand.u32 %v5445, 4294901760
      %5447 = vmatmul.f32.gmra.mxu0 %v5446
      %v5448 = vpop.f32.mrf.mxu0
      %v5449 = vadd.f32 0.0, %v5448
      %v5450 = vand.u32 %v526, 4294901760
      %v5451 = vsub.f32 %v526, %v5450
      %v5452 = vand.u32 %v5451, 4294901760
      %v5453 = vsub.f32 %v5451, %v5452
      %v5454 = vand.u32 %v5453, 4294901760
      %5455 = vmatmul.f32.gmra.mxu0 %v5454
      %v5456 = vpop.f32.mrf.mxu0
      %v5457 = vadd.f32 0.0, %v5456
      %v5458 = vand.u32 %v528, 4294901760
      %v5459 = vsub.f32 %v528, %v5458
      %v5460 = vand.u32 %v5459, 4294901760
      %v5461 = vsub.f32 %v5459, %v5460
      %v5462 = vand.u32 %v5461, 4294901760
      %5463 = vmatmul.f32.gmra.mxu0 %v5462
      %v5464 = vpop.f32.mrf.mxu0
      %v5465 = vadd.f32 0.0, %v5464
      %v5466 = vand.u32 %v530, 4294901760
      %v5467 = vsub.f32 %v530, %v5466
      %v5468 = vand.u32 %v5467, 4294901760
      %v5469 = vsub.f32 %v5467, %v5468
      %v5470 = vand.u32 %v5469, 4294901760
      %5471 = vmatmul.f32.gmra.mxu0 %v5470
      %v5472 = vpop.f32.mrf.mxu0
      %v5473 = vadd.f32 0.0, %v5472
      %v5474 = vand.u32 %v532, 4294901760
      %v5475 = vsub.f32 %v532, %v5474
      %v5476 = vand.u32 %v5475, 4294901760
      %v5477 = vsub.f32 %v5475, %v5476
      %v5478 = vand.u32 %v5477, 4294901760
      %5479 = vmatmul.f32.gmra.mxu0 %v5478
      %v5480 = vpop.f32.mrf.mxu0
      %v5481 = vadd.f32 0.0, %v5480
      %v5482 = vand.u32 %v534, 4294901760
      %v5483 = vsub.f32 %v534, %v5482
      %v5484 = vand.u32 %v5483, 4294901760
      %v5485 = vsub.f32 %v5483, %v5484
      %v5486 = vand.u32 %v5485, 4294901760
      %5487 = vmatmul.f32.gmra.mxu0 %v5486
      %v5488 = vpop.f32.mrf.mxu0
      %v5489 = vadd.f32 0.0, %v5488
      %v5490 = vand.u32 %v536, 4294901760
      %v5491 = vsub.f32 %v536, %v5490
      %v5492 = vand.u32 %v5491, 4294901760
      %v5493 = vsub.f32 %v5491, %v5492
      %v5494 = vand.u32 %v5493, 4294901760
      %5495 = vmatmul.f32.gmra.mxu0 %v5494
      %v5496 = vpop.f32.mrf.mxu0
      %v5497 = vadd.f32 0.0, %v5496
      %v5498 = vand.u32 %v538, 4294901760
      %v5499 = vsub.f32 %v538, %v5498
      %v5500 = vand.u32 %v5499, 4294901760
      %v5501 = vsub.f32 %v5499, %v5500
      %v5502 = vand.u32 %v5501, 4294901760
      %5503 = vmatmul.f32.gmra.mxu0 %v5502
      %v5504 = vpop.f32.mrf.mxu0
      %v5505 = vadd.f32 0.0, %v5504
      %v5506 = vand.u32 %v540, 4294901760
      %v5507 = vsub.f32 %v540, %v5506
      %v5508 = vand.u32 %v5507, 4294901760
      %v5509 = vsub.f32 %v5507, %v5508
      %v5510 = vand.u32 %v5509, 4294901760
      %5511 = vmatmul.f32.gmra.mxu0 %v5510
      %v5512 = vpop.f32.mrf.mxu0
      %v5513 = vadd.f32 0.0, %v5512
      %v5514 = vand.u32 %v542, 4294901760
      %v5515 = vsub.f32 %v542, %v5514
      %v5516 = vand.u32 %v5515, 4294901760
      %v5517 = vsub.f32 %v5515, %v5516
      %v5518 = vand.u32 %v5517, 4294901760
      %5519 = vmatmul.f32.gmra.mxu0 %v5518
      %v5520 = vpop.f32.mrf.mxu0
      %v5521 = vadd.f32 0.0, %v5520
      %v5522 = vand.u32 %v544, 4294901760
      %v5523 = vsub.f32 %v544, %v5522
      %v5524 = vand.u32 %v5523, 4294901760
      %v5525 = vsub.f32 %v5523, %v5524
      %v5526 = vand.u32 %v5525, 4294901760
      %5527 = vmatmul.f32.gmra.mxu0 %v5526
      %v5528 = vpop.f32.mrf.mxu0
      %v5529 = vadd.f32 0.0, %v5528
      %v5530 = vand.u32 %v546, 4294901760
      %v5531 = vsub.f32 %v546, %v5530
      %v5532 = vand.u32 %v5531, 4294901760
      %v5533 = vsub.f32 %v5531, %v5532
      %v5534 = vand.u32 %v5533, 4294901760
      %5535 = vmatmul.f32.gmra.mxu0 %v5534
      %v5536 = vpop.f32.mrf.mxu0
      %v5537 = vadd.f32 0.0, %v5536
      %v5538 = vand.u32 %v5274, 4294901760
      %v5539 = vsub.f32 %v5274, %v5538
      %v5540 = vand.u32 %v5539, 4294901760
      %v5541 = vsub.f32 %v5539, %v5540
      %v5542 = vand.u32 %v5541, 4294901760
      %5543 = vmatmul.f32.gmra.mxu0 %v5542
      %v5544 = vpop.f32.mrf.mxu0
      %v5545 = vadd.f32 0.0, %v5544
      %v5546 = vand.u32 %v5276, 4294901760
      %v5547 = vsub.f32 %v5276, %v5546
      %v5548 = vand.u32 %v5547, 4294901760
      %v5549 = vsub.f32 %v5547, %v5548
      %v5550 = vand.u32 %v5549, 4294901760
      %5551 = vmatmul.f32.gmra.mxu0 %v5550
      %v5552 = vpop.f32.mrf.mxu0
      %v5553 = vadd.f32 0.0, %v5552
      %5554 = vdwg.mxu0
      %5555 = vmatpush.msra.mxu0 0.0
      %5556 = vmatpush.msra.mxu0 0.0
      %5557 = vmatpush.msra.mxu0 0.0
      %5558 = vmatpush.msra.mxu0 0.0
      %5559 = vmatpush.msra.mxu0 0.0
      %5560 = vmatpush.msra.mxu0 0.0
      %5561 = vmatpush.msra.mxu0 0.0
      %5562 = vmatpush.msra.mxu0 0.0
      %5563 = vmatpush.msra.mxu0 0.0
      %5564 = vmatpush.msra.mxu0 0.0
      %5565 = vmatpush.msra.mxu0 0.0
      %5566 = vmatpush.msra.mxu0 0.0
      %5567 = vmatpush.msra.mxu0 0.0
      %5568 = vmatpush.msra.mxu0 0.0
      %5569 = vmatpush.msra.mxu0 0.0
      %v5570 = vand.u32 %v5279, 4294901760
      %v5571 = vsub.f32 %v5279, %v5570
      %v5572 = vand.u32 %v5571, 4294901760
      %v5573 = vsub.f32 %v5571, %v5572
      %v5574 = vand.u32 %v5573, 4294901760
      %5575 = vmatpush.msra.mxu0 %v5574
      %v5576 = vand.u32 %v488, 4294901760
      %5577 = vmatmul.f32.gmra.mxu0 %v5576
      %v5578 = vpop.f32.mrf.mxu0
      %v5579 = vadd.f32 %v5305, %v5578
      %v5580 = vand.u32 %v490, 4294901760
      %5581 = vmatmul.f32.gmra.mxu0 %v5580
      %v5582 = vpop.f32.mrf.mxu0
      %v5583 = vadd.f32 %v5313, %v5582
      %v5584 = vand.u32 %v492, 4294901760
      %5585 = vmatmul.f32.gmra.mxu0 %v5584
      %v5586 = vpop.f32.mrf.mxu0
      %v5587 = vadd.f32 %v5321, %v5586
      %v5588 = vand.u32 %v494, 4294901760
      %5589 = vmatmul.f32.gmra.mxu0 %v5588
      %v5590 = vpop.f32.mrf.mxu0
      %v5591 = vadd.f32 %v5329, %v5590
      %v5592 = vand.u32 %v496, 4294901760
      %5593 = vmatmul.f32.gmra.mxu0 %v5592
      %v5594 = vpop.f32.mrf.mxu0
      %v5595 = vadd.f32 %v5337, %v5594
      %v5596 = vand.u32 %v498, 4294901760
      %5597 = vmatmul.f32.gmra.mxu0 %v5596
      %v5598 = vpop.f32.mrf.mxu0
      %v5599 = vadd.f32 %v5345, %v5598
      %v5600 = vand.u32 %v500, 4294901760
      %5601 = vmatmul.f32.gmra.mxu0 %v5600
      %v5602 = vpop.f32.mrf.mxu0
      %v5603 = vadd.f32 %v5353, %v5602
      %v5604 = vand.u32 %v502, 4294901760
      %5605 = vmatmul.f32.gmra.mxu0 %v5604
      %v5606 = vpop.f32.mrf.mxu0
      %v5607 = vadd.f32 %v5361, %v5606
      %v5608 = vand.u32 %v504, 4294901760
      %5609 = vmatmul.f32.gmra.mxu0 %v5608
      %v5610 = vpop.f32.mrf.mxu0
      %v5611 = vadd.f32 %v5369, %v5610
      %v5612 = vand.u32 %v506, 4294901760
      %5613 = vmatmul.f32.gmra.mxu0 %v5612
      %v5614 = vpop.f32.mrf.mxu0
      %v5615 = vadd.f32 %v5377, %v5614
      %v5616 = vand.u32 %v508, 4294901760
      %5617 = vmatmul.f32.gmra.mxu0 %v5616
      %v5618 = vpop.f32.mrf.mxu0
      %v5619 = vadd.f32 %v5385, %v5618
      %v5620 = vand.u32 %v510, 4294901760
      %5621 = vmatmul.f32.gmra.mxu0 %v5620
      %v5622 = vpop.f32.mrf.mxu0
      %v5623 = vadd.f32 %v5393, %v5622
      %v5624 = vand.u32 %v512, 4294901760
      %5625 = vmatmul.f32.gmra.mxu0 %v5624
      %v5626 = vpop.f32.mrf.mxu0
      %v5627 = vadd.f32 %v5401, %v5626
      %v5628 = vand.u32 %v514, 4294901760
      %5629 = vmatmul.f32.gmra.mxu0 %v5628
      %v5630 = vpop.f32.mrf.mxu0
      %v5631 = vadd.f32 %v5409, %v5630
      %v5632 = vand.u32 %v516, 4294901760
      %5633 = vmatmul.f32.gmra.mxu0 %v5632
      %v5634 = vpop.f32.mrf.mxu0
      %v5635 = vadd.f32 %v5417, %v5634
      %v5636 = vand.u32 %v518, 4294901760
      %5637 = vmatmul.f32.gmra.mxu0 %v5636
      %v5638 = vpop.f32.mrf.mxu0
      %v5639 = vadd.f32 %v5425, %v5638
      %v5640 = vand.u32 %v520, 4294901760
      %5641 = vmatmul.f32.gmra.mxu0 %v5640
      %v5642 = vpop.f32.mrf.mxu0
      %v5643 = vadd.f32 %v5433, %v5642
      %v5644 = vand.u32 %v522, 4294901760
      %5645 = vmatmul.f32.gmra.mxu0 %v5644
      %v5646 = vpop.f32.mrf.mxu0
      %v5647 = vadd.f32 %v5441, %v5646
      %v5648 = vand.u32 %v524, 4294901760
      %5649 = vmatmul.f32.gmra.mxu0 %v5648
      %v5650 = vpop.f32.mrf.mxu0
      %v5651 = vadd.f32 %v5449, %v5650
      %v5652 = vand.u32 %v526, 4294901760
      %5653 = vmatmul.f32.gmra.mxu0 %v5652
      %v5654 = vpop.f32.mrf.mxu0
      %v5655 = vadd.f32 %v5457, %v5654
      %v5656 = vand.u32 %v528, 4294901760
      %5657 = vmatmul.f32.gmra.mxu0 %v5656
      %v5658 = vpop.f32.mrf.mxu0
      %v5659 = vadd.f32 %v5465, %v5658
      %v5660 = vand.u32 %v530, 4294901760
      %5661 = vmatmul.f32.gmra.mxu0 %v5660
      %v5662 = vpop.f32.mrf.mxu0
      %v5663 = vadd.f32 %v5473, %v5662
      %v5664 = vand.u32 %v532, 4294901760
      %5665 = vmatmul.f32.gmra.mxu0 %v5664
      %v5666 = vpop.f32.mrf.mxu0
      %v5667 = vadd.f32 %v5481, %v5666
      %v5668 = vand.u32 %v534, 4294901760
      %5669 = vmatmul.f32.gmra.mxu0 %v5668
      %v5670 = vpop.f32.mrf.mxu0
      %v5671 = vadd.f32 %v5489, %v5670
      %v5672 = vand.u32 %v536, 4294901760
      %5673 = vmatmul.f32.gmra.mxu0 %v5672
      %v5674 = vpop.f32.mrf.mxu0
      %v5675 = vadd.f32 %v5497, %v5674
      %v5676 = vand.u32 %v538, 4294901760
      %5677 = vmatmul.f32.gmra.mxu0 %v5676
      %v5678 = vpop.f32.mrf.mxu0
      %v5679 = vadd.f32 %v5505, %v5678
      %v5680 = vand.u32 %v540, 4294901760
      %5681 = vmatmul.f32.gmra.mxu0 %v5680
      %v5682 = vpop.f32.mrf.mxu0
      %v5683 = vadd.f32 %v5513, %v5682
      %v5684 = vand.u32 %v542, 4294901760
      %5685 = vmatmul.f32.gmra.mxu0 %v5684
      %v5686 = vpop.f32.mrf.mxu0
      %v5687 = vadd.f32 %v5521, %v5686
      %v5688 = vand.u32 %v544, 4294901760
      %5689 = vmatmul.f32.gmra.mxu0 %v5688
      %v5690 = vpop.f32.mrf.mxu0
      %v5691 = vadd.f32 %v5529, %v5690
      %v5692 = vand.u32 %v546, 4294901760
      %5693 = vmatmul.f32.gmra.mxu0 %v5692
      %v5694 = vpop.f32.mrf.mxu0
      %v5695 = vadd.f32 %v5537, %v5694
      %v5696 = vand.u32 %v5274, 4294901760
      %5697 = vmatmul.f32.gmra.mxu0 %v5696
      %v5698 = vpop.f32.mrf.mxu0
      %v5699 = vadd.f32 %v5545, %v5698
      %v5700 = vand.u32 %v5276, 4294901760
      %5701 = vmatmul.f32.gmra.mxu0 %v5700
      %v5702 = vpop.f32.mrf.mxu0
      %v5703 = vadd.f32 %v5553, %v5702
      %5704 = vdwg.mxu0
      %5705 = vmatpush.msra.mxu0 0.0
      %5706 = vmatpush.msra.mxu0 0.0
      %5707 = vmatpush.msra.mxu0 0.0
      %5708 = vmatpush.msra.mxu0 0.0
      %5709 = vmatpush.msra.mxu0 0.0
      %5710 = vmatpush.msra.mxu0 0.0
      %5711 = vmatpush.msra.mxu0 0.0
      %5712 = vmatpush.msra.mxu0 0.0
      %5713 = vmatpush.msra.mxu0 0.0
      %5714 = vmatpush.msra.mxu0 0.0
      %5715 = vmatpush.msra.mxu0 0.0
      %5716 = vmatpush.msra.mxu0 0.0
      %5717 = vmatpush.msra.mxu0 0.0
      %5718 = vmatpush.msra.mxu0 0.0
      %5719 = vmatpush.msra.mxu0 0.0
      %v5720 = vand.u32 %v5279, 4294901760
      %v5721 = vsub.f32 %v5279, %v5720
      %5722 = vmatpush.msra.mxu0 %v5721
      %v5723 = vand.u32 %v488, 4294901760
      %v5724 = vsub.f32 %v488, %v5723
      %5725 = vmatmul.f32.gmra.mxu0 %v5724
      %v5726 = vpop.f32.mrf.mxu0
      %v5727 = vadd.f32 %v5579, %v5726
      %v5728 = vand.u32 %v490, 4294901760
      %v5729 = vsub.f32 %v490, %v5728
      %5730 = vmatmul.f32.gmra.mxu0 %v5729
      %v5731 = vpop.f32.mrf.mxu0
      %v5732 = vadd.f32 %v5583, %v5731
      %v5733 = vand.u32 %v492, 4294901760
      %v5734 = vsub.f32 %v492, %v5733
      %5735 = vmatmul.f32.gmra.mxu0 %v5734
      %v5736 = vpop.f32.mrf.mxu0
      %v5737 = vadd.f32 %v5587, %v5736
      %v5738 = vand.u32 %v494, 4294901760
      %v5739 = vsub.f32 %v494, %v5738
      %5740 = vmatmul.f32.gmra.mxu0 %v5739
      %v5741 = vpop.f32.mrf.mxu0
      %v5742 = vadd.f32 %v5591, %v5741
      %v5743 = vand.u32 %v496, 4294901760
      %v5744 = vsub.f32 %v496, %v5743
      %5745 = vmatmul.f32.gmra.mxu0 %v5744
      %v5746 = vpop.f32.mrf.mxu0
      %v5747 = vadd.f32 %v5595, %v5746
      %v5748 = vand.u32 %v498, 4294901760
      %v5749 = vsub.f32 %v498, %v5748
      %5750 = vmatmul.f32.gmra.mxu0 %v5749
      %v5751 = vpop.f32.mrf.mxu0
      %v5752 = vadd.f32 %v5599, %v5751
      %v5753 = vand.u32 %v500, 4294901760
      %v5754 = vsub.f32 %v500, %v5753
      %5755 = vmatmul.f32.gmra.mxu0 %v5754
      %v5756 = vpop.f32.mrf.mxu0
      %v5757 = vadd.f32 %v5603, %v5756
      %v5758 = vand.u32 %v502, 4294901760
      %v5759 = vsub.f32 %v502, %v5758
      %5760 = vmatmul.f32.gmra.mxu0 %v5759
      %v5761 = vpop.f32.mrf.mxu0
      %v5762 = vadd.f32 %v5607, %v5761
      %v5763 = vand.u32 %v504, 4294901760
      %v5764 = vsub.f32 %v504, %v5763
      %5765 = vmatmul.f32.gmra.mxu0 %v5764
      %v5766 = vpop.f32.mrf.mxu0
      %v5767 = vadd.f32 %v5611, %v5766
      %v5768 = vand.u32 %v506, 4294901760
      %v5769 = vsub.f32 %v506, %v5768
      %5770 = vmatmul.f32.gmra.mxu0 %v5769
      %v5771 = vpop.f32.mrf.mxu0
      %v5772 = vadd.f32 %v5615, %v5771
      %v5773 = vand.u32 %v508, 4294901760
      %v5774 = vsub.f32 %v508, %v5773
      %5775 = vmatmul.f32.gmra.mxu0 %v5774
      %v5776 = vpop.f32.mrf.mxu0
      %v5777 = vadd.f32 %v5619, %v5776
      %v5778 = vand.u32 %v510, 4294901760
      %v5779 = vsub.f32 %v510, %v5778
      %5780 = vmatmul.f32.gmra.mxu0 %v5779
      %v5781 = vpop.f32.mrf.mxu0
      %v5782 = vadd.f32 %v5623, %v5781
      %v5783 = vand.u32 %v512, 4294901760
      %v5784 = vsub.f32 %v512, %v5783
      %5785 = vmatmul.f32.gmra.mxu0 %v5784
      %v5786 = vpop.f32.mrf.mxu0
      %v5787 = vadd.f32 %v5627, %v5786
      %v5788 = vand.u32 %v514, 4294901760
      %v5789 = vsub.f32 %v514, %v5788
      %5790 = vmatmul.f32.gmra.mxu0 %v5789
      %v5791 = vpop.f32.mrf.mxu0
      %v5792 = vadd.f32 %v5631, %v5791
      %v5793 = vand.u32 %v516, 4294901760
      %v5794 = vsub.f32 %v516, %v5793
      %5795 = vmatmul.f32.gmra.mxu0 %v5794
      %v5796 = vpop.f32.mrf.mxu0
      %v5797 = vadd.f32 %v5635, %v5796
      %v5798 = vand.u32 %v518, 4294901760
      %v5799 = vsub.f32 %v518, %v5798
      %5800 = vmatmul.f32.gmra.mxu0 %v5799
      %v5801 = vpop.f32.mrf.mxu0
      %v5802 = vadd.f32 %v5639, %v5801
      %v5803 = vand.u32 %v520, 4294901760
      %v5804 = vsub.f32 %v520, %v5803
      %5805 = vmatmul.f32.gmra.mxu0 %v5804
      %v5806 = vpop.f32.mrf.mxu0
      %v5807 = vadd.f32 %v5643, %v5806
      %v5808 = vand.u32 %v522, 4294901760
      %v5809 = vsub.f32 %v522, %v5808
      %5810 = vmatmul.f32.gmra.mxu0 %v5809
      %v5811 = vpop.f32.mrf.mxu0
      %v5812 = vadd.f32 %v5647, %v5811
      %v5813 = vand.u32 %v524, 4294901760
      %v5814 = vsub.f32 %v524, %v5813
      %5815 = vmatmul.f32.gmra.mxu0 %v5814
      %v5816 = vpop.f32.mrf.mxu0
      %v5817 = vadd.f32 %v5651, %v5816
      %v5818 = vand.u32 %v526, 4294901760
      %v5819 = vsub.f32 %v526, %v5818
      %5820 = vmatmul.f32.gmra.mxu0 %v5819
      %v5821 = vpop.f32.mrf.mxu0
      %v5822 = vadd.f32 %v5655, %v5821
      %v5823 = vand.u32 %v528, 4294901760
      %v5824 = vsub.f32 %v528, %v5823
      %5825 = vmatmul.f32.gmra.mxu0 %v5824
      %v5826 = vpop.f32.mrf.mxu0
      %v5827 = vadd.f32 %v5659, %v5826
      %v5828 = vand.u32 %v530, 4294901760
      %v5829 = vsub.f32 %v530, %v5828
      %5830 = vmatmul.f32.gmra.mxu0 %v5829
      %v5831 = vpop.f32.mrf.mxu0
      %v5832 = vadd.f32 %v5663, %v5831
      %v5833 = vand.u32 %v532, 4294901760
      %v5834 = vsub.f32 %v532, %v5833
      %5835 = vmatmul.f32.gmra.mxu0 %v5834
      %v5836 = vpop.f32.mrf.mxu0
      %v5837 = vadd.f32 %v5667, %v5836
      %v5838 = vand.u32 %v534, 4294901760
      %v5839 = vsub.f32 %v534, %v5838
      %5840 = vmatmul.f32.gmra.mxu0 %v5839
      %v5841 = vpop.f32.mrf.mxu0
      %v5842 = vadd.f32 %v5671, %v5841
      %v5843 = vand.u32 %v536, 4294901760
      %v5844 = vsub.f32 %v536, %v5843
      %5845 = vmatmul.f32.gmra.mxu0 %v5844
      %v5846 = vpop.f32.mrf.mxu0
      %v5847 = vadd.f32 %v5675, %v5846
      %v5848 = vand.u32 %v538, 4294901760
      %v5849 = vsub.f32 %v538, %v5848
      %5850 = vmatmul.f32.gmra.mxu0 %v5849
      %v5851 = vpop.f32.mrf.mxu0
      %v5852 = vadd.f32 %v5679, %v5851
      %v5853 = vand.u32 %v540, 4294901760
      %v5854 = vsub.f32 %v540, %v5853
      %5855 = vmatmul.f32.gmra.mxu0 %v5854
      %v5856 = vpop.f32.mrf.mxu0
      %v5857 = vadd.f32 %v5683, %v5856
      %v5858 = vand.u32 %v542, 4294901760
      %v5859 = vsub.f32 %v542, %v5858
      %5860 = vmatmul.f32.gmra.mxu0 %v5859
      %v5861 = vpop.f32.mrf.mxu0
      %v5862 = vadd.f32 %v5687, %v5861
      %v5863 = vand.u32 %v544, 4294901760
      %v5864 = vsub.f32 %v544, %v5863
      %5865 = vmatmul.f32.gmra.mxu0 %v5864
      %v5866 = vpop.f32.mrf.mxu0
      %v5867 = vadd.f32 %v5691, %v5866
      %v5868 = vand.u32 %v546, 4294901760
      %v5869 = vsub.f32 %v546, %v5868
      %5870 = vmatmul.f32.gmra.mxu0 %v5869
      %v5871 = vpop.f32.mrf.mxu0
      %v5872 = vadd.f32 %v5695, %v5871
      %v5873 = vand.u32 %v5274, 4294901760
      %v5874 = vsub.f32 %v5274, %v5873
      %5875 = vmatmul.f32.gmra.mxu0 %v5874
      %v5876 = vpop.f32.mrf.mxu0
      %v5877 = vadd.f32 %v5699, %v5876
      %v5878 = vand.u32 %v5276, 4294901760
      %v5879 = vsub.f32 %v5276, %v5878
      %5880 = vmatmul.f32.gmra.mxu0 %v5879
      %v5881 = vpop.f32.mrf.mxu0
      %v5882 = vadd.f32 %v5703, %v5881
      %5883 = vdwg.mxu0
      %5884 = vmatpush.msra.mxu0 0.0
      %5885 = vmatpush.msra.mxu0 0.0
      %5886 = vmatpush.msra.mxu0 0.0
      %5887 = vmatpush.msra.mxu0 0.0
      %5888 = vmatpush.msra.mxu0 0.0
      %5889 = vmatpush.msra.mxu0 0.0
      %5890 = vmatpush.msra.mxu0 0.0
      %5891 = vmatpush.msra.mxu0 0.0
      %5892 = vmatpush.msra.mxu0 0.0
      %5893 = vmatpush.msra.mxu0 0.0
      %5894 = vmatpush.msra.mxu0 0.0
      %5895 = vmatpush.msra.mxu0 0.0
      %5896 = vmatpush.msra.mxu0 0.0
      %5897 = vmatpush.msra.mxu0 0.0
      %5898 = vmatpush.msra.mxu0 0.0
      %v5899 = vand.u32 %v5279, 4294901760
      %5900 = vmatpush.msra.mxu0 %v5899
      %v5901 = vand.u32 %v488, 4294901760
      %v5902 = vsub.f32 %v488, %v5901
      %v5903 = vand.u32 %v5902, 4294901760
      %5904 = vmatmul.f32.gmra.mxu0 %v5903
      %v5905 = vpop.f32.mrf.mxu0
      %v5906 = vadd.f32 %v5727, %v5905
      %v5907 = vand.u32 %v490, 4294901760
      %v5908 = vsub.f32 %v490, %v5907
      %v5909 = vand.u32 %v5908, 4294901760
      %5910 = vmatmul.f32.gmra.mxu0 %v5909
      %v5911 = vpop.f32.mrf.mxu0
      %v5912 = vadd.f32 %v5732, %v5911
      %v5913 = vand.u32 %v492, 4294901760
      %v5914 = vsub.f32 %v492, %v5913
      %v5915 = vand.u32 %v5914, 4294901760
      %5916 = vmatmul.f32.gmra.mxu0 %v5915
      %v5917 = vpop.f32.mrf.mxu0
      %v5918 = vadd.f32 %v5737, %v5917
      %v5919 = vand.u32 %v494, 4294901760
      %v5920 = vsub.f32 %v494, %v5919
      %v5921 = vand.u32 %v5920, 4294901760
      %5922 = vmatmul.f32.gmra.mxu0 %v5921
      %v5923 = vpop.f32.mrf.mxu0
      %v5924 = vadd.f32 %v5742, %v5923
      %v5925 = vand.u32 %v496, 4294901760
      %v5926 = vsub.f32 %v496, %v5925
      %v5927 = vand.u32 %v5926, 4294901760
      %5928 = vmatmul.f32.gmra.mxu0 %v5927
      %v5929 = vpop.f32.mrf.mxu0
      %v5930 = vadd.f32 %v5747, %v5929
      %v5931 = vand.u32 %v498, 4294901760
      %v5932 = vsub.f32 %v498, %v5931
      %v5933 = vand.u32 %v5932, 4294901760
      %5934 = vmatmul.f32.gmra.mxu0 %v5933
      %v5935 = vpop.f32.mrf.mxu0
      %v5936 = vadd.f32 %v5752, %v5935
      %v5937 = vand.u32 %v500, 4294901760
      %v5938 = vsub.f32 %v500, %v5937
      %v5939 = vand.u32 %v5938, 4294901760
      %5940 = vmatmul.f32.gmra.mxu0 %v5939
      %v5941 = vpop.f32.mrf.mxu0
      %v5942 = vadd.f32 %v5757, %v5941
      %v5943 = vand.u32 %v502, 4294901760
      %v5944 = vsub.f32 %v502, %v5943
      %v5945 = vand.u32 %v5944, 4294901760
      %5946 = vmatmul.f32.gmra.mxu0 %v5945
      %v5947 = vpop.f32.mrf.mxu0
      %v5948 = vadd.f32 %v5762, %v5947
      %v5949 = vand.u32 %v504, 4294901760
      %v5950 = vsub.f32 %v504, %v5949
      %v5951 = vand.u32 %v5950, 4294901760
      %5952 = vmatmul.f32.gmra.mxu0 %v5951
      %v5953 = vpop.f32.mrf.mxu0
      %v5954 = vadd.f32 %v5767, %v5953
      %v5955 = vand.u32 %v506, 4294901760
      %v5956 = vsub.f32 %v506, %v5955
      %v5957 = vand.u32 %v5956, 4294901760
      %5958 = vmatmul.f32.gmra.mxu0 %v5957
      %v5959 = vpop.f32.mrf.mxu0
      %v5960 = vadd.f32 %v5772, %v5959
      %v5961 = vand.u32 %v508, 4294901760
      %v5962 = vsub.f32 %v508, %v5961
      %v5963 = vand.u32 %v5962, 4294901760
      %5964 = vmatmul.f32.gmra.mxu0 %v5963
      %v5965 = vpop.f32.mrf.mxu0
      %v5966 = vadd.f32 %v5777, %v5965
      %v5967 = vand.u32 %v510, 4294901760
      %v5968 = vsub.f32 %v510, %v5967
      %v5969 = vand.u32 %v5968, 4294901760
      %5970 = vmatmul.f32.gmra.mxu0 %v5969
      %v5971 = vpop.f32.mrf.mxu0
      %v5972 = vadd.f32 %v5782, %v5971
      %v5973 = vand.u32 %v512, 4294901760
      %v5974 = vsub.f32 %v512, %v5973
      %v5975 = vand.u32 %v5974, 4294901760
      %5976 = vmatmul.f32.gmra.mxu0 %v5975
      %v5977 = vpop.f32.mrf.mxu0
      %v5978 = vadd.f32 %v5787, %v5977
      %v5979 = vand.u32 %v514, 4294901760
      %v5980 = vsub.f32 %v514, %v5979
      %v5981 = vand.u32 %v5980, 4294901760
      %5982 = vmatmul.f32.gmra.mxu0 %v5981
      %v5983 = vpop.f32.mrf.mxu0
      %v5984 = vadd.f32 %v5792, %v5983
      %v5985 = vand.u32 %v516, 4294901760
      %v5986 = vsub.f32 %v516, %v5985
      %v5987 = vand.u32 %v5986, 4294901760
      %5988 = vmatmul.f32.gmra.mxu0 %v5987
      %v5989 = vpop.f32.mrf.mxu0
      %v5990 = vadd.f32 %v5797, %v5989
      %v5991 = vand.u32 %v518, 4294901760
      %v5992 = vsub.f32 %v518, %v5991
      %v5993 = vand.u32 %v5992, 4294901760
      %5994 = vmatmul.f32.gmra.mxu0 %v5993
      %v5995 = vpop.f32.mrf.mxu0
      %v5996 = vadd.f32 %v5802, %v5995
      %v5997 = vand.u32 %v520, 4294901760
      %v5998 = vsub.f32 %v520, %v5997
      %v5999 = vand.u32 %v5998, 4294901760
      %6000 = vmatmul.f32.gmra.mxu0 %v5999
      %v6001 = vpop.f32.mrf.mxu0
      %v6002 = vadd.f32 %v5807, %v6001
      %v6003 = vand.u32 %v522, 4294901760
      %v6004 = vsub.f32 %v522, %v6003
      %v6005 = vand.u32 %v6004, 4294901760
      %6006 = vmatmul.f32.gmra.mxu0 %v6005
      %v6007 = vpop.f32.mrf.mxu0
      %v6008 = vadd.f32 %v5812, %v6007
      %v6009 = vand.u32 %v524, 4294901760
      %v6010 = vsub.f32 %v524, %v6009
      %v6011 = vand.u32 %v6010, 4294901760
      %6012 = vmatmul.f32.gmra.mxu0 %v6011
      %v6013 = vpop.f32.mrf.mxu0
      %v6014 = vadd.f32 %v5817, %v6013
      %v6015 = vand.u32 %v526, 4294901760
      %v6016 = vsub.f32 %v526, %v6015
      %v6017 = vand.u32 %v6016, 4294901760
      %6018 = vmatmul.f32.gmra.mxu0 %v6017
      %v6019 = vpop.f32.mrf.mxu0
      %v6020 = vadd.f32 %v5822, %v6019
      %v6021 = vand.u32 %v528, 4294901760
      %v6022 = vsub.f32 %v528, %v6021
      %v6023 = vand.u32 %v6022, 4294901760
      %6024 = vmatmul.f32.gmra.mxu0 %v6023
      %v6025 = vpop.f32.mrf.mxu0
      %v6026 = vadd.f32 %v5827, %v6025
      %v6027 = vand.u32 %v530, 4294901760
      %v6028 = vsub.f32 %v530, %v6027
      %v6029 = vand.u32 %v6028, 4294901760
      %6030 = vmatmul.f32.gmra.mxu0 %v6029
      %v6031 = vpop.f32.mrf.mxu0
      %v6032 = vadd.f32 %v5832, %v6031
      %v6033 = vand.u32 %v532, 4294901760
      %v6034 = vsub.f32 %v532, %v6033
      %v6035 = vand.u32 %v6034, 4294901760
      %6036 = vmatmul.f32.gmra.mxu0 %v6035
      %v6037 = vpop.f32.mrf.mxu0
      %v6038 = vadd.f32 %v5837, %v6037
      %v6039 = vand.u32 %v534, 4294901760
      %v6040 = vsub.f32 %v534, %v6039
      %v6041 = vand.u32 %v6040, 4294901760
      %6042 = vmatmul.f32.gmra.mxu0 %v6041
      %v6043 = vpop.f32.mrf.mxu0
      %v6044 = vadd.f32 %v5842, %v6043
      %v6045 = vand.u32 %v536, 4294901760
      %v6046 = vsub.f32 %v536, %v6045
      %v6047 = vand.u32 %v6046, 4294901760
      %6048 = vmatmul.f32.gmra.mxu0 %v6047
      %v6049 = vpop.f32.mrf.mxu0
      %v6050 = vadd.f32 %v5847, %v6049
      %v6051 = vand.u32 %v538, 4294901760
      %v6052 = vsub.f32 %v538, %v6051
      %v6053 = vand.u32 %v6052, 4294901760
      %6054 = vmatmul.f32.gmra.mxu0 %v6053
      %v6055 = vpop.f32.mrf.mxu0
      %v6056 = vadd.f32 %v5852, %v6055
      %v6057 = vand.u32 %v540, 4294901760
      %v6058 = vsub.f32 %v540, %v6057
      %v6059 = vand.u32 %v6058, 4294901760
      %6060 = vmatmul.f32.gmra.mxu0 %v6059
      %v6061 = vpop.f32.mrf.mxu0
      %v6062 = vadd.f32 %v5857, %v6061
      %v6063 = vand.u32 %v542, 4294901760
      %v6064 = vsub.f32 %v542, %v6063
      %v6065 = vand.u32 %v6064, 4294901760
      %6066 = vmatmul.f32.gmra.mxu0 %v6065
      %v6067 = vpop.f32.mrf.mxu0
      %v6068 = vadd.f32 %v5862, %v6067
      %v6069 = vand.u32 %v544, 4294901760
      %v6070 = vsub.f32 %v544, %v6069
      %v6071 = vand.u32 %v6070, 4294901760
      %6072 = vmatmul.f32.gmra.mxu0 %v6071
      %v6073 = vpop.f32.mrf.mxu0
      %v6074 = vadd.f32 %v5867, %v6073
      %v6075 = vand.u32 %v546, 4294901760
      %v6076 = vsub.f32 %v546, %v6075
      %v6077 = vand.u32 %v6076, 4294901760
      %6078 = vmatmul.f32.gmra.mxu0 %v6077
      %v6079 = vpop.f32.mrf.mxu0
      %v6080 = vadd.f32 %v5872, %v6079
      %v6081 = vand.u32 %v5274, 4294901760
      %v6082 = vsub.f32 %v5274, %v6081
      %v6083 = vand.u32 %v6082, 4294901760
      %6084 = vmatmul.f32.gmra.mxu0 %v6083
      %v6085 = vpop.f32.mrf.mxu0
      %v6086 = vadd.f32 %v5877, %v6085
      %v6087 = vand.u32 %v5276, 4294901760
      %v6088 = vsub.f32 %v5276, %v6087
      %v6089 = vand.u32 %v6088, 4294901760
      %6090 = vmatmul.f32.gmra.mxu0 %v6089
      %v6091 = vpop.f32.mrf.mxu0
      %v6092 = vadd.f32 %v5882, %v6091
      %6093 = vdwg.mxu0
      %6094 = vmatpush.msra.mxu0 0.0
      %6095 = vmatpush.msra.mxu0 0.0
      %6096 = vmatpush.msra.mxu0 0.0
      %6097 = vmatpush.msra.mxu0 0.0
      %6098 = vmatpush.msra.mxu0 0.0
      %6099 = vmatpush.msra.mxu0 0.0
      %6100 = vmatpush.msra.mxu0 0.0
      %6101 = vmatpush.msra.mxu0 0.0
      %6102 = vmatpush.msra.mxu0 0.0
      %6103 = vmatpush.msra.mxu0 0.0
      %6104 = vmatpush.msra.mxu0 0.0
      %6105 = vmatpush.msra.mxu0 0.0
      %6106 = vmatpush.msra.mxu0 0.0
      %6107 = vmatpush.msra.mxu0 0.0
      %6108 = vmatpush.msra.mxu0 0.0
      %v6109 = vand.u32 %v5279, 4294901760
      %v6110 = vsub.f32 %v5279, %v6109
      %v6111 = vand.u32 %v6110, 4294901760
      %6112 = vmatpush.msra.mxu0 %v6111
      %v6113 = vand.u32 %v488, 4294901760
      %6114 = vmatmul.f32.gmra.mxu0 %v6113
      %v6115 = vpop.f32.mrf.mxu0
      %v6116 = vadd.f32 %v5906, %v6115
      %v6117 = vand.u32 %v490, 4294901760
      %6118 = vmatmul.f32.gmra.mxu0 %v6117
      %v6119 = vpop.f32.mrf.mxu0
      %v6120 = vadd.f32 %v5912, %v6119
      %v6121 = vand.u32 %v492, 4294901760
      %6122 = vmatmul.f32.gmra.mxu0 %v6121
      %v6123 = vpop.f32.mrf.mxu0
      %v6124 = vadd.f32 %v5918, %v6123
      %v6125 = vand.u32 %v494, 4294901760
      %6126 = vmatmul.f32.gmra.mxu0 %v6125
      %v6127 = vpop.f32.mrf.mxu0
      %v6128 = vadd.f32 %v5924, %v6127
      %v6129 = vand.u32 %v496, 4294901760
      %6130 = vmatmul.f32.gmra.mxu0 %v6129
      %v6131 = vpop.f32.mrf.mxu0
      %v6132 = vadd.f32 %v5930, %v6131
      %v6133 = vand.u32 %v498, 4294901760
      %6134 = vmatmul.f32.gmra.mxu0 %v6133
      %v6135 = vpop.f32.mrf.mxu0
      %v6136 = vadd.f32 %v5936, %v6135
      %v6137 = vand.u32 %v500, 4294901760
      %6138 = vmatmul.f32.gmra.mxu0 %v6137
      %v6139 = vpop.f32.mrf.mxu0
      %v6140 = vadd.f32 %v5942, %v6139
      %v6141 = vand.u32 %v502, 4294901760
      %6142 = vmatmul.f32.gmra.mxu0 %v6141
      %v6143 = vpop.f32.mrf.mxu0
      %v6144 = vadd.f32 %v5948, %v6143
      %v6145 = vand.u32 %v504, 4294901760
      %6146 = vmatmul.f32.gmra.mxu0 %v6145
      %v6147 = vpop.f32.mrf.mxu0
      %v6148 = vadd.f32 %v5954, %v6147
      %v6149 = vand.u32 %v506, 4294901760
      %6150 = vmatmul.f32.gmra.mxu0 %v6149
      %v6151 = vpop.f32.mrf.mxu0
      %v6152 = vadd.f32 %v5960, %v6151
      %v6153 = vand.u32 %v508, 4294901760
      %6154 = vmatmul.f32.gmra.mxu0 %v6153
      %v6155 = vpop.f32.mrf.mxu0
      %v6156 = vadd.f32 %v5966, %v6155
      %v6157 = vand.u32 %v510, 4294901760
      %6158 = vmatmul.f32.gmra.mxu0 %v6157
      %v6159 = vpop.f32.mrf.mxu0
      %v6160 = vadd.f32 %v5972, %v6159
      %v6161 = vand.u32 %v512, 4294901760
      %6162 = vmatmul.f32.gmra.mxu0 %v6161
      %v6163 = vpop.f32.mrf.mxu0
      %v6164 = vadd.f32 %v5978, %v6163
      %v6165 = vand.u32 %v514, 4294901760
      %6166 = vmatmul.f32.gmra.mxu0 %v6165
      %v6167 = vpop.f32.mrf.mxu0
      %v6168 = vadd.f32 %v5984, %v6167
      %v6169 = vand.u32 %v516, 4294901760
      %6170 = vmatmul.f32.gmra.mxu0 %v6169
      %v6171 = vpop.f32.mrf.mxu0
      %v6172 = vadd.f32 %v5990, %v6171
      %v6173 = vand.u32 %v518, 4294901760
      %6174 = vmatmul.f32.gmra.mxu0 %v6173
      %v6175 = vpop.f32.mrf.mxu0
      %v6176 = vadd.f32 %v5996, %v6175
      %v6177 = vand.u32 %v520, 4294901760
      %6178 = vmatmul.f32.gmra.mxu0 %v6177
      %v6179 = vpop.f32.mrf.mxu0
      %v6180 = vadd.f32 %v6002, %v6179
      %v6181 = vand.u32 %v522, 4294901760
      %6182 = vmatmul.f32.gmra.mxu0 %v6181
      %v6183 = vpop.f32.mrf.mxu0
      %v6184 = vadd.f32 %v6008, %v6183
      %v6185 = vand.u32 %v524, 4294901760
      %6186 = vmatmul.f32.gmra.mxu0 %v6185
      %v6187 = vpop.f32.mrf.mxu0
      %v6188 = vadd.f32 %v6014, %v6187
      %v6189 = vand.u32 %v526, 4294901760
      %6190 = vmatmul.f32.gmra.mxu0 %v6189
      %v6191 = vpop.f32.mrf.mxu0
      %v6192 = vadd.f32 %v6020, %v6191
      %v6193 = vand.u32 %v528, 4294901760
      %6194 = vmatmul.f32.gmra.mxu0 %v6193
      %v6195 = vpop.f32.mrf.mxu0
      %v6196 = vadd.f32 %v6026, %v6195
      %v6197 = vand.u32 %v530, 4294901760
      %6198 = vmatmul.f32.gmra.mxu0 %v6197
      %v6199 = vpop.f32.mrf.mxu0
      %v6200 = vadd.f32 %v6032, %v6199
      %v6201 = vand.u32 %v532, 4294901760
      %6202 = vmatmul.f32.gmra.mxu0 %v6201
      %v6203 = vpop.f32.mrf.mxu0
      %v6204 = vadd.f32 %v6038, %v6203
      %v6205 = vand.u32 %v534, 4294901760
      %6206 = vmatmul.f32.gmra.mxu0 %v6205
      %v6207 = vpop.f32.mrf.mxu0
      %v6208 = vadd.f32 %v6044, %v6207
      %v6209 = vand.u32 %v536, 4294901760
      %6210 = vmatmul.f32.gmra.mxu0 %v6209
      %v6211 = vpop.f32.mrf.mxu0
      %v6212 = vadd.f32 %v6050, %v6211
      %v6213 = vand.u32 %v538, 4294901760
      %6214 = vmatmul.f32.gmra.mxu0 %v6213
      %v6215 = vpop.f32.mrf.mxu0
      %v6216 = vadd.f32 %v6056, %v6215
      %v6217 = vand.u32 %v540, 4294901760
      %6218 = vmatmul.f32.gmra.mxu0 %v6217
      %v6219 = vpop.f32.mrf.mxu0
      %v6220 = vadd.f32 %v6062, %v6219
      %v6221 = vand.u32 %v542, 4294901760
      %6222 = vmatmul.f32.gmra.mxu0 %v6221
      %v6223 = vpop.f32.mrf.mxu0
      %v6224 = vadd.f32 %v6068, %v6223
      %v6225 = vand.u32 %v544, 4294901760
      %6226 = vmatmul.f32.gmra.mxu0 %v6225
      %v6227 = vpop.f32.mrf.mxu0
      %v6228 = vadd.f32 %v6074, %v6227
      %v6229 = vand.u32 %v546, 4294901760
      %6230 = vmatmul.f32.gmra.mxu0 %v6229
      %v6231 = vpop.f32.mrf.mxu0
      %v6232 = vadd.f32 %v6080, %v6231
      %v6233 = vand.u32 %v5274, 4294901760
      %6234 = vmatmul.f32.gmra.mxu0 %v6233
      %v6235 = vpop.f32.mrf.mxu0
      %v6236 = vadd.f32 %v6086, %v6235
      %v6237 = vand.u32 %v5276, 4294901760
      %6238 = vmatmul.f32.gmra.mxu0 %v6237
      %v6239 = vpop.f32.mrf.mxu0
      %v6240 = vadd.f32 %v6092, %v6239
      %6241 = vdwg.mxu0
      %6242 = vmatpush.msra.mxu0 0.0
      %6243 = vmatpush.msra.mxu0 0.0
      %6244 = vmatpush.msra.mxu0 0.0
      %6245 = vmatpush.msra.mxu0 0.0
      %6246 = vmatpush.msra.mxu0 0.0
      %6247 = vmatpush.msra.mxu0 0.0
      %6248 = vmatpush.msra.mxu0 0.0
      %6249 = vmatpush.msra.mxu0 0.0
      %6250 = vmatpush.msra.mxu0 0.0
      %6251 = vmatpush.msra.mxu0 0.0
      %6252 = vmatpush.msra.mxu0 0.0
      %6253 = vmatpush.msra.mxu0 0.0
      %6254 = vmatpush.msra.mxu0 0.0
      %6255 = vmatpush.msra.mxu0 0.0
      %6256 = vmatpush.msra.mxu0 0.0
      %v6257 = vand.u32 %v5279, 4294901760
      %6258 = vmatpush.msra.mxu0 %v6257
      %v6259 = vand.u32 %v488, 4294901760
      %6260 = vmatmul.f32.gmra.mxu0 %v6259
      %v6261 = vpop.f32.mrf.mxu0
      %v6262 = vadd.f32 %v6116, %v6261
      %v6263 = vand.u32 %v490, 4294901760
      %6264 = vmatmul.f32.gmra.mxu0 %v6263
      %v6265 = vpop.f32.mrf.mxu0
      %v6266 = vadd.f32 %v6120, %v6265
      %v6267 = vand.u32 %v492, 4294901760
      %6268 = vmatmul.f32.gmra.mxu0 %v6267
      %v6269 = vpop.f32.mrf.mxu0
      %v6270 = vadd.f32 %v6124, %v6269
      %v6271 = vand.u32 %v494, 4294901760
      %6272 = vmatmul.f32.gmra.mxu0 %v6271
      %v6273 = vpop.f32.mrf.mxu0
      %v6274 = vadd.f32 %v6128, %v6273
      %v6275 = vand.u32 %v496, 4294901760
      %6276 = vmatmul.f32.gmra.mxu0 %v6275
      %v6277 = vpop.f32.mrf.mxu0
      %v6278 = vadd.f32 %v6132, %v6277
      %v6279 = vand.u32 %v498, 4294901760
      %6280 = vmatmul.f32.gmra.mxu0 %v6279
      %v6281 = vpop.f32.mrf.mxu0
      %v6282 = vadd.f32 %v6136, %v6281
      %v6283 = vand.u32 %v500, 4294901760
      %6284 = vmatmul.f32.gmra.mxu0 %v6283
      %v6285 = vpop.f32.mrf.mxu0
      %v6286 = vadd.f32 %v6140, %v6285
      %v6287 = vand.u32 %v502, 4294901760
      %6288 = vmatmul.f32.gmra.mxu0 %v6287
      %v6289 = vpop.f32.mrf.mxu0
      %v6290 = vadd.f32 %v6144, %v6289
      %v6291 = vand.u32 %v504, 4294901760
      %6292 = vmatmul.f32.gmra.mxu0 %v6291
      %v6293 = vpop.f32.mrf.mxu0
      %v6294 = vadd.f32 %v6148, %v6293
      %v6295 = vand.u32 %v506, 4294901760
      %6296 = vmatmul.f32.gmra.mxu0 %v6295
      %v6297 = vpop.f32.mrf.mxu0
      %v6298 = vadd.f32 %v6152, %v6297
      %v6299 = vand.u32 %v508, 4294901760
      %6300 = vmatmul.f32.gmra.mxu0 %v6299
      %v6301 = vpop.f32.mrf.mxu0
      %v6302 = vadd.f32 %v6156, %v6301
      %v6303 = vand.u32 %v510, 4294901760
      %6304 = vmatmul.f32.gmra.mxu0 %v6303
      %v6305 = vpop.f32.mrf.mxu0
      %v6306 = vadd.f32 %v6160, %v6305
      %v6307 = vand.u32 %v512, 4294901760
      %6308 = vmatmul.f32.gmra.mxu0 %v6307
      %v6309 = vpop.f32.mrf.mxu0
      %v6310 = vadd.f32 %v6164, %v6309
      %v6311 = vand.u32 %v514, 4294901760
      %6312 = vmatmul.f32.gmra.mxu0 %v6311
      %v6313 = vpop.f32.mrf.mxu0
      %v6314 = vadd.f32 %v6168, %v6313
      %v6315 = vand.u32 %v516, 4294901760
      %6316 = vmatmul.f32.gmra.mxu0 %v6315
      %v6317 = vpop.f32.mrf.mxu0
      %v6318 = vadd.f32 %v6172, %v6317
      %v6319 = vand.u32 %v518, 4294901760
      %6320 = vmatmul.f32.gmra.mxu0 %v6319
      %v6321 = vpop.f32.mrf.mxu0
      %v6322 = vadd.f32 %v6176, %v6321
      %v6323 = vand.u32 %v520, 4294901760
      %6324 = vmatmul.f32.gmra.mxu0 %v6323
      %v6325 = vpop.f32.mrf.mxu0
      %v6326 = vadd.f32 %v6180, %v6325
      %v6327 = vand.u32 %v522, 4294901760
      %6328 = vmatmul.f32.gmra.mxu0 %v6327
      %v6329 = vpop.f32.mrf.mxu0
      %v6330 = vadd.f32 %v6184, %v6329
      %v6331 = vand.u32 %v524, 4294901760
      %6332 = vmatmul.f32.gmra.mxu0 %v6331
      %v6333 = vpop.f32.mrf.mxu0
      %v6334 = vadd.f32 %v6188, %v6333
      %v6335 = vand.u32 %v526, 4294901760
      %6336 = vmatmul.f32.gmra.mxu0 %v6335
      %v6337 = vpop.f32.mrf.mxu0
      %v6338 = vadd.f32 %v6192, %v6337
      %v6339 = vand.u32 %v528, 4294901760
      %6340 = vmatmul.f32.gmra.mxu0 %v6339
      %v6341 = vpop.f32.mrf.mxu0
      %v6342 = vadd.f32 %v6196, %v6341
      %v6343 = vand.u32 %v530, 4294901760
      %6344 = vmatmul.f32.gmra.mxu0 %v6343
      %v6345 = vpop.f32.mrf.mxu0
      %v6346 = vadd.f32 %v6200, %v6345
      %v6347 = vand.u32 %v532, 4294901760
      %6348 = vmatmul.f32.gmra.mxu0 %v6347
      %v6349 = vpop.f32.mrf.mxu0
      %v6350 = vadd.f32 %v6204, %v6349
      %v6351 = vand.u32 %v534, 4294901760
      %6352 = vmatmul.f32.gmra.mxu0 %v6351
      %v6353 = vpop.f32.mrf.mxu0
      %v6354 = vadd.f32 %v6208, %v6353
      %v6355 = vand.u32 %v536, 4294901760
      %6356 = vmatmul.f32.gmra.mxu0 %v6355
      %v6357 = vpop.f32.mrf.mxu0
      %v6358 = vadd.f32 %v6212, %v6357
      %v6359 = vand.u32 %v538, 4294901760
      %6360 = vmatmul.f32.gmra.mxu0 %v6359
      %v6361 = vpop.f32.mrf.mxu0
      %v6362 = vadd.f32 %v6216, %v6361
      %v6363 = vand.u32 %v540, 4294901760
      %6364 = vmatmul.f32.gmra.mxu0 %v6363
      %v6365 = vpop.f32.mrf.mxu0
      %v6366 = vadd.f32 %v6220, %v6365
      %v6367 = vand.u32 %v542, 4294901760
      %6368 = vmatmul.f32.gmra.mxu0 %v6367
      %v6369 = vpop.f32.mrf.mxu0
      %v6370 = vadd.f32 %v6224, %v6369
      %v6371 = vand.u32 %v544, 4294901760
      %6372 = vmatmul.f32.gmra.mxu0 %v6371
      %v6373 = vpop.f32.mrf.mxu0
      %v6374 = vadd.f32 %v6228, %v6373
      %v6375 = vand.u32 %v546, 4294901760
      %6376 = vmatmul.f32.gmra.mxu0 %v6375
      %v6377 = vpop.f32.mrf.mxu0
      %v6378 = vadd.f32 %v6232, %v6377
      %v6379 = vand.u32 %v5274, 4294901760
      %6380 = vmatmul.f32.gmra.mxu0 %v6379
      %v6381 = vpop.f32.mrf.mxu0
      %v6382 = vadd.f32 %v6236, %v6381
      %v6383 = vand.u32 %v5276, 4294901760
      %6384 = vmatmul.f32.gmra.mxu0 %v6383
      %v6385 = vpop.f32.mrf.mxu0
      %v6386 = vadd.f32 %v6240, %v6385
      %6387 = vdwg.mxu0
      %v6388 = vadd.f32 %v5236, %v6262
      %v6389 = vadd.f32 %v5237, %v6266
      %v6390 = vadd.f32 %v5238, %v6270
      %v6391 = vadd.f32 %v5239, %v6274
      %v6392 = vadd.f32 %v5240, %v6278
      %v6393 = vadd.f32 %v5241, %v6282
      %v6394 = vadd.f32 %v5242, %v6286
      %v6395 = vadd.f32 %v5243, %v6290
      %v6396 = vadd.f32 %v5244, %v6294
      %v6397 = vadd.f32 %v5245, %v6298
      %v6398 = vadd.f32 %v5246, %v6302
      %v6399 = vadd.f32 %v5247, %v6306
      %v6400 = vadd.f32 %v5248, %v6310
      %v6401 = vadd.f32 %v5249, %v6314
      %v6402 = vadd.f32 %v5250, %v6318
      %v6403 = vadd.f32 %v5251, %v6322
      %v6404 = vadd.f32 %v5252, %v6326
      %v6405 = vadd.f32 %v5253, %v6330
      %v6406 = vadd.f32 %v5254, %v6334
      %v6407 = vadd.f32 %v5255, %v6338
      %v6408 = vadd.f32 %v5256, %v6342
      %v6409 = vadd.f32 %v5257, %v6346
      %v6410 = vadd.f32 %v5258, %v6350
      %v6411 = vadd.f32 %v5259, %v6354
      %v6412 = vadd.f32 %v5260, %v6358
      %v6413 = vadd.f32 %v5261, %v6362
      %v6414 = vadd.f32 %v5262, %v6366
      %v6415 = vadd.f32 %v5263, %v6370
      %v6416 = vadd.f32 %v5264, %v6374
      %v6417 = vadd.f32 %v5265, %v6378
      %v6418 = vadd.f32 %v5266, %v6382
      %v6419 = vadd.f32 %v5267, %v6386
      %v6420 = vrot.slane %v340, 2
      %v6421 = vrot.slane %v341, 2
      %v6422 = vsel %vm2833, %v6420, %v6421
      %v6423 = vrot.slane %v342, 2
      %v6424 = vsel %vm2833, %v6421, %v6423
      %v6425 = vsel %vm171, %v6422, 0
      %v6427 = vsel %vm171, %v6424, 0
      %v6430 = vsel %vm548, %v351, 0
      %6432 = vmatpush.msra.mxu0 0.0
      %6433 = vmatpush.msra.mxu0 0.0
      %6434 = vmatpush.msra.mxu0 0.0
      %6435 = vmatpush.msra.mxu0 0.0
      %6436 = vmatpush.msra.mxu0 0.0
      %6437 = vmatpush.msra.mxu0 0.0
      %6438 = vmatpush.msra.mxu0 0.0
      %6439 = vmatpush.msra.mxu0 0.0
      %6440 = vmatpush.msra.mxu0 0.0
      %6441 = vmatpush.msra.mxu0 0.0
      %6442 = vmatpush.msra.mxu0 0.0
      %6443 = vmatpush.msra.mxu0 0.0
      %6444 = vmatpush.msra.mxu0 0.0
      %6445 = vmatpush.msra.mxu0 0.0
      %6446 = vmatpush.msra.mxu0 0.0
      %v6447 = vand.u32 %v6430, 4294901760
      %6448 = vmatpush.msra.mxu0 %v6447
      %v6449 = vand.u32 %v2918, 4294901760
      %v6450 = vsub.f32 %v2918, %v6449
      %v6451 = vand.u32 %v6450, 4294901760
      %v6452 = vsub.f32 %v6450, %v6451
      %v6453 = vand.u32 %v6452, 4294901760
      %6454 = vmatmul.f32.gmra.mxu0 %v6453
      %v6455 = vpop.f32.mrf.mxu0
      %v6456 = vadd.f32 0.0, %v6455
      %v6457 = vand.u32 %v2920, 4294901760
      %v6458 = vsub.f32 %v2920, %v6457
      %v6459 = vand.u32 %v6458, 4294901760
      %v6460 = vsub.f32 %v6458, %v6459
      %v6461 = vand.u32 %v6460, 4294901760
      %6462 = vmatmul.f32.gmra.mxu0 %v6461
      %v6463 = vpop.f32.mrf.mxu0
      %v6464 = vadd.f32 0.0, %v6463
      %v6465 = vand.u32 %v2922, 4294901760
      %v6466 = vsub.f32 %v2922, %v6465
      %v6467 = vand.u32 %v6466, 4294901760
      %v6468 = vsub.f32 %v6466, %v6467
      %v6469 = vand.u32 %v6468, 4294901760
      %6470 = vmatmul.f32.gmra.mxu0 %v6469
      %v6471 = vpop.f32.mrf.mxu0
      %v6472 = vadd.f32 0.0, %v6471
      %v6473 = vand.u32 %v2924, 4294901760
      %v6474 = vsub.f32 %v2924, %v6473
      %v6475 = vand.u32 %v6474, 4294901760
      %v6476 = vsub.f32 %v6474, %v6475
      %v6477 = vand.u32 %v6476, 4294901760
      %6478 = vmatmul.f32.gmra.mxu0 %v6477
      %v6479 = vpop.f32.mrf.mxu0
      %v6480 = vadd.f32 0.0, %v6479
      %v6481 = vand.u32 %v2926, 4294901760
      %v6482 = vsub.f32 %v2926, %v6481
      %v6483 = vand.u32 %v6482, 4294901760
      %v6484 = vsub.f32 %v6482, %v6483
      %v6485 = vand.u32 %v6484, 4294901760
      %6486 = vmatmul.f32.gmra.mxu0 %v6485
      %v6487 = vpop.f32.mrf.mxu0
      %v6488 = vadd.f32 0.0, %v6487
      %v6489 = vand.u32 %v2928, 4294901760
      %v6490 = vsub.f32 %v2928, %v6489
      %v6491 = vand.u32 %v6490, 4294901760
      %v6492 = vsub.f32 %v6490, %v6491
      %v6493 = vand.u32 %v6492, 4294901760
      %6494 = vmatmul.f32.gmra.mxu0 %v6493
      %v6495 = vpop.f32.mrf.mxu0
      %v6496 = vadd.f32 0.0, %v6495
      %v6497 = vand.u32 %v2930, 4294901760
      %v6498 = vsub.f32 %v2930, %v6497
      %v6499 = vand.u32 %v6498, 4294901760
      %v6500 = vsub.f32 %v6498, %v6499
      %v6501 = vand.u32 %v6500, 4294901760
      %6502 = vmatmul.f32.gmra.mxu0 %v6501
      %v6503 = vpop.f32.mrf.mxu0
      %v6504 = vadd.f32 0.0, %v6503
      %v6505 = vand.u32 %v2932, 4294901760
      %v6506 = vsub.f32 %v2932, %v6505
      %v6507 = vand.u32 %v6506, 4294901760
      %v6508 = vsub.f32 %v6506, %v6507
      %v6509 = vand.u32 %v6508, 4294901760
      %6510 = vmatmul.f32.gmra.mxu0 %v6509
      %v6511 = vpop.f32.mrf.mxu0
      %v6512 = vadd.f32 0.0, %v6511
      %v6513 = vand.u32 %v2934, 4294901760
      %v6514 = vsub.f32 %v2934, %v6513
      %v6515 = vand.u32 %v6514, 4294901760
      %v6516 = vsub.f32 %v6514, %v6515
      %v6517 = vand.u32 %v6516, 4294901760
      %6518 = vmatmul.f32.gmra.mxu0 %v6517
      %v6519 = vpop.f32.mrf.mxu0
      %v6520 = vadd.f32 0.0, %v6519
      %v6521 = vand.u32 %v2936, 4294901760
      %v6522 = vsub.f32 %v2936, %v6521
      %v6523 = vand.u32 %v6522, 4294901760
      %v6524 = vsub.f32 %v6522, %v6523
      %v6525 = vand.u32 %v6524, 4294901760
      %6526 = vmatmul.f32.gmra.mxu0 %v6525
      %v6527 = vpop.f32.mrf.mxu0
      %v6528 = vadd.f32 0.0, %v6527
      %v6529 = vand.u32 %v2938, 4294901760
      %v6530 = vsub.f32 %v2938, %v6529
      %v6531 = vand.u32 %v6530, 4294901760
      %v6532 = vsub.f32 %v6530, %v6531
      %v6533 = vand.u32 %v6532, 4294901760
      %6534 = vmatmul.f32.gmra.mxu0 %v6533
      %v6535 = vpop.f32.mrf.mxu0
      %v6536 = vadd.f32 0.0, %v6535
      %v6537 = vand.u32 %v2940, 4294901760
      %v6538 = vsub.f32 %v2940, %v6537
      %v6539 = vand.u32 %v6538, 4294901760
      %v6540 = vsub.f32 %v6538, %v6539
      %v6541 = vand.u32 %v6540, 4294901760
      %6542 = vmatmul.f32.gmra.mxu0 %v6541
      %v6543 = vpop.f32.mrf.mxu0
      %v6544 = vadd.f32 0.0, %v6543
      %v6545 = vand.u32 %v2942, 4294901760
      %v6546 = vsub.f32 %v2942, %v6545
      %v6547 = vand.u32 %v6546, 4294901760
      %v6548 = vsub.f32 %v6546, %v6547
      %v6549 = vand.u32 %v6548, 4294901760
      %6550 = vmatmul.f32.gmra.mxu0 %v6549
      %v6551 = vpop.f32.mrf.mxu0
      %v6552 = vadd.f32 0.0, %v6551
      %v6553 = vand.u32 %v2944, 4294901760
      %v6554 = vsub.f32 %v2944, %v6553
      %v6555 = vand.u32 %v6554, 4294901760
      %v6556 = vsub.f32 %v6554, %v6555
      %v6557 = vand.u32 %v6556, 4294901760
      %6558 = vmatmul.f32.gmra.mxu0 %v6557
      %v6559 = vpop.f32.mrf.mxu0
      %v6560 = vadd.f32 0.0, %v6559
      %v6561 = vand.u32 %v2946, 4294901760
      %v6562 = vsub.f32 %v2946, %v6561
      %v6563 = vand.u32 %v6562, 4294901760
      %v6564 = vsub.f32 %v6562, %v6563
      %v6565 = vand.u32 %v6564, 4294901760
      %6566 = vmatmul.f32.gmra.mxu0 %v6565
      %v6567 = vpop.f32.mrf.mxu0
      %v6568 = vadd.f32 0.0, %v6567
      %v6569 = vand.u32 %v2948, 4294901760
      %v6570 = vsub.f32 %v2948, %v6569
      %v6571 = vand.u32 %v6570, 4294901760
      %v6572 = vsub.f32 %v6570, %v6571
      %v6573 = vand.u32 %v6572, 4294901760
      %6574 = vmatmul.f32.gmra.mxu0 %v6573
      %v6575 = vpop.f32.mrf.mxu0
      %v6576 = vadd.f32 0.0, %v6575
      %v6577 = vand.u32 %v2950, 4294901760
      %v6578 = vsub.f32 %v2950, %v6577
      %v6579 = vand.u32 %v6578, 4294901760
      %v6580 = vsub.f32 %v6578, %v6579
      %v6581 = vand.u32 %v6580, 4294901760
      %6582 = vmatmul.f32.gmra.mxu0 %v6581
      %v6583 = vpop.f32.mrf.mxu0
      %v6584 = vadd.f32 0.0, %v6583
      %v6585 = vand.u32 %v2952, 4294901760
      %v6586 = vsub.f32 %v2952, %v6585
      %v6587 = vand.u32 %v6586, 4294901760
      %v6588 = vsub.f32 %v6586, %v6587
      %v6589 = vand.u32 %v6588, 4294901760
      %6590 = vmatmul.f32.gmra.mxu0 %v6589
      %v6591 = vpop.f32.mrf.mxu0
      %v6592 = vadd.f32 0.0, %v6591
      %v6593 = vand.u32 %v2954, 4294901760
      %v6594 = vsub.f32 %v2954, %v6593
      %v6595 = vand.u32 %v6594, 4294901760
      %v6596 = vsub.f32 %v6594, %v6595
      %v6597 = vand.u32 %v6596, 4294901760
      %6598 = vmatmul.f32.gmra.mxu0 %v6597
      %v6599 = vpop.f32.mrf.mxu0
      %v6600 = vadd.f32 0.0, %v6599
      %v6601 = vand.u32 %v2956, 4294901760
      %v6602 = vsub.f32 %v2956, %v6601
      %v6603 = vand.u32 %v6602, 4294901760
      %v6604 = vsub.f32 %v6602, %v6603
      %v6605 = vand.u32 %v6604, 4294901760
      %6606 = vmatmul.f32.gmra.mxu0 %v6605
      %v6607 = vpop.f32.mrf.mxu0
      %v6608 = vadd.f32 0.0, %v6607
      %v6609 = vand.u32 %v2958, 4294901760
      %v6610 = vsub.f32 %v2958, %v6609
      %v6611 = vand.u32 %v6610, 4294901760
      %v6612 = vsub.f32 %v6610, %v6611
      %v6613 = vand.u32 %v6612, 4294901760
      %6614 = vmatmul.f32.gmra.mxu0 %v6613
      %v6615 = vpop.f32.mrf.mxu0
      %v6616 = vadd.f32 0.0, %v6615
      %v6617 = vand.u32 %v2960, 4294901760
      %v6618 = vsub.f32 %v2960, %v6617
      %v6619 = vand.u32 %v6618, 4294901760
      %v6620 = vsub.f32 %v6618, %v6619
      %v6621 = vand.u32 %v6620, 4294901760
      %6622 = vmatmul.f32.gmra.mxu0 %v6621
      %v6623 = vpop.f32.mrf.mxu0
      %v6624 = vadd.f32 0.0, %v6623
      %v6625 = vand.u32 %v2962, 4294901760
      %v6626 = vsub.f32 %v2962, %v6625
      %v6627 = vand.u32 %v6626, 4294901760
      %v6628 = vsub.f32 %v6626, %v6627
      %v6629 = vand.u32 %v6628, 4294901760
      %6630 = vmatmul.f32.gmra.mxu0 %v6629
      %v6631 = vpop.f32.mrf.mxu0
      %v6632 = vadd.f32 0.0, %v6631
      %v6633 = vand.u32 %v2964, 4294901760
      %v6634 = vsub.f32 %v2964, %v6633
      %v6635 = vand.u32 %v6634, 4294901760
      %v6636 = vsub.f32 %v6634, %v6635
      %v6637 = vand.u32 %v6636, 4294901760
      %6638 = vmatmul.f32.gmra.mxu0 %v6637
      %v6639 = vpop.f32.mrf.mxu0
      %v6640 = vadd.f32 0.0, %v6639
      %v6641 = vand.u32 %v2966, 4294901760
      %v6642 = vsub.f32 %v2966, %v6641
      %v6643 = vand.u32 %v6642, 4294901760
      %v6644 = vsub.f32 %v6642, %v6643
      %v6645 = vand.u32 %v6644, 4294901760
      %6646 = vmatmul.f32.gmra.mxu0 %v6645
      %v6647 = vpop.f32.mrf.mxu0
      %v6648 = vadd.f32 0.0, %v6647
      %v6649 = vand.u32 %v2968, 4294901760
      %v6650 = vsub.f32 %v2968, %v6649
      %v6651 = vand.u32 %v6650, 4294901760
      %v6652 = vsub.f32 %v6650, %v6651
      %v6653 = vand.u32 %v6652, 4294901760
      %6654 = vmatmul.f32.gmra.mxu0 %v6653
      %v6655 = vpop.f32.mrf.mxu0
      %v6656 = vadd.f32 0.0, %v6655
      %v6657 = vand.u32 %v2970, 4294901760
      %v6658 = vsub.f32 %v2970, %v6657
      %v6659 = vand.u32 %v6658, 4294901760
      %v6660 = vsub.f32 %v6658, %v6659
      %v6661 = vand.u32 %v6660, 4294901760
      %6662 = vmatmul.f32.gmra.mxu0 %v6661
      %v6663 = vpop.f32.mrf.mxu0
      %v6664 = vadd.f32 0.0, %v6663
      %v6665 = vand.u32 %v2972, 4294901760
      %v6666 = vsub.f32 %v2972, %v6665
      %v6667 = vand.u32 %v6666, 4294901760
      %v6668 = vsub.f32 %v6666, %v6667
      %v6669 = vand.u32 %v6668, 4294901760
      %6670 = vmatmul.f32.gmra.mxu0 %v6669
      %v6671 = vpop.f32.mrf.mxu0
      %v6672 = vadd.f32 0.0, %v6671
      %v6673 = vand.u32 %v2974, 4294901760
      %v6674 = vsub.f32 %v2974, %v6673
      %v6675 = vand.u32 %v6674, 4294901760
      %v6676 = vsub.f32 %v6674, %v6675
      %v6677 = vand.u32 %v6676, 4294901760
      %6678 = vmatmul.f32.gmra.mxu0 %v6677
      %v6679 = vpop.f32.mrf.mxu0
      %v6680 = vadd.f32 0.0, %v6679
      %v6681 = vand.u32 %v2976, 4294901760
      %v6682 = vsub.f32 %v2976, %v6681
      %v6683 = vand.u32 %v6682, 4294901760
      %v6684 = vsub.f32 %v6682, %v6683
      %v6685 = vand.u32 %v6684, 4294901760
      %6686 = vmatmul.f32.gmra.mxu0 %v6685
      %v6687 = vpop.f32.mrf.mxu0
      %v6688 = vadd.f32 0.0, %v6687
      %v6689 = vand.u32 %v6425, 4294901760
      %v6690 = vsub.f32 %v6425, %v6689
      %v6691 = vand.u32 %v6690, 4294901760
      %v6692 = vsub.f32 %v6690, %v6691
      %v6693 = vand.u32 %v6692, 4294901760
      %6694 = vmatmul.f32.gmra.mxu0 %v6693
      %v6695 = vpop.f32.mrf.mxu0
      %v6696 = vadd.f32 0.0, %v6695
      %v6697 = vand.u32 %v6427, 4294901760
      %v6698 = vsub.f32 %v6427, %v6697
      %v6699 = vand.u32 %v6698, 4294901760
      %v6700 = vsub.f32 %v6698, %v6699
      %v6701 = vand.u32 %v6700, 4294901760
      %6702 = vmatmul.f32.gmra.mxu0 %v6701
      %v6703 = vpop.f32.mrf.mxu0
      %v6704 = vadd.f32 0.0, %v6703
      %6705 = vdwg.mxu0
      %6706 = vmatpush.msra.mxu0 0.0
      %6707 = vmatpush.msra.mxu0 0.0
      %6708 = vmatpush.msra.mxu0 0.0
      %6709 = vmatpush.msra.mxu0 0.0
      %6710 = vmatpush.msra.mxu0 0.0
      %6711 = vmatpush.msra.mxu0 0.0
      %6712 = vmatpush.msra.mxu0 0.0
      %6713 = vmatpush.msra.mxu0 0.0
      %6714 = vmatpush.msra.mxu0 0.0
      %6715 = vmatpush.msra.mxu0 0.0
      %6716 = vmatpush.msra.mxu0 0.0
      %6717 = vmatpush.msra.mxu0 0.0
      %6718 = vmatpush.msra.mxu0 0.0
      %6719 = vmatpush.msra.mxu0 0.0
      %6720 = vmatpush.msra.mxu0 0.0
      %v6721 = vand.u32 %v6430, 4294901760
      %v6722 = vsub.f32 %v6430, %v6721
      %v6723 = vand.u32 %v6722, 4294901760
      %v6724 = vsub.f32 %v6722, %v6723
      %v6725 = vand.u32 %v6724, 4294901760
      %6726 = vmatpush.msra.mxu0 %v6725
      %v6727 = vand.u32 %v2918, 4294901760
      %6728 = vmatmul.f32.gmra.mxu0 %v6727
      %v6729 = vpop.f32.mrf.mxu0
      %v6730 = vadd.f32 %v6456, %v6729
      %v6731 = vand.u32 %v2920, 4294901760
      %6732 = vmatmul.f32.gmra.mxu0 %v6731
      %v6733 = vpop.f32.mrf.mxu0
      %v6734 = vadd.f32 %v6464, %v6733
      %v6735 = vand.u32 %v2922, 4294901760
      %6736 = vmatmul.f32.gmra.mxu0 %v6735
      %v6737 = vpop.f32.mrf.mxu0
      %v6738 = vadd.f32 %v6472, %v6737
      %v6739 = vand.u32 %v2924, 4294901760
      %6740 = vmatmul.f32.gmra.mxu0 %v6739
      %v6741 = vpop.f32.mrf.mxu0
      %v6742 = vadd.f32 %v6480, %v6741
      %v6743 = vand.u32 %v2926, 4294901760
      %6744 = vmatmul.f32.gmra.mxu0 %v6743
      %v6745 = vpop.f32.mrf.mxu0
      %v6746 = vadd.f32 %v6488, %v6745
      %v6747 = vand.u32 %v2928, 4294901760
      %6748 = vmatmul.f32.gmra.mxu0 %v6747
      %v6749 = vpop.f32.mrf.mxu0
      %v6750 = vadd.f32 %v6496, %v6749
      %v6751 = vand.u32 %v2930, 4294901760
      %6752 = vmatmul.f32.gmra.mxu0 %v6751
      %v6753 = vpop.f32.mrf.mxu0
      %v6754 = vadd.f32 %v6504, %v6753
      %v6755 = vand.u32 %v2932, 4294901760
      %6756 = vmatmul.f32.gmra.mxu0 %v6755
      %v6757 = vpop.f32.mrf.mxu0
      %v6758 = vadd.f32 %v6512, %v6757
      %v6759 = vand.u32 %v2934, 4294901760
      %6760 = vmatmul.f32.gmra.mxu0 %v6759
      %v6761 = vpop.f32.mrf.mxu0
      %v6762 = vadd.f32 %v6520, %v6761
      %v6763 = vand.u32 %v2936, 4294901760
      %6764 = vmatmul.f32.gmra.mxu0 %v6763
      %v6765 = vpop.f32.mrf.mxu0
      %v6766 = vadd.f32 %v6528, %v6765
      %v6767 = vand.u32 %v2938, 4294901760
      %6768 = vmatmul.f32.gmra.mxu0 %v6767
      %v6769 = vpop.f32.mrf.mxu0
      %v6770 = vadd.f32 %v6536, %v6769
      %v6771 = vand.u32 %v2940, 4294901760
      %6772 = vmatmul.f32.gmra.mxu0 %v6771
      %v6773 = vpop.f32.mrf.mxu0
      %v6774 = vadd.f32 %v6544, %v6773
      %v6775 = vand.u32 %v2942, 4294901760
      %6776 = vmatmul.f32.gmra.mxu0 %v6775
      %v6777 = vpop.f32.mrf.mxu0
      %v6778 = vadd.f32 %v6552, %v6777
      %v6779 = vand.u32 %v2944, 4294901760
      %6780 = vmatmul.f32.gmra.mxu0 %v6779
      %v6781 = vpop.f32.mrf.mxu0
      %v6782 = vadd.f32 %v6560, %v6781
      %v6783 = vand.u32 %v2946, 4294901760
      %6784 = vmatmul.f32.gmra.mxu0 %v6783
      %v6785 = vpop.f32.mrf.mxu0
      %v6786 = vadd.f32 %v6568, %v6785
      %v6787 = vand.u32 %v2948, 4294901760
      %6788 = vmatmul.f32.gmra.mxu0 %v6787
      %v6789 = vpop.f32.mrf.mxu0
      %v6790 = vadd.f32 %v6576, %v6789
      %v6791 = vand.u32 %v2950, 4294901760
      %6792 = vmatmul.f32.gmra.mxu0 %v6791
      %v6793 = vpop.f32.mrf.mxu0
      %v6794 = vadd.f32 %v6584, %v6793
      %v6795 = vand.u32 %v2952, 4294901760
      %6796 = vmatmul.f32.gmra.mxu0 %v6795
      %v6797 = vpop.f32.mrf.mxu0
      %v6798 = vadd.f32 %v6592, %v6797
      %v6799 = vand.u32 %v2954, 4294901760
      %6800 = vmatmul.f32.gmra.mxu0 %v6799
      %v6801 = vpop.f32.mrf.mxu0
      %v6802 = vadd.f32 %v6600, %v6801
      %v6803 = vand.u32 %v2956, 4294901760
      %6804 = vmatmul.f32.gmra.mxu0 %v6803
      %v6805 = vpop.f32.mrf.mxu0
      %v6806 = vadd.f32 %v6608, %v6805
      %v6807 = vand.u32 %v2958, 4294901760
      %6808 = vmatmul.f32.gmra.mxu0 %v6807
      %v6809 = vpop.f32.mrf.mxu0
      %v6810 = vadd.f32 %v6616, %v6809
      %v6811 = vand.u32 %v2960, 4294901760
      %6812 = vmatmul.f32.gmra.mxu0 %v6811
      %v6813 = vpop.f32.mrf.mxu0
      %v6814 = vadd.f32 %v6624, %v6813
      %v6815 = vand.u32 %v2962, 4294901760
      %6816 = vmatmul.f32.gmra.mxu0 %v6815
      %v6817 = vpop.f32.mrf.mxu0
      %v6818 = vadd.f32 %v6632, %v6817
      %v6819 = vand.u32 %v2964, 4294901760
      %6820 = vmatmul.f32.gmra.mxu0 %v6819
      %v6821 = vpop.f32.mrf.mxu0
      %v6822 = vadd.f32 %v6640, %v6821
      %v6823 = vand.u32 %v2966, 4294901760
      %6824 = vmatmul.f32.gmra.mxu0 %v6823
      %v6825 = vpop.f32.mrf.mxu0
      %v6826 = vadd.f32 %v6648, %v6825
      %v6827 = vand.u32 %v2968, 4294901760
      %6828 = vmatmul.f32.gmra.mxu0 %v6827
      %v6829 = vpop.f32.mrf.mxu0
      %v6830 = vadd.f32 %v6656, %v6829
      %v6831 = vand.u32 %v2970, 4294901760
      %6832 = vmatmul.f32.gmra.mxu0 %v6831
      %v6833 = vpop.f32.mrf.mxu0
      %v6834 = vadd.f32 %v6664, %v6833
      %v6835 = vand.u32 %v2972, 4294901760
      %6836 = vmatmul.f32.gmra.mxu0 %v6835
      %v6837 = vpop.f32.mrf.mxu0
      %v6838 = vadd.f32 %v6672, %v6837
      %v6839 = vand.u32 %v2974, 4294901760
      %6840 = vmatmul.f32.gmra.mxu0 %v6839
      %v6841 = vpop.f32.mrf.mxu0
      %v6842 = vadd.f32 %v6680, %v6841
      %v6843 = vand.u32 %v2976, 4294901760
      %6844 = vmatmul.f32.gmra.mxu0 %v6843
      %v6845 = vpop.f32.mrf.mxu0
      %v6846 = vadd.f32 %v6688, %v6845
      %v6847 = vand.u32 %v6425, 4294901760
      %6848 = vmatmul.f32.gmra.mxu0 %v6847
      %v6849 = vpop.f32.mrf.mxu0
      %v6850 = vadd.f32 %v6696, %v6849
      %v6851 = vand.u32 %v6427, 4294901760
      %6852 = vmatmul.f32.gmra.mxu0 %v6851
      %v6853 = vpop.f32.mrf.mxu0
      %v6854 = vadd.f32 %v6704, %v6853
      %6855 = vdwg.mxu0
      %6856 = vmatpush.msra.mxu0 0.0
      %6857 = vmatpush.msra.mxu0 0.0
      %6858 = vmatpush.msra.mxu0 0.0
      %6859 = vmatpush.msra.mxu0 0.0
      %6860 = vmatpush.msra.mxu0 0.0
      %6861 = vmatpush.msra.mxu0 0.0
      %6862 = vmatpush.msra.mxu0 0.0
      %6863 = vmatpush.msra.mxu0 0.0
      %6864 = vmatpush.msra.mxu0 0.0
      %6865 = vmatpush.msra.mxu0 0.0
      %6866 = vmatpush.msra.mxu0 0.0
      %6867 = vmatpush.msra.mxu0 0.0
      %6868 = vmatpush.msra.mxu0 0.0
      %6869 = vmatpush.msra.mxu0 0.0
      %6870 = vmatpush.msra.mxu0 0.0
      %v6871 = vand.u32 %v6430, 4294901760
      %v6872 = vsub.f32 %v6430, %v6871
      %6873 = vmatpush.msra.mxu0 %v6872
      %v6874 = vand.u32 %v2918, 4294901760
      %v6875 = vsub.f32 %v2918, %v6874
      %6876 = vmatmul.f32.gmra.mxu0 %v6875
      %v6877 = vpop.f32.mrf.mxu0
      %v6878 = vadd.f32 %v6730, %v6877
      %v6879 = vand.u32 %v2920, 4294901760
      %v6880 = vsub.f32 %v2920, %v6879
      %6881 = vmatmul.f32.gmra.mxu0 %v6880
      %v6882 = vpop.f32.mrf.mxu0
      %v6883 = vadd.f32 %v6734, %v6882
      %v6884 = vand.u32 %v2922, 4294901760
      %v6885 = vsub.f32 %v2922, %v6884
      %6886 = vmatmul.f32.gmra.mxu0 %v6885
      %v6887 = vpop.f32.mrf.mxu0
      %v6888 = vadd.f32 %v6738, %v6887
      %v6889 = vand.u32 %v2924, 4294901760
      %v6890 = vsub.f32 %v2924, %v6889
      %6891 = vmatmul.f32.gmra.mxu0 %v6890
      %v6892 = vpop.f32.mrf.mxu0
      %v6893 = vadd.f32 %v6742, %v6892
      %v6894 = vand.u32 %v2926, 4294901760
      %v6895 = vsub.f32 %v2926, %v6894
      %6896 = vmatmul.f32.gmra.mxu0 %v6895
      %v6897 = vpop.f32.mrf.mxu0
      %v6898 = vadd.f32 %v6746, %v6897
      %v6899 = vand.u32 %v2928, 4294901760
      %v6900 = vsub.f32 %v2928, %v6899
      %6901 = vmatmul.f32.gmra.mxu0 %v6900
      %v6902 = vpop.f32.mrf.mxu0
      %v6903 = vadd.f32 %v6750, %v6902
      %v6904 = vand.u32 %v2930, 4294901760
      %v6905 = vsub.f32 %v2930, %v6904
      %6906 = vmatmul.f32.gmra.mxu0 %v6905
      %v6907 = vpop.f32.mrf.mxu0
      %v6908 = vadd.f32 %v6754, %v6907
      %v6909 = vand.u32 %v2932, 4294901760
      %v6910 = vsub.f32 %v2932, %v6909
      %6911 = vmatmul.f32.gmra.mxu0 %v6910
      %v6912 = vpop.f32.mrf.mxu0
      %v6913 = vadd.f32 %v6758, %v6912
      %v6914 = vand.u32 %v2934, 4294901760
      %v6915 = vsub.f32 %v2934, %v6914
      %6916 = vmatmul.f32.gmra.mxu0 %v6915
      %v6917 = vpop.f32.mrf.mxu0
      %v6918 = vadd.f32 %v6762, %v6917
      %v6919 = vand.u32 %v2936, 4294901760
      %v6920 = vsub.f32 %v2936, %v6919
      %6921 = vmatmul.f32.gmra.mxu0 %v6920
      %v6922 = vpop.f32.mrf.mxu0
      %v6923 = vadd.f32 %v6766, %v6922
      %v6924 = vand.u32 %v2938, 4294901760
      %v6925 = vsub.f32 %v2938, %v6924
      %6926 = vmatmul.f32.gmra.mxu0 %v6925
      %v6927 = vpop.f32.mrf.mxu0
      %v6928 = vadd.f32 %v6770, %v6927
      %v6929 = vand.u32 %v2940, 4294901760
      %v6930 = vsub.f32 %v2940, %v6929
      %6931 = vmatmul.f32.gmra.mxu0 %v6930
      %v6932 = vpop.f32.mrf.mxu0
      %v6933 = vadd.f32 %v6774, %v6932
      %v6934 = vand.u32 %v2942, 4294901760
      %v6935 = vsub.f32 %v2942, %v6934
      %6936 = vmatmul.f32.gmra.mxu0 %v6935
      %v6937 = vpop.f32.mrf.mxu0
      %v6938 = vadd.f32 %v6778, %v6937
      %v6939 = vand.u32 %v2944, 4294901760
      %v6940 = vsub.f32 %v2944, %v6939
      %6941 = vmatmul.f32.gmra.mxu0 %v6940
      %v6942 = vpop.f32.mrf.mxu0
      %v6943 = vadd.f32 %v6782, %v6942
      %v6944 = vand.u32 %v2946, 4294901760
      %v6945 = vsub.f32 %v2946, %v6944
      %6946 = vmatmul.f32.gmra.mxu0 %v6945
      %v6947 = vpop.f32.mrf.mxu0
      %v6948 = vadd.f32 %v6786, %v6947
      %v6949 = vand.u32 %v2948, 4294901760
      %v6950 = vsub.f32 %v2948, %v6949
      %6951 = vmatmul.f32.gmra.mxu0 %v6950
      %v6952 = vpop.f32.mrf.mxu0
      %v6953 = vadd.f32 %v6790, %v6952
      %v6954 = vand.u32 %v2950, 4294901760
      %v6955 = vsub.f32 %v2950, %v6954
      %6956 = vmatmul.f32.gmra.mxu0 %v6955
      %v6957 = vpop.f32.mrf.mxu0
      %v6958 = vadd.f32 %v6794, %v6957
      %v6959 = vand.u32 %v2952, 4294901760
      %v6960 = vsub.f32 %v2952, %v6959
      %6961 = vmatmul.f32.gmra.mxu0 %v6960
      %v6962 = vpop.f32.mrf.mxu0
      %v6963 = vadd.f32 %v6798, %v6962
      %v6964 = vand.u32 %v2954, 4294901760
      %v6965 = vsub.f32 %v2954, %v6964
      %6966 = vmatmul.f32.gmra.mxu0 %v6965
      %v6967 = vpop.f32.mrf.mxu0
      %v6968 = vadd.f32 %v6802, %v6967
      %v6969 = vand.u32 %v2956, 4294901760
      %v6970 = vsub.f32 %v2956, %v6969
      %6971 = vmatmul.f32.gmra.mxu0 %v6970
      %v6972 = vpop.f32.mrf.mxu0
      %v6973 = vadd.f32 %v6806, %v6972
      %v6974 = vand.u32 %v2958, 4294901760
      %v6975 = vsub.f32 %v2958, %v6974
      %6976 = vmatmul.f32.gmra.mxu0 %v6975
      %v6977 = vpop.f32.mrf.mxu0
      %v6978 = vadd.f32 %v6810, %v6977
      %v6979 = vand.u32 %v2960, 4294901760
      %v6980 = vsub.f32 %v2960, %v6979
      %6981 = vmatmul.f32.gmra.mxu0 %v6980
      %v6982 = vpop.f32.mrf.mxu0
      %v6983 = vadd.f32 %v6814, %v6982
      %v6984 = vand.u32 %v2962, 4294901760
      %v6985 = vsub.f32 %v2962, %v6984
      %6986 = vmatmul.f32.gmra.mxu0 %v6985
      %v6987 = vpop.f32.mrf.mxu0
      %v6988 = vadd.f32 %v6818, %v6987
      %v6989 = vand.u32 %v2964, 4294901760
      %v6990 = vsub.f32 %v2964, %v6989
      %6991 = vmatmul.f32.gmra.mxu0 %v6990
      %v6992 = vpop.f32.mrf.mxu0
      %v6993 = vadd.f32 %v6822, %v6992
      %v6994 = vand.u32 %v2966, 4294901760
      %v6995 = vsub.f32 %v2966, %v6994
      %6996 = vmatmul.f32.gmra.mxu0 %v6995
      %v6997 = vpop.f32.mrf.mxu0
      %v6998 = vadd.f32 %v6826, %v6997
      %v6999 = vand.u32 %v2968, 4294901760
      %v7000 = vsub.f32 %v2968, %v6999
      %7001 = vmatmul.f32.gmra.mxu0 %v7000
      %v7002 = vpop.f32.mrf.mxu0
      %v7003 = vadd.f32 %v6830, %v7002
      %v7004 = vand.u32 %v2970, 4294901760
      %v7005 = vsub.f32 %v2970, %v7004
      %7006 = vmatmul.f32.gmra.mxu0 %v7005
      %v7007 = vpop.f32.mrf.mxu0
      %v7008 = vadd.f32 %v6834, %v7007
      %v7009 = vand.u32 %v2972, 4294901760
      %v7010 = vsub.f32 %v2972, %v7009
      %7011 = vmatmul.f32.gmra.mxu0 %v7010
      %v7012 = vpop.f32.mrf.mxu0
      %v7013 = vadd.f32 %v6838, %v7012
      %v7014 = vand.u32 %v2974, 4294901760
      %v7015 = vsub.f32 %v2974, %v7014
      %7016 = vmatmul.f32.gmra.mxu0 %v7015
      %v7017 = vpop.f32.mrf.mxu0
      %v7018 = vadd.f32 %v6842, %v7017
      %v7019 = vand.u32 %v2976, 4294901760
      %v7020 = vsub.f32 %v2976, %v7019
      %7021 = vmatmul.f32.gmra.mxu0 %v7020
      %v7022 = vpop.f32.mrf.mxu0
      %v7023 = vadd.f32 %v6846, %v7022
      %v7024 = vand.u32 %v6425, 4294901760
      %v7025 = vsub.f32 %v6425, %v7024
      %7026 = vmatmul.f32.gmra.mxu0 %v7025
      %v7027 = vpop.f32.mrf.mxu0
      %v7028 = vadd.f32 %v6850, %v7027
      %v7029 = vand.u32 %v6427, 4294901760
      %v7030 = vsub.f32 %v6427, %v7029
      %7031 = vmatmul.f32.gmra.mxu0 %v7030
      %v7032 = vpop.f32.mrf.mxu0
      %v7033 = vadd.f32 %v6854, %v7032
      %7034 = vdwg.mxu0
      %7035 = vmatpush.msra.mxu0 0.0
      %7036 = vmatpush.msra.mxu0 0.0
      %7037 = vmatpush.msra.mxu0 0.0
      %7038 = vmatpush.msra.mxu0 0.0
      %7039 = vmatpush.msra.mxu0 0.0
      %7040 = vmatpush.msra.mxu0 0.0
      %7041 = vmatpush.msra.mxu0 0.0
      %7042 = vmatpush.msra.mxu0 0.0
      %7043 = vmatpush.msra.mxu0 0.0
      %7044 = vmatpush.msra.mxu0 0.0
      %7045 = vmatpush.msra.mxu0 0.0
      %7046 = vmatpush.msra.mxu0 0.0
      %7047 = vmatpush.msra.mxu0 0.0
      %7048 = vmatpush.msra.mxu0 0.0
      %7049 = vmatpush.msra.mxu0 0.0
      %v7050 = vand.u32 %v6430, 4294901760
      %7051 = vmatpush.msra.mxu0 %v7050
      %v7052 = vand.u32 %v2918, 4294901760
      %v7053 = vsub.f32 %v2918, %v7052
      %v7054 = vand.u32 %v7053, 4294901760
      %7055 = vmatmul.f32.gmra.mxu0 %v7054
      %v7056 = vpop.f32.mrf.mxu0
      %v7057 = vadd.f32 %v6878, %v7056
      %v7058 = vand.u32 %v2920, 4294901760
      %v7059 = vsub.f32 %v2920, %v7058
      %v7060 = vand.u32 %v7059, 4294901760
      %7061 = vmatmul.f32.gmra.mxu0 %v7060
      %v7062 = vpop.f32.mrf.mxu0
      %v7063 = vadd.f32 %v6883, %v7062
      %v7064 = vand.u32 %v2922, 4294901760
      %v7065 = vsub.f32 %v2922, %v7064
      %v7066 = vand.u32 %v7065, 4294901760
      %7067 = vmatmul.f32.gmra.mxu0 %v7066
      %v7068 = vpop.f32.mrf.mxu0
      %v7069 = vadd.f32 %v6888, %v7068
      %v7070 = vand.u32 %v2924, 4294901760
      %v7071 = vsub.f32 %v2924, %v7070
      %v7072 = vand.u32 %v7071, 4294901760
      %7073 = vmatmul.f32.gmra.mxu0 %v7072
      %v7074 = vpop.f32.mrf.mxu0
      %v7075 = vadd.f32 %v6893, %v7074
      %v7076 = vand.u32 %v2926, 4294901760
      %v7077 = vsub.f32 %v2926, %v7076
      %v7078 = vand.u32 %v7077, 4294901760
      %7079 = vmatmul.f32.gmra.mxu0 %v7078
      %v7080 = vpop.f32.mrf.mxu0
      %v7081 = vadd.f32 %v6898, %v7080
      %v7082 = vand.u32 %v2928, 4294901760
      %v7083 = vsub.f32 %v2928, %v7082
      %v7084 = vand.u32 %v7083, 4294901760
      %7085 = vmatmul.f32.gmra.mxu0 %v7084
      %v7086 = vpop.f32.mrf.mxu0
      %v7087 = vadd.f32 %v6903, %v7086
      %v7088 = vand.u32 %v2930, 4294901760
      %v7089 = vsub.f32 %v2930, %v7088
      %v7090 = vand.u32 %v7089, 4294901760
      %7091 = vmatmul.f32.gmra.mxu0 %v7090
      %v7092 = vpop.f32.mrf.mxu0
      %v7093 = vadd.f32 %v6908, %v7092
      %v7094 = vand.u32 %v2932, 4294901760
      %v7095 = vsub.f32 %v2932, %v7094
      %v7096 = vand.u32 %v7095, 4294901760
      %7097 = vmatmul.f32.gmra.mxu0 %v7096
      %v7098 = vpop.f32.mrf.mxu0
      %v7099 = vadd.f32 %v6913, %v7098
      %v7100 = vand.u32 %v2934, 4294901760
      %v7101 = vsub.f32 %v2934, %v7100
      %v7102 = vand.u32 %v7101, 4294901760
      %7103 = vmatmul.f32.gmra.mxu0 %v7102
      %v7104 = vpop.f32.mrf.mxu0
      %v7105 = vadd.f32 %v6918, %v7104
      %v7106 = vand.u32 %v2936, 4294901760
      %v7107 = vsub.f32 %v2936, %v7106
      %v7108 = vand.u32 %v7107, 4294901760
      %7109 = vmatmul.f32.gmra.mxu0 %v7108
      %v7110 = vpop.f32.mrf.mxu0
      %v7111 = vadd.f32 %v6923, %v7110
      %v7112 = vand.u32 %v2938, 4294901760
      %v7113 = vsub.f32 %v2938, %v7112
      %v7114 = vand.u32 %v7113, 4294901760
      %7115 = vmatmul.f32.gmra.mxu0 %v7114
      %v7116 = vpop.f32.mrf.mxu0
      %v7117 = vadd.f32 %v6928, %v7116
      %v7118 = vand.u32 %v2940, 4294901760
      %v7119 = vsub.f32 %v2940, %v7118
      %v7120 = vand.u32 %v7119, 4294901760
      %7121 = vmatmul.f32.gmra.mxu0 %v7120
      %v7122 = vpop.f32.mrf.mxu0
      %v7123 = vadd.f32 %v6933, %v7122
      %v7124 = vand.u32 %v2942, 4294901760
      %v7125 = vsub.f32 %v2942, %v7124
      %v7126 = vand.u32 %v7125, 4294901760
      %7127 = vmatmul.f32.gmra.mxu0 %v7126
      %v7128 = vpop.f32.mrf.mxu0
      %v7129 = vadd.f32 %v6938, %v7128
      %v7130 = vand.u32 %v2944, 4294901760
      %v7131 = vsub.f32 %v2944, %v7130
      %v7132 = vand.u32 %v7131, 4294901760
      %7133 = vmatmul.f32.gmra.mxu0 %v7132
      %v7134 = vpop.f32.mrf.mxu0
      %v7135 = vadd.f32 %v6943, %v7134
      %v7136 = vand.u32 %v2946, 4294901760
      %v7137 = vsub.f32 %v2946, %v7136
      %v7138 = vand.u32 %v7137, 4294901760
      %7139 = vmatmul.f32.gmra.mxu0 %v7138
      %v7140 = vpop.f32.mrf.mxu0
      %v7141 = vadd.f32 %v6948, %v7140
      %v7142 = vand.u32 %v2948, 4294901760
      %v7143 = vsub.f32 %v2948, %v7142
      %v7144 = vand.u32 %v7143, 4294901760
      %7145 = vmatmul.f32.gmra.mxu0 %v7144
      %v7146 = vpop.f32.mrf.mxu0
      %v7147 = vadd.f32 %v6953, %v7146
      %v7148 = vand.u32 %v2950, 4294901760
      %v7149 = vsub.f32 %v2950, %v7148
      %v7150 = vand.u32 %v7149, 4294901760
      %7151 = vmatmul.f32.gmra.mxu0 %v7150
      %v7152 = vpop.f32.mrf.mxu0
      %v7153 = vadd.f32 %v6958, %v7152
      %v7154 = vand.u32 %v2952, 4294901760
      %v7155 = vsub.f32 %v2952, %v7154
      %v7156 = vand.u32 %v7155, 4294901760
      %7157 = vmatmul.f32.gmra.mxu0 %v7156
      %v7158 = vpop.f32.mrf.mxu0
      %v7159 = vadd.f32 %v6963, %v7158
      %v7160 = vand.u32 %v2954, 4294901760
      %v7161 = vsub.f32 %v2954, %v7160
      %v7162 = vand.u32 %v7161, 4294901760
      %7163 = vmatmul.f32.gmra.mxu0 %v7162
      %v7164 = vpop.f32.mrf.mxu0
      %v7165 = vadd.f32 %v6968, %v7164
      %v7166 = vand.u32 %v2956, 4294901760
      %v7167 = vsub.f32 %v2956, %v7166
      %v7168 = vand.u32 %v7167, 4294901760
      %7169 = vmatmul.f32.gmra.mxu0 %v7168
      %v7170 = vpop.f32.mrf.mxu0
      %v7171 = vadd.f32 %v6973, %v7170
      %v7172 = vand.u32 %v2958, 4294901760
      %v7173 = vsub.f32 %v2958, %v7172
      %v7174 = vand.u32 %v7173, 4294901760
      %7175 = vmatmul.f32.gmra.mxu0 %v7174
      %v7176 = vpop.f32.mrf.mxu0
      %v7177 = vadd.f32 %v6978, %v7176
      %v7178 = vand.u32 %v2960, 4294901760
      %v7179 = vsub.f32 %v2960, %v7178
      %v7180 = vand.u32 %v7179, 4294901760
      %7181 = vmatmul.f32.gmra.mxu0 %v7180
      %v7182 = vpop.f32.mrf.mxu0
      %v7183 = vadd.f32 %v6983, %v7182
      %v7184 = vand.u32 %v2962, 4294901760
      %v7185 = vsub.f32 %v2962, %v7184
      %v7186 = vand.u32 %v7185, 4294901760
      %7187 = vmatmul.f32.gmra.mxu0 %v7186
      %v7188 = vpop.f32.mrf.mxu0
      %v7189 = vadd.f32 %v6988, %v7188
      %v7190 = vand.u32 %v2964, 4294901760
      %v7191 = vsub.f32 %v2964, %v7190
      %v7192 = vand.u32 %v7191, 4294901760
      %7193 = vmatmul.f32.gmra.mxu0 %v7192
      %v7194 = vpop.f32.mrf.mxu0
      %v7195 = vadd.f32 %v6993, %v7194
      %v7196 = vand.u32 %v2966, 4294901760
      %v7197 = vsub.f32 %v2966, %v7196
      %v7198 = vand.u32 %v7197, 4294901760
      %7199 = vmatmul.f32.gmra.mxu0 %v7198
      %v7200 = vpop.f32.mrf.mxu0
      %v7201 = vadd.f32 %v6998, %v7200
      %v7202 = vand.u32 %v2968, 4294901760
      %v7203 = vsub.f32 %v2968, %v7202
      %v7204 = vand.u32 %v7203, 4294901760
      %7205 = vmatmul.f32.gmra.mxu0 %v7204
      %v7206 = vpop.f32.mrf.mxu0
      %v7207 = vadd.f32 %v7003, %v7206
      %v7208 = vand.u32 %v2970, 4294901760
      %v7209 = vsub.f32 %v2970, %v7208
      %v7210 = vand.u32 %v7209, 4294901760
      %7211 = vmatmul.f32.gmra.mxu0 %v7210
      %v7212 = vpop.f32.mrf.mxu0
      %v7213 = vadd.f32 %v7008, %v7212
      %v7214 = vand.u32 %v2972, 4294901760
      %v7215 = vsub.f32 %v2972, %v7214
      %v7216 = vand.u32 %v7215, 4294901760
      %7217 = vmatmul.f32.gmra.mxu0 %v7216
      %v7218 = vpop.f32.mrf.mxu0
      %v7219 = vadd.f32 %v7013, %v7218
      %v7220 = vand.u32 %v2974, 4294901760
      %v7221 = vsub.f32 %v2974, %v7220
      %v7222 = vand.u32 %v7221, 4294901760
      %7223 = vmatmul.f32.gmra.mxu0 %v7222
      %v7224 = vpop.f32.mrf.mxu0
      %v7225 = vadd.f32 %v7018, %v7224
      %v7226 = vand.u32 %v2976, 4294901760
      %v7227 = vsub.f32 %v2976, %v7226
      %v7228 = vand.u32 %v7227, 4294901760
      %7229 = vmatmul.f32.gmra.mxu0 %v7228
      %v7230 = vpop.f32.mrf.mxu0
      %v7231 = vadd.f32 %v7023, %v7230
      %v7232 = vand.u32 %v6425, 4294901760
      %v7233 = vsub.f32 %v6425, %v7232
      %v7234 = vand.u32 %v7233, 4294901760
      %7235 = vmatmul.f32.gmra.mxu0 %v7234
      %v7236 = vpop.f32.mrf.mxu0
      %v7237 = vadd.f32 %v7028, %v7236
      %v7238 = vand.u32 %v6427, 4294901760
      %v7239 = vsub.f32 %v6427, %v7238
      %v7240 = vand.u32 %v7239, 4294901760
      %7241 = vmatmul.f32.gmra.mxu0 %v7240
      %v7242 = vpop.f32.mrf.mxu0
      %v7243 = vadd.f32 %v7033, %v7242
      %7244 = vdwg.mxu0
      %7245 = vmatpush.msra.mxu0 0.0
      %7246 = vmatpush.msra.mxu0 0.0
      %7247 = vmatpush.msra.mxu0 0.0
      %7248 = vmatpush.msra.mxu0 0.0
      %7249 = vmatpush.msra.mxu0 0.0
      %7250 = vmatpush.msra.mxu0 0.0
      %7251 = vmatpush.msra.mxu0 0.0
      %7252 = vmatpush.msra.mxu0 0.0
      %7253 = vmatpush.msra.mxu0 0.0
      %7254 = vmatpush.msra.mxu0 0.0
      %7255 = vmatpush.msra.mxu0 0.0
      %7256 = vmatpush.msra.mxu0 0.0
      %7257 = vmatpush.msra.mxu0 0.0
      %7258 = vmatpush.msra.mxu0 0.0
      %7259 = vmatpush.msra.mxu0 0.0
      %v7260 = vand.u32 %v6430, 4294901760
      %v7261 = vsub.f32 %v6430, %v7260
      %v7262 = vand.u32 %v7261, 4294901760
      %7263 = vmatpush.msra.mxu0 %v7262
      %v7264 = vand.u32 %v2918, 4294901760
      %7265 = vmatmul.f32.gmra.mxu0 %v7264
      %v7266 = vpop.f32.mrf.mxu0
      %v7267 = vadd.f32 %v7057, %v7266
      %v7268 = vand.u32 %v2920, 4294901760
      %7269 = vmatmul.f32.gmra.mxu0 %v7268
      %v7270 = vpop.f32.mrf.mxu0
      %v7271 = vadd.f32 %v7063, %v7270
      %v7272 = vand.u32 %v2922, 4294901760
      %7273 = vmatmul.f32.gmra.mxu0 %v7272
      %v7274 = vpop.f32.mrf.mxu0
      %v7275 = vadd.f32 %v7069, %v7274
      %v7276 = vand.u32 %v2924, 4294901760
      %7277 = vmatmul.f32.gmra.mxu0 %v7276
      %v7278 = vpop.f32.mrf.mxu0
      %v7279 = vadd.f32 %v7075, %v7278
      %v7280 = vand.u32 %v2926, 4294901760
      %7281 = vmatmul.f32.gmra.mxu0 %v7280
      %v7282 = vpop.f32.mrf.mxu0
      %v7283 = vadd.f32 %v7081, %v7282
      %v7284 = vand.u32 %v2928, 4294901760
      %7285 = vmatmul.f32.gmra.mxu0 %v7284
      %v7286 = vpop.f32.mrf.mxu0
      %v7287 = vadd.f32 %v7087, %v7286
      %v7288 = vand.u32 %v2930, 4294901760
      %7289 = vmatmul.f32.gmra.mxu0 %v7288
      %v7290 = vpop.f32.mrf.mxu0
      %v7291 = vadd.f32 %v7093, %v7290
      %v7292 = vand.u32 %v2932, 4294901760
      %7293 = vmatmul.f32.gmra.mxu0 %v7292
      %v7294 = vpop.f32.mrf.mxu0
      %v7295 = vadd.f32 %v7099, %v7294
      %v7296 = vand.u32 %v2934, 4294901760
      %7297 = vmatmul.f32.gmra.mxu0 %v7296
      %v7298 = vpop.f32.mrf.mxu0
      %v7299 = vadd.f32 %v7105, %v7298
      %v7300 = vand.u32 %v2936, 4294901760
      %7301 = vmatmul.f32.gmra.mxu0 %v7300
      %v7302 = vpop.f32.mrf.mxu0
      %v7303 = vadd.f32 %v7111, %v7302
      %v7304 = vand.u32 %v2938, 4294901760
      %7305 = vmatmul.f32.gmra.mxu0 %v7304
      %v7306 = vpop.f32.mrf.mxu0
      %v7307 = vadd.f32 %v7117, %v7306
      %v7308 = vand.u32 %v2940, 4294901760
      %7309 = vmatmul.f32.gmra.mxu0 %v7308
      %v7310 = vpop.f32.mrf.mxu0
      %v7311 = vadd.f32 %v7123, %v7310
      %v7312 = vand.u32 %v2942, 4294901760
      %7313 = vmatmul.f32.gmra.mxu0 %v7312
      %v7314 = vpop.f32.mrf.mxu0
      %v7315 = vadd.f32 %v7129, %v7314
      %v7316 = vand.u32 %v2944, 4294901760
      %7317 = vmatmul.f32.gmra.mxu0 %v7316
      %v7318 = vpop.f32.mrf.mxu0
      %v7319 = vadd.f32 %v7135, %v7318
      %v7320 = vand.u32 %v2946, 4294901760
      %7321 = vmatmul.f32.gmra.mxu0 %v7320
      %v7322 = vpop.f32.mrf.mxu0
      %v7323 = vadd.f32 %v7141, %v7322
      %v7324 = vand.u32 %v2948, 4294901760
      %7325 = vmatmul.f32.gmra.mxu0 %v7324
      %v7326 = vpop.f32.mrf.mxu0
      %v7327 = vadd.f32 %v7147, %v7326
      %v7328 = vand.u32 %v2950, 4294901760
      %7329 = vmatmul.f32.gmra.mxu0 %v7328
      %v7330 = vpop.f32.mrf.mxu0
      %v7331 = vadd.f32 %v7153, %v7330
      %v7332 = vand.u32 %v2952, 4294901760
      %7333 = vmatmul.f32.gmra.mxu0 %v7332
      %v7334 = vpop.f32.mrf.mxu0
      %v7335 = vadd.f32 %v7159, %v7334
      %v7336 = vand.u32 %v2954, 4294901760
      %7337 = vmatmul.f32.gmra.mxu0 %v7336
      %v7338 = vpop.f32.mrf.mxu0
      %v7339 = vadd.f32 %v7165, %v7338
      %v7340 = vand.u32 %v2956, 4294901760
      %7341 = vmatmul.f32.gmra.mxu0 %v7340
      %v7342 = vpop.f32.mrf.mxu0
      %v7343 = vadd.f32 %v7171, %v7342
      %v7344 = vand.u32 %v2958, 4294901760
      %7345 = vmatmul.f32.gmra.mxu0 %v7344
      %v7346 = vpop.f32.mrf.mxu0
      %v7347 = vadd.f32 %v7177, %v7346
      %v7348 = vand.u32 %v2960, 4294901760
      %7349 = vmatmul.f32.gmra.mxu0 %v7348
      %v7350 = vpop.f32.mrf.mxu0
      %v7351 = vadd.f32 %v7183, %v7350
      %v7352 = vand.u32 %v2962, 4294901760
      %7353 = vmatmul.f32.gmra.mxu0 %v7352
      %v7354 = vpop.f32.mrf.mxu0
      %v7355 = vadd.f32 %v7189, %v7354
      %v7356 = vand.u32 %v2964, 4294901760
      %7357 = vmatmul.f32.gmra.mxu0 %v7356
      %v7358 = vpop.f32.mrf.mxu0
      %v7359 = vadd.f32 %v7195, %v7358
      %v7360 = vand.u32 %v2966, 4294901760
      %7361 = vmatmul.f32.gmra.mxu0 %v7360
      %v7362 = vpop.f32.mrf.mxu0
      %v7363 = vadd.f32 %v7201, %v7362
      %v7364 = vand.u32 %v2968, 4294901760
      %7365 = vmatmul.f32.gmra.mxu0 %v7364
      %v7366 = vpop.f32.mrf.mxu0
      %v7367 = vadd.f32 %v7207, %v7366
      %v7368 = vand.u32 %v2970, 4294901760
      %7369 = vmatmul.f32.gmra.mxu0 %v7368
      %v7370 = vpop.f32.mrf.mxu0
      %v7371 = vadd.f32 %v7213, %v7370
      %v7372 = vand.u32 %v2972, 4294901760
      %7373 = vmatmul.f32.gmra.mxu0 %v7372
      %v7374 = vpop.f32.mrf.mxu0
      %v7375 = vadd.f32 %v7219, %v7374
      %v7376 = vand.u32 %v2974, 4294901760
      %7377 = vmatmul.f32.gmra.mxu0 %v7376
      %v7378 = vpop.f32.mrf.mxu0
      %v7379 = vadd.f32 %v7225, %v7378
      %v7380 = vand.u32 %v2976, 4294901760
      %7381 = vmatmul.f32.gmra.mxu0 %v7380
      %v7382 = vpop.f32.mrf.mxu0
      %v7383 = vadd.f32 %v7231, %v7382
      %v7384 = vand.u32 %v6425, 4294901760
      %7385 = vmatmul.f32.gmra.mxu0 %v7384
      %v7386 = vpop.f32.mrf.mxu0
      %v7387 = vadd.f32 %v7237, %v7386
      %v7388 = vand.u32 %v6427, 4294901760
      %7389 = vmatmul.f32.gmra.mxu0 %v7388
      %v7390 = vpop.f32.mrf.mxu0
      %v7391 = vadd.f32 %v7243, %v7390
      %7392 = vdwg.mxu0
      %7393 = vmatpush.msra.mxu0 0.0
      %7394 = vmatpush.msra.mxu0 0.0
      %7395 = vmatpush.msra.mxu0 0.0
      %7396 = vmatpush.msra.mxu0 0.0
      %7397 = vmatpush.msra.mxu0 0.0
      %7398 = vmatpush.msra.mxu0 0.0
      %7399 = vmatpush.msra.mxu0 0.0
      %7400 = vmatpush.msra.mxu0 0.0
      %7401 = vmatpush.msra.mxu0 0.0
      %7402 = vmatpush.msra.mxu0 0.0
      %7403 = vmatpush.msra.mxu0 0.0
      %7404 = vmatpush.msra.mxu0 0.0
      %7405 = vmatpush.msra.mxu0 0.0
      %7406 = vmatpush.msra.mxu0 0.0
      %7407 = vmatpush.msra.mxu0 0.0
      %v7408 = vand.u32 %v6430, 4294901760
      %7409 = vmatpush.msra.mxu0 %v7408
      %v7410 = vand.u32 %v2918, 4294901760
      %7411 = vmatmul.f32.gmra.mxu0 %v7410
      %v7412 = vpop.f32.mrf.mxu0
      %v7413 = vadd.f32 %v7267, %v7412
      %v7414 = vand.u32 %v2920, 4294901760
      %7415 = vmatmul.f32.gmra.mxu0 %v7414
      %v7416 = vpop.f32.mrf.mxu0
      %v7417 = vadd.f32 %v7271, %v7416
      %v7418 = vand.u32 %v2922, 4294901760
      %7419 = vmatmul.f32.gmra.mxu0 %v7418
      %v7420 = vpop.f32.mrf.mxu0
      %v7421 = vadd.f32 %v7275, %v7420
      %v7422 = vand.u32 %v2924, 4294901760
      %7423 = vmatmul.f32.gmra.mxu0 %v7422
      %v7424 = vpop.f32.mrf.mxu0
      %v7425 = vadd.f32 %v7279, %v7424
      %v7426 = vand.u32 %v2926, 4294901760
      %7427 = vmatmul.f32.gmra.mxu0 %v7426
      %v7428 = vpop.f32.mrf.mxu0
      %v7429 = vadd.f32 %v7283, %v7428
      %v7430 = vand.u32 %v2928, 4294901760
      %7431 = vmatmul.f32.gmra.mxu0 %v7430
      %v7432 = vpop.f32.mrf.mxu0
      %v7433 = vadd.f32 %v7287, %v7432
      %v7434 = vand.u32 %v2930, 4294901760
      %7435 = vmatmul.f32.gmra.mxu0 %v7434
      %v7436 = vpop.f32.mrf.mxu0
      %v7437 = vadd.f32 %v7291, %v7436
      %v7438 = vand.u32 %v2932, 4294901760
      %7439 = vmatmul.f32.gmra.mxu0 %v7438
      %v7440 = vpop.f32.mrf.mxu0
      %v7441 = vadd.f32 %v7295, %v7440
      %v7442 = vand.u32 %v2934, 4294901760
      %7443 = vmatmul.f32.gmra.mxu0 %v7442
      %v7444 = vpop.f32.mrf.mxu0
      %v7445 = vadd.f32 %v7299, %v7444
      %v7446 = vand.u32 %v2936, 4294901760
      %7447 = vmatmul.f32.gmra.mxu0 %v7446
      %v7448 = vpop.f32.mrf.mxu0
      %v7449 = vadd.f32 %v7303, %v7448
      %v7450 = vand.u32 %v2938, 4294901760
      %7451 = vmatmul.f32.gmra.mxu0 %v7450
      %v7452 = vpop.f32.mrf.mxu0
      %v7453 = vadd.f32 %v7307, %v7452
      %v7454 = vand.u32 %v2940, 4294901760
      %7455 = vmatmul.f32.gmra.mxu0 %v7454
      %v7456 = vpop.f32.mrf.mxu0
      %v7457 = vadd.f32 %v7311, %v7456
      %v7458 = vand.u32 %v2942, 4294901760
      %7459 = vmatmul.f32.gmra.mxu0 %v7458
      %v7460 = vpop.f32.mrf.mxu0
      %v7461 = vadd.f32 %v7315, %v7460
      %v7462 = vand.u32 %v2944, 4294901760
      %7463 = vmatmul.f32.gmra.mxu0 %v7462
      %v7464 = vpop.f32.mrf.mxu0
      %v7465 = vadd.f32 %v7319, %v7464
      %v7466 = vand.u32 %v2946, 4294901760
      %7467 = vmatmul.f32.gmra.mxu0 %v7466
      %v7468 = vpop.f32.mrf.mxu0
      %v7469 = vadd.f32 %v7323, %v7468
      %v7470 = vand.u32 %v2948, 4294901760
      %7471 = vmatmul.f32.gmra.mxu0 %v7470
      %v7472 = vpop.f32.mrf.mxu0
      %v7473 = vadd.f32 %v7327, %v7472
      %v7474 = vand.u32 %v2950, 4294901760
      %7475 = vmatmul.f32.gmra.mxu0 %v7474
      %v7476 = vpop.f32.mrf.mxu0
      %v7477 = vadd.f32 %v7331, %v7476
      %v7478 = vand.u32 %v2952, 4294901760
      %7479 = vmatmul.f32.gmra.mxu0 %v7478
      %v7480 = vpop.f32.mrf.mxu0
      %v7481 = vadd.f32 %v7335, %v7480
      %v7482 = vand.u32 %v2954, 4294901760
      %7483 = vmatmul.f32.gmra.mxu0 %v7482
      %v7484 = vpop.f32.mrf.mxu0
      %v7485 = vadd.f32 %v7339, %v7484
      %v7486 = vand.u32 %v2956, 4294901760
      %7487 = vmatmul.f32.gmra.mxu0 %v7486
      %v7488 = vpop.f32.mrf.mxu0
      %v7489 = vadd.f32 %v7343, %v7488
      %v7490 = vand.u32 %v2958, 4294901760
      %7491 = vmatmul.f32.gmra.mxu0 %v7490
      %v7492 = vpop.f32.mrf.mxu0
      %v7493 = vadd.f32 %v7347, %v7492
      %v7494 = vand.u32 %v2960, 4294901760
      %7495 = vmatmul.f32.gmra.mxu0 %v7494
      %v7496 = vpop.f32.mrf.mxu0
      %v7497 = vadd.f32 %v7351, %v7496
      %v7498 = vand.u32 %v2962, 4294901760
      %7499 = vmatmul.f32.gmra.mxu0 %v7498
      %v7500 = vpop.f32.mrf.mxu0
      %v7501 = vadd.f32 %v7355, %v7500
      %v7502 = vand.u32 %v2964, 4294901760
      %7503 = vmatmul.f32.gmra.mxu0 %v7502
      %v7504 = vpop.f32.mrf.mxu0
      %v7505 = vadd.f32 %v7359, %v7504
      %v7506 = vand.u32 %v2966, 4294901760
      %7507 = vmatmul.f32.gmra.mxu0 %v7506
      %v7508 = vpop.f32.mrf.mxu0
      %v7509 = vadd.f32 %v7363, %v7508
      %v7510 = vand.u32 %v2968, 4294901760
      %7511 = vmatmul.f32.gmra.mxu0 %v7510
      %v7512 = vpop.f32.mrf.mxu0
      %v7513 = vadd.f32 %v7367, %v7512
      %v7514 = vand.u32 %v2970, 4294901760
      %7515 = vmatmul.f32.gmra.mxu0 %v7514
      %v7516 = vpop.f32.mrf.mxu0
      %v7517 = vadd.f32 %v7371, %v7516
      %v7518 = vand.u32 %v2972, 4294901760
      %7519 = vmatmul.f32.gmra.mxu0 %v7518
      %v7520 = vpop.f32.mrf.mxu0
      %v7521 = vadd.f32 %v7375, %v7520
      %v7522 = vand.u32 %v2974, 4294901760
      %7523 = vmatmul.f32.gmra.mxu0 %v7522
      %v7524 = vpop.f32.mrf.mxu0
      %v7525 = vadd.f32 %v7379, %v7524
      %v7526 = vand.u32 %v2976, 4294901760
      %7527 = vmatmul.f32.gmra.mxu0 %v7526
      %v7528 = vpop.f32.mrf.mxu0
      %v7529 = vadd.f32 %v7383, %v7528
      %v7530 = vand.u32 %v6425, 4294901760
      %7531 = vmatmul.f32.gmra.mxu0 %v7530
      %v7532 = vpop.f32.mrf.mxu0
      %v7533 = vadd.f32 %v7387, %v7532
      %v7534 = vand.u32 %v6427, 4294901760
      %7535 = vmatmul.f32.gmra.mxu0 %v7534
      %v7536 = vpop.f32.mrf.mxu0
      %v7537 = vadd.f32 %v7391, %v7536
      %7538 = vdwg.mxu0
      %v7539 = vadd.f32 %v6388, %v7413
      %v7540 = vadd.f32 %v6389, %v7417
      %v7541 = vadd.f32 %v6390, %v7421
      %v7542 = vadd.f32 %v6391, %v7425
      %v7543 = vadd.f32 %v6392, %v7429
      %v7544 = vadd.f32 %v6393, %v7433
      %v7545 = vadd.f32 %v6394, %v7437
      %v7546 = vadd.f32 %v6395, %v7441
      %v7547 = vadd.f32 %v6396, %v7445
      %v7548 = vadd.f32 %v6397, %v7449
      %v7549 = vadd.f32 %v6398, %v7453
      %v7550 = vadd.f32 %v6399, %v7457
      %v7551 = vadd.f32 %v6400, %v7461
      %v7552 = vadd.f32 %v6401, %v7465
      %v7553 = vadd.f32 %v6402, %v7469
      %v7554 = vadd.f32 %v6403, %v7473
      %v7555 = vadd.f32 %v6404, %v7477
      %v7556 = vadd.f32 %v6405, %v7481
      %v7557 = vadd.f32 %v6406, %v7485
      %v7558 = vadd.f32 %v6407, %v7489
      %v7559 = vadd.f32 %v6408, %v7493
      %v7560 = vadd.f32 %v6409, %v7497
      %v7561 = vadd.f32 %v6410, %v7501
      %v7562 = vadd.f32 %v6411, %v7505
      %v7563 = vadd.f32 %v6412, %v7509
      %v7564 = vadd.f32 %v6413, %v7513
      %v7565 = vadd.f32 %v6414, %v7517
      %v7566 = vadd.f32 %v6415, %v7521
      %v7567 = vadd.f32 %v6416, %v7525
      %v7568 = vadd.f32 %v6417, %v7529
      %v7569 = vadd.f32 %v6418, %v7533
      %v7570 = vadd.f32 %v6419, %v7537
      %v7572 = vsel %vm171, %v343, 0
      %v7575 = vsel %vm171, %v344, 0
      %v7578 = vsel %vm548, %v352, 0
      %7580 = vmatpush.msra.mxu0 0.0
      %7581 = vmatpush.msra.mxu0 0.0
      %7582 = vmatpush.msra.mxu0 0.0
      %7583 = vmatpush.msra.mxu0 0.0
      %7584 = vmatpush.msra.mxu0 0.0
      %7585 = vmatpush.msra.mxu0 0.0
      %7586 = vmatpush.msra.mxu0 0.0
      %7587 = vmatpush.msra.mxu0 0.0
      %7588 = vmatpush.msra.mxu0 0.0
      %7589 = vmatpush.msra.mxu0 0.0
      %7590 = vmatpush.msra.mxu0 0.0
      %7591 = vmatpush.msra.mxu0 0.0
      %7592 = vmatpush.msra.mxu0 0.0
      %7593 = vmatpush.msra.mxu0 0.0
      %7594 = vmatpush.msra.mxu0 0.0
      %v7595 = vand.u32 %v7578, 4294901760
      %7596 = vmatpush.msra.mxu0 %v7595
      %v7597 = vand.u32 %v1667, 4294901760
      %v7598 = vsub.f32 %v1667, %v7597
      %v7599 = vand.u32 %v7598, 4294901760
      %v7600 = vsub.f32 %v7598, %v7599
      %v7601 = vand.u32 %v7600, 4294901760
      %7602 = vmatmul.f32.gmra.mxu0 %v7601
      %v7603 = vpop.f32.mrf.mxu0
      %v7604 = vadd.f32 0.0, %v7603
      %v7605 = vand.u32 %v1669, 4294901760
      %v7606 = vsub.f32 %v1669, %v7605
      %v7607 = vand.u32 %v7606, 4294901760
      %v7608 = vsub.f32 %v7606, %v7607
      %v7609 = vand.u32 %v7608, 4294901760
      %7610 = vmatmul.f32.gmra.mxu0 %v7609
      %v7611 = vpop.f32.mrf.mxu0
      %v7612 = vadd.f32 0.0, %v7611
      %v7613 = vand.u32 %v1671, 4294901760
      %v7614 = vsub.f32 %v1671, %v7613
      %v7615 = vand.u32 %v7614, 4294901760
      %v7616 = vsub.f32 %v7614, %v7615
      %v7617 = vand.u32 %v7616, 4294901760
      %7618 = vmatmul.f32.gmra.mxu0 %v7617
      %v7619 = vpop.f32.mrf.mxu0
      %v7620 = vadd.f32 0.0, %v7619
      %v7621 = vand.u32 %v1673, 4294901760
      %v7622 = vsub.f32 %v1673, %v7621
      %v7623 = vand.u32 %v7622, 4294901760
      %v7624 = vsub.f32 %v7622, %v7623
      %v7625 = vand.u32 %v7624, 4294901760
      %7626 = vmatmul.f32.gmra.mxu0 %v7625
      %v7627 = vpop.f32.mrf.mxu0
      %v7628 = vadd.f32 0.0, %v7627
      %v7629 = vand.u32 %v1675, 4294901760
      %v7630 = vsub.f32 %v1675, %v7629
      %v7631 = vand.u32 %v7630, 4294901760
      %v7632 = vsub.f32 %v7630, %v7631
      %v7633 = vand.u32 %v7632, 4294901760
      %7634 = vmatmul.f32.gmra.mxu0 %v7633
      %v7635 = vpop.f32.mrf.mxu0
      %v7636 = vadd.f32 0.0, %v7635
      %v7637 = vand.u32 %v1677, 4294901760
      %v7638 = vsub.f32 %v1677, %v7637
      %v7639 = vand.u32 %v7638, 4294901760
      %v7640 = vsub.f32 %v7638, %v7639
      %v7641 = vand.u32 %v7640, 4294901760
      %7642 = vmatmul.f32.gmra.mxu0 %v7641
      %v7643 = vpop.f32.mrf.mxu0
      %v7644 = vadd.f32 0.0, %v7643
      %v7645 = vand.u32 %v1679, 4294901760
      %v7646 = vsub.f32 %v1679, %v7645
      %v7647 = vand.u32 %v7646, 4294901760
      %v7648 = vsub.f32 %v7646, %v7647
      %v7649 = vand.u32 %v7648, 4294901760
      %7650 = vmatmul.f32.gmra.mxu0 %v7649
      %v7651 = vpop.f32.mrf.mxu0
      %v7652 = vadd.f32 0.0, %v7651
      %v7653 = vand.u32 %v1681, 4294901760
      %v7654 = vsub.f32 %v1681, %v7653
      %v7655 = vand.u32 %v7654, 4294901760
      %v7656 = vsub.f32 %v7654, %v7655
      %v7657 = vand.u32 %v7656, 4294901760
      %7658 = vmatmul.f32.gmra.mxu0 %v7657
      %v7659 = vpop.f32.mrf.mxu0
      %v7660 = vadd.f32 0.0, %v7659
      %v7661 = vand.u32 %v1683, 4294901760
      %v7662 = vsub.f32 %v1683, %v7661
      %v7663 = vand.u32 %v7662, 4294901760
      %v7664 = vsub.f32 %v7662, %v7663
      %v7665 = vand.u32 %v7664, 4294901760
      %7666 = vmatmul.f32.gmra.mxu0 %v7665
      %v7667 = vpop.f32.mrf.mxu0
      %v7668 = vadd.f32 0.0, %v7667
      %v7669 = vand.u32 %v1685, 4294901760
      %v7670 = vsub.f32 %v1685, %v7669
      %v7671 = vand.u32 %v7670, 4294901760
      %v7672 = vsub.f32 %v7670, %v7671
      %v7673 = vand.u32 %v7672, 4294901760
      %7674 = vmatmul.f32.gmra.mxu0 %v7673
      %v7675 = vpop.f32.mrf.mxu0
      %v7676 = vadd.f32 0.0, %v7675
      %v7677 = vand.u32 %v1687, 4294901760
      %v7678 = vsub.f32 %v1687, %v7677
      %v7679 = vand.u32 %v7678, 4294901760
      %v7680 = vsub.f32 %v7678, %v7679
      %v7681 = vand.u32 %v7680, 4294901760
      %7682 = vmatmul.f32.gmra.mxu0 %v7681
      %v7683 = vpop.f32.mrf.mxu0
      %v7684 = vadd.f32 0.0, %v7683
      %v7685 = vand.u32 %v1689, 4294901760
      %v7686 = vsub.f32 %v1689, %v7685
      %v7687 = vand.u32 %v7686, 4294901760
      %v7688 = vsub.f32 %v7686, %v7687
      %v7689 = vand.u32 %v7688, 4294901760
      %7690 = vmatmul.f32.gmra.mxu0 %v7689
      %v7691 = vpop.f32.mrf.mxu0
      %v7692 = vadd.f32 0.0, %v7691
      %v7693 = vand.u32 %v1691, 4294901760
      %v7694 = vsub.f32 %v1691, %v7693
      %v7695 = vand.u32 %v7694, 4294901760
      %v7696 = vsub.f32 %v7694, %v7695
      %v7697 = vand.u32 %v7696, 4294901760
      %7698 = vmatmul.f32.gmra.mxu0 %v7697
      %v7699 = vpop.f32.mrf.mxu0
      %v7700 = vadd.f32 0.0, %v7699
      %v7701 = vand.u32 %v1693, 4294901760
      %v7702 = vsub.f32 %v1693, %v7701
      %v7703 = vand.u32 %v7702, 4294901760
      %v7704 = vsub.f32 %v7702, %v7703
      %v7705 = vand.u32 %v7704, 4294901760
      %7706 = vmatmul.f32.gmra.mxu0 %v7705
      %v7707 = vpop.f32.mrf.mxu0
      %v7708 = vadd.f32 0.0, %v7707
      %v7709 = vand.u32 %v1695, 4294901760
      %v7710 = vsub.f32 %v1695, %v7709
      %v7711 = vand.u32 %v7710, 4294901760
      %v7712 = vsub.f32 %v7710, %v7711
      %v7713 = vand.u32 %v7712, 4294901760
      %7714 = vmatmul.f32.gmra.mxu0 %v7713
      %v7715 = vpop.f32.mrf.mxu0
      %v7716 = vadd.f32 0.0, %v7715
      %v7717 = vand.u32 %v1697, 4294901760
      %v7718 = vsub.f32 %v1697, %v7717
      %v7719 = vand.u32 %v7718, 4294901760
      %v7720 = vsub.f32 %v7718, %v7719
      %v7721 = vand.u32 %v7720, 4294901760
      %7722 = vmatmul.f32.gmra.mxu0 %v7721
      %v7723 = vpop.f32.mrf.mxu0
      %v7724 = vadd.f32 0.0, %v7723
      %v7725 = vand.u32 %v1699, 4294901760
      %v7726 = vsub.f32 %v1699, %v7725
      %v7727 = vand.u32 %v7726, 4294901760
      %v7728 = vsub.f32 %v7726, %v7727
      %v7729 = vand.u32 %v7728, 4294901760
      %7730 = vmatmul.f32.gmra.mxu0 %v7729
      %v7731 = vpop.f32.mrf.mxu0
      %v7732 = vadd.f32 0.0, %v7731
      %v7733 = vand.u32 %v1701, 4294901760
      %v7734 = vsub.f32 %v1701, %v7733
      %v7735 = vand.u32 %v7734, 4294901760
      %v7736 = vsub.f32 %v7734, %v7735
      %v7737 = vand.u32 %v7736, 4294901760
      %7738 = vmatmul.f32.gmra.mxu0 %v7737
      %v7739 = vpop.f32.mrf.mxu0
      %v7740 = vadd.f32 0.0, %v7739
      %v7741 = vand.u32 %v1703, 4294901760
      %v7742 = vsub.f32 %v1703, %v7741
      %v7743 = vand.u32 %v7742, 4294901760
      %v7744 = vsub.f32 %v7742, %v7743
      %v7745 = vand.u32 %v7744, 4294901760
      %7746 = vmatmul.f32.gmra.mxu0 %v7745
      %v7747 = vpop.f32.mrf.mxu0
      %v7748 = vadd.f32 0.0, %v7747
      %v7749 = vand.u32 %v1705, 4294901760
      %v7750 = vsub.f32 %v1705, %v7749
      %v7751 = vand.u32 %v7750, 4294901760
      %v7752 = vsub.f32 %v7750, %v7751
      %v7753 = vand.u32 %v7752, 4294901760
      %7754 = vmatmul.f32.gmra.mxu0 %v7753
      %v7755 = vpop.f32.mrf.mxu0
      %v7756 = vadd.f32 0.0, %v7755
      %v7757 = vand.u32 %v1707, 4294901760
      %v7758 = vsub.f32 %v1707, %v7757
      %v7759 = vand.u32 %v7758, 4294901760
      %v7760 = vsub.f32 %v7758, %v7759
      %v7761 = vand.u32 %v7760, 4294901760
      %7762 = vmatmul.f32.gmra.mxu0 %v7761
      %v7763 = vpop.f32.mrf.mxu0
      %v7764 = vadd.f32 0.0, %v7763
      %v7765 = vand.u32 %v1709, 4294901760
      %v7766 = vsub.f32 %v1709, %v7765
      %v7767 = vand.u32 %v7766, 4294901760
      %v7768 = vsub.f32 %v7766, %v7767
      %v7769 = vand.u32 %v7768, 4294901760
      %7770 = vmatmul.f32.gmra.mxu0 %v7769
      %v7771 = vpop.f32.mrf.mxu0
      %v7772 = vadd.f32 0.0, %v7771
      %v7773 = vand.u32 %v1711, 4294901760
      %v7774 = vsub.f32 %v1711, %v7773
      %v7775 = vand.u32 %v7774, 4294901760
      %v7776 = vsub.f32 %v7774, %v7775
      %v7777 = vand.u32 %v7776, 4294901760
      %7778 = vmatmul.f32.gmra.mxu0 %v7777
      %v7779 = vpop.f32.mrf.mxu0
      %v7780 = vadd.f32 0.0, %v7779
      %v7781 = vand.u32 %v1713, 4294901760
      %v7782 = vsub.f32 %v1713, %v7781
      %v7783 = vand.u32 %v7782, 4294901760
      %v7784 = vsub.f32 %v7782, %v7783
      %v7785 = vand.u32 %v7784, 4294901760
      %7786 = vmatmul.f32.gmra.mxu0 %v7785
      %v7787 = vpop.f32.mrf.mxu0
      %v7788 = vadd.f32 0.0, %v7787
      %v7789 = vand.u32 %v1715, 4294901760
      %v7790 = vsub.f32 %v1715, %v7789
      %v7791 = vand.u32 %v7790, 4294901760
      %v7792 = vsub.f32 %v7790, %v7791
      %v7793 = vand.u32 %v7792, 4294901760
      %7794 = vmatmul.f32.gmra.mxu0 %v7793
      %v7795 = vpop.f32.mrf.mxu0
      %v7796 = vadd.f32 0.0, %v7795
      %v7797 = vand.u32 %v1717, 4294901760
      %v7798 = vsub.f32 %v1717, %v7797
      %v7799 = vand.u32 %v7798, 4294901760
      %v7800 = vsub.f32 %v7798, %v7799
      %v7801 = vand.u32 %v7800, 4294901760
      %7802 = vmatmul.f32.gmra.mxu0 %v7801
      %v7803 = vpop.f32.mrf.mxu0
      %v7804 = vadd.f32 0.0, %v7803
      %v7805 = vand.u32 %v1719, 4294901760
      %v7806 = vsub.f32 %v1719, %v7805
      %v7807 = vand.u32 %v7806, 4294901760
      %v7808 = vsub.f32 %v7806, %v7807
      %v7809 = vand.u32 %v7808, 4294901760
      %7810 = vmatmul.f32.gmra.mxu0 %v7809
      %v7811 = vpop.f32.mrf.mxu0
      %v7812 = vadd.f32 0.0, %v7811
      %v7813 = vand.u32 %v1721, 4294901760
      %v7814 = vsub.f32 %v1721, %v7813
      %v7815 = vand.u32 %v7814, 4294901760
      %v7816 = vsub.f32 %v7814, %v7815
      %v7817 = vand.u32 %v7816, 4294901760
      %7818 = vmatmul.f32.gmra.mxu0 %v7817
      %v7819 = vpop.f32.mrf.mxu0
      %v7820 = vadd.f32 0.0, %v7819
      %v7821 = vand.u32 %v4121, 4294901760
      %v7822 = vsub.f32 %v4121, %v7821
      %v7823 = vand.u32 %v7822, 4294901760
      %v7824 = vsub.f32 %v7822, %v7823
      %v7825 = vand.u32 %v7824, 4294901760
      %7826 = vmatmul.f32.gmra.mxu0 %v7825
      %v7827 = vpop.f32.mrf.mxu0
      %v7828 = vadd.f32 0.0, %v7827
      %v7829 = vand.u32 %v4124, 4294901760
      %v7830 = vsub.f32 %v4124, %v7829
      %v7831 = vand.u32 %v7830, 4294901760
      %v7832 = vsub.f32 %v7830, %v7831
      %v7833 = vand.u32 %v7832, 4294901760
      %7834 = vmatmul.f32.gmra.mxu0 %v7833
      %v7835 = vpop.f32.mrf.mxu0
      %v7836 = vadd.f32 0.0, %v7835
      %v7837 = vand.u32 %v7572, 4294901760
      %v7838 = vsub.f32 %v7572, %v7837
      %v7839 = vand.u32 %v7838, 4294901760
      %v7840 = vsub.f32 %v7838, %v7839
      %v7841 = vand.u32 %v7840, 4294901760
      %7842 = vmatmul.f32.gmra.mxu0 %v7841
      %v7843 = vpop.f32.mrf.mxu0
      %v7844 = vadd.f32 0.0, %v7843
      %v7845 = vand.u32 %v7575, 4294901760
      %v7846 = vsub.f32 %v7575, %v7845
      %v7847 = vand.u32 %v7846, 4294901760
      %v7848 = vsub.f32 %v7846, %v7847
      %v7849 = vand.u32 %v7848, 4294901760
      %7850 = vmatmul.f32.gmra.mxu0 %v7849
      %v7851 = vpop.f32.mrf.mxu0
      %v7852 = vadd.f32 0.0, %v7851
      %7853 = vdwg.mxu0
      %7854 = vmatpush.msra.mxu0 0.0
      %7855 = vmatpush.msra.mxu0 0.0
      %7856 = vmatpush.msra.mxu0 0.0
      %7857 = vmatpush.msra.mxu0 0.0
      %7858 = vmatpush.msra.mxu0 0.0
      %7859 = vmatpush.msra.mxu0 0.0
      %7860 = vmatpush.msra.mxu0 0.0
      %7861 = vmatpush.msra.mxu0 0.0
      %7862 = vmatpush.msra.mxu0 0.0
      %7863 = vmatpush.msra.mxu0 0.0
      %7864 = vmatpush.msra.mxu0 0.0
      %7865 = vmatpush.msra.mxu0 0.0
      %7866 = vmatpush.msra.mxu0 0.0
      %7867 = vmatpush.msra.mxu0 0.0
      %7868 = vmatpush.msra.mxu0 0.0
      %v7869 = vand.u32 %v7578, 4294901760
      %v7870 = vsub.f32 %v7578, %v7869
      %v7871 = vand.u32 %v7870, 4294901760
      %v7872 = vsub.f32 %v7870, %v7871
      %v7873 = vand.u32 %v7872, 4294901760
      %7874 = vmatpush.msra.mxu0 %v7873
      %v7875 = vand.u32 %v1667, 4294901760
      %7876 = vmatmul.f32.gmra.mxu0 %v7875
      %v7877 = vpop.f32.mrf.mxu0
      %v7878 = vadd.f32 %v7604, %v7877
      %v7879 = vand.u32 %v1669, 4294901760
      %7880 = vmatmul.f32.gmra.mxu0 %v7879
      %v7881 = vpop.f32.mrf.mxu0
      %v7882 = vadd.f32 %v7612, %v7881
      %v7883 = vand.u32 %v1671, 4294901760
      %7884 = vmatmul.f32.gmra.mxu0 %v7883
      %v7885 = vpop.f32.mrf.mxu0
      %v7886 = vadd.f32 %v7620, %v7885
      %v7887 = vand.u32 %v1673, 4294901760
      %7888 = vmatmul.f32.gmra.mxu0 %v7887
      %v7889 = vpop.f32.mrf.mxu0
      %v7890 = vadd.f32 %v7628, %v7889
      %v7891 = vand.u32 %v1675, 4294901760
      %7892 = vmatmul.f32.gmra.mxu0 %v7891
      %v7893 = vpop.f32.mrf.mxu0
      %v7894 = vadd.f32 %v7636, %v7893
      %v7895 = vand.u32 %v1677, 4294901760
      %7896 = vmatmul.f32.gmra.mxu0 %v7895
      %v7897 = vpop.f32.mrf.mxu0
      %v7898 = vadd.f32 %v7644, %v7897
      %v7899 = vand.u32 %v1679, 4294901760
      %7900 = vmatmul.f32.gmra.mxu0 %v7899
      %v7901 = vpop.f32.mrf.mxu0
      %v7902 = vadd.f32 %v7652, %v7901
      %v7903 = vand.u32 %v1681, 4294901760
      %7904 = vmatmul.f32.gmra.mxu0 %v7903
      %v7905 = vpop.f32.mrf.mxu0
      %v7906 = vadd.f32 %v7660, %v7905
      %v7907 = vand.u32 %v1683, 4294901760
      %7908 = vmatmul.f32.gmra.mxu0 %v7907
      %v7909 = vpop.f32.mrf.mxu0
      %v7910 = vadd.f32 %v7668, %v7909
      %v7911 = vand.u32 %v1685, 4294901760
      %7912 = vmatmul.f32.gmra.mxu0 %v7911
      %v7913 = vpop.f32.mrf.mxu0
      %v7914 = vadd.f32 %v7676, %v7913
      %v7915 = vand.u32 %v1687, 4294901760
      %7916 = vmatmul.f32.gmra.mxu0 %v7915
      %v7917 = vpop.f32.mrf.mxu0
      %v7918 = vadd.f32 %v7684, %v7917
      %v7919 = vand.u32 %v1689, 4294901760
      %7920 = vmatmul.f32.gmra.mxu0 %v7919
      %v7921 = vpop.f32.mrf.mxu0
      %v7922 = vadd.f32 %v7692, %v7921
      %v7923 = vand.u32 %v1691, 4294901760
      %7924 = vmatmul.f32.gmra.mxu0 %v7923
      %v7925 = vpop.f32.mrf.mxu0
      %v7926 = vadd.f32 %v7700, %v7925
      %v7927 = vand.u32 %v1693, 4294901760
      %7928 = vmatmul.f32.gmra.mxu0 %v7927
      %v7929 = vpop.f32.mrf.mxu0
      %v7930 = vadd.f32 %v7708, %v7929
      %v7931 = vand.u32 %v1695, 4294901760
      %7932 = vmatmul.f32.gmra.mxu0 %v7931
      %v7933 = vpop.f32.mrf.mxu0
      %v7934 = vadd.f32 %v7716, %v7933
      %v7935 = vand.u32 %v1697, 4294901760
      %7936 = vmatmul.f32.gmra.mxu0 %v7935
      %v7937 = vpop.f32.mrf.mxu0
      %v7938 = vadd.f32 %v7724, %v7937
      %v7939 = vand.u32 %v1699, 4294901760
      %7940 = vmatmul.f32.gmra.mxu0 %v7939
      %v7941 = vpop.f32.mrf.mxu0
      %v7942 = vadd.f32 %v7732, %v7941
      %v7943 = vand.u32 %v1701, 4294901760
      %7944 = vmatmul.f32.gmra.mxu0 %v7943
      %v7945 = vpop.f32.mrf.mxu0
      %v7946 = vadd.f32 %v7740, %v7945
      %v7947 = vand.u32 %v1703, 4294901760
      %7948 = vmatmul.f32.gmra.mxu0 %v7947
      %v7949 = vpop.f32.mrf.mxu0
      %v7950 = vadd.f32 %v7748, %v7949
      %v7951 = vand.u32 %v1705, 4294901760
      %7952 = vmatmul.f32.gmra.mxu0 %v7951
      %v7953 = vpop.f32.mrf.mxu0
      %v7954 = vadd.f32 %v7756, %v7953
      %v7955 = vand.u32 %v1707, 4294901760
      %7956 = vmatmul.f32.gmra.mxu0 %v7955
      %v7957 = vpop.f32.mrf.mxu0
      %v7958 = vadd.f32 %v7764, %v7957
      %v7959 = vand.u32 %v1709, 4294901760
      %7960 = vmatmul.f32.gmra.mxu0 %v7959
      %v7961 = vpop.f32.mrf.mxu0
      %v7962 = vadd.f32 %v7772, %v7961
      %v7963 = vand.u32 %v1711, 4294901760
      %7964 = vmatmul.f32.gmra.mxu0 %v7963
      %v7965 = vpop.f32.mrf.mxu0
      %v7966 = vadd.f32 %v7780, %v7965
      %v7967 = vand.u32 %v1713, 4294901760
      %7968 = vmatmul.f32.gmra.mxu0 %v7967
      %v7969 = vpop.f32.mrf.mxu0
      %v7970 = vadd.f32 %v7788, %v7969
      %v7971 = vand.u32 %v1715, 4294901760
      %7972 = vmatmul.f32.gmra.mxu0 %v7971
      %v7973 = vpop.f32.mrf.mxu0
      %v7974 = vadd.f32 %v7796, %v7973
      %v7975 = vand.u32 %v1717, 4294901760
      %7976 = vmatmul.f32.gmra.mxu0 %v7975
      %v7977 = vpop.f32.mrf.mxu0
      %v7978 = vadd.f32 %v7804, %v7977
      %v7979 = vand.u32 %v1719, 4294901760
      %7980 = vmatmul.f32.gmra.mxu0 %v7979
      %v7981 = vpop.f32.mrf.mxu0
      %v7982 = vadd.f32 %v7812, %v7981
      %v7983 = vand.u32 %v1721, 4294901760
      %7984 = vmatmul.f32.gmra.mxu0 %v7983
      %v7985 = vpop.f32.mrf.mxu0
      %v7986 = vadd.f32 %v7820, %v7985
      %v7987 = vand.u32 %v4121, 4294901760
      %7988 = vmatmul.f32.gmra.mxu0 %v7987
      %v7989 = vpop.f32.mrf.mxu0
      %v7990 = vadd.f32 %v7828, %v7989
      %v7991 = vand.u32 %v4124, 4294901760
      %7992 = vmatmul.f32.gmra.mxu0 %v7991
      %v7993 = vpop.f32.mrf.mxu0
      %v7994 = vadd.f32 %v7836, %v7993
      %v7995 = vand.u32 %v7572, 4294901760
      %7996 = vmatmul.f32.gmra.mxu0 %v7995
      %v7997 = vpop.f32.mrf.mxu0
      %v7998 = vadd.f32 %v7844, %v7997
      %v7999 = vand.u32 %v7575, 4294901760
      %8000 = vmatmul.f32.gmra.mxu0 %v7999
      %v8001 = vpop.f32.mrf.mxu0
      %v8002 = vadd.f32 %v7852, %v8001
      %8003 = vdwg.mxu0
      %8004 = vmatpush.msra.mxu0 0.0
      %8005 = vmatpush.msra.mxu0 0.0
      %8006 = vmatpush.msra.mxu0 0.0
      %8007 = vmatpush.msra.mxu0 0.0
      %8008 = vmatpush.msra.mxu0 0.0
      %8009 = vmatpush.msra.mxu0 0.0
      %8010 = vmatpush.msra.mxu0 0.0
      %8011 = vmatpush.msra.mxu0 0.0
      %8012 = vmatpush.msra.mxu0 0.0
      %8013 = vmatpush.msra.mxu0 0.0
      %8014 = vmatpush.msra.mxu0 0.0
      %8015 = vmatpush.msra.mxu0 0.0
      %8016 = vmatpush.msra.mxu0 0.0
      %8017 = vmatpush.msra.mxu0 0.0
      %8018 = vmatpush.msra.mxu0 0.0
      %v8019 = vand.u32 %v7578, 4294901760
      %v8020 = vsub.f32 %v7578, %v8019
      %8021 = vmatpush.msra.mxu0 %v8020
      %v8022 = vand.u32 %v1667, 4294901760
      %v8023 = vsub.f32 %v1667, %v8022
      %8024 = vmatmul.f32.gmra.mxu0 %v8023
      %v8025 = vpop.f32.mrf.mxu0
      %v8026 = vadd.f32 %v7878, %v8025
      %v8027 = vand.u32 %v1669, 4294901760
      %v8028 = vsub.f32 %v1669, %v8027
      %8029 = vmatmul.f32.gmra.mxu0 %v8028
      %v8030 = vpop.f32.mrf.mxu0
      %v8031 = vadd.f32 %v7882, %v8030
      %v8032 = vand.u32 %v1671, 4294901760
      %v8033 = vsub.f32 %v1671, %v8032
      %8034 = vmatmul.f32.gmra.mxu0 %v8033
      %v8035 = vpop.f32.mrf.mxu0
      %v8036 = vadd.f32 %v7886, %v8035
      %v8037 = vand.u32 %v1673, 4294901760
      %v8038 = vsub.f32 %v1673, %v8037
      %8039 = vmatmul.f32.gmra.mxu0 %v8038
      %v8040 = vpop.f32.mrf.mxu0
      %v8041 = vadd.f32 %v7890, %v8040
      %v8042 = vand.u32 %v1675, 4294901760
      %v8043 = vsub.f32 %v1675, %v8042
      %8044 = vmatmul.f32.gmra.mxu0 %v8043
      %v8045 = vpop.f32.mrf.mxu0
      %v8046 = vadd.f32 %v7894, %v8045
      %v8047 = vand.u32 %v1677, 4294901760
      %v8048 = vsub.f32 %v1677, %v8047
      %8049 = vmatmul.f32.gmra.mxu0 %v8048
      %v8050 = vpop.f32.mrf.mxu0
      %v8051 = vadd.f32 %v7898, %v8050
      %v8052 = vand.u32 %v1679, 4294901760
      %v8053 = vsub.f32 %v1679, %v8052
      %8054 = vmatmul.f32.gmra.mxu0 %v8053
      %v8055 = vpop.f32.mrf.mxu0
      %v8056 = vadd.f32 %v7902, %v8055
      %v8057 = vand.u32 %v1681, 4294901760
      %v8058 = vsub.f32 %v1681, %v8057
      %8059 = vmatmul.f32.gmra.mxu0 %v8058
      %v8060 = vpop.f32.mrf.mxu0
      %v8061 = vadd.f32 %v7906, %v8060
      %v8062 = vand.u32 %v1683, 4294901760
      %v8063 = vsub.f32 %v1683, %v8062
      %8064 = vmatmul.f32.gmra.mxu0 %v8063
      %v8065 = vpop.f32.mrf.mxu0
      %v8066 = vadd.f32 %v7910, %v8065
      %v8067 = vand.u32 %v1685, 4294901760
      %v8068 = vsub.f32 %v1685, %v8067
      %8069 = vmatmul.f32.gmra.mxu0 %v8068
      %v8070 = vpop.f32.mrf.mxu0
      %v8071 = vadd.f32 %v7914, %v8070
      %v8072 = vand.u32 %v1687, 4294901760
      %v8073 = vsub.f32 %v1687, %v8072
      %8074 = vmatmul.f32.gmra.mxu0 %v8073
      %v8075 = vpop.f32.mrf.mxu0
      %v8076 = vadd.f32 %v7918, %v8075
      %v8077 = vand.u32 %v1689, 4294901760
      %v8078 = vsub.f32 %v1689, %v8077
      %8079 = vmatmul.f32.gmra.mxu0 %v8078
      %v8080 = vpop.f32.mrf.mxu0
      %v8081 = vadd.f32 %v7922, %v8080
      %v8082 = vand.u32 %v1691, 4294901760
      %v8083 = vsub.f32 %v1691, %v8082
      %8084 = vmatmul.f32.gmra.mxu0 %v8083
      %v8085 = vpop.f32.mrf.mxu0
      %v8086 = vadd.f32 %v7926, %v8085
      %v8087 = vand.u32 %v1693, 4294901760
      %v8088 = vsub.f32 %v1693, %v8087
      %8089 = vmatmul.f32.gmra.mxu0 %v8088
      %v8090 = vpop.f32.mrf.mxu0
      %v8091 = vadd.f32 %v7930, %v8090
      %v8092 = vand.u32 %v1695, 4294901760
      %v8093 = vsub.f32 %v1695, %v8092
      %8094 = vmatmul.f32.gmra.mxu0 %v8093
      %v8095 = vpop.f32.mrf.mxu0
      %v8096 = vadd.f32 %v7934, %v8095
      %v8097 = vand.u32 %v1697, 4294901760
      %v8098 = vsub.f32 %v1697, %v8097
      %8099 = vmatmul.f32.gmra.mxu0 %v8098
      %v8100 = vpop.f32.mrf.mxu0
      %v8101 = vadd.f32 %v7938, %v8100
      %v8102 = vand.u32 %v1699, 4294901760
      %v8103 = vsub.f32 %v1699, %v8102
      %8104 = vmatmul.f32.gmra.mxu0 %v8103
      %v8105 = vpop.f32.mrf.mxu0
      %v8106 = vadd.f32 %v7942, %v8105
      %v8107 = vand.u32 %v1701, 4294901760
      %v8108 = vsub.f32 %v1701, %v8107
      %8109 = vmatmul.f32.gmra.mxu0 %v8108
      %v8110 = vpop.f32.mrf.mxu0
      %v8111 = vadd.f32 %v7946, %v8110
      %v8112 = vand.u32 %v1703, 4294901760
      %v8113 = vsub.f32 %v1703, %v8112
      %8114 = vmatmul.f32.gmra.mxu0 %v8113
      %v8115 = vpop.f32.mrf.mxu0
      %v8116 = vadd.f32 %v7950, %v8115
      %v8117 = vand.u32 %v1705, 4294901760
      %v8118 = vsub.f32 %v1705, %v8117
      %8119 = vmatmul.f32.gmra.mxu0 %v8118
      %v8120 = vpop.f32.mrf.mxu0
      %v8121 = vadd.f32 %v7954, %v8120
      %v8122 = vand.u32 %v1707, 4294901760
      %v8123 = vsub.f32 %v1707, %v8122
      %8124 = vmatmul.f32.gmra.mxu0 %v8123
      %v8125 = vpop.f32.mrf.mxu0
      %v8126 = vadd.f32 %v7958, %v8125
      %v8127 = vand.u32 %v1709, 4294901760
      %v8128 = vsub.f32 %v1709, %v8127
      %8129 = vmatmul.f32.gmra.mxu0 %v8128
      %v8130 = vpop.f32.mrf.mxu0
      %v8131 = vadd.f32 %v7962, %v8130
      %v8132 = vand.u32 %v1711, 4294901760
      %v8133 = vsub.f32 %v1711, %v8132
      %8134 = vmatmul.f32.gmra.mxu0 %v8133
      %v8135 = vpop.f32.mrf.mxu0
      %v8136 = vadd.f32 %v7966, %v8135
      %v8137 = vand.u32 %v1713, 4294901760
      %v8138 = vsub.f32 %v1713, %v8137
      %8139 = vmatmul.f32.gmra.mxu0 %v8138
      %v8140 = vpop.f32.mrf.mxu0
      %v8141 = vadd.f32 %v7970, %v8140
      %v8142 = vand.u32 %v1715, 4294901760
      %v8143 = vsub.f32 %v1715, %v8142
      %8144 = vmatmul.f32.gmra.mxu0 %v8143
      %v8145 = vpop.f32.mrf.mxu0
      %v8146 = vadd.f32 %v7974, %v8145
      %v8147 = vand.u32 %v1717, 4294901760
      %v8148 = vsub.f32 %v1717, %v8147
      %8149 = vmatmul.f32.gmra.mxu0 %v8148
      %v8150 = vpop.f32.mrf.mxu0
      %v8151 = vadd.f32 %v7978, %v8150
      %v8152 = vand.u32 %v1719, 4294901760
      %v8153 = vsub.f32 %v1719, %v8152
      %8154 = vmatmul.f32.gmra.mxu0 %v8153
      %v8155 = vpop.f32.mrf.mxu0
      %v8156 = vadd.f32 %v7982, %v8155
      %v8157 = vand.u32 %v1721, 4294901760
      %v8158 = vsub.f32 %v1721, %v8157
      %8159 = vmatmul.f32.gmra.mxu0 %v8158
      %v8160 = vpop.f32.mrf.mxu0
      %v8161 = vadd.f32 %v7986, %v8160
      %v8162 = vand.u32 %v4121, 4294901760
      %v8163 = vsub.f32 %v4121, %v8162
      %8164 = vmatmul.f32.gmra.mxu0 %v8163
      %v8165 = vpop.f32.mrf.mxu0
      %v8166 = vadd.f32 %v7990, %v8165
      %v8167 = vand.u32 %v4124, 4294901760
      %v8168 = vsub.f32 %v4124, %v8167
      %8169 = vmatmul.f32.gmra.mxu0 %v8168
      %v8170 = vpop.f32.mrf.mxu0
      %v8171 = vadd.f32 %v7994, %v8170
      %v8172 = vand.u32 %v7572, 4294901760
      %v8173 = vsub.f32 %v7572, %v8172
      %8174 = vmatmul.f32.gmra.mxu0 %v8173
      %v8175 = vpop.f32.mrf.mxu0
      %v8176 = vadd.f32 %v7998, %v8175
      %v8177 = vand.u32 %v7575, 4294901760
      %v8178 = vsub.f32 %v7575, %v8177
      %8179 = vmatmul.f32.gmra.mxu0 %v8178
      %v8180 = vpop.f32.mrf.mxu0
      %v8181 = vadd.f32 %v8002, %v8180
      %8182 = vdwg.mxu0
      %8183 = vmatpush.msra.mxu0 0.0
      %8184 = vmatpush.msra.mxu0 0.0
      %8185 = vmatpush.msra.mxu0 0.0
      %8186 = vmatpush.msra.mxu0 0.0
      %8187 = vmatpush.msra.mxu0 0.0
      %8188 = vmatpush.msra.mxu0 0.0
      %8189 = vmatpush.msra.mxu0 0.0
      %8190 = vmatpush.msra.mxu0 0.0
      %8191 = vmatpush.msra.mxu0 0.0
      %8192 = vmatpush.msra.mxu0 0.0
      %8193 = vmatpush.msra.mxu0 0.0
      %8194 = vmatpush.msra.mxu0 0.0
      %8195 = vmatpush.msra.mxu0 0.0
      %8196 = vmatpush.msra.mxu0 0.0
      %8197 = vmatpush.msra.mxu0 0.0
      %v8198 = vand.u32 %v7578, 4294901760
      %8199 = vmatpush.msra.mxu0 %v8198
      %v8200 = vand.u32 %v1667, 4294901760
      %v8201 = vsub.f32 %v1667, %v8200
      %v8202 = vand.u32 %v8201, 4294901760
      %8203 = vmatmul.f32.gmra.mxu0 %v8202
      %v8204 = vpop.f32.mrf.mxu0
      %v8205 = vadd.f32 %v8026, %v8204
      %v8206 = vand.u32 %v1669, 4294901760
      %v8207 = vsub.f32 %v1669, %v8206
      %v8208 = vand.u32 %v8207, 4294901760
      %8209 = vmatmul.f32.gmra.mxu0 %v8208
      %v8210 = vpop.f32.mrf.mxu0
      %v8211 = vadd.f32 %v8031, %v8210
      %v8212 = vand.u32 %v1671, 4294901760
      %v8213 = vsub.f32 %v1671, %v8212
      %v8214 = vand.u32 %v8213, 4294901760
      %8215 = vmatmul.f32.gmra.mxu0 %v8214
      %v8216 = vpop.f32.mrf.mxu0
      %v8217 = vadd.f32 %v8036, %v8216
      %v8218 = vand.u32 %v1673, 4294901760
      %v8219 = vsub.f32 %v1673, %v8218
      %v8220 = vand.u32 %v8219, 4294901760
      %8221 = vmatmul.f32.gmra.mxu0 %v8220
      %v8222 = vpop.f32.mrf.mxu0
      %v8223 = vadd.f32 %v8041, %v8222
      %v8224 = vand.u32 %v1675, 4294901760
      %v8225 = vsub.f32 %v1675, %v8224
      %v8226 = vand.u32 %v8225, 4294901760
      %8227 = vmatmul.f32.gmra.mxu0 %v8226
      %v8228 = vpop.f32.mrf.mxu0
      %v8229 = vadd.f32 %v8046, %v8228
      %v8230 = vand.u32 %v1677, 4294901760
      %v8231 = vsub.f32 %v1677, %v8230
      %v8232 = vand.u32 %v8231, 4294901760
      %8233 = vmatmul.f32.gmra.mxu0 %v8232
      %v8234 = vpop.f32.mrf.mxu0
      %v8235 = vadd.f32 %v8051, %v8234
      %v8236 = vand.u32 %v1679, 4294901760
      %v8237 = vsub.f32 %v1679, %v8236
      %v8238 = vand.u32 %v8237, 4294901760
      %8239 = vmatmul.f32.gmra.mxu0 %v8238
      %v8240 = vpop.f32.mrf.mxu0
      %v8241 = vadd.f32 %v8056, %v8240
      %v8242 = vand.u32 %v1681, 4294901760
      %v8243 = vsub.f32 %v1681, %v8242
      %v8244 = vand.u32 %v8243, 4294901760
      %8245 = vmatmul.f32.gmra.mxu0 %v8244
      %v8246 = vpop.f32.mrf.mxu0
      %v8247 = vadd.f32 %v8061, %v8246
      %v8248 = vand.u32 %v1683, 4294901760
      %v8249 = vsub.f32 %v1683, %v8248
      %v8250 = vand.u32 %v8249, 4294901760
      %8251 = vmatmul.f32.gmra.mxu0 %v8250
      %v8252 = vpop.f32.mrf.mxu0
      %v8253 = vadd.f32 %v8066, %v8252
      %v8254 = vand.u32 %v1685, 4294901760
      %v8255 = vsub.f32 %v1685, %v8254
      %v8256 = vand.u32 %v8255, 4294901760
      %8257 = vmatmul.f32.gmra.mxu0 %v8256
      %v8258 = vpop.f32.mrf.mxu0
      %v8259 = vadd.f32 %v8071, %v8258
      %v8260 = vand.u32 %v1687, 4294901760
      %v8261 = vsub.f32 %v1687, %v8260
      %v8262 = vand.u32 %v8261, 4294901760
      %8263 = vmatmul.f32.gmra.mxu0 %v8262
      %v8264 = vpop.f32.mrf.mxu0
      %v8265 = vadd.f32 %v8076, %v8264
      %v8266 = vand.u32 %v1689, 4294901760
      %v8267 = vsub.f32 %v1689, %v8266
      %v8268 = vand.u32 %v8267, 4294901760
      %8269 = vmatmul.f32.gmra.mxu0 %v8268
      %v8270 = vpop.f32.mrf.mxu0
      %v8271 = vadd.f32 %v8081, %v8270
      %v8272 = vand.u32 %v1691, 4294901760
      %v8273 = vsub.f32 %v1691, %v8272
      %v8274 = vand.u32 %v8273, 4294901760
      %8275 = vmatmul.f32.gmra.mxu0 %v8274
      %v8276 = vpop.f32.mrf.mxu0
      %v8277 = vadd.f32 %v8086, %v8276
      %v8278 = vand.u32 %v1693, 4294901760
      %v8279 = vsub.f32 %v1693, %v8278
      %v8280 = vand.u32 %v8279, 4294901760
      %8281 = vmatmul.f32.gmra.mxu0 %v8280
      %v8282 = vpop.f32.mrf.mxu0
      %v8283 = vadd.f32 %v8091, %v8282
      %v8284 = vand.u32 %v1695, 4294901760
      %v8285 = vsub.f32 %v1695, %v8284
      %v8286 = vand.u32 %v8285, 4294901760
      %8287 = vmatmul.f32.gmra.mxu0 %v8286
      %v8288 = vpop.f32.mrf.mxu0
      %v8289 = vadd.f32 %v8096, %v8288
      %v8290 = vand.u32 %v1697, 4294901760
      %v8291 = vsub.f32 %v1697, %v8290
      %v8292 = vand.u32 %v8291, 4294901760
      %8293 = vmatmul.f32.gmra.mxu0 %v8292
      %v8294 = vpop.f32.mrf.mxu0
      %v8295 = vadd.f32 %v8101, %v8294
      %v8296 = vand.u32 %v1699, 4294901760
      %v8297 = vsub.f32 %v1699, %v8296
      %v8298 = vand.u32 %v8297, 4294901760
      %8299 = vmatmul.f32.gmra.mxu0 %v8298
      %v8300 = vpop.f32.mrf.mxu0
      %v8301 = vadd.f32 %v8106, %v8300
      %v8302 = vand.u32 %v1701, 4294901760
      %v8303 = vsub.f32 %v1701, %v8302
      %v8304 = vand.u32 %v8303, 4294901760
      %8305 = vmatmul.f32.gmra.mxu0 %v8304
      %v8306 = vpop.f32.mrf.mxu0
      %v8307 = vadd.f32 %v8111, %v8306
      %v8308 = vand.u32 %v1703, 4294901760
      %v8309 = vsub.f32 %v1703, %v8308
      %v8310 = vand.u32 %v8309, 4294901760
      %8311 = vmatmul.f32.gmra.mxu0 %v8310
      %v8312 = vpop.f32.mrf.mxu0
      %v8313 = vadd.f32 %v8116, %v8312
      %v8314 = vand.u32 %v1705, 4294901760
      %v8315 = vsub.f32 %v1705, %v8314
      %v8316 = vand.u32 %v8315, 4294901760
      %8317 = vmatmul.f32.gmra.mxu0 %v8316
      %v8318 = vpop.f32.mrf.mxu0
      %v8319 = vadd.f32 %v8121, %v8318
      %v8320 = vand.u32 %v1707, 4294901760
      %v8321 = vsub.f32 %v1707, %v8320
      %v8322 = vand.u32 %v8321, 4294901760
      %8323 = vmatmul.f32.gmra.mxu0 %v8322
      %v8324 = vpop.f32.mrf.mxu0
      %v8325 = vadd.f32 %v8126, %v8324
      %v8326 = vand.u32 %v1709, 4294901760
      %v8327 = vsub.f32 %v1709, %v8326
      %v8328 = vand.u32 %v8327, 4294901760
      %8329 = vmatmul.f32.gmra.mxu0 %v8328
      %v8330 = vpop.f32.mrf.mxu0
      %v8331 = vadd.f32 %v8131, %v8330
      %v8332 = vand.u32 %v1711, 4294901760
      %v8333 = vsub.f32 %v1711, %v8332
      %v8334 = vand.u32 %v8333, 4294901760
      %8335 = vmatmul.f32.gmra.mxu0 %v8334
      %v8336 = vpop.f32.mrf.mxu0
      %v8337 = vadd.f32 %v8136, %v8336
      %v8338 = vand.u32 %v1713, 4294901760
      %v8339 = vsub.f32 %v1713, %v8338
      %v8340 = vand.u32 %v8339, 4294901760
      %8341 = vmatmul.f32.gmra.mxu0 %v8340
      %v8342 = vpop.f32.mrf.mxu0
      %v8343 = vadd.f32 %v8141, %v8342
      %v8344 = vand.u32 %v1715, 4294901760
      %v8345 = vsub.f32 %v1715, %v8344
      %v8346 = vand.u32 %v8345, 4294901760
      %8347 = vmatmul.f32.gmra.mxu0 %v8346
      %v8348 = vpop.f32.mrf.mxu0
      %v8349 = vadd.f32 %v8146, %v8348
      %v8350 = vand.u32 %v1717, 4294901760
      %v8351 = vsub.f32 %v1717, %v8350
      %v8352 = vand.u32 %v8351, 4294901760
      %8353 = vmatmul.f32.gmra.mxu0 %v8352
      %v8354 = vpop.f32.mrf.mxu0
      %v8355 = vadd.f32 %v8151, %v8354
      %v8356 = vand.u32 %v1719, 4294901760
      %v8357 = vsub.f32 %v1719, %v8356
      %v8358 = vand.u32 %v8357, 4294901760
      %8359 = vmatmul.f32.gmra.mxu0 %v8358
      %v8360 = vpop.f32.mrf.mxu0
      %v8361 = vadd.f32 %v8156, %v8360
      %v8362 = vand.u32 %v1721, 4294901760
      %v8363 = vsub.f32 %v1721, %v8362
      %v8364 = vand.u32 %v8363, 4294901760
      %8365 = vmatmul.f32.gmra.mxu0 %v8364
      %v8366 = vpop.f32.mrf.mxu0
      %v8367 = vadd.f32 %v8161, %v8366
      %v8368 = vand.u32 %v4121, 4294901760
      %v8369 = vsub.f32 %v4121, %v8368
      %v8370 = vand.u32 %v8369, 4294901760
      %8371 = vmatmul.f32.gmra.mxu0 %v8370
      %v8372 = vpop.f32.mrf.mxu0
      %v8373 = vadd.f32 %v8166, %v8372
      %v8374 = vand.u32 %v4124, 4294901760
      %v8375 = vsub.f32 %v4124, %v8374
      %v8376 = vand.u32 %v8375, 4294901760
      %8377 = vmatmul.f32.gmra.mxu0 %v8376
      %v8378 = vpop.f32.mrf.mxu0
      %v8379 = vadd.f32 %v8171, %v8378
      %v8380 = vand.u32 %v7572, 4294901760
      %v8381 = vsub.f32 %v7572, %v8380
      %v8382 = vand.u32 %v8381, 4294901760
      %8383 = vmatmul.f32.gmra.mxu0 %v8382
      %v8384 = vpop.f32.mrf.mxu0
      %v8385 = vadd.f32 %v8176, %v8384
      %v8386 = vand.u32 %v7575, 4294901760
      %v8387 = vsub.f32 %v7575, %v8386
      %v8388 = vand.u32 %v8387, 4294901760
      %8389 = vmatmul.f32.gmra.mxu0 %v8388
      %v8390 = vpop.f32.mrf.mxu0
      %v8391 = vadd.f32 %v8181, %v8390
      %8392 = vdwg.mxu0
      %8393 = vmatpush.msra.mxu0 0.0
      %8394 = vmatpush.msra.mxu0 0.0
      %8395 = vmatpush.msra.mxu0 0.0
      %8396 = vmatpush.msra.mxu0 0.0
      %8397 = vmatpush.msra.mxu0 0.0
      %8398 = vmatpush.msra.mxu0 0.0
      %8399 = vmatpush.msra.mxu0 0.0
      %8400 = vmatpush.msra.mxu0 0.0
      %8401 = vmatpush.msra.mxu0 0.0
      %8402 = vmatpush.msra.mxu0 0.0
      %8403 = vmatpush.msra.mxu0 0.0
      %8404 = vmatpush.msra.mxu0 0.0
      %8405 = vmatpush.msra.mxu0 0.0
      %8406 = vmatpush.msra.mxu0 0.0
      %8407 = vmatpush.msra.mxu0 0.0
      %v8408 = vand.u32 %v7578, 4294901760
      %v8409 = vsub.f32 %v7578, %v8408
      %v8410 = vand.u32 %v8409, 4294901760
      %8411 = vmatpush.msra.mxu0 %v8410
      %v8412 = vand.u32 %v1667, 4294901760
      %8413 = vmatmul.f32.gmra.mxu0 %v8412
      %v8414 = vpop.f32.mrf.mxu0
      %v8415 = vadd.f32 %v8205, %v8414
      %v8416 = vand.u32 %v1669, 4294901760
      %8417 = vmatmul.f32.gmra.mxu0 %v8416
      %v8418 = vpop.f32.mrf.mxu0
      %v8419 = vadd.f32 %v8211, %v8418
      %v8420 = vand.u32 %v1671, 4294901760
      %8421 = vmatmul.f32.gmra.mxu0 %v8420
      %v8422 = vpop.f32.mrf.mxu0
      %v8423 = vadd.f32 %v8217, %v8422
      %v8424 = vand.u32 %v1673, 4294901760
      %8425 = vmatmul.f32.gmra.mxu0 %v8424
      %v8426 = vpop.f32.mrf.mxu0
      %v8427 = vadd.f32 %v8223, %v8426
      %v8428 = vand.u32 %v1675, 4294901760
      %8429 = vmatmul.f32.gmra.mxu0 %v8428
      %v8430 = vpop.f32.mrf.mxu0
      %v8431 = vadd.f32 %v8229, %v8430
      %v8432 = vand.u32 %v1677, 4294901760
      %8433 = vmatmul.f32.gmra.mxu0 %v8432
      %v8434 = vpop.f32.mrf.mxu0
      %v8435 = vadd.f32 %v8235, %v8434
      %v8436 = vand.u32 %v1679, 4294901760
      %8437 = vmatmul.f32.gmra.mxu0 %v8436
      %v8438 = vpop.f32.mrf.mxu0
      %v8439 = vadd.f32 %v8241, %v8438
      %v8440 = vand.u32 %v1681, 4294901760
      %8441 = vmatmul.f32.gmra.mxu0 %v8440
      %v8442 = vpop.f32.mrf.mxu0
      %v8443 = vadd.f32 %v8247, %v8442
      %v8444 = vand.u32 %v1683, 4294901760
      %8445 = vmatmul.f32.gmra.mxu0 %v8444
      %v8446 = vpop.f32.mrf.mxu0
      %v8447 = vadd.f32 %v8253, %v8446
      %v8448 = vand.u32 %v1685, 4294901760
      %8449 = vmatmul.f32.gmra.mxu0 %v8448
      %v8450 = vpop.f32.mrf.mxu0
      %v8451 = vadd.f32 %v8259, %v8450
      %v8452 = vand.u32 %v1687, 4294901760
      %8453 = vmatmul.f32.gmra.mxu0 %v8452
      %v8454 = vpop.f32.mrf.mxu0
      %v8455 = vadd.f32 %v8265, %v8454
      %v8456 = vand.u32 %v1689, 4294901760
      %8457 = vmatmul.f32.gmra.mxu0 %v8456
      %v8458 = vpop.f32.mrf.mxu0
      %v8459 = vadd.f32 %v8271, %v8458
      %v8460 = vand.u32 %v1691, 4294901760
      %8461 = vmatmul.f32.gmra.mxu0 %v8460
      %v8462 = vpop.f32.mrf.mxu0
      %v8463 = vadd.f32 %v8277, %v8462
      %v8464 = vand.u32 %v1693, 4294901760
      %8465 = vmatmul.f32.gmra.mxu0 %v8464
      %v8466 = vpop.f32.mrf.mxu0
      %v8467 = vadd.f32 %v8283, %v8466
      %v8468 = vand.u32 %v1695, 4294901760
      %8469 = vmatmul.f32.gmra.mxu0 %v8468
      %v8470 = vpop.f32.mrf.mxu0
      %v8471 = vadd.f32 %v8289, %v8470
      %v8472 = vand.u32 %v1697, 4294901760
      %8473 = vmatmul.f32.gmra.mxu0 %v8472
      %v8474 = vpop.f32.mrf.mxu0
      %v8475 = vadd.f32 %v8295, %v8474
      %v8476 = vand.u32 %v1699, 4294901760
      %8477 = vmatmul.f32.gmra.mxu0 %v8476
      %v8478 = vpop.f32.mrf.mxu0
      %v8479 = vadd.f32 %v8301, %v8478
      %v8480 = vand.u32 %v1701, 4294901760
      %8481 = vmatmul.f32.gmra.mxu0 %v8480
      %v8482 = vpop.f32.mrf.mxu0
      %v8483 = vadd.f32 %v8307, %v8482
      %v8484 = vand.u32 %v1703, 4294901760
      %8485 = vmatmul.f32.gmra.mxu0 %v8484
      %v8486 = vpop.f32.mrf.mxu0
      %v8487 = vadd.f32 %v8313, %v8486
      %v8488 = vand.u32 %v1705, 4294901760
      %8489 = vmatmul.f32.gmra.mxu0 %v8488
      %v8490 = vpop.f32.mrf.mxu0
      %v8491 = vadd.f32 %v8319, %v8490
      %v8492 = vand.u32 %v1707, 4294901760
      %8493 = vmatmul.f32.gmra.mxu0 %v8492
      %v8494 = vpop.f32.mrf.mxu0
      %v8495 = vadd.f32 %v8325, %v8494
      %v8496 = vand.u32 %v1709, 4294901760
      %8497 = vmatmul.f32.gmra.mxu0 %v8496
      %v8498 = vpop.f32.mrf.mxu0
      %v8499 = vadd.f32 %v8331, %v8498
      %v8500 = vand.u32 %v1711, 4294901760
      %8501 = vmatmul.f32.gmra.mxu0 %v8500
      %v8502 = vpop.f32.mrf.mxu0
      %v8503 = vadd.f32 %v8337, %v8502
      %v8504 = vand.u32 %v1713, 4294901760
      %8505 = vmatmul.f32.gmra.mxu0 %v8504
      %v8506 = vpop.f32.mrf.mxu0
      %v8507 = vadd.f32 %v8343, %v8506
      %v8508 = vand.u32 %v1715, 4294901760
      %8509 = vmatmul.f32.gmra.mxu0 %v8508
      %v8510 = vpop.f32.mrf.mxu0
      %v8511 = vadd.f32 %v8349, %v8510
      %v8512 = vand.u32 %v1717, 4294901760
      %8513 = vmatmul.f32.gmra.mxu0 %v8512
      %v8514 = vpop.f32.mrf.mxu0
      %v8515 = vadd.f32 %v8355, %v8514
      %v8516 = vand.u32 %v1719, 4294901760
      %8517 = vmatmul.f32.gmra.mxu0 %v8516
      %v8518 = vpop.f32.mrf.mxu0
      %v8519 = vadd.f32 %v8361, %v8518
      %v8520 = vand.u32 %v1721, 4294901760
      %8521 = vmatmul.f32.gmra.mxu0 %v8520
      %v8522 = vpop.f32.mrf.mxu0
      %v8523 = vadd.f32 %v8367, %v8522
      %v8524 = vand.u32 %v4121, 4294901760
      %8525 = vmatmul.f32.gmra.mxu0 %v8524
      %v8526 = vpop.f32.mrf.mxu0
      %v8527 = vadd.f32 %v8373, %v8526
      %v8528 = vand.u32 %v4124, 4294901760
      %8529 = vmatmul.f32.gmra.mxu0 %v8528
      %v8530 = vpop.f32.mrf.mxu0
      %v8531 = vadd.f32 %v8379, %v8530
      %v8532 = vand.u32 %v7572, 4294901760
      %8533 = vmatmul.f32.gmra.mxu0 %v8532
      %v8534 = vpop.f32.mrf.mxu0
      %v8535 = vadd.f32 %v8385, %v8534
      %v8536 = vand.u32 %v7575, 4294901760
      %8537 = vmatmul.f32.gmra.mxu0 %v8536
      %v8538 = vpop.f32.mrf.mxu0
      %v8539 = vadd.f32 %v8391, %v8538
      %8540 = vdwg.mxu0
      %8541 = vmatpush.msra.mxu0 0.0
      %8542 = vmatpush.msra.mxu0 0.0
      %8543 = vmatpush.msra.mxu0 0.0
      %8544 = vmatpush.msra.mxu0 0.0
      %8545 = vmatpush.msra.mxu0 0.0
      %8546 = vmatpush.msra.mxu0 0.0
      %8547 = vmatpush.msra.mxu0 0.0
      %8548 = vmatpush.msra.mxu0 0.0
      %8549 = vmatpush.msra.mxu0 0.0
      %8550 = vmatpush.msra.mxu0 0.0
      %8551 = vmatpush.msra.mxu0 0.0
      %8552 = vmatpush.msra.mxu0 0.0
      %8553 = vmatpush.msra.mxu0 0.0
      %8554 = vmatpush.msra.mxu0 0.0
      %8555 = vmatpush.msra.mxu0 0.0
      %v8556 = vand.u32 %v7578, 4294901760
      %8557 = vmatpush.msra.mxu0 %v8556
      %v8558 = vand.u32 %v1667, 4294901760
      %8559 = vmatmul.f32.gmra.mxu0 %v8558
      %v8560 = vpop.f32.mrf.mxu0
      %v8561 = vadd.f32 %v8415, %v8560
      %v8562 = vand.u32 %v1669, 4294901760
      %8563 = vmatmul.f32.gmra.mxu0 %v8562
      %v8564 = vpop.f32.mrf.mxu0
      %v8565 = vadd.f32 %v8419, %v8564
      %v8566 = vand.u32 %v1671, 4294901760
      %8567 = vmatmul.f32.gmra.mxu0 %v8566
      %v8568 = vpop.f32.mrf.mxu0
      %v8569 = vadd.f32 %v8423, %v8568
      %v8570 = vand.u32 %v1673, 4294901760
      %8571 = vmatmul.f32.gmra.mxu0 %v8570
      %v8572 = vpop.f32.mrf.mxu0
      %v8573 = vadd.f32 %v8427, %v8572
      %v8574 = vand.u32 %v1675, 4294901760
      %8575 = vmatmul.f32.gmra.mxu0 %v8574
      %v8576 = vpop.f32.mrf.mxu0
      %v8577 = vadd.f32 %v8431, %v8576
      %v8578 = vand.u32 %v1677, 4294901760
      %8579 = vmatmul.f32.gmra.mxu0 %v8578
      %v8580 = vpop.f32.mrf.mxu0
      %v8581 = vadd.f32 %v8435, %v8580
      %v8582 = vand.u32 %v1679, 4294901760
      %8583 = vmatmul.f32.gmra.mxu0 %v8582
      %v8584 = vpop.f32.mrf.mxu0
      %v8585 = vadd.f32 %v8439, %v8584
      %v8586 = vand.u32 %v1681, 4294901760
      %8587 = vmatmul.f32.gmra.mxu0 %v8586
      %v8588 = vpop.f32.mrf.mxu0
      %v8589 = vadd.f32 %v8443, %v8588
      %v8590 = vand.u32 %v1683, 4294901760
      %8591 = vmatmul.f32.gmra.mxu0 %v8590
      %v8592 = vpop.f32.mrf.mxu0
      %v8593 = vadd.f32 %v8447, %v8592
      %v8594 = vand.u32 %v1685, 4294901760
      %8595 = vmatmul.f32.gmra.mxu0 %v8594
      %v8596 = vpop.f32.mrf.mxu0
      %v8597 = vadd.f32 %v8451, %v8596
      %v8598 = vand.u32 %v1687, 4294901760
      %8599 = vmatmul.f32.gmra.mxu0 %v8598
      %v8600 = vpop.f32.mrf.mxu0
      %v8601 = vadd.f32 %v8455, %v8600
      %v8602 = vand.u32 %v1689, 4294901760
      %8603 = vmatmul.f32.gmra.mxu0 %v8602
      %v8604 = vpop.f32.mrf.mxu0
      %v8605 = vadd.f32 %v8459, %v8604
      %v8606 = vand.u32 %v1691, 4294901760
      %8607 = vmatmul.f32.gmra.mxu0 %v8606
      %v8608 = vpop.f32.mrf.mxu0
      %v8609 = vadd.f32 %v8463, %v8608
      %v8610 = vand.u32 %v1693, 4294901760
      %8611 = vmatmul.f32.gmra.mxu0 %v8610
      %v8612 = vpop.f32.mrf.mxu0
      %v8613 = vadd.f32 %v8467, %v8612
      %v8614 = vand.u32 %v1695, 4294901760
      %8615 = vmatmul.f32.gmra.mxu0 %v8614
      %v8616 = vpop.f32.mrf.mxu0
      %v8617 = vadd.f32 %v8471, %v8616
      %v8618 = vand.u32 %v1697, 4294901760
      %8619 = vmatmul.f32.gmra.mxu0 %v8618
      %v8620 = vpop.f32.mrf.mxu0
      %v8621 = vadd.f32 %v8475, %v8620
      %v8622 = vand.u32 %v1699, 4294901760
      %8623 = vmatmul.f32.gmra.mxu0 %v8622
      %v8624 = vpop.f32.mrf.mxu0
      %v8625 = vadd.f32 %v8479, %v8624
      %v8626 = vand.u32 %v1701, 4294901760
      %8627 = vmatmul.f32.gmra.mxu0 %v8626
      %v8628 = vpop.f32.mrf.mxu0
      %v8629 = vadd.f32 %v8483, %v8628
      %v8630 = vand.u32 %v1703, 4294901760
      %8631 = vmatmul.f32.gmra.mxu0 %v8630
      %v8632 = vpop.f32.mrf.mxu0
      %v8633 = vadd.f32 %v8487, %v8632
      %v8634 = vand.u32 %v1705, 4294901760
      %8635 = vmatmul.f32.gmra.mxu0 %v8634
      %v8636 = vpop.f32.mrf.mxu0
      %v8637 = vadd.f32 %v8491, %v8636
      %v8638 = vand.u32 %v1707, 4294901760
      %8639 = vmatmul.f32.gmra.mxu0 %v8638
      %v8640 = vpop.f32.mrf.mxu0
      %v8641 = vadd.f32 %v8495, %v8640
      %v8642 = vand.u32 %v1709, 4294901760
      %8643 = vmatmul.f32.gmra.mxu0 %v8642
      %v8644 = vpop.f32.mrf.mxu0
      %v8645 = vadd.f32 %v8499, %v8644
      %v8646 = vand.u32 %v1711, 4294901760
      %8647 = vmatmul.f32.gmra.mxu0 %v8646
      %v8648 = vpop.f32.mrf.mxu0
      %v8649 = vadd.f32 %v8503, %v8648
      %v8650 = vand.u32 %v1713, 4294901760
      %8651 = vmatmul.f32.gmra.mxu0 %v8650
      %v8652 = vpop.f32.mrf.mxu0
      %v8653 = vadd.f32 %v8507, %v8652
      %v8654 = vand.u32 %v1715, 4294901760
      %8655 = vmatmul.f32.gmra.mxu0 %v8654
      %v8656 = vpop.f32.mrf.mxu0
      %v8657 = vadd.f32 %v8511, %v8656
      %v8658 = vand.u32 %v1717, 4294901760
      %8659 = vmatmul.f32.gmra.mxu0 %v8658
      %v8660 = vpop.f32.mrf.mxu0
      %v8661 = vadd.f32 %v8515, %v8660
      %v8662 = vand.u32 %v1719, 4294901760
      %8663 = vmatmul.f32.gmra.mxu0 %v8662
      %v8664 = vpop.f32.mrf.mxu0
      %v8665 = vadd.f32 %v8519, %v8664
      %v8666 = vand.u32 %v1721, 4294901760
      %8667 = vmatmul.f32.gmra.mxu0 %v8666
      %v8668 = vpop.f32.mrf.mxu0
      %v8669 = vadd.f32 %v8523, %v8668
      %v8670 = vand.u32 %v4121, 4294901760
      %8671 = vmatmul.f32.gmra.mxu0 %v8670
      %v8672 = vpop.f32.mrf.mxu0
      %v8673 = vadd.f32 %v8527, %v8672
      %v8674 = vand.u32 %v4124, 4294901760
      %8675 = vmatmul.f32.gmra.mxu0 %v8674
      %v8676 = vpop.f32.mrf.mxu0
      %v8677 = vadd.f32 %v8531, %v8676
      %v8678 = vand.u32 %v7572, 4294901760
      %8679 = vmatmul.f32.gmra.mxu0 %v8678
      %v8680 = vpop.f32.mrf.mxu0
      %v8681 = vadd.f32 %v8535, %v8680
      %v8682 = vand.u32 %v7575, 4294901760
      %8683 = vmatmul.f32.gmra.mxu0 %v8682
      %v8684 = vpop.f32.mrf.mxu0
      %v8685 = vadd.f32 %v8539, %v8684
      %8686 = vdwg.mxu0
      %v8687 = vadd.f32 %v7539, %v8561
      %v8688 = vadd.f32 %v7540, %v8565
      %v8689 = vadd.f32 %v7541, %v8569
      %v8690 = vadd.f32 %v7542, %v8573
      %v8691 = vadd.f32 %v7543, %v8577
      %v8692 = vadd.f32 %v7544, %v8581
      %v8693 = vadd.f32 %v7545, %v8585
      %v8694 = vadd.f32 %v7546, %v8589
      %v8695 = vadd.f32 %v7547, %v8593
      %v8696 = vadd.f32 %v7548, %v8597
      %v8697 = vadd.f32 %v7549, %v8601
      %v8698 = vadd.f32 %v7550, %v8605
      %v8699 = vadd.f32 %v7551, %v8609
      %v8700 = vadd.f32 %v7552, %v8613
      %v8701 = vadd.f32 %v7553, %v8617
      %v8702 = vadd.f32 %v7554, %v8621
      %v8703 = vadd.f32 %v7555, %v8625
      %v8704 = vadd.f32 %v7556, %v8629
      %v8705 = vadd.f32 %v7557, %v8633
      %v8706 = vadd.f32 %v7558, %v8637
      %v8707 = vadd.f32 %v7559, %v8641
      %v8708 = vadd.f32 %v7560, %v8645
      %v8709 = vadd.f32 %v7561, %v8649
      %v8710 = vadd.f32 %v7562, %v8653
      %v8711 = vadd.f32 %v7563, %v8657
      %v8712 = vadd.f32 %v7564, %v8661
      %v8713 = vadd.f32 %v7565, %v8665
      %v8714 = vadd.f32 %v7566, %v8669
      %v8715 = vadd.f32 %v7567, %v8673
      %v8716 = vadd.f32 %v7568, %v8677
      %v8717 = vadd.f32 %v7569, %v8681
      %v8718 = vadd.f32 %v7570, %v8685
      %v8720 = vrot.slane %v343, 1
      %v8721 = vrot.slane %v344, 1
      %v8722 = vsel %vm403, %v8720, %v8721
      %v8723 = vrot.slane %v345, 1
      %v8724 = vsel %vm403, %v8721, %v8723
      %v8725 = vsel %vm171, %v8722, 0
      %v8727 = vsel %vm171, %v8724, 0
      %v8730 = vsel %vm548, %v353, 0
      %8732 = vmatpush.msra.mxu0 0.0
      %8733 = vmatpush.msra.mxu0 0.0
      %8734 = vmatpush.msra.mxu0 0.0
      %8735 = vmatpush.msra.mxu0 0.0
      %8736 = vmatpush.msra.mxu0 0.0
      %8737 = vmatpush.msra.mxu0 0.0
      %8738 = vmatpush.msra.mxu0 0.0
      %8739 = vmatpush.msra.mxu0 0.0
      %8740 = vmatpush.msra.mxu0 0.0
      %8741 = vmatpush.msra.mxu0 0.0
      %8742 = vmatpush.msra.mxu0 0.0
      %8743 = vmatpush.msra.mxu0 0.0
      %8744 = vmatpush.msra.mxu0 0.0
      %8745 = vmatpush.msra.mxu0 0.0
      %8746 = vmatpush.msra.mxu0 0.0
      %v8747 = vand.u32 %v8730, 4294901760
      %8748 = vmatpush.msra.mxu0 %v8747
      %v8749 = vand.u32 %v492, 4294901760
      %v8750 = vsub.f32 %v492, %v8749
      %v8751 = vand.u32 %v8750, 4294901760
      %v8752 = vsub.f32 %v8750, %v8751
      %v8753 = vand.u32 %v8752, 4294901760
      %8754 = vmatmul.f32.gmra.mxu0 %v8753
      %v8755 = vpop.f32.mrf.mxu0
      %v8756 = vadd.f32 0.0, %v8755
      %v8757 = vand.u32 %v494, 4294901760
      %v8758 = vsub.f32 %v494, %v8757
      %v8759 = vand.u32 %v8758, 4294901760
      %v8760 = vsub.f32 %v8758, %v8759
      %v8761 = vand.u32 %v8760, 4294901760
      %8762 = vmatmul.f32.gmra.mxu0 %v8761
      %v8763 = vpop.f32.mrf.mxu0
      %v8764 = vadd.f32 0.0, %v8763
      %v8765 = vand.u32 %v496, 4294901760
      %v8766 = vsub.f32 %v496, %v8765
      %v8767 = vand.u32 %v8766, 4294901760
      %v8768 = vsub.f32 %v8766, %v8767
      %v8769 = vand.u32 %v8768, 4294901760
      %8770 = vmatmul.f32.gmra.mxu0 %v8769
      %v8771 = vpop.f32.mrf.mxu0
      %v8772 = vadd.f32 0.0, %v8771
      %v8773 = vand.u32 %v498, 4294901760
      %v8774 = vsub.f32 %v498, %v8773
      %v8775 = vand.u32 %v8774, 4294901760
      %v8776 = vsub.f32 %v8774, %v8775
      %v8777 = vand.u32 %v8776, 4294901760
      %8778 = vmatmul.f32.gmra.mxu0 %v8777
      %v8779 = vpop.f32.mrf.mxu0
      %v8780 = vadd.f32 0.0, %v8779
      %v8781 = vand.u32 %v500, 4294901760
      %v8782 = vsub.f32 %v500, %v8781
      %v8783 = vand.u32 %v8782, 4294901760
      %v8784 = vsub.f32 %v8782, %v8783
      %v8785 = vand.u32 %v8784, 4294901760
      %8786 = vmatmul.f32.gmra.mxu0 %v8785
      %v8787 = vpop.f32.mrf.mxu0
      %v8788 = vadd.f32 0.0, %v8787
      %v8789 = vand.u32 %v502, 4294901760
      %v8790 = vsub.f32 %v502, %v8789
      %v8791 = vand.u32 %v8790, 4294901760
      %v8792 = vsub.f32 %v8790, %v8791
      %v8793 = vand.u32 %v8792, 4294901760
      %8794 = vmatmul.f32.gmra.mxu0 %v8793
      %v8795 = vpop.f32.mrf.mxu0
      %v8796 = vadd.f32 0.0, %v8795
      %v8797 = vand.u32 %v504, 4294901760
      %v8798 = vsub.f32 %v504, %v8797
      %v8799 = vand.u32 %v8798, 4294901760
      %v8800 = vsub.f32 %v8798, %v8799
      %v8801 = vand.u32 %v8800, 4294901760
      %8802 = vmatmul.f32.gmra.mxu0 %v8801
      %v8803 = vpop.f32.mrf.mxu0
      %v8804 = vadd.f32 0.0, %v8803
      %v8805 = vand.u32 %v506, 4294901760
      %v8806 = vsub.f32 %v506, %v8805
      %v8807 = vand.u32 %v8806, 4294901760
      %v8808 = vsub.f32 %v8806, %v8807
      %v8809 = vand.u32 %v8808, 4294901760
      %8810 = vmatmul.f32.gmra.mxu0 %v8809
      %v8811 = vpop.f32.mrf.mxu0
      %v8812 = vadd.f32 0.0, %v8811
      %v8813 = vand.u32 %v508, 4294901760
      %v8814 = vsub.f32 %v508, %v8813
      %v8815 = vand.u32 %v8814, 4294901760
      %v8816 = vsub.f32 %v8814, %v8815
      %v8817 = vand.u32 %v8816, 4294901760
      %8818 = vmatmul.f32.gmra.mxu0 %v8817
      %v8819 = vpop.f32.mrf.mxu0
      %v8820 = vadd.f32 0.0, %v8819
      %v8821 = vand.u32 %v510, 4294901760
      %v8822 = vsub.f32 %v510, %v8821
      %v8823 = vand.u32 %v8822, 4294901760
      %v8824 = vsub.f32 %v8822, %v8823
      %v8825 = vand.u32 %v8824, 4294901760
      %8826 = vmatmul.f32.gmra.mxu0 %v8825
      %v8827 = vpop.f32.mrf.mxu0
      %v8828 = vadd.f32 0.0, %v8827
      %v8829 = vand.u32 %v512, 4294901760
      %v8830 = vsub.f32 %v512, %v8829
      %v8831 = vand.u32 %v8830, 4294901760
      %v8832 = vsub.f32 %v8830, %v8831
      %v8833 = vand.u32 %v8832, 4294901760
      %8834 = vmatmul.f32.gmra.mxu0 %v8833
      %v8835 = vpop.f32.mrf.mxu0
      %v8836 = vadd.f32 0.0, %v8835
      %v8837 = vand.u32 %v514, 4294901760
      %v8838 = vsub.f32 %v514, %v8837
      %v8839 = vand.u32 %v8838, 4294901760
      %v8840 = vsub.f32 %v8838, %v8839
      %v8841 = vand.u32 %v8840, 4294901760
      %8842 = vmatmul.f32.gmra.mxu0 %v8841
      %v8843 = vpop.f32.mrf.mxu0
      %v8844 = vadd.f32 0.0, %v8843
      %v8845 = vand.u32 %v516, 4294901760
      %v8846 = vsub.f32 %v516, %v8845
      %v8847 = vand.u32 %v8846, 4294901760
      %v8848 = vsub.f32 %v8846, %v8847
      %v8849 = vand.u32 %v8848, 4294901760
      %8850 = vmatmul.f32.gmra.mxu0 %v8849
      %v8851 = vpop.f32.mrf.mxu0
      %v8852 = vadd.f32 0.0, %v8851
      %v8853 = vand.u32 %v518, 4294901760
      %v8854 = vsub.f32 %v518, %v8853
      %v8855 = vand.u32 %v8854, 4294901760
      %v8856 = vsub.f32 %v8854, %v8855
      %v8857 = vand.u32 %v8856, 4294901760
      %8858 = vmatmul.f32.gmra.mxu0 %v8857
      %v8859 = vpop.f32.mrf.mxu0
      %v8860 = vadd.f32 0.0, %v8859
      %v8861 = vand.u32 %v520, 4294901760
      %v8862 = vsub.f32 %v520, %v8861
      %v8863 = vand.u32 %v8862, 4294901760
      %v8864 = vsub.f32 %v8862, %v8863
      %v8865 = vand.u32 %v8864, 4294901760
      %8866 = vmatmul.f32.gmra.mxu0 %v8865
      %v8867 = vpop.f32.mrf.mxu0
      %v8868 = vadd.f32 0.0, %v8867
      %v8869 = vand.u32 %v522, 4294901760
      %v8870 = vsub.f32 %v522, %v8869
      %v8871 = vand.u32 %v8870, 4294901760
      %v8872 = vsub.f32 %v8870, %v8871
      %v8873 = vand.u32 %v8872, 4294901760
      %8874 = vmatmul.f32.gmra.mxu0 %v8873
      %v8875 = vpop.f32.mrf.mxu0
      %v8876 = vadd.f32 0.0, %v8875
      %v8877 = vand.u32 %v524, 4294901760
      %v8878 = vsub.f32 %v524, %v8877
      %v8879 = vand.u32 %v8878, 4294901760
      %v8880 = vsub.f32 %v8878, %v8879
      %v8881 = vand.u32 %v8880, 4294901760
      %8882 = vmatmul.f32.gmra.mxu0 %v8881
      %v8883 = vpop.f32.mrf.mxu0
      %v8884 = vadd.f32 0.0, %v8883
      %v8885 = vand.u32 %v526, 4294901760
      %v8886 = vsub.f32 %v526, %v8885
      %v8887 = vand.u32 %v8886, 4294901760
      %v8888 = vsub.f32 %v8886, %v8887
      %v8889 = vand.u32 %v8888, 4294901760
      %8890 = vmatmul.f32.gmra.mxu0 %v8889
      %v8891 = vpop.f32.mrf.mxu0
      %v8892 = vadd.f32 0.0, %v8891
      %v8893 = vand.u32 %v528, 4294901760
      %v8894 = vsub.f32 %v528, %v8893
      %v8895 = vand.u32 %v8894, 4294901760
      %v8896 = vsub.f32 %v8894, %v8895
      %v8897 = vand.u32 %v8896, 4294901760
      %8898 = vmatmul.f32.gmra.mxu0 %v8897
      %v8899 = vpop.f32.mrf.mxu0
      %v8900 = vadd.f32 0.0, %v8899
      %v8901 = vand.u32 %v530, 4294901760
      %v8902 = vsub.f32 %v530, %v8901
      %v8903 = vand.u32 %v8902, 4294901760
      %v8904 = vsub.f32 %v8902, %v8903
      %v8905 = vand.u32 %v8904, 4294901760
      %8906 = vmatmul.f32.gmra.mxu0 %v8905
      %v8907 = vpop.f32.mrf.mxu0
      %v8908 = vadd.f32 0.0, %v8907
      %v8909 = vand.u32 %v532, 4294901760
      %v8910 = vsub.f32 %v532, %v8909
      %v8911 = vand.u32 %v8910, 4294901760
      %v8912 = vsub.f32 %v8910, %v8911
      %v8913 = vand.u32 %v8912, 4294901760
      %8914 = vmatmul.f32.gmra.mxu0 %v8913
      %v8915 = vpop.f32.mrf.mxu0
      %v8916 = vadd.f32 0.0, %v8915
      %v8917 = vand.u32 %v534, 4294901760
      %v8918 = vsub.f32 %v534, %v8917
      %v8919 = vand.u32 %v8918, 4294901760
      %v8920 = vsub.f32 %v8918, %v8919
      %v8921 = vand.u32 %v8920, 4294901760
      %8922 = vmatmul.f32.gmra.mxu0 %v8921
      %v8923 = vpop.f32.mrf.mxu0
      %v8924 = vadd.f32 0.0, %v8923
      %v8925 = vand.u32 %v536, 4294901760
      %v8926 = vsub.f32 %v536, %v8925
      %v8927 = vand.u32 %v8926, 4294901760
      %v8928 = vsub.f32 %v8926, %v8927
      %v8929 = vand.u32 %v8928, 4294901760
      %8930 = vmatmul.f32.gmra.mxu0 %v8929
      %v8931 = vpop.f32.mrf.mxu0
      %v8932 = vadd.f32 0.0, %v8931
      %v8933 = vand.u32 %v538, 4294901760
      %v8934 = vsub.f32 %v538, %v8933
      %v8935 = vand.u32 %v8934, 4294901760
      %v8936 = vsub.f32 %v8934, %v8935
      %v8937 = vand.u32 %v8936, 4294901760
      %8938 = vmatmul.f32.gmra.mxu0 %v8937
      %v8939 = vpop.f32.mrf.mxu0
      %v8940 = vadd.f32 0.0, %v8939
      %v8941 = vand.u32 %v540, 4294901760
      %v8942 = vsub.f32 %v540, %v8941
      %v8943 = vand.u32 %v8942, 4294901760
      %v8944 = vsub.f32 %v8942, %v8943
      %v8945 = vand.u32 %v8944, 4294901760
      %8946 = vmatmul.f32.gmra.mxu0 %v8945
      %v8947 = vpop.f32.mrf.mxu0
      %v8948 = vadd.f32 0.0, %v8947
      %v8949 = vand.u32 %v542, 4294901760
      %v8950 = vsub.f32 %v542, %v8949
      %v8951 = vand.u32 %v8950, 4294901760
      %v8952 = vsub.f32 %v8950, %v8951
      %v8953 = vand.u32 %v8952, 4294901760
      %8954 = vmatmul.f32.gmra.mxu0 %v8953
      %v8955 = vpop.f32.mrf.mxu0
      %v8956 = vadd.f32 0.0, %v8955
      %v8957 = vand.u32 %v544, 4294901760
      %v8958 = vsub.f32 %v544, %v8957
      %v8959 = vand.u32 %v8958, 4294901760
      %v8960 = vsub.f32 %v8958, %v8959
      %v8961 = vand.u32 %v8960, 4294901760
      %8962 = vmatmul.f32.gmra.mxu0 %v8961
      %v8963 = vpop.f32.mrf.mxu0
      %v8964 = vadd.f32 0.0, %v8963
      %v8965 = vand.u32 %v546, 4294901760
      %v8966 = vsub.f32 %v546, %v8965
      %v8967 = vand.u32 %v8966, 4294901760
      %v8968 = vsub.f32 %v8966, %v8967
      %v8969 = vand.u32 %v8968, 4294901760
      %8970 = vmatmul.f32.gmra.mxu0 %v8969
      %v8971 = vpop.f32.mrf.mxu0
      %v8972 = vadd.f32 0.0, %v8971
      %v8973 = vand.u32 %v5274, 4294901760
      %v8974 = vsub.f32 %v5274, %v8973
      %v8975 = vand.u32 %v8974, 4294901760
      %v8976 = vsub.f32 %v8974, %v8975
      %v8977 = vand.u32 %v8976, 4294901760
      %8978 = vmatmul.f32.gmra.mxu0 %v8977
      %v8979 = vpop.f32.mrf.mxu0
      %v8980 = vadd.f32 0.0, %v8979
      %v8981 = vand.u32 %v5276, 4294901760
      %v8982 = vsub.f32 %v5276, %v8981
      %v8983 = vand.u32 %v8982, 4294901760
      %v8984 = vsub.f32 %v8982, %v8983
      %v8985 = vand.u32 %v8984, 4294901760
      %8986 = vmatmul.f32.gmra.mxu0 %v8985
      %v8987 = vpop.f32.mrf.mxu0
      %v8988 = vadd.f32 0.0, %v8987
      %v8989 = vand.u32 %v8725, 4294901760
      %v8990 = vsub.f32 %v8725, %v8989
      %v8991 = vand.u32 %v8990, 4294901760
      %v8992 = vsub.f32 %v8990, %v8991
      %v8993 = vand.u32 %v8992, 4294901760
      %8994 = vmatmul.f32.gmra.mxu0 %v8993
      %v8995 = vpop.f32.mrf.mxu0
      %v8996 = vadd.f32 0.0, %v8995
      %v8997 = vand.u32 %v8727, 4294901760
      %v8998 = vsub.f32 %v8727, %v8997
      %v8999 = vand.u32 %v8998, 4294901760
      %v9000 = vsub.f32 %v8998, %v8999
      %v9001 = vand.u32 %v9000, 4294901760
      %9002 = vmatmul.f32.gmra.mxu0 %v9001
      %v9003 = vpop.f32.mrf.mxu0
      %v9004 = vadd.f32 0.0, %v9003
      %9005 = vdwg.mxu0
      %9006 = vmatpush.msra.mxu0 0.0
      %9007 = vmatpush.msra.mxu0 0.0
      %9008 = vmatpush.msra.mxu0 0.0
      %9009 = vmatpush.msra.mxu0 0.0
      %9010 = vmatpush.msra.mxu0 0.0
      %9011 = vmatpush.msra.mxu0 0.0
      %9012 = vmatpush.msra.mxu0 0.0
      %9013 = vmatpush.msra.mxu0 0.0
      %9014 = vmatpush.msra.mxu0 0.0
      %9015 = vmatpush.msra.mxu0 0.0
      %9016 = vmatpush.msra.mxu0 0.0
      %9017 = vmatpush.msra.mxu0 0.0
      %9018 = vmatpush.msra.mxu0 0.0
      %9019 = vmatpush.msra.mxu0 0.0
      %9020 = vmatpush.msra.mxu0 0.0
      %v9021 = vand.u32 %v8730, 4294901760
      %v9022 = vsub.f32 %v8730, %v9021
      %v9023 = vand.u32 %v9022, 4294901760
      %v9024 = vsub.f32 %v9022, %v9023
      %v9025 = vand.u32 %v9024, 4294901760
      %9026 = vmatpush.msra.mxu0 %v9025
      %v9027 = vand.u32 %v492, 4294901760
      %9028 = vmatmul.f32.gmra.mxu0 %v9027
      %v9029 = vpop.f32.mrf.mxu0
      %v9030 = vadd.f32 %v8756, %v9029
      %v9031 = vand.u32 %v494, 4294901760
      %9032 = vmatmul.f32.gmra.mxu0 %v9031
      %v9033 = vpop.f32.mrf.mxu0
      %v9034 = vadd.f32 %v8764, %v9033
      %v9035 = vand.u32 %v496, 4294901760
      %9036 = vmatmul.f32.gmra.mxu0 %v9035
      %v9037 = vpop.f32.mrf.mxu0
      %v9038 = vadd.f32 %v8772, %v9037
      %v9039 = vand.u32 %v498, 4294901760
      %9040 = vmatmul.f32.gmra.mxu0 %v9039
      %v9041 = vpop.f32.mrf.mxu0
      %v9042 = vadd.f32 %v8780, %v9041
      %v9043 = vand.u32 %v500, 4294901760
      %9044 = vmatmul.f32.gmra.mxu0 %v9043
      %v9045 = vpop.f32.mrf.mxu0
      %v9046 = vadd.f32 %v8788, %v9045
      %v9047 = vand.u32 %v502, 4294901760
      %9048 = vmatmul.f32.gmra.mxu0 %v9047
      %v9049 = vpop.f32.mrf.mxu0
      %v9050 = vadd.f32 %v8796, %v9049
      %v9051 = vand.u32 %v504, 4294901760
      %9052 = vmatmul.f32.gmra.mxu0 %v9051
      %v9053 = vpop.f32.mrf.mxu0
      %v9054 = vadd.f32 %v8804, %v9053
      %v9055 = vand.u32 %v506, 4294901760
      %9056 = vmatmul.f32.gmra.mxu0 %v9055
      %v9057 = vpop.f32.mrf.mxu0
      %v9058 = vadd.f32 %v8812, %v9057
      %v9059 = vand.u32 %v508, 4294901760
      %9060 = vmatmul.f32.gmra.mxu0 %v9059
      %v9061 = vpop.f32.mrf.mxu0
      %v9062 = vadd.f32 %v8820, %v9061
      %v9063 = vand.u32 %v510, 4294901760
      %9064 = vmatmul.f32.gmra.mxu0 %v9063
      %v9065 = vpop.f32.mrf.mxu0
      %v9066 = vadd.f32 %v8828, %v9065
      %v9067 = vand.u32 %v512, 4294901760
      %9068 = vmatmul.f32.gmra.mxu0 %v9067
      %v9069 = vpop.f32.mrf.mxu0
      %v9070 = vadd.f32 %v8836, %v9069
      %v9071 = vand.u32 %v514, 4294901760
      %9072 = vmatmul.f32.gmra.mxu0 %v9071
      %v9073 = vpop.f32.mrf.mxu0
      %v9074 = vadd.f32 %v8844, %v9073
      %v9075 = vand.u32 %v516, 4294901760
      %9076 = vmatmul.f32.gmra.mxu0 %v9075
      %v9077 = vpop.f32.mrf.mxu0
      %v9078 = vadd.f32 %v8852, %v9077
      %v9079 = vand.u32 %v518, 4294901760
      %9080 = vmatmul.f32.gmra.mxu0 %v9079
      %v9081 = vpop.f32.mrf.mxu0
      %v9082 = vadd.f32 %v8860, %v9081
      %v9083 = vand.u32 %v520, 4294901760
      %9084 = vmatmul.f32.gmra.mxu0 %v9083
      %v9085 = vpop.f32.mrf.mxu0
      %v9086 = vadd.f32 %v8868, %v9085
      %v9087 = vand.u32 %v522, 4294901760
      %9088 = vmatmul.f32.gmra.mxu0 %v9087
      %v9089 = vpop.f32.mrf.mxu0
      %v9090 = vadd.f32 %v8876, %v9089
      %v9091 = vand.u32 %v524, 4294901760
      %9092 = vmatmul.f32.gmra.mxu0 %v9091
      %v9093 = vpop.f32.mrf.mxu0
      %v9094 = vadd.f32 %v8884, %v9093
      %v9095 = vand.u32 %v526, 4294901760
      %9096 = vmatmul.f32.gmra.mxu0 %v9095
      %v9097 = vpop.f32.mrf.mxu0
      %v9098 = vadd.f32 %v8892, %v9097
      %v9099 = vand.u32 %v528, 4294901760
      %9100 = vmatmul.f32.gmra.mxu0 %v9099
      %v9101 = vpop.f32.mrf.mxu0
      %v9102 = vadd.f32 %v8900, %v9101
      %v9103 = vand.u32 %v530, 4294901760
      %9104 = vmatmul.f32.gmra.mxu0 %v9103
      %v9105 = vpop.f32.mrf.mxu0
      %v9106 = vadd.f32 %v8908, %v9105
      %v9107 = vand.u32 %v532, 4294901760
      %9108 = vmatmul.f32.gmra.mxu0 %v9107
      %v9109 = vpop.f32.mrf.mxu0
      %v9110 = vadd.f32 %v8916, %v9109
      %v9111 = vand.u32 %v534, 4294901760
      %9112 = vmatmul.f32.gmra.mxu0 %v9111
      %v9113 = vpop.f32.mrf.mxu0
      %v9114 = vadd.f32 %v8924, %v9113
      %v9115 = vand.u32 %v536, 4294901760
      %9116 = vmatmul.f32.gmra.mxu0 %v9115
      %v9117 = vpop.f32.mrf.mxu0
      %v9118 = vadd.f32 %v8932, %v9117
      %v9119 = vand.u32 %v538, 4294901760
      %9120 = vmatmul.f32.gmra.mxu0 %v9119
      %v9121 = vpop.f32.mrf.mxu0
      %v9122 = vadd.f32 %v8940, %v9121
      %v9123 = vand.u32 %v540, 4294901760
      %9124 = vmatmul.f32.gmra.mxu0 %v9123
      %v9125 = vpop.f32.mrf.mxu0
      %v9126 = vadd.f32 %v8948, %v9125
      %v9127 = vand.u32 %v542, 4294901760
      %9128 = vmatmul.f32.gmra.mxu0 %v9127
      %v9129 = vpop.f32.mrf.mxu0
      %v9130 = vadd.f32 %v8956, %v9129
      %v9131 = vand.u32 %v544, 4294901760
      %9132 = vmatmul.f32.gmra.mxu0 %v9131
      %v9133 = vpop.f32.mrf.mxu0
      %v9134 = vadd.f32 %v8964, %v9133
      %v9135 = vand.u32 %v546, 4294901760
      %9136 = vmatmul.f32.gmra.mxu0 %v9135
      %v9137 = vpop.f32.mrf.mxu0
      %v9138 = vadd.f32 %v8972, %v9137
      %v9139 = vand.u32 %v5274, 4294901760
      %9140 = vmatmul.f32.gmra.mxu0 %v9139
      %v9141 = vpop.f32.mrf.mxu0
      %v9142 = vadd.f32 %v8980, %v9141
      %v9143 = vand.u32 %v5276, 4294901760
      %9144 = vmatmul.f32.gmra.mxu0 %v9143
      %v9145 = vpop.f32.mrf.mxu0
      %v9146 = vadd.f32 %v8988, %v9145
      %v9147 = vand.u32 %v8725, 4294901760
      %9148 = vmatmul.f32.gmra.mxu0 %v9147
      %v9149 = vpop.f32.mrf.mxu0
      %v9150 = vadd.f32 %v8996, %v9149
      %v9151 = vand.u32 %v8727, 4294901760
      %9152 = vmatmul.f32.gmra.mxu0 %v9151
      %v9153 = vpop.f32.mrf.mxu0
      %v9154 = vadd.f32 %v9004, %v9153
      %9155 = vdwg.mxu0
      %9156 = vmatpush.msra.mxu0 0.0
      %9157 = vmatpush.msra.mxu0 0.0
      %9158 = vmatpush.msra.mxu0 0.0
      %9159 = vmatpush.msra.mxu0 0.0
      %9160 = vmatpush.msra.mxu0 0.0
      %9161 = vmatpush.msra.mxu0 0.0
      %9162 = vmatpush.msra.mxu0 0.0
      %9163 = vmatpush.msra.mxu0 0.0
      %9164 = vmatpush.msra.mxu0 0.0
      %9165 = vmatpush.msra.mxu0 0.0
      %9166 = vmatpush.msra.mxu0 0.0
      %9167 = vmatpush.msra.mxu0 0.0
      %9168 = vmatpush.msra.mxu0 0.0
      %9169 = vmatpush.msra.mxu0 0.0
      %9170 = vmatpush.msra.mxu0 0.0
      %v9171 = vand.u32 %v8730, 4294901760
      %v9172 = vsub.f32 %v8730, %v9171
      %9173 = vmatpush.msra.mxu0 %v9172
      %v9174 = vand.u32 %v492, 4294901760
      %v9175 = vsub.f32 %v492, %v9174
      %9176 = vmatmul.f32.gmra.mxu0 %v9175
      %v9177 = vpop.f32.mrf.mxu0
      %v9178 = vadd.f32 %v9030, %v9177
      %v9179 = vand.u32 %v494, 4294901760
      %v9180 = vsub.f32 %v494, %v9179
      %9181 = vmatmul.f32.gmra.mxu0 %v9180
      %v9182 = vpop.f32.mrf.mxu0
      %v9183 = vadd.f32 %v9034, %v9182
      %v9184 = vand.u32 %v496, 4294901760
      %v9185 = vsub.f32 %v496, %v9184
      %9186 = vmatmul.f32.gmra.mxu0 %v9185
      %v9187 = vpop.f32.mrf.mxu0
      %v9188 = vadd.f32 %v9038, %v9187
      %v9189 = vand.u32 %v498, 4294901760
      %v9190 = vsub.f32 %v498, %v9189
      %9191 = vmatmul.f32.gmra.mxu0 %v9190
      %v9192 = vpop.f32.mrf.mxu0
      %v9193 = vadd.f32 %v9042, %v9192
      %v9194 = vand.u32 %v500, 4294901760
      %v9195 = vsub.f32 %v500, %v9194
      %9196 = vmatmul.f32.gmra.mxu0 %v9195
      %v9197 = vpop.f32.mrf.mxu0
      %v9198 = vadd.f32 %v9046, %v9197
      %v9199 = vand.u32 %v502, 4294901760
      %v9200 = vsub.f32 %v502, %v9199
      %9201 = vmatmul.f32.gmra.mxu0 %v9200
      %v9202 = vpop.f32.mrf.mxu0
      %v9203 = vadd.f32 %v9050, %v9202
      %v9204 = vand.u32 %v504, 4294901760
      %v9205 = vsub.f32 %v504, %v9204
      %9206 = vmatmul.f32.gmra.mxu0 %v9205
      %v9207 = vpop.f32.mrf.mxu0
      %v9208 = vadd.f32 %v9054, %v9207
      %v9209 = vand.u32 %v506, 4294901760
      %v9210 = vsub.f32 %v506, %v9209
      %9211 = vmatmul.f32.gmra.mxu0 %v9210
      %v9212 = vpop.f32.mrf.mxu0
      %v9213 = vadd.f32 %v9058, %v9212
      %v9214 = vand.u32 %v508, 4294901760
      %v9215 = vsub.f32 %v508, %v9214
      %9216 = vmatmul.f32.gmra.mxu0 %v9215
      %v9217 = vpop.f32.mrf.mxu0
      %v9218 = vadd.f32 %v9062, %v9217
      %v9219 = vand.u32 %v510, 4294901760
      %v9220 = vsub.f32 %v510, %v9219
      %9221 = vmatmul.f32.gmra.mxu0 %v9220
      %v9222 = vpop.f32.mrf.mxu0
      %v9223 = vadd.f32 %v9066, %v9222
      %v9224 = vand.u32 %v512, 4294901760
      %v9225 = vsub.f32 %v512, %v9224
      %9226 = vmatmul.f32.gmra.mxu0 %v9225
      %v9227 = vpop.f32.mrf.mxu0
      %v9228 = vadd.f32 %v9070, %v9227
      %v9229 = vand.u32 %v514, 4294901760
      %v9230 = vsub.f32 %v514, %v9229
      %9231 = vmatmul.f32.gmra.mxu0 %v9230
      %v9232 = vpop.f32.mrf.mxu0
      %v9233 = vadd.f32 %v9074, %v9232
      %v9234 = vand.u32 %v516, 4294901760
      %v9235 = vsub.f32 %v516, %v9234
      %9236 = vmatmul.f32.gmra.mxu0 %v9235
      %v9237 = vpop.f32.mrf.mxu0
      %v9238 = vadd.f32 %v9078, %v9237
      %v9239 = vand.u32 %v518, 4294901760
      %v9240 = vsub.f32 %v518, %v9239
      %9241 = vmatmul.f32.gmra.mxu0 %v9240
      %v9242 = vpop.f32.mrf.mxu0
      %v9243 = vadd.f32 %v9082, %v9242
      %v9244 = vand.u32 %v520, 4294901760
      %v9245 = vsub.f32 %v520, %v9244
      %9246 = vmatmul.f32.gmra.mxu0 %v9245
      %v9247 = vpop.f32.mrf.mxu0
      %v9248 = vadd.f32 %v9086, %v9247
      %v9249 = vand.u32 %v522, 4294901760
      %v9250 = vsub.f32 %v522, %v9249
      %9251 = vmatmul.f32.gmra.mxu0 %v9250
      %v9252 = vpop.f32.mrf.mxu0
      %v9253 = vadd.f32 %v9090, %v9252
      %v9254 = vand.u32 %v524, 4294901760
      %v9255 = vsub.f32 %v524, %v9254
      %9256 = vmatmul.f32.gmra.mxu0 %v9255
      %v9257 = vpop.f32.mrf.mxu0
      %v9258 = vadd.f32 %v9094, %v9257
      %v9259 = vand.u32 %v526, 4294901760
      %v9260 = vsub.f32 %v526, %v9259
      %9261 = vmatmul.f32.gmra.mxu0 %v9260
      %v9262 = vpop.f32.mrf.mxu0
      %v9263 = vadd.f32 %v9098, %v9262
      %v9264 = vand.u32 %v528, 4294901760
      %v9265 = vsub.f32 %v528, %v9264
      %9266 = vmatmul.f32.gmra.mxu0 %v9265
      %v9267 = vpop.f32.mrf.mxu0
      %v9268 = vadd.f32 %v9102, %v9267
      %v9269 = vand.u32 %v530, 4294901760
      %v9270 = vsub.f32 %v530, %v9269
      %9271 = vmatmul.f32.gmra.mxu0 %v9270
      %v9272 = vpop.f32.mrf.mxu0
      %v9273 = vadd.f32 %v9106, %v9272
      %v9274 = vand.u32 %v532, 4294901760
      %v9275 = vsub.f32 %v532, %v9274
      %9276 = vmatmul.f32.gmra.mxu0 %v9275
      %v9277 = vpop.f32.mrf.mxu0
      %v9278 = vadd.f32 %v9110, %v9277
      %v9279 = vand.u32 %v534, 4294901760
      %v9280 = vsub.f32 %v534, %v9279
      %9281 = vmatmul.f32.gmra.mxu0 %v9280
      %v9282 = vpop.f32.mrf.mxu0
      %v9283 = vadd.f32 %v9114, %v9282
      %v9284 = vand.u32 %v536, 4294901760
      %v9285 = vsub.f32 %v536, %v9284
      %9286 = vmatmul.f32.gmra.mxu0 %v9285
      %v9287 = vpop.f32.mrf.mxu0
      %v9288 = vadd.f32 %v9118, %v9287
      %v9289 = vand.u32 %v538, 4294901760
      %v9290 = vsub.f32 %v538, %v9289
      %9291 = vmatmul.f32.gmra.mxu0 %v9290
      %v9292 = vpop.f32.mrf.mxu0
      %v9293 = vadd.f32 %v9122, %v9292
      %v9294 = vand.u32 %v540, 4294901760
      %v9295 = vsub.f32 %v540, %v9294
      %9296 = vmatmul.f32.gmra.mxu0 %v9295
      %v9297 = vpop.f32.mrf.mxu0
      %v9298 = vadd.f32 %v9126, %v9297
      %v9299 = vand.u32 %v542, 4294901760
      %v9300 = vsub.f32 %v542, %v9299
      %9301 = vmatmul.f32.gmra.mxu0 %v9300
      %v9302 = vpop.f32.mrf.mxu0
      %v9303 = vadd.f32 %v9130, %v9302
      %v9304 = vand.u32 %v544, 4294901760
      %v9305 = vsub.f32 %v544, %v9304
      %9306 = vmatmul.f32.gmra.mxu0 %v9305
      %v9307 = vpop.f32.mrf.mxu0
      %v9308 = vadd.f32 %v9134, %v9307
      %v9309 = vand.u32 %v546, 4294901760
      %v9310 = vsub.f32 %v546, %v9309
      %9311 = vmatmul.f32.gmra.mxu0 %v9310
      %v9312 = vpop.f32.mrf.mxu0
      %v9313 = vadd.f32 %v9138, %v9312
      %v9314 = vand.u32 %v5274, 4294901760
      %v9315 = vsub.f32 %v5274, %v9314
      %9316 = vmatmul.f32.gmra.mxu0 %v9315
      %v9317 = vpop.f32.mrf.mxu0
      %v9318 = vadd.f32 %v9142, %v9317
      %v9319 = vand.u32 %v5276, 4294901760
      %v9320 = vsub.f32 %v5276, %v9319
      %9321 = vmatmul.f32.gmra.mxu0 %v9320
      %v9322 = vpop.f32.mrf.mxu0
      %v9323 = vadd.f32 %v9146, %v9322
      %v9324 = vand.u32 %v8725, 4294901760
      %v9325 = vsub.f32 %v8725, %v9324
      %9326 = vmatmul.f32.gmra.mxu0 %v9325
      %v9327 = vpop.f32.mrf.mxu0
      %v9328 = vadd.f32 %v9150, %v9327
      %v9329 = vand.u32 %v8727, 4294901760
      %v9330 = vsub.f32 %v8727, %v9329
      %9331 = vmatmul.f32.gmra.mxu0 %v9330
      %v9332 = vpop.f32.mrf.mxu0
      %v9333 = vadd.f32 %v9154, %v9332
      %9334 = vdwg.mxu0
      %9335 = vmatpush.msra.mxu0 0.0
      %9336 = vmatpush.msra.mxu0 0.0
      %9337 = vmatpush.msra.mxu0 0.0
      %9338 = vmatpush.msra.mxu0 0.0
      %9339 = vmatpush.msra.mxu0 0.0
      %9340 = vmatpush.msra.mxu0 0.0
      %9341 = vmatpush.msra.mxu0 0.0
      %9342 = vmatpush.msra.mxu0 0.0
      %9343 = vmatpush.msra.mxu0 0.0
      %9344 = vmatpush.msra.mxu0 0.0
      %9345 = vmatpush.msra.mxu0 0.0
      %9346 = vmatpush.msra.mxu0 0.0
      %9347 = vmatpush.msra.mxu0 0.0
      %9348 = vmatpush.msra.mxu0 0.0
      %9349 = vmatpush.msra.mxu0 0.0
      %v9350 = vand.u32 %v8730, 4294901760
      %9351 = vmatpush.msra.mxu0 %v9350
      %v9352 = vand.u32 %v492, 4294901760
      %v9353 = vsub.f32 %v492, %v9352
      %v9354 = vand.u32 %v9353, 4294901760
      %9355 = vmatmul.f32.gmra.mxu0 %v9354
      %v9356 = vpop.f32.mrf.mxu0
      %v9357 = vadd.f32 %v9178, %v9356
      %v9358 = vand.u32 %v494, 4294901760
      %v9359 = vsub.f32 %v494, %v9358
      %v9360 = vand.u32 %v9359, 4294901760
      %9361 = vmatmul.f32.gmra.mxu0 %v9360
      %v9362 = vpop.f32.mrf.mxu0
      %v9363 = vadd.f32 %v9183, %v9362
      %v9364 = vand.u32 %v496, 4294901760
      %v9365 = vsub.f32 %v496, %v9364
      %v9366 = vand.u32 %v9365, 4294901760
      %9367 = vmatmul.f32.gmra.mxu0 %v9366
      %v9368 = vpop.f32.mrf.mxu0
      %v9369 = vadd.f32 %v9188, %v9368
      %v9370 = vand.u32 %v498, 4294901760
      %v9371 = vsub.f32 %v498, %v9370
      %v9372 = vand.u32 %v9371, 4294901760
      %9373 = vmatmul.f32.gmra.mxu0 %v9372
      %v9374 = vpop.f32.mrf.mxu0
      %v9375 = vadd.f32 %v9193, %v9374
      %v9376 = vand.u32 %v500, 4294901760
      %v9377 = vsub.f32 %v500, %v9376
      %v9378 = vand.u32 %v9377, 4294901760
      %9379 = vmatmul.f32.gmra.mxu0 %v9378
      %v9380 = vpop.f32.mrf.mxu0
      %v9381 = vadd.f32 %v9198, %v9380
      %v9382 = vand.u32 %v502, 4294901760
      %v9383 = vsub.f32 %v502, %v9382
      %v9384 = vand.u32 %v9383, 4294901760
      %9385 = vmatmul.f32.gmra.mxu0 %v9384
      %v9386 = vpop.f32.mrf.mxu0
      %v9387 = vadd.f32 %v9203, %v9386
      %v9388 = vand.u32 %v504, 4294901760
      %v9389 = vsub.f32 %v504, %v9388
      %v9390 = vand.u32 %v9389, 4294901760
      %9391 = vmatmul.f32.gmra.mxu0 %v9390
      %v9392 = vpop.f32.mrf.mxu0
      %v9393 = vadd.f32 %v9208, %v9392
      %v9394 = vand.u32 %v506, 4294901760
      %v9395 = vsub.f32 %v506, %v9394
      %v9396 = vand.u32 %v9395, 4294901760
      %9397 = vmatmul.f32.gmra.mxu0 %v9396
      %v9398 = vpop.f32.mrf.mxu0
      %v9399 = vadd.f32 %v9213, %v9398
      %v9400 = vand.u32 %v508, 4294901760
      %v9401 = vsub.f32 %v508, %v9400
      %v9402 = vand.u32 %v9401, 4294901760
      %9403 = vmatmul.f32.gmra.mxu0 %v9402
      %v9404 = vpop.f32.mrf.mxu0
      %v9405 = vadd.f32 %v9218, %v9404
      %v9406 = vand.u32 %v510, 4294901760
      %v9407 = vsub.f32 %v510, %v9406
      %v9408 = vand.u32 %v9407, 4294901760
      %9409 = vmatmul.f32.gmra.mxu0 %v9408
      %v9410 = vpop.f32.mrf.mxu0
      %v9411 = vadd.f32 %v9223, %v9410
      %v9412 = vand.u32 %v512, 4294901760
      %v9413 = vsub.f32 %v512, %v9412
      %v9414 = vand.u32 %v9413, 4294901760
      %9415 = vmatmul.f32.gmra.mxu0 %v9414
      %v9416 = vpop.f32.mrf.mxu0
      %v9417 = vadd.f32 %v9228, %v9416
      %v9418 = vand.u32 %v514, 4294901760
      %v9419 = vsub.f32 %v514, %v9418
      %v9420 = vand.u32 %v9419, 4294901760
      %9421 = vmatmul.f32.gmra.mxu0 %v9420
      %v9422 = vpop.f32.mrf.mxu0
      %v9423 = vadd.f32 %v9233, %v9422
      %v9424 = vand.u32 %v516, 4294901760
      %v9425 = vsub.f32 %v516, %v9424
      %v9426 = vand.u32 %v9425, 4294901760
      %9427 = vmatmul.f32.gmra.mxu0 %v9426
      %v9428 = vpop.f32.mrf.mxu0
      %v9429 = vadd.f32 %v9238, %v9428
      %v9430 = vand.u32 %v518, 4294901760
      %v9431 = vsub.f32 %v518, %v9430
      %v9432 = vand.u32 %v9431, 4294901760
      %9433 = vmatmul.f32.gmra.mxu0 %v9432
      %v9434 = vpop.f32.mrf.mxu0
      %v9435 = vadd.f32 %v9243, %v9434
      %v9436 = vand.u32 %v520, 4294901760
      %v9437 = vsub.f32 %v520, %v9436
      %v9438 = vand.u32 %v9437, 4294901760
      %9439 = vmatmul.f32.gmra.mxu0 %v9438
      %v9440 = vpop.f32.mrf.mxu0
      %v9441 = vadd.f32 %v9248, %v9440
      %v9442 = vand.u32 %v522, 4294901760
      %v9443 = vsub.f32 %v522, %v9442
      %v9444 = vand.u32 %v9443, 4294901760
      %9445 = vmatmul.f32.gmra.mxu0 %v9444
      %v9446 = vpop.f32.mrf.mxu0
      %v9447 = vadd.f32 %v9253, %v9446
      %v9448 = vand.u32 %v524, 4294901760
      %v9449 = vsub.f32 %v524, %v9448
      %v9450 = vand.u32 %v9449, 4294901760
      %9451 = vmatmul.f32.gmra.mxu0 %v9450
      %v9452 = vpop.f32.mrf.mxu0
      %v9453 = vadd.f32 %v9258, %v9452
      %v9454 = vand.u32 %v526, 4294901760
      %v9455 = vsub.f32 %v526, %v9454
      %v9456 = vand.u32 %v9455, 4294901760
      %9457 = vmatmul.f32.gmra.mxu0 %v9456
      %v9458 = vpop.f32.mrf.mxu0
      %v9459 = vadd.f32 %v9263, %v9458
      %v9460 = vand.u32 %v528, 4294901760
      %v9461 = vsub.f32 %v528, %v9460
      %v9462 = vand.u32 %v9461, 4294901760
      %9463 = vmatmul.f32.gmra.mxu0 %v9462
      %v9464 = vpop.f32.mrf.mxu0
      %v9465 = vadd.f32 %v9268, %v9464
      %v9466 = vand.u32 %v530, 4294901760
      %v9467 = vsub.f32 %v530, %v9466
      %v9468 = vand.u32 %v9467, 4294901760
      %9469 = vmatmul.f32.gmra.mxu0 %v9468
      %v9470 = vpop.f32.mrf.mxu0
      %v9471 = vadd.f32 %v9273, %v9470
      %v9472 = vand.u32 %v532, 4294901760
      %v9473 = vsub.f32 %v532, %v9472
      %v9474 = vand.u32 %v9473, 4294901760
      %9475 = vmatmul.f32.gmra.mxu0 %v9474
      %v9476 = vpop.f32.mrf.mxu0
      %v9477 = vadd.f32 %v9278, %v9476
      %v9478 = vand.u32 %v534, 4294901760
      %v9479 = vsub.f32 %v534, %v9478
      %v9480 = vand.u32 %v9479, 4294901760
      %9481 = vmatmul.f32.gmra.mxu0 %v9480
      %v9482 = vpop.f32.mrf.mxu0
      %v9483 = vadd.f32 %v9283, %v9482
      %v9484 = vand.u32 %v536, 4294901760
      %v9485 = vsub.f32 %v536, %v9484
      %v9486 = vand.u32 %v9485, 4294901760
      %9487 = vmatmul.f32.gmra.mxu0 %v9486
      %v9488 = vpop.f32.mrf.mxu0
      %v9489 = vadd.f32 %v9288, %v9488
      %v9490 = vand.u32 %v538, 4294901760
      %v9491 = vsub.f32 %v538, %v9490
      %v9492 = vand.u32 %v9491, 4294901760
      %9493 = vmatmul.f32.gmra.mxu0 %v9492
      %v9494 = vpop.f32.mrf.mxu0
      %v9495 = vadd.f32 %v9293, %v9494
      %v9496 = vand.u32 %v540, 4294901760
      %v9497 = vsub.f32 %v540, %v9496
      %v9498 = vand.u32 %v9497, 4294901760
      %9499 = vmatmul.f32.gmra.mxu0 %v9498
      %v9500 = vpop.f32.mrf.mxu0
      %v9501 = vadd.f32 %v9298, %v9500
      %v9502 = vand.u32 %v542, 4294901760
      %v9503 = vsub.f32 %v542, %v9502
      %v9504 = vand.u32 %v9503, 4294901760
      %9505 = vmatmul.f32.gmra.mxu0 %v9504
      %v9506 = vpop.f32.mrf.mxu0
      %v9507 = vadd.f32 %v9303, %v9506
      %v9508 = vand.u32 %v544, 4294901760
      %v9509 = vsub.f32 %v544, %v9508
      %v9510 = vand.u32 %v9509, 4294901760
      %9511 = vmatmul.f32.gmra.mxu0 %v9510
      %v9512 = vpop.f32.mrf.mxu0
      %v9513 = vadd.f32 %v9308, %v9512
      %v9514 = vand.u32 %v546, 4294901760
      %v9515 = vsub.f32 %v546, %v9514
      %v9516 = vand.u32 %v9515, 4294901760
      %9517 = vmatmul.f32.gmra.mxu0 %v9516
      %v9518 = vpop.f32.mrf.mxu0
      %v9519 = vadd.f32 %v9313, %v9518
      %v9520 = vand.u32 %v5274, 4294901760
      %v9521 = vsub.f32 %v5274, %v9520
      %v9522 = vand.u32 %v9521, 4294901760
      %9523 = vmatmul.f32.gmra.mxu0 %v9522
      %v9524 = vpop.f32.mrf.mxu0
      %v9525 = vadd.f32 %v9318, %v9524
      %v9526 = vand.u32 %v5276, 4294901760
      %v9527 = vsub.f32 %v5276, %v9526
      %v9528 = vand.u32 %v9527, 4294901760
      %9529 = vmatmul.f32.gmra.mxu0 %v9528
      %v9530 = vpop.f32.mrf.mxu0
      %v9531 = vadd.f32 %v9323, %v9530
      %v9532 = vand.u32 %v8725, 4294901760
      %v9533 = vsub.f32 %v8725, %v9532
      %v9534 = vand.u32 %v9533, 4294901760
      %9535 = vmatmul.f32.gmra.mxu0 %v9534
      %v9536 = vpop.f32.mrf.mxu0
      %v9537 = vadd.f32 %v9328, %v9536
      %v9538 = vand.u32 %v8727, 4294901760
      %v9539 = vsub.f32 %v8727, %v9538
      %v9540 = vand.u32 %v9539, 4294901760
      %9541 = vmatmul.f32.gmra.mxu0 %v9540
      %v9542 = vpop.f32.mrf.mxu0
      %v9543 = vadd.f32 %v9333, %v9542
      %9544 = vdwg.mxu0
      %9545 = vmatpush.msra.mxu0 0.0
      %9546 = vmatpush.msra.mxu0 0.0
      %9547 = vmatpush.msra.mxu0 0.0
      %9548 = vmatpush.msra.mxu0 0.0
      %9549 = vmatpush.msra.mxu0 0.0
      %9550 = vmatpush.msra.mxu0 0.0
      %9551 = vmatpush.msra.mxu0 0.0
      %9552 = vmatpush.msra.mxu0 0.0
      %9553 = vmatpush.msra.mxu0 0.0
      %9554 = vmatpush.msra.mxu0 0.0
      %9555 = vmatpush.msra.mxu0 0.0
      %9556 = vmatpush.msra.mxu0 0.0
      %9557 = vmatpush.msra.mxu0 0.0
      %9558 = vmatpush.msra.mxu0 0.0
      %9559 = vmatpush.msra.mxu0 0.0
      %v9560 = vand.u32 %v8730, 4294901760
      %v9561 = vsub.f32 %v8730, %v9560
      %v9562 = vand.u32 %v9561, 4294901760
      %9563 = vmatpush.msra.mxu0 %v9562
      %v9564 = vand.u32 %v492, 4294901760
      %9565 = vmatmul.f32.gmra.mxu0 %v9564
      %v9566 = vpop.f32.mrf.mxu0
      %v9567 = vadd.f32 %v9357, %v9566
      %v9568 = vand.u32 %v494, 4294901760
      %9569 = vmatmul.f32.gmra.mxu0 %v9568
      %v9570 = vpop.f32.mrf.mxu0
      %v9571 = vadd.f32 %v9363, %v9570
      %v9572 = vand.u32 %v496, 4294901760
      %9573 = vmatmul.f32.gmra.mxu0 %v9572
      %v9574 = vpop.f32.mrf.mxu0
      %v9575 = vadd.f32 %v9369, %v9574
      %v9576 = vand.u32 %v498, 4294901760
      %9577 = vmatmul.f32.gmra.mxu0 %v9576
      %v9578 = vpop.f32.mrf.mxu0
      %v9579 = vadd.f32 %v9375, %v9578
      %v9580 = vand.u32 %v500, 4294901760
      %9581 = vmatmul.f32.gmra.mxu0 %v9580
      %v9582 = vpop.f32.mrf.mxu0
      %v9583 = vadd.f32 %v9381, %v9582
      %v9584 = vand.u32 %v502, 4294901760
      %9585 = vmatmul.f32.gmra.mxu0 %v9584
      %v9586 = vpop.f32.mrf.mxu0
      %v9587 = vadd.f32 %v9387, %v9586
      %v9588 = vand.u32 %v504, 4294901760
      %9589 = vmatmul.f32.gmra.mxu0 %v9588
      %v9590 = vpop.f32.mrf.mxu0
      %v9591 = vadd.f32 %v9393, %v9590
      %v9592 = vand.u32 %v506, 4294901760
      %9593 = vmatmul.f32.gmra.mxu0 %v9592
      %v9594 = vpop.f32.mrf.mxu0
      %v9595 = vadd.f32 %v9399, %v9594
      %v9596 = vand.u32 %v508, 4294901760
      %9597 = vmatmul.f32.gmra.mxu0 %v9596
      %v9598 = vpop.f32.mrf.mxu0
      %v9599 = vadd.f32 %v9405, %v9598
      %v9600 = vand.u32 %v510, 4294901760
      %9601 = vmatmul.f32.gmra.mxu0 %v9600
      %v9602 = vpop.f32.mrf.mxu0
      %v9603 = vadd.f32 %v9411, %v9602
      %v9604 = vand.u32 %v512, 4294901760
      %9605 = vmatmul.f32.gmra.mxu0 %v9604
      %v9606 = vpop.f32.mrf.mxu0
      %v9607 = vadd.f32 %v9417, %v9606
      %v9608 = vand.u32 %v514, 4294901760
      %9609 = vmatmul.f32.gmra.mxu0 %v9608
      %v9610 = vpop.f32.mrf.mxu0
      %v9611 = vadd.f32 %v9423, %v9610
      %v9612 = vand.u32 %v516, 4294901760
      %9613 = vmatmul.f32.gmra.mxu0 %v9612
      %v9614 = vpop.f32.mrf.mxu0
      %v9615 = vadd.f32 %v9429, %v9614
      %v9616 = vand.u32 %v518, 4294901760
      %9617 = vmatmul.f32.gmra.mxu0 %v9616
      %v9618 = vpop.f32.mrf.mxu0
      %v9619 = vadd.f32 %v9435, %v9618
      %v9620 = vand.u32 %v520, 4294901760
      %9621 = vmatmul.f32.gmra.mxu0 %v9620
      %v9622 = vpop.f32.mrf.mxu0
      %v9623 = vadd.f32 %v9441, %v9622
      %v9624 = vand.u32 %v522, 4294901760
      %9625 = vmatmul.f32.gmra.mxu0 %v9624
      %v9626 = vpop.f32.mrf.mxu0
      %v9627 = vadd.f32 %v9447, %v9626
      %v9628 = vand.u32 %v524, 4294901760
      %9629 = vmatmul.f32.gmra.mxu0 %v9628
      %v9630 = vpop.f32.mrf.mxu0
      %v9631 = vadd.f32 %v9453, %v9630
      %v9632 = vand.u32 %v526, 4294901760
      %9633 = vmatmul.f32.gmra.mxu0 %v9632
      %v9634 = vpop.f32.mrf.mxu0
      %v9635 = vadd.f32 %v9459, %v9634
      %v9636 = vand.u32 %v528, 4294901760
      %9637 = vmatmul.f32.gmra.mxu0 %v9636
      %v9638 = vpop.f32.mrf.mxu0
      %v9639 = vadd.f32 %v9465, %v9638
      %v9640 = vand.u32 %v530, 4294901760
      %9641 = vmatmul.f32.gmra.mxu0 %v9640
      %v9642 = vpop.f32.mrf.mxu0
      %v9643 = vadd.f32 %v9471, %v9642
      %v9644 = vand.u32 %v532, 4294901760
      %9645 = vmatmul.f32.gmra.mxu0 %v9644
      %v9646 = vpop.f32.mrf.mxu0
      %v9647 = vadd.f32 %v9477, %v9646
      %v9648 = vand.u32 %v534, 4294901760
      %9649 = vmatmul.f32.gmra.mxu0 %v9648
      %v9650 = vpop.f32.mrf.mxu0
      %v9651 = vadd.f32 %v9483, %v9650
      %v9652 = vand.u32 %v536, 4294901760
      %9653 = vmatmul.f32.gmra.mxu0 %v9652
      %v9654 = vpop.f32.mrf.mxu0
      %v9655 = vadd.f32 %v9489, %v9654
      %v9656 = vand.u32 %v538, 4294901760
      %9657 = vmatmul.f32.gmra.mxu0 %v9656
      %v9658 = vpop.f32.mrf.mxu0
      %v9659 = vadd.f32 %v9495, %v9658
      %v9660 = vand.u32 %v540, 4294901760
      %9661 = vmatmul.f32.gmra.mxu0 %v9660
      %v9662 = vpop.f32.mrf.mxu0
      %v9663 = vadd.f32 %v9501, %v9662
      %v9664 = vand.u32 %v542, 4294901760
      %9665 = vmatmul.f32.gmra.mxu0 %v9664
      %v9666 = vpop.f32.mrf.mxu0
      %v9667 = vadd.f32 %v9507, %v9666
      %v9668 = vand.u32 %v544, 4294901760
      %9669 = vmatmul.f32.gmra.mxu0 %v9668
      %v9670 = vpop.f32.mrf.mxu0
      %v9671 = vadd.f32 %v9513, %v9670
      %v9672 = vand.u32 %v546, 4294901760
      %9673 = vmatmul.f32.gmra.mxu0 %v9672
      %v9674 = vpop.f32.mrf.mxu0
      %v9675 = vadd.f32 %v9519, %v9674
      %v9676 = vand.u32 %v5274, 4294901760
      %9677 = vmatmul.f32.gmra.mxu0 %v9676
      %v9678 = vpop.f32.mrf.mxu0
      %v9679 = vadd.f32 %v9525, %v9678
      %v9680 = vand.u32 %v5276, 4294901760
      %9681 = vmatmul.f32.gmra.mxu0 %v9680
      %v9682 = vpop.f32.mrf.mxu0
      %v9683 = vadd.f32 %v9531, %v9682
      %v9684 = vand.u32 %v8725, 4294901760
      %9685 = vmatmul.f32.gmra.mxu0 %v9684
      %v9686 = vpop.f32.mrf.mxu0
      %v9687 = vadd.f32 %v9537, %v9686
      %v9688 = vand.u32 %v8727, 4294901760
      %9689 = vmatmul.f32.gmra.mxu0 %v9688
      %v9690 = vpop.f32.mrf.mxu0
      %v9691 = vadd.f32 %v9543, %v9690
      %9692 = vdwg.mxu0
      %9693 = vmatpush.msra.mxu0 0.0
      %9694 = vmatpush.msra.mxu0 0.0
      %9695 = vmatpush.msra.mxu0 0.0
      %9696 = vmatpush.msra.mxu0 0.0
      %9697 = vmatpush.msra.mxu0 0.0
      %9698 = vmatpush.msra.mxu0 0.0
      %9699 = vmatpush.msra.mxu0 0.0
      %9700 = vmatpush.msra.mxu0 0.0
      %9701 = vmatpush.msra.mxu0 0.0
      %9702 = vmatpush.msra.mxu0 0.0
      %9703 = vmatpush.msra.mxu0 0.0
      %9704 = vmatpush.msra.mxu0 0.0
      %9705 = vmatpush.msra.mxu0 0.0
      %9706 = vmatpush.msra.mxu0 0.0
      %9707 = vmatpush.msra.mxu0 0.0
      %v9708 = vand.u32 %v8730, 4294901760
      %9709 = vmatpush.msra.mxu0 %v9708
      %v9710 = vand.u32 %v492, 4294901760
      %9711 = vmatmul.f32.gmra.mxu0 %v9710
      %v9712 = vpop.f32.mrf.mxu0
      %v9713 = vadd.f32 %v9567, %v9712
      %v9714 = vand.u32 %v494, 4294901760
      %9715 = vmatmul.f32.gmra.mxu0 %v9714
      %v9716 = vpop.f32.mrf.mxu0
      %v9717 = vadd.f32 %v9571, %v9716
      %v9718 = vand.u32 %v496, 4294901760
      %9719 = vmatmul.f32.gmra.mxu0 %v9718
      %v9720 = vpop.f32.mrf.mxu0
      %v9721 = vadd.f32 %v9575, %v9720
      %v9722 = vand.u32 %v498, 4294901760
      %9723 = vmatmul.f32.gmra.mxu0 %v9722
      %v9724 = vpop.f32.mrf.mxu0
      %v9725 = vadd.f32 %v9579, %v9724
      %v9726 = vand.u32 %v500, 4294901760
      %9727 = vmatmul.f32.gmra.mxu0 %v9726
      %v9728 = vpop.f32.mrf.mxu0
      %v9729 = vadd.f32 %v9583, %v9728
      %v9730 = vand.u32 %v502, 4294901760
      %9731 = vmatmul.f32.gmra.mxu0 %v9730
      %v9732 = vpop.f32.mrf.mxu0
      %v9733 = vadd.f32 %v9587, %v9732
      %v9734 = vand.u32 %v504, 4294901760
      %9735 = vmatmul.f32.gmra.mxu0 %v9734
      %v9736 = vpop.f32.mrf.mxu0
      %v9737 = vadd.f32 %v9591, %v9736
      %v9738 = vand.u32 %v506, 4294901760
      %9739 = vmatmul.f32.gmra.mxu0 %v9738
      %v9740 = vpop.f32.mrf.mxu0
      %v9741 = vadd.f32 %v9595, %v9740
      %v9742 = vand.u32 %v508, 4294901760
      %9743 = vmatmul.f32.gmra.mxu0 %v9742
      %v9744 = vpop.f32.mrf.mxu0
      %v9745 = vadd.f32 %v9599, %v9744
      %v9746 = vand.u32 %v510, 4294901760
      %9747 = vmatmul.f32.gmra.mxu0 %v9746
      %v9748 = vpop.f32.mrf.mxu0
      %v9749 = vadd.f32 %v9603, %v9748
      %v9750 = vand.u32 %v512, 4294901760
      %9751 = vmatmul.f32.gmra.mxu0 %v9750
      %v9752 = vpop.f32.mrf.mxu0
      %v9753 = vadd.f32 %v9607, %v9752
      %v9754 = vand.u32 %v514, 4294901760
      %9755 = vmatmul.f32.gmra.mxu0 %v9754
      %v9756 = vpop.f32.mrf.mxu0
      %v9757 = vadd.f32 %v9611, %v9756
      %v9758 = vand.u32 %v516, 4294901760
      %9759 = vmatmul.f32.gmra.mxu0 %v9758
      %v9760 = vpop.f32.mrf.mxu0
      %v9761 = vadd.f32 %v9615, %v9760
      %v9762 = vand.u32 %v518, 4294901760
      %9763 = vmatmul.f32.gmra.mxu0 %v9762
      %v9764 = vpop.f32.mrf.mxu0
      %v9765 = vadd.f32 %v9619, %v9764
      %v9766 = vand.u32 %v520, 4294901760
      %9767 = vmatmul.f32.gmra.mxu0 %v9766
      %v9768 = vpop.f32.mrf.mxu0
      %v9769 = vadd.f32 %v9623, %v9768
      %v9770 = vand.u32 %v522, 4294901760
      %9771 = vmatmul.f32.gmra.mxu0 %v9770
      %v9772 = vpop.f32.mrf.mxu0
      %v9773 = vadd.f32 %v9627, %v9772
      %v9774 = vand.u32 %v524, 4294901760
      %9775 = vmatmul.f32.gmra.mxu0 %v9774
      %v9776 = vpop.f32.mrf.mxu0
      %v9777 = vadd.f32 %v9631, %v9776
      %v9778 = vand.u32 %v526, 4294901760
      %9779 = vmatmul.f32.gmra.mxu0 %v9778
      %v9780 = vpop.f32.mrf.mxu0
      %v9781 = vadd.f32 %v9635, %v9780
      %v9782 = vand.u32 %v528, 4294901760
      %9783 = vmatmul.f32.gmra.mxu0 %v9782
      %v9784 = vpop.f32.mrf.mxu0
      %v9785 = vadd.f32 %v9639, %v9784
      %v9786 = vand.u32 %v530, 4294901760
      %9787 = vmatmul.f32.gmra.mxu0 %v9786
      %v9788 = vpop.f32.mrf.mxu0
      %v9789 = vadd.f32 %v9643, %v9788
      %v9790 = vand.u32 %v532, 4294901760
      %9791 = vmatmul.f32.gmra.mxu0 %v9790
      %v9792 = vpop.f32.mrf.mxu0
      %v9793 = vadd.f32 %v9647, %v9792
      %v9794 = vand.u32 %v534, 4294901760
      %9795 = vmatmul.f32.gmra.mxu0 %v9794
      %v9796 = vpop.f32.mrf.mxu0
      %v9797 = vadd.f32 %v9651, %v9796
      %v9798 = vand.u32 %v536, 4294901760
      %9799 = vmatmul.f32.gmra.mxu0 %v9798
      %v9800 = vpop.f32.mrf.mxu0
      %v9801 = vadd.f32 %v9655, %v9800
      %v9802 = vand.u32 %v538, 4294901760
      %9803 = vmatmul.f32.gmra.mxu0 %v9802
      %v9804 = vpop.f32.mrf.mxu0
      %v9805 = vadd.f32 %v9659, %v9804
      %v9806 = vand.u32 %v540, 4294901760
      %9807 = vmatmul.f32.gmra.mxu0 %v9806
      %v9808 = vpop.f32.mrf.mxu0
      %v9809 = vadd.f32 %v9663, %v9808
      %v9810 = vand.u32 %v542, 4294901760
      %9811 = vmatmul.f32.gmra.mxu0 %v9810
      %v9812 = vpop.f32.mrf.mxu0
      %v9813 = vadd.f32 %v9667, %v9812
      %v9814 = vand.u32 %v544, 4294901760
      %9815 = vmatmul.f32.gmra.mxu0 %v9814
      %v9816 = vpop.f32.mrf.mxu0
      %v9817 = vadd.f32 %v9671, %v9816
      %v9818 = vand.u32 %v546, 4294901760
      %9819 = vmatmul.f32.gmra.mxu0 %v9818
      %v9820 = vpop.f32.mrf.mxu0
      %v9821 = vadd.f32 %v9675, %v9820
      %v9822 = vand.u32 %v5274, 4294901760
      %9823 = vmatmul.f32.gmra.mxu0 %v9822
      %v9824 = vpop.f32.mrf.mxu0
      %v9825 = vadd.f32 %v9679, %v9824
      %v9826 = vand.u32 %v5276, 4294901760
      %9827 = vmatmul.f32.gmra.mxu0 %v9826
      %v9828 = vpop.f32.mrf.mxu0
      %v9829 = vadd.f32 %v9683, %v9828
      %v9830 = vand.u32 %v8725, 4294901760
      %9831 = vmatmul.f32.gmra.mxu0 %v9830
      %v9832 = vpop.f32.mrf.mxu0
      %v9833 = vadd.f32 %v9687, %v9832
      %v9834 = vand.u32 %v8727, 4294901760
      %9835 = vmatmul.f32.gmra.mxu0 %v9834
      %v9836 = vpop.f32.mrf.mxu0
      %v9837 = vadd.f32 %v9691, %v9836
      %9838 = vdwg.mxu0
      %v9839 = vadd.f32 %v8687, %v9713
      %v9840 = vadd.f32 %v8688, %v9717
      %v9841 = vadd.f32 %v8689, %v9721
      %v9842 = vadd.f32 %v8690, %v9725
      %v9843 = vadd.f32 %v8691, %v9729
      %v9844 = vadd.f32 %v8692, %v9733
      %v9845 = vadd.f32 %v8693, %v9737
      %v9846 = vadd.f32 %v8694, %v9741
      %v9847 = vadd.f32 %v8695, %v9745
      %v9848 = vadd.f32 %v8696, %v9749
      %v9849 = vadd.f32 %v8697, %v9753
      %v9850 = vadd.f32 %v8698, %v9757
      %v9851 = vadd.f32 %v8699, %v9761
      %v9852 = vadd.f32 %v8700, %v9765
      %v9853 = vadd.f32 %v8701, %v9769
      %v9854 = vadd.f32 %v8702, %v9773
      %v9855 = vadd.f32 %v8703, %v9777
      %v9856 = vadd.f32 %v8704, %v9781
      %v9857 = vadd.f32 %v8705, %v9785
      %v9858 = vadd.f32 %v8706, %v9789
      %v9859 = vadd.f32 %v8707, %v9793
      %v9860 = vadd.f32 %v8708, %v9797
      %v9861 = vadd.f32 %v8709, %v9801
      %v9862 = vadd.f32 %v8710, %v9805
      %v9863 = vadd.f32 %v8711, %v9809
      %v9864 = vadd.f32 %v8712, %v9813
      %v9865 = vadd.f32 %v8713, %v9817
      %v9866 = vadd.f32 %v8714, %v9821
      %v9867 = vadd.f32 %v8715, %v9825
      %v9868 = vadd.f32 %v8716, %v9829
      %v9869 = vadd.f32 %v8717, %v9833
      %v9870 = vadd.f32 %v8718, %v9837
      %v9871 = vrot.slane %v343, 2
      %v9872 = vrot.slane %v344, 2
      %v9873 = vsel %vm2833, %v9871, %v9872
      %v9874 = vrot.slane %v345, 2
      %v9875 = vsel %vm2833, %v9872, %v9874
      %v9876 = vsel %vm171, %v9873, 0
      %v9878 = vsel %vm171, %v9875, 0
      %v9881 = vsel %vm548, %v354, 0
      %9883 = vmatpush.msra.mxu0 0.0
      %9884 = vmatpush.msra.mxu0 0.0
      %9885 = vmatpush.msra.mxu0 0.0
      %9886 = vmatpush.msra.mxu0 0.0
      %9887 = vmatpush.msra.mxu0 0.0
      %9888 = vmatpush.msra.mxu0 0.0
      %9889 = vmatpush.msra.mxu0 0.0
      %9890 = vmatpush.msra.mxu0 0.0
      %9891 = vmatpush.msra.mxu0 0.0
      %9892 = vmatpush.msra.mxu0 0.0
      %9893 = vmatpush.msra.mxu0 0.0
      %9894 = vmatpush.msra.mxu0 0.0
      %9895 = vmatpush.msra.mxu0 0.0
      %9896 = vmatpush.msra.mxu0 0.0
      %9897 = vmatpush.msra.mxu0 0.0
      %v9898 = vand.u32 %v9881, 4294901760
      %9899 = vmatpush.msra.mxu0 %v9898
      %v9900 = vand.u32 %v2922, 4294901760
      %v9901 = vsub.f32 %v2922, %v9900
      %v9902 = vand.u32 %v9901, 4294901760
      %v9903 = vsub.f32 %v9901, %v9902
      %v9904 = vand.u32 %v9903, 4294901760
      %9905 = vmatmul.f32.gmra.mxu0 %v9904
      %v9906 = vpop.f32.mrf.mxu0
      %v9907 = vadd.f32 0.0, %v9906
      %v9908 = vand.u32 %v2924, 4294901760
      %v9909 = vsub.f32 %v2924, %v9908
      %v9910 = vand.u32 %v9909, 4294901760
      %v9911 = vsub.f32 %v9909, %v9910
      %v9912 = vand.u32 %v9911, 4294901760
      %9913 = vmatmul.f32.gmra.mxu0 %v9912
      %v9914 = vpop.f32.mrf.mxu0
      %v9915 = vadd.f32 0.0, %v9914
      %v9916 = vand.u32 %v2926, 4294901760
      %v9917 = vsub.f32 %v2926, %v9916
      %v9918 = vand.u32 %v9917, 4294901760
      %v9919 = vsub.f32 %v9917, %v9918
      %v9920 = vand.u32 %v9919, 4294901760
      %9921 = vmatmul.f32.gmra.mxu0 %v9920
      %v9922 = vpop.f32.mrf.mxu0
      %v9923 = vadd.f32 0.0, %v9922
      %v9924 = vand.u32 %v2928, 4294901760
      %v9925 = vsub.f32 %v2928, %v9924
      %v9926 = vand.u32 %v9925, 4294901760
      %v9927 = vsub.f32 %v9925, %v9926
      %v9928 = vand.u32 %v9927, 4294901760
      %9929 = vmatmul.f32.gmra.mxu0 %v9928
      %v9930 = vpop.f32.mrf.mxu0
      %v9931 = vadd.f32 0.0, %v9930
      %v9932 = vand.u32 %v2930, 4294901760
      %v9933 = vsub.f32 %v2930, %v9932
      %v9934 = vand.u32 %v9933, 4294901760
      %v9935 = vsub.f32 %v9933, %v9934
      %v9936 = vand.u32 %v9935, 4294901760
      %9937 = vmatmul.f32.gmra.mxu0 %v9936
      %v9938 = vpop.f32.mrf.mxu0
      %v9939 = vadd.f32 0.0, %v9938
      %v9940 = vand.u32 %v2932, 4294901760
      %v9941 = vsub.f32 %v2932, %v9940
      %v9942 = vand.u32 %v9941, 4294901760
      %v9943 = vsub.f32 %v9941, %v9942
      %v9944 = vand.u32 %v9943, 4294901760
      %9945 = vmatmul.f32.gmra.mxu0 %v9944
      %v9946 = vpop.f32.mrf.mxu0
      %v9947 = vadd.f32 0.0, %v9946
      %v9948 = vand.u32 %v2934, 4294901760
      %v9949 = vsub.f32 %v2934, %v9948
      %v9950 = vand.u32 %v9949, 4294901760
      %v9951 = vsub.f32 %v9949, %v9950
      %v9952 = vand.u32 %v9951, 4294901760
      %9953 = vmatmul.f32.gmra.mxu0 %v9952
      %v9954 = vpop.f32.mrf.mxu0
      %v9955 = vadd.f32 0.0, %v9954
      %v9956 = vand.u32 %v2936, 4294901760
      %v9957 = vsub.f32 %v2936, %v9956
      %v9958 = vand.u32 %v9957, 4294901760
      %v9959 = vsub.f32 %v9957, %v9958
      %v9960 = vand.u32 %v9959, 4294901760
      %9961 = vmatmul.f32.gmra.mxu0 %v9960
      %v9962 = vpop.f32.mrf.mxu0
      %v9963 = vadd.f32 0.0, %v9962
      %v9964 = vand.u32 %v2938, 4294901760
      %v9965 = vsub.f32 %v2938, %v9964
      %v9966 = vand.u32 %v9965, 4294901760
      %v9967 = vsub.f32 %v9965, %v9966
      %v9968 = vand.u32 %v9967, 4294901760
      %9969 = vmatmul.f32.gmra.mxu0 %v9968
      %v9970 = vpop.f32.mrf.mxu0
      %v9971 = vadd.f32 0.0, %v9970
      %v9972 = vand.u32 %v2940, 4294901760
      %v9973 = vsub.f32 %v2940, %v9972
      %v9974 = vand.u32 %v9973, 4294901760
      %v9975 = vsub.f32 %v9973, %v9974
      %v9976 = vand.u32 %v9975, 4294901760
      %9977 = vmatmul.f32.gmra.mxu0 %v9976
      %v9978 = vpop.f32.mrf.mxu0
      %v9979 = vadd.f32 0.0, %v9978
      %v9980 = vand.u32 %v2942, 4294901760
      %v9981 = vsub.f32 %v2942, %v9980
      %v9982 = vand.u32 %v9981, 4294901760
      %v9983 = vsub.f32 %v9981, %v9982
      %v9984 = vand.u32 %v9983, 4294901760
      %9985 = vmatmul.f32.gmra.mxu0 %v9984
      %v9986 = vpop.f32.mrf.mxu0
      %v9987 = vadd.f32 0.0, %v9986
      %v9988 = vand.u32 %v2944, 4294901760
      %v9989 = vsub.f32 %v2944, %v9988
      %v9990 = vand.u32 %v9989, 4294901760
      %v9991 = vsub.f32 %v9989, %v9990
      %v9992 = vand.u32 %v9991, 4294901760
      %9993 = vmatmul.f32.gmra.mxu0 %v9992
      %v9994 = vpop.f32.mrf.mxu0
      %v9995 = vadd.f32 0.0, %v9994
      %v9996 = vand.u32 %v2946, 4294901760
      %v9997 = vsub.f32 %v2946, %v9996
      %v9998 = vand.u32 %v9997, 4294901760
      %v9999 = vsub.f32 %v9997, %v9998
      %v10000 = vand.u32 %v9999, 4294901760
      %10001 = vmatmul.f32.gmra.mxu0 %v10000
      %v10002 = vpop.f32.mrf.mxu0
      %v10003 = vadd.f32 0.0, %v10002
      %v10004 = vand.u32 %v2948, 4294901760
      %v10005 = vsub.f32 %v2948, %v10004
      %v10006 = vand.u32 %v10005, 4294901760
      %v10007 = vsub.f32 %v10005, %v10006
      %v10008 = vand.u32 %v10007, 4294901760
      %10009 = vmatmul.f32.gmra.mxu0 %v10008
      %v10010 = vpop.f32.mrf.mxu0
      %v10011 = vadd.f32 0.0, %v10010
      %v10012 = vand.u32 %v2950, 4294901760
      %v10013 = vsub.f32 %v2950, %v10012
      %v10014 = vand.u32 %v10013, 4294901760
      %v10015 = vsub.f32 %v10013, %v10014
      %v10016 = vand.u32 %v10015, 4294901760
      %10017 = vmatmul.f32.gmra.mxu0 %v10016
      %v10018 = vpop.f32.mrf.mxu0
      %v10019 = vadd.f32 0.0, %v10018
      %v10020 = vand.u32 %v2952, 4294901760
      %v10021 = vsub.f32 %v2952, %v10020
      %v10022 = vand.u32 %v10021, 4294901760
      %v10023 = vsub.f32 %v10021, %v10022
      %v10024 = vand.u32 %v10023, 4294901760
      %10025 = vmatmul.f32.gmra.mxu0 %v10024
      %v10026 = vpop.f32.mrf.mxu0
      %v10027 = vadd.f32 0.0, %v10026
      %v10028 = vand.u32 %v2954, 4294901760
      %v10029 = vsub.f32 %v2954, %v10028
      %v10030 = vand.u32 %v10029, 4294901760
      %v10031 = vsub.f32 %v10029, %v10030
      %v10032 = vand.u32 %v10031, 4294901760
      %10033 = vmatmul.f32.gmra.mxu0 %v10032
      %v10034 = vpop.f32.mrf.mxu0
      %v10035 = vadd.f32 0.0, %v10034
      %v10036 = vand.u32 %v2956, 4294901760
      %v10037 = vsub.f32 %v2956, %v10036
      %v10038 = vand.u32 %v10037, 4294901760
      %v10039 = vsub.f32 %v10037, %v10038
      %v10040 = vand.u32 %v10039, 4294901760
      %10041 = vmatmul.f32.gmra.mxu0 %v10040
      %v10042 = vpop.f32.mrf.mxu0
      %v10043 = vadd.f32 0.0, %v10042
      %v10044 = vand.u32 %v2958, 4294901760
      %v10045 = vsub.f32 %v2958, %v10044
      %v10046 = vand.u32 %v10045, 4294901760
      %v10047 = vsub.f32 %v10045, %v10046
      %v10048 = vand.u32 %v10047, 4294901760
      %10049 = vmatmul.f32.gmra.mxu0 %v10048
      %v10050 = vpop.f32.mrf.mxu0
      %v10051 = vadd.f32 0.0, %v10050
      %v10052 = vand.u32 %v2960, 4294901760
      %v10053 = vsub.f32 %v2960, %v10052
      %v10054 = vand.u32 %v10053, 4294901760
      %v10055 = vsub.f32 %v10053, %v10054
      %v10056 = vand.u32 %v10055, 4294901760
      %10057 = vmatmul.f32.gmra.mxu0 %v10056
      %v10058 = vpop.f32.mrf.mxu0
      %v10059 = vadd.f32 0.0, %v10058
      %v10060 = vand.u32 %v2962, 4294901760
      %v10061 = vsub.f32 %v2962, %v10060
      %v10062 = vand.u32 %v10061, 4294901760
      %v10063 = vsub.f32 %v10061, %v10062
      %v10064 = vand.u32 %v10063, 4294901760
      %10065 = vmatmul.f32.gmra.mxu0 %v10064
      %v10066 = vpop.f32.mrf.mxu0
      %v10067 = vadd.f32 0.0, %v10066
      %v10068 = vand.u32 %v2964, 4294901760
      %v10069 = vsub.f32 %v2964, %v10068
      %v10070 = vand.u32 %v10069, 4294901760
      %v10071 = vsub.f32 %v10069, %v10070
      %v10072 = vand.u32 %v10071, 4294901760
      %10073 = vmatmul.f32.gmra.mxu0 %v10072
      %v10074 = vpop.f32.mrf.mxu0
      %v10075 = vadd.f32 0.0, %v10074
      %v10076 = vand.u32 %v2966, 4294901760
      %v10077 = vsub.f32 %v2966, %v10076
      %v10078 = vand.u32 %v10077, 4294901760
      %v10079 = vsub.f32 %v10077, %v10078
      %v10080 = vand.u32 %v10079, 4294901760
      %10081 = vmatmul.f32.gmra.mxu0 %v10080
      %v10082 = vpop.f32.mrf.mxu0
      %v10083 = vadd.f32 0.0, %v10082
      %v10084 = vand.u32 %v2968, 4294901760
      %v10085 = vsub.f32 %v2968, %v10084
      %v10086 = vand.u32 %v10085, 4294901760
      %v10087 = vsub.f32 %v10085, %v10086
      %v10088 = vand.u32 %v10087, 4294901760
      %10089 = vmatmul.f32.gmra.mxu0 %v10088
      %v10090 = vpop.f32.mrf.mxu0
      %v10091 = vadd.f32 0.0, %v10090
      %v10092 = vand.u32 %v2970, 4294901760
      %v10093 = vsub.f32 %v2970, %v10092
      %v10094 = vand.u32 %v10093, 4294901760
      %v10095 = vsub.f32 %v10093, %v10094
      %v10096 = vand.u32 %v10095, 4294901760
      %10097 = vmatmul.f32.gmra.mxu0 %v10096
      %v10098 = vpop.f32.mrf.mxu0
      %v10099 = vadd.f32 0.0, %v10098
      %v10100 = vand.u32 %v2972, 4294901760
      %v10101 = vsub.f32 %v2972, %v10100
      %v10102 = vand.u32 %v10101, 4294901760
      %v10103 = vsub.f32 %v10101, %v10102
      %v10104 = vand.u32 %v10103, 4294901760
      %10105 = vmatmul.f32.gmra.mxu0 %v10104
      %v10106 = vpop.f32.mrf.mxu0
      %v10107 = vadd.f32 0.0, %v10106
      %v10108 = vand.u32 %v2974, 4294901760
      %v10109 = vsub.f32 %v2974, %v10108
      %v10110 = vand.u32 %v10109, 4294901760
      %v10111 = vsub.f32 %v10109, %v10110
      %v10112 = vand.u32 %v10111, 4294901760
      %10113 = vmatmul.f32.gmra.mxu0 %v10112
      %v10114 = vpop.f32.mrf.mxu0
      %v10115 = vadd.f32 0.0, %v10114
      %v10116 = vand.u32 %v2976, 4294901760
      %v10117 = vsub.f32 %v2976, %v10116
      %v10118 = vand.u32 %v10117, 4294901760
      %v10119 = vsub.f32 %v10117, %v10118
      %v10120 = vand.u32 %v10119, 4294901760
      %10121 = vmatmul.f32.gmra.mxu0 %v10120
      %v10122 = vpop.f32.mrf.mxu0
      %v10123 = vadd.f32 0.0, %v10122
      %v10124 = vand.u32 %v6425, 4294901760
      %v10125 = vsub.f32 %v6425, %v10124
      %v10126 = vand.u32 %v10125, 4294901760
      %v10127 = vsub.f32 %v10125, %v10126
      %v10128 = vand.u32 %v10127, 4294901760
      %10129 = vmatmul.f32.gmra.mxu0 %v10128
      %v10130 = vpop.f32.mrf.mxu0
      %v10131 = vadd.f32 0.0, %v10130
      %v10132 = vand.u32 %v6427, 4294901760
      %v10133 = vsub.f32 %v6427, %v10132
      %v10134 = vand.u32 %v10133, 4294901760
      %v10135 = vsub.f32 %v10133, %v10134
      %v10136 = vand.u32 %v10135, 4294901760
      %10137 = vmatmul.f32.gmra.mxu0 %v10136
      %v10138 = vpop.f32.mrf.mxu0
      %v10139 = vadd.f32 0.0, %v10138
      %v10140 = vand.u32 %v9876, 4294901760
      %v10141 = vsub.f32 %v9876, %v10140
      %v10142 = vand.u32 %v10141, 4294901760
      %v10143 = vsub.f32 %v10141, %v10142
      %v10144 = vand.u32 %v10143, 4294901760
      %10145 = vmatmul.f32.gmra.mxu0 %v10144
      %v10146 = vpop.f32.mrf.mxu0
      %v10147 = vadd.f32 0.0, %v10146
      %v10148 = vand.u32 %v9878, 4294901760
      %v10149 = vsub.f32 %v9878, %v10148
      %v10150 = vand.u32 %v10149, 4294901760
      %v10151 = vsub.f32 %v10149, %v10150
      %v10152 = vand.u32 %v10151, 4294901760
      %10153 = vmatmul.f32.gmra.mxu0 %v10152
      %v10154 = vpop.f32.mrf.mxu0
      %v10155 = vadd.f32 0.0, %v10154
      %10156 = vdwg.mxu0
      %10157 = vmatpush.msra.mxu0 0.0
      %10158 = vmatpush.msra.mxu0 0.0
      %10159 = vmatpush.msra.mxu0 0.0
      %10160 = vmatpush.msra.mxu0 0.0
      %10161 = vmatpush.msra.mxu0 0.0
      %10162 = vmatpush.msra.mxu0 0.0
      %10163 = vmatpush.msra.mxu0 0.0
      %10164 = vmatpush.msra.mxu0 0.0
      %10165 = vmatpush.msra.mxu0 0.0
      %10166 = vmatpush.msra.mxu0 0.0
      %10167 = vmatpush.msra.mxu0 0.0
      %10168 = vmatpush.msra.mxu0 0.0
      %10169 = vmatpush.msra.mxu0 0.0
      %10170 = vmatpush.msra.mxu0 0.0
      %10171 = vmatpush.msra.mxu0 0.0
      %v10172 = vand.u32 %v9881, 4294901760
      %v10173 = vsub.f32 %v9881, %v10172
      %v10174 = vand.u32 %v10173, 4294901760
      %v10175 = vsub.f32 %v10173, %v10174
      %v10176 = vand.u32 %v10175, 4294901760
      %10177 = vmatpush.msra.mxu0 %v10176
      %v10178 = vand.u32 %v2922, 4294901760
      %10179 = vmatmul.f32.gmra.mxu0 %v10178
      %v10180 = vpop.f32.mrf.mxu0
      %v10181 = vadd.f32 %v9907, %v10180
      %v10182 = vand.u32 %v2924, 4294901760
      %10183 = vmatmul.f32.gmra.mxu0 %v10182
      %v10184 = vpop.f32.mrf.mxu0
      %v10185 = vadd.f32 %v9915, %v10184
      %v10186 = vand.u32 %v2926, 4294901760
      %10187 = vmatmul.f32.gmra.mxu0 %v10186
      %v10188 = vpop.f32.mrf.mxu0
      %v10189 = vadd.f32 %v9923, %v10188
      %v10190 = vand.u32 %v2928, 4294901760
      %10191 = vmatmul.f32.gmra.mxu0 %v10190
      %v10192 = vpop.f32.mrf.mxu0
      %v10193 = vadd.f32 %v9931, %v10192
      %v10194 = vand.u32 %v2930, 4294901760
      %10195 = vmatmul.f32.gmra.mxu0 %v10194
      %v10196 = vpop.f32.mrf.mxu0
      %v10197 = vadd.f32 %v9939, %v10196
      %v10198 = vand.u32 %v2932, 4294901760
      %10199 = vmatmul.f32.gmra.mxu0 %v10198
      %v10200 = vpop.f32.mrf.mxu0
      %v10201 = vadd.f32 %v9947, %v10200
      %v10202 = vand.u32 %v2934, 4294901760
      %10203 = vmatmul.f32.gmra.mxu0 %v10202
      %v10204 = vpop.f32.mrf.mxu0
      %v10205 = vadd.f32 %v9955, %v10204
      %v10206 = vand.u32 %v2936, 4294901760
      %10207 = vmatmul.f32.gmra.mxu0 %v10206
      %v10208 = vpop.f32.mrf.mxu0
      %v10209 = vadd.f32 %v9963, %v10208
      %v10210 = vand.u32 %v2938, 4294901760
      %10211 = vmatmul.f32.gmra.mxu0 %v10210
      %v10212 = vpop.f32.mrf.mxu0
      %v10213 = vadd.f32 %v9971, %v10212
      %v10214 = vand.u32 %v2940, 4294901760
      %10215 = vmatmul.f32.gmra.mxu0 %v10214
      %v10216 = vpop.f32.mrf.mxu0
      %v10217 = vadd.f32 %v9979, %v10216
      %v10218 = vand.u32 %v2942, 4294901760
      %10219 = vmatmul.f32.gmra.mxu0 %v10218
      %v10220 = vpop.f32.mrf.mxu0
      %v10221 = vadd.f32 %v9987, %v10220
      %v10222 = vand.u32 %v2944, 4294901760
      %10223 = vmatmul.f32.gmra.mxu0 %v10222
      %v10224 = vpop.f32.mrf.mxu0
      %v10225 = vadd.f32 %v9995, %v10224
      %v10226 = vand.u32 %v2946, 4294901760
      %10227 = vmatmul.f32.gmra.mxu0 %v10226
      %v10228 = vpop.f32.mrf.mxu0
      %v10229 = vadd.f32 %v10003, %v10228
      %v10230 = vand.u32 %v2948, 4294901760
      %10231 = vmatmul.f32.gmra.mxu0 %v10230
      %v10232 = vpop.f32.mrf.mxu0
      %v10233 = vadd.f32 %v10011, %v10232
      %v10234 = vand.u32 %v2950, 4294901760
      %10235 = vmatmul.f32.gmra.mxu0 %v10234
      %v10236 = vpop.f32.mrf.mxu0
      %v10237 = vadd.f32 %v10019, %v10236
      %v10238 = vand.u32 %v2952, 4294901760
      %10239 = vmatmul.f32.gmra.mxu0 %v10238
      %v10240 = vpop.f32.mrf.mxu0
      %v10241 = vadd.f32 %v10027, %v10240
      %v10242 = vand.u32 %v2954, 4294901760
      %10243 = vmatmul.f32.gmra.mxu0 %v10242
      %v10244 = vpop.f32.mrf.mxu0
      %v10245 = vadd.f32 %v10035, %v10244
      %v10246 = vand.u32 %v2956, 4294901760
      %10247 = vmatmul.f32.gmra.mxu0 %v10246
      %v10248 = vpop.f32.mrf.mxu0
      %v10249 = vadd.f32 %v10043, %v10248
      %v10250 = vand.u32 %v2958, 4294901760
      %10251 = vmatmul.f32.gmra.mxu0 %v10250
      %v10252 = vpop.f32.mrf.mxu0
      %v10253 = vadd.f32 %v10051, %v10252
      %v10254 = vand.u32 %v2960, 4294901760
      %10255 = vmatmul.f32.gmra.mxu0 %v10254
      %v10256 = vpop.f32.mrf.mxu0
      %v10257 = vadd.f32 %v10059, %v10256
      %v10258 = vand.u32 %v2962, 4294901760
      %10259 = vmatmul.f32.gmra.mxu0 %v10258
      %v10260 = vpop.f32.mrf.mxu0
      %v10261 = vadd.f32 %v10067, %v10260
      %v10262 = vand.u32 %v2964, 4294901760
      %10263 = vmatmul.f32.gmra.mxu0 %v10262
      %v10264 = vpop.f32.mrf.mxu0
      %v10265 = vadd.f32 %v10075, %v10264
      %v10266 = vand.u32 %v2966, 4294901760
      %10267 = vmatmul.f32.gmra.mxu0 %v10266
      %v10268 = vpop.f32.mrf.mxu0
      %v10269 = vadd.f32 %v10083, %v10268
      %v10270 = vand.u32 %v2968, 4294901760
      %10271 = vmatmul.f32.gmra.mxu0 %v10270
      %v10272 = vpop.f32.mrf.mxu0
      %v10273 = vadd.f32 %v10091, %v10272
      %v10274 = vand.u32 %v2970, 4294901760
      %10275 = vmatmul.f32.gmra.mxu0 %v10274
      %v10276 = vpop.f32.mrf.mxu0
      %v10277 = vadd.f32 %v10099, %v10276
      %v10278 = vand.u32 %v2972, 4294901760
      %10279 = vmatmul.f32.gmra.mxu0 %v10278
      %v10280 = vpop.f32.mrf.mxu0
      %v10281 = vadd.f32 %v10107, %v10280
      %v10282 = vand.u32 %v2974, 4294901760
      %10283 = vmatmul.f32.gmra.mxu0 %v10282
      %v10284 = vpop.f32.mrf.mxu0
      %v10285 = vadd.f32 %v10115, %v10284
      %v10286 = vand.u32 %v2976, 4294901760
      %10287 = vmatmul.f32.gmra.mxu0 %v10286
      %v10288 = vpop.f32.mrf.mxu0
      %v10289 = vadd.f32 %v10123, %v10288
      %v10290 = vand.u32 %v6425, 4294901760
      %10291 = vmatmul.f32.gmra.mxu0 %v10290
      %v10292 = vpop.f32.mrf.mxu0
      %v10293 = vadd.f32 %v10131, %v10292
      %v10294 = vand.u32 %v6427, 4294901760
      %10295 = vmatmul.f32.gmra.mxu0 %v10294
      %v10296 = vpop.f32.mrf.mxu0
      %v10297 = vadd.f32 %v10139, %v10296
      %v10298 = vand.u32 %v9876, 4294901760
      %10299 = vmatmul.f32.gmra.mxu0 %v10298
      %v10300 = vpop.f32.mrf.mxu0
      %v10301 = vadd.f32 %v10147, %v10300
      %v10302 = vand.u32 %v9878, 4294901760
      %10303 = vmatmul.f32.gmra.mxu0 %v10302
      %v10304 = vpop.f32.mrf.mxu0
      %v10305 = vadd.f32 %v10155, %v10304
      %10306 = vdwg.mxu0
      %10307 = vmatpush.msra.mxu0 0.0
      %10308 = vmatpush.msra.mxu0 0.0
      %10309 = vmatpush.msra.mxu0 0.0
      %10310 = vmatpush.msra.mxu0 0.0
      %10311 = vmatpush.msra.mxu0 0.0
      %10312 = vmatpush.msra.mxu0 0.0
      %10313 = vmatpush.msra.mxu0 0.0
      %10314 = vmatpush.msra.mxu0 0.0
      %10315 = vmatpush.msra.mxu0 0.0
      %10316 = vmatpush.msra.mxu0 0.0
      %10317 = vmatpush.msra.mxu0 0.0
      %10318 = vmatpush.msra.mxu0 0.0
      %10319 = vmatpush.msra.mxu0 0.0
      %10320 = vmatpush.msra.mxu0 0.0
      %10321 = vmatpush.msra.mxu0 0.0
      %v10322 = vand.u32 %v9881, 4294901760
      %v10323 = vsub.f32 %v9881, %v10322
      %10324 = vmatpush.msra.mxu0 %v10323
      %v10325 = vand.u32 %v2922, 4294901760
      %v10326 = vsub.f32 %v2922, %v10325
      %10327 = vmatmul.f32.gmra.mxu0 %v10326
      %v10328 = vpop.f32.mrf.mxu0
      %v10329 = vadd.f32 %v10181, %v10328
      %v10330 = vand.u32 %v2924, 4294901760
      %v10331 = vsub.f32 %v2924, %v10330
      %10332 = vmatmul.f32.gmra.mxu0 %v10331
      %v10333 = vpop.f32.mrf.mxu0
      %v10334 = vadd.f32 %v10185, %v10333
      %v10335 = vand.u32 %v2926, 4294901760
      %v10336 = vsub.f32 %v2926, %v10335
      %10337 = vmatmul.f32.gmra.mxu0 %v10336
      %v10338 = vpop.f32.mrf.mxu0
      %v10339 = vadd.f32 %v10189, %v10338
      %v10340 = vand.u32 %v2928, 4294901760
      %v10341 = vsub.f32 %v2928, %v10340
      %10342 = vmatmul.f32.gmra.mxu0 %v10341
      %v10343 = vpop.f32.mrf.mxu0
      %v10344 = vadd.f32 %v10193, %v10343
      %v10345 = vand.u32 %v2930, 4294901760
      %v10346 = vsub.f32 %v2930, %v10345
      %10347 = vmatmul.f32.gmra.mxu0 %v10346
      %v10348 = vpop.f32.mrf.mxu0
      %v10349 = vadd.f32 %v10197, %v10348
      %v10350 = vand.u32 %v2932, 4294901760
      %v10351 = vsub.f32 %v2932, %v10350
      %10352 = vmatmul.f32.gmra.mxu0 %v10351
      %v10353 = vpop.f32.mrf.mxu0
      %v10354 = vadd.f32 %v10201, %v10353
      %v10355 = vand.u32 %v2934, 4294901760
      %v10356 = vsub.f32 %v2934, %v10355
      %10357 = vmatmul.f32.gmra.mxu0 %v10356
      %v10358 = vpop.f32.mrf.mxu0
      %v10359 = vadd.f32 %v10205, %v10358
      %v10360 = vand.u32 %v2936, 4294901760
      %v10361 = vsub.f32 %v2936, %v10360
      %10362 = vmatmul.f32.gmra.mxu0 %v10361
      %v10363 = vpop.f32.mrf.mxu0
      %v10364 = vadd.f32 %v10209, %v10363
      %v10365 = vand.u32 %v2938, 4294901760
      %v10366 = vsub.f32 %v2938, %v10365
      %10367 = vmatmul.f32.gmra.mxu0 %v10366
      %v10368 = vpop.f32.mrf.mxu0
      %v10369 = vadd.f32 %v10213, %v10368
      %v10370 = vand.u32 %v2940, 4294901760
      %v10371 = vsub.f32 %v2940, %v10370
      %10372 = vmatmul.f32.gmra.mxu0 %v10371
      %v10373 = vpop.f32.mrf.mxu0
      %v10374 = vadd.f32 %v10217, %v10373
      %v10375 = vand.u32 %v2942, 4294901760
      %v10376 = vsub.f32 %v2942, %v10375
      %10377 = vmatmul.f32.gmra.mxu0 %v10376
      %v10378 = vpop.f32.mrf.mxu0
      %v10379 = vadd.f32 %v10221, %v10378
      %v10380 = vand.u32 %v2944, 4294901760
      %v10381 = vsub.f32 %v2944, %v10380
      %10382 = vmatmul.f32.gmra.mxu0 %v10381
      %v10383 = vpop.f32.mrf.mxu0
      %v10384 = vadd.f32 %v10225, %v10383
      %v10385 = vand.u32 %v2946, 4294901760
      %v10386 = vsub.f32 %v2946, %v10385
      %10387 = vmatmul.f32.gmra.mxu0 %v10386
      %v10388 = vpop.f32.mrf.mxu0
      %v10389 = vadd.f32 %v10229, %v10388
      %v10390 = vand.u32 %v2948, 4294901760
      %v10391 = vsub.f32 %v2948, %v10390
      %10392 = vmatmul.f32.gmra.mxu0 %v10391
      %v10393 = vpop.f32.mrf.mxu0
      %v10394 = vadd.f32 %v10233, %v10393
      %v10395 = vand.u32 %v2950, 4294901760
      %v10396 = vsub.f32 %v2950, %v10395
      %10397 = vmatmul.f32.gmra.mxu0 %v10396
      %v10398 = vpop.f32.mrf.mxu0
      %v10399 = vadd.f32 %v10237, %v10398
      %v10400 = vand.u32 %v2952, 4294901760
      %v10401 = vsub.f32 %v2952, %v10400
      %10402 = vmatmul.f32.gmra.mxu0 %v10401
      %v10403 = vpop.f32.mrf.mxu0
      %v10404 = vadd.f32 %v10241, %v10403
      %v10405 = vand.u32 %v2954, 4294901760
      %v10406 = vsub.f32 %v2954, %v10405
      %10407 = vmatmul.f32.gmra.mxu0 %v10406
      %v10408 = vpop.f32.mrf.mxu0
      %v10409 = vadd.f32 %v10245, %v10408
      %v10410 = vand.u32 %v2956, 4294901760
      %v10411 = vsub.f32 %v2956, %v10410
      %10412 = vmatmul.f32.gmra.mxu0 %v10411
      %v10413 = vpop.f32.mrf.mxu0
      %v10414 = vadd.f32 %v10249, %v10413
      %v10415 = vand.u32 %v2958, 4294901760
      %v10416 = vsub.f32 %v2958, %v10415
      %10417 = vmatmul.f32.gmra.mxu0 %v10416
      %v10418 = vpop.f32.mrf.mxu0
      %v10419 = vadd.f32 %v10253, %v10418
      %v10420 = vand.u32 %v2960, 4294901760
      %v10421 = vsub.f32 %v2960, %v10420
      %10422 = vmatmul.f32.gmra.mxu0 %v10421
      %v10423 = vpop.f32.mrf.mxu0
      %v10424 = vadd.f32 %v10257, %v10423
      %v10425 = vand.u32 %v2962, 4294901760
      %v10426 = vsub.f32 %v2962, %v10425
      %10427 = vmatmul.f32.gmra.mxu0 %v10426
      %v10428 = vpop.f32.mrf.mxu0
      %v10429 = vadd.f32 %v10261, %v10428
      %v10430 = vand.u32 %v2964, 4294901760
      %v10431 = vsub.f32 %v2964, %v10430
      %10432 = vmatmul.f32.gmra.mxu0 %v10431
      %v10433 = vpop.f32.mrf.mxu0
      %v10434 = vadd.f32 %v10265, %v10433
      %v10435 = vand.u32 %v2966, 4294901760
      %v10436 = vsub.f32 %v2966, %v10435
      %10437 = vmatmul.f32.gmra.mxu0 %v10436
      %v10438 = vpop.f32.mrf.mxu0
      %v10439 = vadd.f32 %v10269, %v10438
      %v10440 = vand.u32 %v2968, 4294901760
      %v10441 = vsub.f32 %v2968, %v10440
      %10442 = vmatmul.f32.gmra.mxu0 %v10441
      %v10443 = vpop.f32.mrf.mxu0
      %v10444 = vadd.f32 %v10273, %v10443
      %v10445 = vand.u32 %v2970, 4294901760
      %v10446 = vsub.f32 %v2970, %v10445
      %10447 = vmatmul.f32.gmra.mxu0 %v10446
      %v10448 = vpop.f32.mrf.mxu0
      %v10449 = vadd.f32 %v10277, %v10448
      %v10450 = vand.u32 %v2972, 4294901760
      %v10451 = vsub.f32 %v2972, %v10450
      %10452 = vmatmul.f32.gmra.mxu0 %v10451
      %v10453 = vpop.f32.mrf.mxu0
      %v10454 = vadd.f32 %v10281, %v10453
      %v10455 = vand.u32 %v2974, 4294901760
      %v10456 = vsub.f32 %v2974, %v10455
      %10457 = vmatmul.f32.gmra.mxu0 %v10456
      %v10458 = vpop.f32.mrf.mxu0
      %v10459 = vadd.f32 %v10285, %v10458
      %v10460 = vand.u32 %v2976, 4294901760
      %v10461 = vsub.f32 %v2976, %v10460
      %10462 = vmatmul.f32.gmra.mxu0 %v10461
      %v10463 = vpop.f32.mrf.mxu0
      %v10464 = vadd.f32 %v10289, %v10463
      %v10465 = vand.u32 %v6425, 4294901760
      %v10466 = vsub.f32 %v6425, %v10465
      %10467 = vmatmul.f32.gmra.mxu0 %v10466
      %v10468 = vpop.f32.mrf.mxu0
      %v10469 = vadd.f32 %v10293, %v10468
      %v10470 = vand.u32 %v6427, 4294901760
      %v10471 = vsub.f32 %v6427, %v10470
      %10472 = vmatmul.f32.gmra.mxu0 %v10471
      %v10473 = vpop.f32.mrf.mxu0
      %v10474 = vadd.f32 %v10297, %v10473
      %v10475 = vand.u32 %v9876, 4294901760
      %v10476 = vsub.f32 %v9876, %v10475
      %10477 = vmatmul.f32.gmra.mxu0 %v10476
      %v10478 = vpop.f32.mrf.mxu0
      %v10479 = vadd.f32 %v10301, %v10478
      %v10480 = vand.u32 %v9878, 4294901760
      %v10481 = vsub.f32 %v9878, %v10480
      %10482 = vmatmul.f32.gmra.mxu0 %v10481
      %v10483 = vpop.f32.mrf.mxu0
      %v10484 = vadd.f32 %v10305, %v10483
      %10485 = vdwg.mxu0
      %10486 = vmatpush.msra.mxu0 0.0
      %10487 = vmatpush.msra.mxu0 0.0
      %10488 = vmatpush.msra.mxu0 0.0
      %10489 = vmatpush.msra.mxu0 0.0
      %10490 = vmatpush.msra.mxu0 0.0
      %10491 = vmatpush.msra.mxu0 0.0
      %10492 = vmatpush.msra.mxu0 0.0
      %10493 = vmatpush.msra.mxu0 0.0
      %10494 = vmatpush.msra.mxu0 0.0
      %10495 = vmatpush.msra.mxu0 0.0
      %10496 = vmatpush.msra.mxu0 0.0
      %10497 = vmatpush.msra.mxu0 0.0
      %10498 = vmatpush.msra.mxu0 0.0
      %10499 = vmatpush.msra.mxu0 0.0
      %10500 = vmatpush.msra.mxu0 0.0
      %v10501 = vand.u32 %v9881, 4294901760
      %10502 = vmatpush.msra.mxu0 %v10501
      %v10503 = vand.u32 %v2922, 4294901760
      %v10504 = vsub.f32 %v2922, %v10503
      %v10505 = vand.u32 %v10504, 4294901760
      %10506 = vmatmul.f32.gmra.mxu0 %v10505
      %v10507 = vpop.f32.mrf.mxu0
      %v10508 = vadd.f32 %v10329, %v10507
      %v10509 = vand.u32 %v2924, 4294901760
      %v10510 = vsub.f32 %v2924, %v10509
      %v10511 = vand.u32 %v10510, 4294901760
      %10512 = vmatmul.f32.gmra.mxu0 %v10511
      %v10513 = vpop.f32.mrf.mxu0
      %v10514 = vadd.f32 %v10334, %v10513
      %v10515 = vand.u32 %v2926, 4294901760
      %v10516 = vsub.f32 %v2926, %v10515
      %v10517 = vand.u32 %v10516, 4294901760
      %10518 = vmatmul.f32.gmra.mxu0 %v10517
      %v10519 = vpop.f32.mrf.mxu0
      %v10520 = vadd.f32 %v10339, %v10519
      %v10521 = vand.u32 %v2928, 4294901760
      %v10522 = vsub.f32 %v2928, %v10521
      %v10523 = vand.u32 %v10522, 4294901760
      %10524 = vmatmul.f32.gmra.mxu0 %v10523
      %v10525 = vpop.f32.mrf.mxu0
      %v10526 = vadd.f32 %v10344, %v10525
      %v10527 = vand.u32 %v2930, 4294901760
      %v10528 = vsub.f32 %v2930, %v10527
      %v10529 = vand.u32 %v10528, 4294901760
      %10530 = vmatmul.f32.gmra.mxu0 %v10529
      %v10531 = vpop.f32.mrf.mxu0
      %v10532 = vadd.f32 %v10349, %v10531
      %v10533 = vand.u32 %v2932, 4294901760
      %v10534 = vsub.f32 %v2932, %v10533
      %v10535 = vand.u32 %v10534, 4294901760
      %10536 = vmatmul.f32.gmra.mxu0 %v10535
      %v10537 = vpop.f32.mrf.mxu0
      %v10538 = vadd.f32 %v10354, %v10537
      %v10539 = vand.u32 %v2934, 4294901760
      %v10540 = vsub.f32 %v2934, %v10539
      %v10541 = vand.u32 %v10540, 4294901760
      %10542 = vmatmul.f32.gmra.mxu0 %v10541
      %v10543 = vpop.f32.mrf.mxu0
      %v10544 = vadd.f32 %v10359, %v10543
      %v10545 = vand.u32 %v2936, 4294901760
      %v10546 = vsub.f32 %v2936, %v10545
      %v10547 = vand.u32 %v10546, 4294901760
      %10548 = vmatmul.f32.gmra.mxu0 %v10547
      %v10549 = vpop.f32.mrf.mxu0
      %v10550 = vadd.f32 %v10364, %v10549
      %v10551 = vand.u32 %v2938, 4294901760
      %v10552 = vsub.f32 %v2938, %v10551
      %v10553 = vand.u32 %v10552, 4294901760
      %10554 = vmatmul.f32.gmra.mxu0 %v10553
      %v10555 = vpop.f32.mrf.mxu0
      %v10556 = vadd.f32 %v10369, %v10555
      %v10557 = vand.u32 %v2940, 4294901760
      %v10558 = vsub.f32 %v2940, %v10557
      %v10559 = vand.u32 %v10558, 4294901760
      %10560 = vmatmul.f32.gmra.mxu0 %v10559
      %v10561 = vpop.f32.mrf.mxu0
      %v10562 = vadd.f32 %v10374, %v10561
      %v10563 = vand.u32 %v2942, 4294901760
      %v10564 = vsub.f32 %v2942, %v10563
      %v10565 = vand.u32 %v10564, 4294901760
      %10566 = vmatmul.f32.gmra.mxu0 %v10565
      %v10567 = vpop.f32.mrf.mxu0
      %v10568 = vadd.f32 %v10379, %v10567
      %v10569 = vand.u32 %v2944, 4294901760
      %v10570 = vsub.f32 %v2944, %v10569
      %v10571 = vand.u32 %v10570, 4294901760
      %10572 = vmatmul.f32.gmra.mxu0 %v10571
      %v10573 = vpop.f32.mrf.mxu0
      %v10574 = vadd.f32 %v10384, %v10573
      %v10575 = vand.u32 %v2946, 4294901760
      %v10576 = vsub.f32 %v2946, %v10575
      %v10577 = vand.u32 %v10576, 4294901760
      %10578 = vmatmul.f32.gmra.mxu0 %v10577
      %v10579 = vpop.f32.mrf.mxu0
      %v10580 = vadd.f32 %v10389, %v10579
      %v10581 = vand.u32 %v2948, 4294901760
      %v10582 = vsub.f32 %v2948, %v10581
      %v10583 = vand.u32 %v10582, 4294901760
      %10584 = vmatmul.f32.gmra.mxu0 %v10583
      %v10585 = vpop.f32.mrf.mxu0
      %v10586 = vadd.f32 %v10394, %v10585
      %v10587 = vand.u32 %v2950, 4294901760
      %v10588 = vsub.f32 %v2950, %v10587
      %v10589 = vand.u32 %v10588, 4294901760
      %10590 = vmatmul.f32.gmra.mxu0 %v10589
      %v10591 = vpop.f32.mrf.mxu0
      %v10592 = vadd.f32 %v10399, %v10591
      %v10593 = vand.u32 %v2952, 4294901760
      %v10594 = vsub.f32 %v2952, %v10593
      %v10595 = vand.u32 %v10594, 4294901760
      %10596 = vmatmul.f32.gmra.mxu0 %v10595
      %v10597 = vpop.f32.mrf.mxu0
      %v10598 = vadd.f32 %v10404, %v10597
      %v10599 = vand.u32 %v2954, 4294901760
      %v10600 = vsub.f32 %v2954, %v10599
      %v10601 = vand.u32 %v10600, 4294901760
      %10602 = vmatmul.f32.gmra.mxu0 %v10601
      %v10603 = vpop.f32.mrf.mxu0
      %v10604 = vadd.f32 %v10409, %v10603
      %v10605 = vand.u32 %v2956, 4294901760
      %v10606 = vsub.f32 %v2956, %v10605
      %v10607 = vand.u32 %v10606, 4294901760
      %10608 = vmatmul.f32.gmra.mxu0 %v10607
      %v10609 = vpop.f32.mrf.mxu0
      %v10610 = vadd.f32 %v10414, %v10609
      %v10611 = vand.u32 %v2958, 4294901760
      %v10612 = vsub.f32 %v2958, %v10611
      %v10613 = vand.u32 %v10612, 4294901760
      %10614 = vmatmul.f32.gmra.mxu0 %v10613
      %v10615 = vpop.f32.mrf.mxu0
      %v10616 = vadd.f32 %v10419, %v10615
      %v10617 = vand.u32 %v2960, 4294901760
      %v10618 = vsub.f32 %v2960, %v10617
      %v10619 = vand.u32 %v10618, 4294901760
      %10620 = vmatmul.f32.gmra.mxu0 %v10619
      %v10621 = vpop.f32.mrf.mxu0
      %v10622 = vadd.f32 %v10424, %v10621
      %v10623 = vand.u32 %v2962, 4294901760
      %v10624 = vsub.f32 %v2962, %v10623
      %v10625 = vand.u32 %v10624, 4294901760
      %10626 = vmatmul.f32.gmra.mxu0 %v10625
      %v10627 = vpop.f32.mrf.mxu0
      %v10628 = vadd.f32 %v10429, %v10627
      %v10629 = vand.u32 %v2964, 4294901760
      %v10630 = vsub.f32 %v2964, %v10629
      %v10631 = vand.u32 %v10630, 4294901760
      %10632 = vmatmul.f32.gmra.mxu0 %v10631
      %v10633 = vpop.f32.mrf.mxu0
      %v10634 = vadd.f32 %v10434, %v10633
      %v10635 = vand.u32 %v2966, 4294901760
      %v10636 = vsub.f32 %v2966, %v10635
      %v10637 = vand.u32 %v10636, 4294901760
      %10638 = vmatmul.f32.gmra.mxu0 %v10637
      %v10639 = vpop.f32.mrf.mxu0
      %v10640 = vadd.f32 %v10439, %v10639
      %v10641 = vand.u32 %v2968, 4294901760
      %v10642 = vsub.f32 %v2968, %v10641
      %v10643 = vand.u32 %v10642, 4294901760
      %10644 = vmatmul.f32.gmra.mxu0 %v10643
      %v10645 = vpop.f32.mrf.mxu0
      %v10646 = vadd.f32 %v10444, %v10645
      %v10647 = vand.u32 %v2970, 4294901760
      %v10648 = vsub.f32 %v2970, %v10647
      %v10649 = vand.u32 %v10648, 4294901760
      %10650 = vmatmul.f32.gmra.mxu0 %v10649
      %v10651 = vpop.f32.mrf.mxu0
      %v10652 = vadd.f32 %v10449, %v10651
      %v10653 = vand.u32 %v2972, 4294901760
      %v10654 = vsub.f32 %v2972, %v10653
      %v10655 = vand.u32 %v10654, 4294901760
      %10656 = vmatmul.f32.gmra.mxu0 %v10655
      %v10657 = vpop.f32.mrf.mxu0
      %v10658 = vadd.f32 %v10454, %v10657
      %v10659 = vand.u32 %v2974, 4294901760
      %v10660 = vsub.f32 %v2974, %v10659
      %v10661 = vand.u32 %v10660, 4294901760
      %10662 = vmatmul.f32.gmra.mxu0 %v10661
      %v10663 = vpop.f32.mrf.mxu0
      %v10664 = vadd.f32 %v10459, %v10663
      %v10665 = vand.u32 %v2976, 4294901760
      %v10666 = vsub.f32 %v2976, %v10665
      %v10667 = vand.u32 %v10666, 4294901760
      %10668 = vmatmul.f32.gmra.mxu0 %v10667
      %v10669 = vpop.f32.mrf.mxu0
      %v10670 = vadd.f32 %v10464, %v10669
      %v10671 = vand.u32 %v6425, 4294901760
      %v10672 = vsub.f32 %v6425, %v10671
      %v10673 = vand.u32 %v10672, 4294901760
      %10674 = vmatmul.f32.gmra.mxu0 %v10673
      %v10675 = vpop.f32.mrf.mxu0
      %v10676 = vadd.f32 %v10469, %v10675
      %v10677 = vand.u32 %v6427, 4294901760
      %v10678 = vsub.f32 %v6427, %v10677
      %v10679 = vand.u32 %v10678, 4294901760
      %10680 = vmatmul.f32.gmra.mxu0 %v10679
      %v10681 = vpop.f32.mrf.mxu0
      %v10682 = vadd.f32 %v10474, %v10681
      %v10683 = vand.u32 %v9876, 4294901760
      %v10684 = vsub.f32 %v9876, %v10683
      %v10685 = vand.u32 %v10684, 4294901760
      %10686 = vmatmul.f32.gmra.mxu0 %v10685
      %v10687 = vpop.f32.mrf.mxu0
      %v10688 = vadd.f32 %v10479, %v10687
      %v10689 = vand.u32 %v9878, 4294901760
      %v10690 = vsub.f32 %v9878, %v10689
      %v10691 = vand.u32 %v10690, 4294901760
      %10692 = vmatmul.f32.gmra.mxu0 %v10691
      %v10693 = vpop.f32.mrf.mxu0
      %v10694 = vadd.f32 %v10484, %v10693
      %10695 = vdwg.mxu0
      %10696 = vmatpush.msra.mxu0 0.0
      %10697 = vmatpush.msra.mxu0 0.0
      %10698 = vmatpush.msra.mxu0 0.0
      %10699 = vmatpush.msra.mxu0 0.0
      %10700 = vmatpush.msra.mxu0 0.0
      %10701 = vmatpush.msra.mxu0 0.0
      %10702 = vmatpush.msra.mxu0 0.0
      %10703 = vmatpush.msra.mxu0 0.0
      %10704 = vmatpush.msra.mxu0 0.0
      %10705 = vmatpush.msra.mxu0 0.0
      %10706 = vmatpush.msra.mxu0 0.0
      %10707 = vmatpush.msra.mxu0 0.0
      %10708 = vmatpush.msra.mxu0 0.0
      %10709 = vmatpush.msra.mxu0 0.0
      %10710 = vmatpush.msra.mxu0 0.0
      %v10711 = vand.u32 %v9881, 4294901760
      %v10712 = vsub.f32 %v9881, %v10711
      %v10713 = vand.u32 %v10712, 4294901760
      %10714 = vmatpush.msra.mxu0 %v10713
      %v10715 = vand.u32 %v2922, 4294901760
      %10716 = vmatmul.f32.gmra.mxu0 %v10715
      %v10717 = vpop.f32.mrf.mxu0
      %v10718 = vadd.f32 %v10508, %v10717
      %v10719 = vand.u32 %v2924, 4294901760
      %10720 = vmatmul.f32.gmra.mxu0 %v10719
      %v10721 = vpop.f32.mrf.mxu0
      %v10722 = vadd.f32 %v10514, %v10721
      %v10723 = vand.u32 %v2926, 4294901760
      %10724 = vmatmul.f32.gmra.mxu0 %v10723
      %v10725 = vpop.f32.mrf.mxu0
      %v10726 = vadd.f32 %v10520, %v10725
      %v10727 = vand.u32 %v2928, 4294901760
      %10728 = vmatmul.f32.gmra.mxu0 %v10727
      %v10729 = vpop.f32.mrf.mxu0
      %v10730 = vadd.f32 %v10526, %v10729
      %v10731 = vand.u32 %v2930, 4294901760
      %10732 = vmatmul.f32.gmra.mxu0 %v10731
      %v10733 = vpop.f32.mrf.mxu0
      %v10734 = vadd.f32 %v10532, %v10733
      %v10735 = vand.u32 %v2932, 4294901760
      %10736 = vmatmul.f32.gmra.mxu0 %v10735
      %v10737 = vpop.f32.mrf.mxu0
      %v10738 = vadd.f32 %v10538, %v10737
      %v10739 = vand.u32 %v2934, 4294901760
      %10740 = vmatmul.f32.gmra.mxu0 %v10739
      %v10741 = vpop.f32.mrf.mxu0
      %v10742 = vadd.f32 %v10544, %v10741
      %v10743 = vand.u32 %v2936, 4294901760
      %10744 = vmatmul.f32.gmra.mxu0 %v10743
      %v10745 = vpop.f32.mrf.mxu0
      %v10746 = vadd.f32 %v10550, %v10745
      %v10747 = vand.u32 %v2938, 4294901760
      %10748 = vmatmul.f32.gmra.mxu0 %v10747
      %v10749 = vpop.f32.mrf.mxu0
      %v10750 = vadd.f32 %v10556, %v10749
      %v10751 = vand.u32 %v2940, 4294901760
      %10752 = vmatmul.f32.gmra.mxu0 %v10751
      %v10753 = vpop.f32.mrf.mxu0
      %v10754 = vadd.f32 %v10562, %v10753
      %v10755 = vand.u32 %v2942, 4294901760
      %10756 = vmatmul.f32.gmra.mxu0 %v10755
      %v10757 = vpop.f32.mrf.mxu0
      %v10758 = vadd.f32 %v10568, %v10757
      %v10759 = vand.u32 %v2944, 4294901760
      %10760 = vmatmul.f32.gmra.mxu0 %v10759
      %v10761 = vpop.f32.mrf.mxu0
      %v10762 = vadd.f32 %v10574, %v10761
      %v10763 = vand.u32 %v2946, 4294901760
      %10764 = vmatmul.f32.gmra.mxu0 %v10763
      %v10765 = vpop.f32.mrf.mxu0
      %v10766 = vadd.f32 %v10580, %v10765
      %v10767 = vand.u32 %v2948, 4294901760
      %10768 = vmatmul.f32.gmra.mxu0 %v10767
      %v10769 = vpop.f32.mrf.mxu0
      %v10770 = vadd.f32 %v10586, %v10769
      %v10771 = vand.u32 %v2950, 4294901760
      %10772 = vmatmul.f32.gmra.mxu0 %v10771
      %v10773 = vpop.f32.mrf.mxu0
      %v10774 = vadd.f32 %v10592, %v10773
      %v10775 = vand.u32 %v2952, 4294901760
      %10776 = vmatmul.f32.gmra.mxu0 %v10775
      %v10777 = vpop.f32.mrf.mxu0
      %v10778 = vadd.f32 %v10598, %v10777
      %v10779 = vand.u32 %v2954, 4294901760
      %10780 = vmatmul.f32.gmra.mxu0 %v10779
      %v10781 = vpop.f32.mrf.mxu0
      %v10782 = vadd.f32 %v10604, %v10781
      %v10783 = vand.u32 %v2956, 4294901760
      %10784 = vmatmul.f32.gmra.mxu0 %v10783
      %v10785 = vpop.f32.mrf.mxu0
      %v10786 = vadd.f32 %v10610, %v10785
      %v10787 = vand.u32 %v2958, 4294901760
      %10788 = vmatmul.f32.gmra.mxu0 %v10787
      %v10789 = vpop.f32.mrf.mxu0
      %v10790 = vadd.f32 %v10616, %v10789
      %v10791 = vand.u32 %v2960, 4294901760
      %10792 = vmatmul.f32.gmra.mxu0 %v10791
      %v10793 = vpop.f32.mrf.mxu0
      %v10794 = vadd.f32 %v10622, %v10793
      %v10795 = vand.u32 %v2962, 4294901760
      %10796 = vmatmul.f32.gmra.mxu0 %v10795
      %v10797 = vpop.f32.mrf.mxu0
      %v10798 = vadd.f32 %v10628, %v10797
      %v10799 = vand.u32 %v2964, 4294901760
      %10800 = vmatmul.f32.gmra.mxu0 %v10799
      %v10801 = vpop.f32.mrf.mxu0
      %v10802 = vadd.f32 %v10634, %v10801
      %v10803 = vand.u32 %v2966, 4294901760
      %10804 = vmatmul.f32.gmra.mxu0 %v10803
      %v10805 = vpop.f32.mrf.mxu0
      %v10806 = vadd.f32 %v10640, %v10805
      %v10807 = vand.u32 %v2968, 4294901760
      %10808 = vmatmul.f32.gmra.mxu0 %v10807
      %v10809 = vpop.f32.mrf.mxu0
      %v10810 = vadd.f32 %v10646, %v10809
      %v10811 = vand.u32 %v2970, 4294901760
      %10812 = vmatmul.f32.gmra.mxu0 %v10811
      %v10813 = vpop.f32.mrf.mxu0
      %v10814 = vadd.f32 %v10652, %v10813
      %v10815 = vand.u32 %v2972, 4294901760
      %10816 = vmatmul.f32.gmra.mxu0 %v10815
      %v10817 = vpop.f32.mrf.mxu0
      %v10818 = vadd.f32 %v10658, %v10817
      %v10819 = vand.u32 %v2974, 4294901760
      %10820 = vmatmul.f32.gmra.mxu0 %v10819
      %v10821 = vpop.f32.mrf.mxu0
      %v10822 = vadd.f32 %v10664, %v10821
      %v10823 = vand.u32 %v2976, 4294901760
      %10824 = vmatmul.f32.gmra.mxu0 %v10823
      %v10825 = vpop.f32.mrf.mxu0
      %v10826 = vadd.f32 %v10670, %v10825
      %v10827 = vand.u32 %v6425, 4294901760
      %10828 = vmatmul.f32.gmra.mxu0 %v10827
      %v10829 = vpop.f32.mrf.mxu0
      %v10830 = vadd.f32 %v10676, %v10829
      %v10831 = vand.u32 %v6427, 4294901760
      %10832 = vmatmul.f32.gmra.mxu0 %v10831
      %v10833 = vpop.f32.mrf.mxu0
      %v10834 = vadd.f32 %v10682, %v10833
      %v10835 = vand.u32 %v9876, 4294901760
      %10836 = vmatmul.f32.gmra.mxu0 %v10835
      %v10837 = vpop.f32.mrf.mxu0
      %v10838 = vadd.f32 %v10688, %v10837
      %v10839 = vand.u32 %v9878, 4294901760
      %10840 = vmatmul.f32.gmra.mxu0 %v10839
      %v10841 = vpop.f32.mrf.mxu0
      %v10842 = vadd.f32 %v10694, %v10841
      %10843 = vdwg.mxu0
      %10844 = vmatpush.msra.mxu0 0.0
      %10845 = vmatpush.msra.mxu0 0.0
      %10846 = vmatpush.msra.mxu0 0.0
      %10847 = vmatpush.msra.mxu0 0.0
      %10848 = vmatpush.msra.mxu0 0.0
      %10849 = vmatpush.msra.mxu0 0.0
      %10850 = vmatpush.msra.mxu0 0.0
      %10851 = vmatpush.msra.mxu0 0.0
      %10852 = vmatpush.msra.mxu0 0.0
      %10853 = vmatpush.msra.mxu0 0.0
      %10854 = vmatpush.msra.mxu0 0.0
      %10855 = vmatpush.msra.mxu0 0.0
      %10856 = vmatpush.msra.mxu0 0.0
      %10857 = vmatpush.msra.mxu0 0.0
      %10858 = vmatpush.msra.mxu0 0.0
      %v10859 = vand.u32 %v9881, 4294901760
      %10860 = vmatpush.msra.mxu0 %v10859
      %v10861 = vand.u32 %v2922, 4294901760
      %10862 = vmatmul.f32.gmra.mxu0 %v10861
      %v10863 = vpop.f32.mrf.mxu0
      %v10864 = vadd.f32 %v10718, %v10863
      %v10865 = vand.u32 %v2924, 4294901760
      %10866 = vmatmul.f32.gmra.mxu0 %v10865
      %v10867 = vpop.f32.mrf.mxu0
      %v10868 = vadd.f32 %v10722, %v10867
      %v10869 = vand.u32 %v2926, 4294901760
      %10870 = vmatmul.f32.gmra.mxu0 %v10869
      %v10871 = vpop.f32.mrf.mxu0
      %v10872 = vadd.f32 %v10726, %v10871
      %v10873 = vand.u32 %v2928, 4294901760
      %10874 = vmatmul.f32.gmra.mxu0 %v10873
      %v10875 = vpop.f32.mrf.mxu0
      %v10876 = vadd.f32 %v10730, %v10875
      %v10877 = vand.u32 %v2930, 4294901760
      %10878 = vmatmul.f32.gmra.mxu0 %v10877
      %v10879 = vpop.f32.mrf.mxu0
      %v10880 = vadd.f32 %v10734, %v10879
      %v10881 = vand.u32 %v2932, 4294901760
      %10882 = vmatmul.f32.gmra.mxu0 %v10881
      %v10883 = vpop.f32.mrf.mxu0
      %v10884 = vadd.f32 %v10738, %v10883
      %v10885 = vand.u32 %v2934, 4294901760
      %10886 = vmatmul.f32.gmra.mxu0 %v10885
      %v10887 = vpop.f32.mrf.mxu0
      %v10888 = vadd.f32 %v10742, %v10887
      %v10889 = vand.u32 %v2936, 4294901760
      %10890 = vmatmul.f32.gmra.mxu0 %v10889
      %v10891 = vpop.f32.mrf.mxu0
      %v10892 = vadd.f32 %v10746, %v10891
      %v10893 = vand.u32 %v2938, 4294901760
      %10894 = vmatmul.f32.gmra.mxu0 %v10893
      %v10895 = vpop.f32.mrf.mxu0
      %v10896 = vadd.f32 %v10750, %v10895
      %v10897 = vand.u32 %v2940, 4294901760
      %10898 = vmatmul.f32.gmra.mxu0 %v10897
      %v10899 = vpop.f32.mrf.mxu0
      %v10900 = vadd.f32 %v10754, %v10899
      %v10901 = vand.u32 %v2942, 4294901760
      %10902 = vmatmul.f32.gmra.mxu0 %v10901
      %v10903 = vpop.f32.mrf.mxu0
      %v10904 = vadd.f32 %v10758, %v10903
      %v10905 = vand.u32 %v2944, 4294901760
      %10906 = vmatmul.f32.gmra.mxu0 %v10905
      %v10907 = vpop.f32.mrf.mxu0
      %v10908 = vadd.f32 %v10762, %v10907
      %v10909 = vand.u32 %v2946, 4294901760
      %10910 = vmatmul.f32.gmra.mxu0 %v10909
      %v10911 = vpop.f32.mrf.mxu0
      %v10912 = vadd.f32 %v10766, %v10911
      %v10913 = vand.u32 %v2948, 4294901760
      %10914 = vmatmul.f32.gmra.mxu0 %v10913
      %v10915 = vpop.f32.mrf.mxu0
      %v10916 = vadd.f32 %v10770, %v10915
      %v10917 = vand.u32 %v2950, 4294901760
      %10918 = vmatmul.f32.gmra.mxu0 %v10917
      %v10919 = vpop.f32.mrf.mxu0
      %v10920 = vadd.f32 %v10774, %v10919
      %v10921 = vand.u32 %v2952, 4294901760
      %10922 = vmatmul.f32.gmra.mxu0 %v10921
      %v10923 = vpop.f32.mrf.mxu0
      %v10924 = vadd.f32 %v10778, %v10923
      %v10925 = vand.u32 %v2954, 4294901760
      %10926 = vmatmul.f32.gmra.mxu0 %v10925
      %v10927 = vpop.f32.mrf.mxu0
      %v10928 = vadd.f32 %v10782, %v10927
      %v10929 = vand.u32 %v2956, 4294901760
      %10930 = vmatmul.f32.gmra.mxu0 %v10929
      %v10931 = vpop.f32.mrf.mxu0
      %v10932 = vadd.f32 %v10786, %v10931
      %v10933 = vand.u32 %v2958, 4294901760
      %10934 = vmatmul.f32.gmra.mxu0 %v10933
      %v10935 = vpop.f32.mrf.mxu0
      %v10936 = vadd.f32 %v10790, %v10935
      %v10937 = vand.u32 %v2960, 4294901760
      %10938 = vmatmul.f32.gmra.mxu0 %v10937
      %v10939 = vpop.f32.mrf.mxu0
      %v10940 = vadd.f32 %v10794, %v10939
      %v10941 = vand.u32 %v2962, 4294901760
      %10942 = vmatmul.f32.gmra.mxu0 %v10941
      %v10943 = vpop.f32.mrf.mxu0
      %v10944 = vadd.f32 %v10798, %v10943
      %v10945 = vand.u32 %v2964, 4294901760
      %10946 = vmatmul.f32.gmra.mxu0 %v10945
      %v10947 = vpop.f32.mrf.mxu0
      %v10948 = vadd.f32 %v10802, %v10947
      %v10949 = vand.u32 %v2966, 4294901760
      %10950 = vmatmul.f32.gmra.mxu0 %v10949
      %v10951 = vpop.f32.mrf.mxu0
      %v10952 = vadd.f32 %v10806, %v10951
      %v10953 = vand.u32 %v2968, 4294901760
      %10954 = vmatmul.f32.gmra.mxu0 %v10953
      %v10955 = vpop.f32.mrf.mxu0
      %v10956 = vadd.f32 %v10810, %v10955
      %v10957 = vand.u32 %v2970, 4294901760
      %10958 = vmatmul.f32.gmra.mxu0 %v10957
      %v10959 = vpop.f32.mrf.mxu0
      %v10960 = vadd.f32 %v10814, %v10959
      %v10961 = vand.u32 %v2972, 4294901760
      %10962 = vmatmul.f32.gmra.mxu0 %v10961
      %v10963 = vpop.f32.mrf.mxu0
      %v10964 = vadd.f32 %v10818, %v10963
      %v10965 = vand.u32 %v2974, 4294901760
      %10966 = vmatmul.f32.gmra.mxu0 %v10965
      %v10967 = vpop.f32.mrf.mxu0
      %v10968 = vadd.f32 %v10822, %v10967
      %v10969 = vand.u32 %v2976, 4294901760
      %10970 = vmatmul.f32.gmra.mxu0 %v10969
      %v10971 = vpop.f32.mrf.mxu0
      %v10972 = vadd.f32 %v10826, %v10971
      %v10973 = vand.u32 %v6425, 4294901760
      %10974 = vmatmul.f32.gmra.mxu0 %v10973
      %v10975 = vpop.f32.mrf.mxu0
      %v10976 = vadd.f32 %v10830, %v10975
      %v10977 = vand.u32 %v6427, 4294901760
      %10978 = vmatmul.f32.gmra.mxu0 %v10977
      %v10979 = vpop.f32.mrf.mxu0
      %v10980 = vadd.f32 %v10834, %v10979
      %v10981 = vand.u32 %v9876, 4294901760
      %10982 = vmatmul.f32.gmra.mxu0 %v10981
      %v10983 = vpop.f32.mrf.mxu0
      %v10984 = vadd.f32 %v10838, %v10983
      %v10985 = vand.u32 %v9878, 4294901760
      %10986 = vmatmul.f32.gmra.mxu0 %v10985
      %v10987 = vpop.f32.mrf.mxu0
      %v10988 = vadd.f32 %v10842, %v10987
      %10989 = vdwg.mxu0
      %v10990 = vadd.f32 %v9839, %v10864
      %v10991 = vadd.f32 %v9840, %v10868
      %v10992 = vadd.f32 %v9841, %v10872
      %v10993 = vadd.f32 %v9842, %v10876
      %v10994 = vadd.f32 %v9843, %v10880
      %v10995 = vadd.f32 %v9844, %v10884
      %v10996 = vadd.f32 %v9845, %v10888
      %v10997 = vadd.f32 %v9846, %v10892
      %v10998 = vadd.f32 %v9847, %v10896
      %v10999 = vadd.f32 %v9848, %v10900
      %v11000 = vadd.f32 %v9849, %v10904
      %v11001 = vadd.f32 %v9850, %v10908
      %v11002 = vadd.f32 %v9851, %v10912
      %v11003 = vadd.f32 %v9852, %v10916
      %v11004 = vadd.f32 %v9853, %v10920
      %v11005 = vadd.f32 %v9854, %v10924
      %v11006 = vadd.f32 %v9855, %v10928
      %v11007 = vadd.f32 %v9856, %v10932
      %v11008 = vadd.f32 %v9857, %v10936
      %v11009 = vadd.f32 %v9858, %v10940
      %v11010 = vadd.f32 %v9859, %v10944
      %v11011 = vadd.f32 %v9860, %v10948
      %v11012 = vadd.f32 %v9861, %v10952
      %v11013 = vadd.f32 %v9862, %v10956
      %v11014 = vadd.f32 %v9863, %v10960
      %v11015 = vadd.f32 %v9864, %v10964
      %v11016 = vadd.f32 %v9865, %v10968
      %v11017 = vadd.f32 %v9866, %v10972
      %v11018 = vadd.f32 %v9867, %v10976
      %v11019 = vadd.f32 %v9868, %v10980
      %v11020 = vadd.f32 %v9869, %v10984
      %v11021 = vadd.f32 %v9870, %v10988
      %v11022 = vld [vmem:[%s2] sm:$0x1]
      %v11024 = vperm.slane %v11022, 0
      %v11026 = vadd.f32 %v10990, %v11024
      %v11027 = vadd.f32 %v10991, %v11024
      %v11028 = vadd.f32 %v10992, %v11024
      %v11029 = vadd.f32 %v10993, %v11024
      %v11030 = vadd.f32 %v10994, %v11024
      %v11031 = vadd.f32 %v10995, %v11024
      %v11032 = vadd.f32 %v10996, %v11024
      %v11033 = vadd.f32 %v10997, %v11024
      %v11034 = vadd.f32 %v10998, %v11024
      %v11035 = vadd.f32 %v10999, %v11024
      %v11036 = vadd.f32 %v11000, %v11024
      %v11037 = vadd.f32 %v11001, %v11024
      %v11038 = vadd.f32 %v11002, %v11024
      %v11039 = vadd.f32 %v11003, %v11024
      %v11040 = vadd.f32 %v11004, %v11024
      %v11041 = vadd.f32 %v11005, %v11024
      %v11042 = vadd.f32 %v11006, %v11024
      %v11043 = vadd.f32 %v11007, %v11024
      %v11044 = vadd.f32 %v11008, %v11024
      %v11045 = vadd.f32 %v11009, %v11024
      %v11046 = vadd.f32 %v11010, %v11024
      %v11047 = vadd.f32 %v11011, %v11024
      %v11048 = vadd.f32 %v11012, %v11024
      %v11049 = vadd.f32 %v11013, %v11024
      %v11050 = vadd.f32 %v11014, %v11024
      %v11051 = vadd.f32 %v11015, %v11024
      %v11052 = vadd.f32 %v11016, %v11024
      %v11053 = vadd.f32 %v11017, %v11024
      %v11054 = vadd.f32 %v11018, %v11024
      %v11055 = vadd.f32 %v11019, %v11024
      %v11056 = vadd.f32 %v11020, %v11024
      %v11057 = vadd.f32 %v11021, %v11024
      %v11058 = vmul.f32 %v11026, 0.2
      %v11059 = vmul.f32 %v11027, 0.2
      %v11060 = vmul.f32 %v11028, 0.2
      %v11061 = vmul.f32 %v11029, 0.2
      %v11062 = vmul.f32 %v11030, 0.2
      %v11063 = vmul.f32 %v11031, 0.2
      %v11064 = vmul.f32 %v11032, 0.2
      %v11065 = vmul.f32 %v11033, 0.2
      %v11066 = vmul.f32 %v11034, 0.2
      %v11067 = vmul.f32 %v11035, 0.2
      %v11068 = vmul.f32 %v11036, 0.2
      %v11069 = vmul.f32 %v11037, 0.2
      %v11070 = vmul.f32 %v11038, 0.2
      %v11071 = vmul.f32 %v11039, 0.2
      %v11072 = vmul.f32 %v11040, 0.2
      %v11073 = vmul.f32 %v11041, 0.2
      %v11074 = vmul.f32 %v11042, 0.2
      %v11075 = vmul.f32 %v11043, 0.2
      %v11076 = vmul.f32 %v11044, 0.2
      %v11077 = vmul.f32 %v11045, 0.2
      %v11078 = vmul.f32 %v11046, 0.2
      %v11079 = vmul.f32 %v11047, 0.2
      %v11080 = vmul.f32 %v11048, 0.2
      %v11081 = vmul.f32 %v11049, 0.2
      %v11082 = vmul.f32 %v11050, 0.2
      %v11083 = vmul.f32 %v11051, 0.2
      %v11084 = vmul.f32 %v11052, 0.2
      %v11085 = vmul.f32 %v11053, 0.2
      %v11086 = vmul.f32 %v11054, 0.2
      %v11087 = vmul.f32 %v11055, 0.2
      %v11088 = vmul.f32 %v11056, 0.2
      %v11089 = vmul.f32 %v11057, 0.2
      %v11090 = vmax.f32 %v11026, %v11058
      %v11091 = vmax.f32 %v11027, %v11059
      %v11092 = vmax.f32 %v11028, %v11060
      %v11093 = vmax.f32 %v11029, %v11061
      %v11094 = vmax.f32 %v11030, %v11062
      %v11095 = vmax.f32 %v11031, %v11063
      %v11096 = vmax.f32 %v11032, %v11064
      %v11097 = vmax.f32 %v11033, %v11065
      %v11098 = vmax.f32 %v11034, %v11066
      %v11099 = vmax.f32 %v11035, %v11067
      %v11100 = vmax.f32 %v11036, %v11068
      %v11101 = vmax.f32 %v11037, %v11069
      %v11102 = vmax.f32 %v11038, %v11070
      %v11103 = vmax.f32 %v11039, %v11071
      %v11104 = vmax.f32 %v11040, %v11072
      %v11105 = vmax.f32 %v11041, %v11073
      %v11106 = vmax.f32 %v11042, %v11074
      %v11107 = vmax.f32 %v11043, %v11075
      %v11108 = vmax.f32 %v11044, %v11076
      %v11109 = vmax.f32 %v11045, %v11077
      %v11110 = vmax.f32 %v11046, %v11078
      %v11111 = vmax.f32 %v11047, %v11079
      %v11112 = vmax.f32 %v11048, %v11080
      %v11113 = vmax.f32 %v11049, %v11081
      %v11114 = vmax.f32 %v11050, %v11082
      %v11115 = vmax.f32 %v11051, %v11083
      %v11116 = vmax.f32 %v11052, %v11084
      %v11117 = vmax.f32 %v11053, %v11085
      %v11118 = vmax.f32 %v11054, %v11086
      %v11119 = vmax.f32 %v11055, %v11087
      %v11120 = vmax.f32 %v11056, %v11088
      %v11121 = vmax.f32 %v11057, %v11089
      %vm11122 = vcmask 64512
      %11123 = vst.msk [vmem:[%s170] sm:$0xff] %vm11122, %v11090
      %11124 = vst.msk [vmem:[%s170 + $0x8] sm:$0xff] %vm11122, %v11091
      %11125 = vst.msk [vmem:[%s170 + $0x10] sm:$0xff] %vm11122, %v11092
      %11126 = vst.msk [vmem:[%s170 + $0x18] sm:$0xff] %vm11122, %v11093
      %11127 = vst.msk [vmem:[%s170 + $0x20] sm:$0xff] %vm11122, %v11094
      %11128 = vst.msk [vmem:[%s170 + $0x28] sm:$0xff] %vm11122, %v11095
      %11129 = vst.msk [vmem:[%s170 + $0x30] sm:$0xff] %vm11122, %v11096
      %11130 = vst.msk [vmem:[%s170 + $0x38] sm:$0xff] %vm11122, %v11097
      %11131 = vst.msk [vmem:[%s170 + $0x40] sm:$0xff] %vm11122, %v11098
      %11132 = vst.msk [vmem:[%s170 + $0x48] sm:$0xff] %vm11122, %v11099
      %11133 = vst.msk [vmem:[%s170 + $0x50] sm:$0xff] %vm11122, %v11100
      %11134 = vst.msk [vmem:[%s170 + $0x58] sm:$0xff] %vm11122, %v11101
      %11135 = vst.msk [vmem:[%s170 + $0x60] sm:$0xff] %vm11122, %v11102
      %11136 = vst.msk [vmem:[%s170 + $0x68] sm:$0xff] %vm11122, %v11103
      %11137 = vst.msk [vmem:[%s170 + $0x70] sm:$0xff] %vm11122, %v11104
      %11138 = vst.msk [vmem:[%s170 + $0x78] sm:$0xff] %vm11122, %v11105
      %11139 = vst.msk [vmem:[%s170 + $0x80] sm:$0xff] %vm11122, %v11106
      %11140 = vst.msk [vmem:[%s170 + $0x88] sm:$0xff] %vm11122, %v11107
      %11141 = vst.msk [vmem:[%s170 + $0x90] sm:$0xff] %vm11122, %v11108
      %11142 = vst.msk [vmem:[%s170 + $0x98] sm:$0xff] %vm11122, %v11109
      %11143 = vst.msk [vmem:[%s170 + $0xa0] sm:$0xff] %vm11122, %v11110
      %11144 = vst.msk [vmem:[%s170 + $0xa8] sm:$0xff] %vm11122, %v11111
      %11145 = vst.msk [vmem:[%s170 + $0xb0] sm:$0xff] %vm11122, %v11112
      %11146 = vst.msk [vmem:[%s170 + $0xb8] sm:$0xff] %vm11122, %v11113
      %11147 = vst.msk [vmem:[%s170 + $0xc0] sm:$0xff] %vm11122, %v11114
      %11148 = vst.msk [vmem:[%s170 + $0xc8] sm:$0xff] %vm11122, %v11115
      %11149 = vst.msk [vmem:[%s170 + $0xd0] sm:$0xff] %vm11122, %v11116
      %11150 = vst.msk [vmem:[%s170 + $0xd8] sm:$0xff] %vm11122, %v11117
      %11151 = vst.msk [vmem:[%s170 + $0xe0] sm:$0xff] %vm11122, %v11118
      %11152 = vst.msk [vmem:[%s170 + $0xe8] sm:$0xff] %vm11122, %v11119
      %11153 = vst.msk [vmem:[%s170 + $0xf0] sm:$0xff] %vm11122, %v11120
      %11154 = vst.msk [vmem:[%s170 + $0xf8] sm:$0xff] %vm11122, %v11121
      %p11155 = scmp.lt.s32.totalorder %s14, 1
      %s11156 = scalar_select %p11155, %s14, 1
      %s11157 = smul.addr %s11156, 32
      %s11158 = smul.addr %s11157, 8
      %s11159 = scalar_lea.vmem %s3, %s11158
      // Predicated region
      $region33: #{tpu_custom_call.1} parent=31 // pred_check
        %p11160 = pneg %p100
      $region34: #{tpu_custom_call.1} parent=31 // pred_check_branch
        %11162 = sbr.rel (%p11160) target = $region36
      $region35: #{tpu_custom_call.1} parent=31 // pred_region
        _
      $region36: #{tpu_custom_call.1} parent=31 // pred_fallthru
        _
    $region32: #{tpu_custom_call.1} parent=5 // pred_fallthru
      _
    %p11163 = scmp.le.s32.totalorder 2, %s9
    // Predicated region
    $region37: #{tpu_custom_call.1} parent=5 // pred_check
      %p11164 = pneg %p11163
    $region38: #{tpu_custom_call.1} parent=5 // pred_check_branch
      %11166 = sbr.rel (%p11164) target = $region40
    $region39: #{tpu_custom_call.1} parent=5 // pred_region
      %s11167 = ssub.s32 %s9, 2
      // Predicated region
      $region41: #{tpu_custom_call.1} parent=39 // pred_check
        %p11168 = pneg %p106
      $region42: #{tpu_custom_call.1} parent=39 // pred_check_branch
        %11170 = sbr.rel (%p11168) target = $region44
      $region43: #{tpu_custom_call.1} parent=39 // pred_region
        %p11171 = scmp.lt.s32.totalorder %s15, 1
        %s11172 = scalar_select %p11171, %s15, 1
        %s11173 = smul.addr %s11172, 32
        %s11174 = smul.addr %s11173, 8
        %s11175 = scalar_lea.vmem %s3, %s11174
      $region44: #{tpu_custom_call.1} parent=39 // pred_fallthru
        _
    $region40: #{tpu_custom_call.1} parent=5 // pred_fallthru
      _
  $region6: #{tpu_custom_call.1} parent=0 // loop_footer
    %s13 = sadd.s32 1, %s9
  $region7: #{tpu_custom_call.1} parent=0 // loop_footer_branch
    %8 = sbr.rel target = $region3
  $region8: #{tpu_custom_call.1} parent=0 // loop_exit
    _

</llo_original>
